<compile_context>
chip_gen: v7x
topology: tpu7x:2x2x1
jax: 0.10.0
libtpu: 0.0.40
codegen_flags: <defaults>
</compile_context>

<pallas_src>
import functools

import jax
import jax.numpy as jnp
from jax.experimental import pallas as pl
from jax.experimental.pallas import tpu as pltpu


def _round_up(x, m):
    return ((x + m - 1) // m) * m


# ----------------------------------------------------------------------------
# Pallas kernels
# ----------------------------------------------------------------------------
def _mm_kernel(relu, x_ref, w_ref, b_ref, o_ref, acc_ref):
    k = pl.program_id(2)

    @pl.when(k == 0)
    def _():
        acc_ref[...] = jnp.zeros_like(acc_ref)

    acc_ref[...] += jnp.dot(x_ref[...], w_ref[...],
                            preferred_element_type=jnp.float32)

    @pl.when(k == pl.num_programs(2) - 1)
    def _():
        acc = acc_ref[...] + b_ref[...]
        if relu:
            acc = jnp.maximum(acc, 0.0)
        o_ref[...] = acc


def _pick_tm(M, K, N):
    if M <= 1024:
        return _round_up(M, 8)
    if K <= 256 and N <= 64:      # small K/N: grow the row tile (HBM roofline)
        return 1024
    return 512


def pallas_matmul(x, w, b=None, relu=False):
    """y = act(x @ w + b);  x:[M,K], w:[K,N].

    bf16 MXU feeds, f32 accumulation, M/N/K tiling with a VMEM accumulator.
    """
    M, K = x.shape
    N = w.shape[1]
    b = jnp.zeros((N,), jnp.float32) if b is None else b.astype(jnp.float32)

    tm = _pick_tm(M, K, N)
    tk = K if K <= 2048 else 512          # 512 is a multiple of 128
    tn = N if N <= 512 else 256

    Mp, Kp, Np = _round_up(M, tm), _round_up(K, tk), _round_up(N, tn)
    xb = x.astype(jnp.bfloat16)
    wb = w.astype(jnp.bfloat16)
    if (Mp, Kp) != (M, K):
        xb = jnp.pad(xb, ((0, Mp - M), (0, Kp - K)))
    if (Kp, Np) != (K, N):
        wb = jnp.pad(wb, ((0, Kp - K), (0, Np - N)))
    if Np != N:
        b = jnp.pad(b, (0, Np - N))
    b2 = b.reshape(1, Np)

    grid = (Mp // tm, Np // tn, Kp // tk)
    out = pl.pallas_call(
        functools.partial(_mm_kernel, relu),
        out_shape=jax.ShapeDtypeStruct((Mp, Np), jnp.float32),
        grid=grid,
        in_specs=[
            pl.BlockSpec((tm, tk), lambda i, j, k: (i, k)),
            pl.BlockSpec((tk, tn), lambda i, j, k: (k, j)),
            pl.BlockSpec((1, tn), lambda i, j, k: (0, j)),
        ],
        out_specs=pl.BlockSpec((tm, tn), lambda i, j, k: (i, j)),
        scratch_shapes=[pltpu.VMEM((tm, tn), jnp.float32)],
        compiler_params=pltpu.CompilerParams(
            dimension_semantics=("parallel", "parallel", "arbitrary")),
    )(xb, wb, b2)
    if (Mp, Np) != (M, N):
        out = out[:M, :N]
    return out


def _conv_direct_kernel(kh, kw, Ho, Wo, relu, x_ref, w_ref, b_ref, o_ref):
    Cin = x_ref.shape[-1]
    O = o_ref.shape[-1]
    x = x_ref[0]                                   # (Hp, Wp, Cin)  bf16
    acc = jnp.zeros((Ho * Wo, O), jnp.float32)
    for dy in range(kh):
        for dx in range(kw):
            xs = x[dy:dy + Ho, dx:dx + Wo, :].reshape(Ho * Wo, Cin)
            acc = acc + jnp.dot(xs, w_ref[dy * kw + dx],
                                preferred_element_type=jnp.float32)
    acc = acc + b_ref[...]
    if relu:
        acc = jnp.maximum(acc, 0.0)
    o_ref[0] = acc.reshape(Ho, Wo, O)


def conv2d_direct(x_nhwc, w_oihw, b, relu=False):
    """Stride-1 'same' dense conv (padding = k//2), fused bias + ReLU.

    No im2col: the kernel accumulates over the kh*kw taps of one padded image
    per grid step (grid over batch, pipelined / megacore-parallel).
    """
    B, H, W, Cin = x_nhwc.shape
    O, _, kh, kw = w_oihw.shape
    ph, pw = kh // 2, kw // 2
    Wo = _round_up(W, 16)            # lane/sublane friendly, sliced off after
    Hp = H + kh - 1
    Wp = Wo + kw - 1
    xp = jnp.pad(x_nhwc.astype(jnp.bfloat16),
                 ((0, 0), (ph, ph), (pw, Wp - W - pw), (0, 0)))
    w_taps = jnp.transpose(w_oihw, (2, 3, 1, 0)).reshape(
        kh * kw, Cin, O).astype(jnp.bfloat16)
    b2 = (jnp.zeros((O,), jnp.float32) if b is None
          else b.astype(jnp.float32)).reshape(1, O)

    y = pl.pallas_call(
        functools.partial(_conv_direct_kernel, kh, kw, H, Wo, relu),
        out_shape=jax.ShapeDtypeStruct((B, H, Wo, O), jnp.float32),
        grid=(B,),
        in_specs=[
            pl.BlockSpec((1, Hp, Wp, Cin), lambda i: (i, 0, 0, 0)),
            pl.BlockSpec((kh * kw, Cin, O), lambda i: (0, 0, 0)),
            pl.BlockSpec((1, O), lambda i: (0, 0)),
        ],
        out_specs=pl.BlockSpec((1, H, Wo, O), lambda i: (i, 0, 0, 0)),
        compiler_params=pltpu.CompilerParams(
            dimension_semantics=("parallel",)),
    )(xp, w_taps, b2)
    return y[:, :, :W, :] if Wo != W else y


def _dw_kernel(H, W, d, relu, has_res, *refs):
    if has_res:
        x_ref, w_ref, b_ref, res_ref, o_ref = refs
    else:
        x_ref, w_ref, b_ref, o_ref = refs
        res_ref = None
    x = x_ref[0]                                   # (Hp, Wp, C)
    acc = None
    for ky in range(3):
        for kx in range(3):
            xs = x[ky * d:ky * d + H, kx * d:kx * d + W, :]
            term = xs * w_ref[ky * 3 + kx]
            acc = term if acc is None else acc + term
    acc = acc + b_ref[...]
    if relu:
        acc = jnp.maximum(acc, 0.0)
    if has_res:
        acc = acc + res_ref[0]
    o_ref[0] = acc


def pallas_depthwise_conv3x3(x_nhwc, w_c33, bias_c, dilation=1,
                             relu=False, residual=None):
    """Depthwise 3x3 conv (groups == channels), fused bias/ReLU/residual."""
    # TODO(synk): GAB group convs have C in {9,17,65,81} (lane-sparse); the four
    #             dilation groups could be fused into one lane-dense kernel.
    B, H, W, C = x_nhwc.shape
    d = int(dilation)
    xp = jnp.pad(x_nhwc.astype(jnp.float32), ((0, 0), (d, d), (d, d), (0, 0)))
    Hp, Wp = H + 2 * d, W + 2 * d
    w9 = jnp.transpose(w_c33, (1, 2, 0)).reshape(9, 1, C).astype(jnp.float32)
    b = bias_c.reshape(1, C).astype(jnp.float32)
    has_res = residual is not None

    in_specs = [
        pl.BlockSpec((1, Hp, Wp, C), lambda i: (i, 0, 0, 0)),
        pl.BlockSpec((9, 1, C), lambda i: (0, 0, 0)),
        pl.BlockSpec((1, C), lambda i: (0, 0)),
    ]
    args = [xp, w9, b]
    if has_res:
        in_specs.append(pl.BlockSpec((1, H, W, C), lambda i: (i, 0, 0, 0)))
        args.append(residual.astype(jnp.float32))

    return pl.pallas_call(
        functools.partial(_dw_kernel, H, W, d, relu, has_res),
        out_shape=jax.ShapeDtypeStruct((B, H, W, C), jnp.float32),
        grid=(B,),
        in_specs=in_specs,
        out_specs=pl.BlockSpec((1, H, W, C), lambda i: (i, 0, 0, 0)),
        compiler_params=pltpu.CompilerParams(
            dimension_semantics=("parallel",)),
    )(*args)


def _ln_kernel(eps, x_ref, g_ref, b_ref, o_ref):
    x = x_ref[...]
    mu = jnp.mean(x, axis=-1, keepdims=True)
    xc = x - mu
    var = jnp.mean(xc * xc, axis=-1, keepdims=True)
    o_ref[...] = xc * jax.lax.rsqrt(var + eps) * g_ref[...] + b_ref[...]


def pallas_layernorm(x2d, gamma, beta, eps=1e-5):
    M, C = x2d.shape
    tm = min(1024, _round_up(M, 8))
    Mp = _round_up(M, tm)
    xf = x2d.astype(jnp.float32)
    if Mp != M:
        xf = jnp.pad(xf, ((0, Mp - M), (0, 0)))
    g = gamma.reshape(1, C).astype(jnp.float32)
    b = beta.reshape(1, C).astype(jnp.float32)
    y = pl.pallas_call(
        functools.partial(_ln_kernel, float(eps)),
        out_shape=jax.ShapeDtypeStruct((Mp, C), jnp.float32),
        grid=(Mp // tm,),
        in_specs=[
            pl.BlockSpec((tm, C), lambda i: (i, 0)),
            pl.BlockSpec((1, C), lambda i: (0, 0)),
            pl.BlockSpec((1, C), lambda i: (0, 0)),
        ],
        out_specs=pl.BlockSpec((tm, C), lambda i: (i, 0)),
        compiler_params=pltpu.CompilerParams(
            dimension_semantics=("parallel",)),
    )(xf, g, b)
    return y[:M] if Mp != M else y


def _kan_kernel(G, fuse_ln, eps, x_ref, w_ref, b_ref, g_ref, bt_ref, o_ref):
    x = x_ref[...]
    if fuse_ln:                                   # fused LayerNorm prologue
        mu = jnp.mean(x, axis=-1, keepdims=True)
        xc = x - mu
        var = jnp.mean(xc * xc, axis=-1, keepdims=True)
        x = xc * jax.lax.rsqrt(var + eps) * g_ref[...] + bt_ref[...]
    # angle-addition recurrence: one cos/sin pair on the EUP, rest on the VPU.
    c1 = jnp.cos(x)
    s1 = jnp.sin(x)
    feats = [c1, s1]
    ck, sk = c1, s1
    for _ in range(G - 1):
        ck, sk = ck * c1 - sk * s1, sk * c1 + ck * s1
        feats.append(ck)
        feats.append(sk)
    f = jnp.concatenate(feats, axis=-1).astype(jnp.bfloat16)   # (tm, 2*G*Cin)
    acc = jnp.dot(f, w_ref[...], preferred_element_type=jnp.float32)
    o_ref[...] = acc + b_ref[...]


def pallas_fourier_kan(x2d, coeff_cos, coeff_sin, bias, ln=None, ln_eps=1e-5):
    """y = sum_g cos((g+1)x)@Cc[g] + sin((g+1)x)@Cs[g] + b  (optional fused LN)."""
    M, Cin = x2d.shape
    G, _, Cout = coeff_cos.shape
    # Stacked weight rows ordered as [cos(1x), sin(1x), cos(2x), sin(2x), ...]
    wrows = []
    for g in range(G):
        wrows.append(coeff_cos[g])
        wrows.append(coeff_sin[g])
    Wstk = jnp.concatenate(wrows, axis=0).astype(jnp.bfloat16)  # (2*G*Cin, Cout)
    b2 = bias.reshape(1, Cout).astype(jnp.float32)
    fuse_ln = ln is not None
    g_ = (ln['g'] if fuse_ln else jnp.ones((Cin,), jnp.float32))
    bt_ = (ln['b'] if fuse_ln else jnp.zeros((Cin,), jnp.float32))
    g_ = g_.reshape(1, Cin).astype(jnp.float32)
    bt_ = bt_.reshape(1, Cin).astype(jnp.float32)

    tm = min(256, _round_up(M, 8))
    Mp = _round_up(M, tm)
    xf = x2d.astype(jnp.float32)
    if Mp != M:
        xf = jnp.pad(xf, ((0, Mp - M), (0, 0)))

    y = pl.pallas_call(
        functools.partial(_kan_kernel, G, fuse_ln, float(ln_eps)),
        out_shape=jax.ShapeDtypeStruct((Mp, Cout), jnp.float32),
        grid=(Mp // tm,),
        in_specs=[
            pl.BlockSpec((tm, Cin), lambda i: (i, 0)),
            pl.BlockSpec((2 * G * Cin, Cout), lambda i: (0, 0)),
            pl.BlockSpec((1, Cout), lambda i: (0, 0)),
            pl.BlockSpec((1, Cin), lambda i: (0, 0)),
            pl.BlockSpec((1, Cin), lambda i: (0, 0)),
        ],
        out_specs=pl.BlockSpec((tm, Cout), lambda i: (i, 0)),
        compiler_params=pltpu.CompilerParams(
            dimension_semantics=("parallel",)),
    )(xf, Wstk, b2, g_, bt_)
    return y[:M] if Mp != M else y


# ----------------------------------------------------------------------------
# JAX glue built on the Pallas kernels
# ----------------------------------------------------------------------------
def _fold_bn_conv(w_oihw, b, bn):
    """Fold eval-mode BN (scale, shift) into a dense conv's weight/bias."""
    s = bn['scale'].astype(jnp.float32)
    t = bn['shift'].astype(jnp.float32)
    w = w_oihw.astype(jnp.float32) * s.reshape(-1, 1, 1, 1)
    b0 = jnp.zeros((w_oihw.shape[0],), jnp.float32) if b is None else b
    return w, b0.astype(jnp.float32) * s + t


def _fold_bn_dw(w_c33, b, bn):
    s = bn['scale'].astype(jnp.float32)
    t = bn['shift'].astype(jnp.float32)
    return (w_c33.astype(jnp.float32) * s.reshape(-1, 1, 1),
            b.astype(jnp.float32) * s + t)


def conv2d_im2col(x_nhwc, w_oihw, b, stride, padding):
    """Strided conv (patch-embed only, small spatial) via im2col + Pallas GEMM."""
    B, H, W, Cin = x_nhwc.shape
    O, _, kh, kw = w_oihw.shape
    xp = jnp.pad(x_nhwc, ((0, 0), (padding, padding), (padding, padding), (0, 0)))
    Ho = (H + 2 * padding - kh) // stride + 1
    Wo = (W + 2 * padding - kw) // stride + 1
    cols = []
    for dy in range(kh):
        for dx in range(kw):
            cols.append(xp[:, dy:dy + stride * (Ho - 1) + 1:stride,
                           dx:dx + stride * (Wo - 1) + 1:stride, :])
    pat = jnp.concatenate(cols, axis=-1).reshape(B * Ho * Wo, kh * kw * Cin)
    wm = jnp.transpose(w_oihw, (2, 3, 1, 0)).reshape(kh * kw * Cin, O)
    y = pallas_matmul(pat, wm, b)
    return y.reshape(B, Ho, Wo, O)


def conv1x1(x_nhwc, w_oi11, b):
    B, H, W, C = x_nhwc.shape
    O = w_oi11.shape[0]
    wm = w_oi11.reshape(O, C).T
    y = pallas_matmul(x_nhwc.reshape(-1, C), wm, b)
    return y.reshape(B, H, W, O)


def maxpool2(x):
    B, H, W, C = x.shape
    return jnp.max(x.reshape(B, H // 2, 2, W // 2, 2, C), axis=(2, 4))


def _resize_coords(out_size, in_size, align_corners):
    i = jnp.arange(out_size, dtype=jnp.float32)
    if align_corners:
        if out_size == 1:
            src = jnp.zeros((out_size,), jnp.float32)
        else:
            src = i * (in_size - 1) / (out_size - 1)
    else:
        src = (i + 0.5) * (in_size / out_size) - 0.5
        src = jnp.maximum(src, 0.0)
    i0 = jnp.clip(jnp.floor(src).astype(jnp.int32), 0, in_size - 1)
    i1 = jnp.minimum(i0 + 1, in_size - 1)
    w = src - i0.astype(jnp.float32)
    return i0, i1, w


def bilinear_resize(x, oh, ow, align_corners):
    """PyTorch-semantics bilinear interpolation (NHWC)."""
    B, H, W, C = x.shape
    y0, y1, wy = _resize_coords(oh, H, align_corners)
    x0, x1, wx = _resize_coords(ow, W, align_corners)
    r0 = x[:, y0, :, :]
    r1 = x[:, y1, :, :]

    def interp_w(r):
        a = r[:, :, x0, :]
        b = r[:, :, x1, :]
        return a * (1 - wx)[None, None, :, None] + b * wx[None, None, :, None]

    top = interp_w(r0)
    bot = interp_w(r1)
    return top * (1 - wy)[None, :, None, None] + bot * wy[None, :, None, None]


def layernorm_lastdim(x, p, eps=1e-5):
    shp = x.shape
    y = pallas_layernorm(x.reshape(-1, shp[-1]), p['g'], p['b'], eps)
    return y.reshape(shp)


def channels_first_ln(x_nhwc, p, eps=1e-6):
    B, H, W, C = x_nhwc.shape
    y = pallas_layernorm(x_nhwc.reshape(-1, C), p['g'], p['b'], eps)
    return y.reshape(B, H, W, C)


# ----------------------------------------------------------------------------
# Module forwards
# ----------------------------------------------------------------------------
def conv_layer_fwd(p, x):
    # conv -> BN -> ReLU -> conv -> BN -> ReLU   (ConvLayer & D_ConvLayer)
    w1, b1 = _fold_bn_conv(p['c1']['w'], p['c1']['b'], p['bn1'])
    x = conv2d_direct(x, w1, b1, relu=True)
    w2, b2 = _fold_bn_conv(p['c2']['w'], p['c2']['b'], p['bn2'])
    x = conv2d_direct(x, w2, b2, relu=True)
    return x


def patch_embed_fwd(p, x):
    y = conv2d_im2col(x, p['proj']['w'], p['proj']['b'], stride=2, padding=1)
    B, Ho, Wo, C = y.shape
    tok = y.reshape(B, Ho * Wo, C)
    tok = layernorm_lastdim(tok, p['norm'], 1e-5)
    return tok, Ho, Wo


def dw_bn_relu_fwd(p, tok, H, W, residual=None):
    B, N, C = tok.shape
    img = tok.reshape(B, H, W, C)
    w, b = _fold_bn_dw(p['dw']['w'], p['dw']['b'], p['bn'])
    res_img = None if residual is None else residual.reshape(B, H, W, C)
    y = pallas_depthwise_conv3x3(img, w, b, 1, relu=True, residual=res_img)
    return y.reshape(B, N, C)


def kan_layer_fwd(p, tok, H, W, ln=None, residual=None):
    B, N, C = tok.shape
    x = pallas_fourier_kan(tok.reshape(B * N, C), p['fc1']['cc'],
                           p['fc1']['cs'], p['fc1']['b'], ln=ln).reshape(B, N, C)
    x = dw_bn_relu_fwd(p['dw1'], x, H, W)
    x = pallas_fourier_kan(x.reshape(B * N, C), p['fc2']['cc'],
                           p['fc2']['cs'], p['fc2']['b']).reshape(B, N, C)
    x = dw_bn_relu_fwd(p['dw2'], x, H, W)
    x = pallas_fourier_kan(x.reshape(B * N, C), p['fc3']['cc'],
                           p['fc3']['cs'], p['fc3']['b']).reshape(B, N, C)
    x = dw_bn_relu_fwd(p['dw3'], x, H, W, residual=residual)
    return x


def kan_block_fwd(p, tok, H, W):
    # norm2 is fused into the first Fourier-KAN kernel; the residual add is
    # fused into the final depthwise conv of the layer.
    return kan_layer_fwd(p['layer'], tok, H, W, ln=p['norm2'], residual=tok)


def gab_fwd(p, xh, xl, mask):
    low = xl
    B, Hl, Wl, Cl = xl.shape
    xh = conv1x1(xh, p['pre']['w'], p['pre']['b'])
    xh = bilinear_resize(xh, Hl, Wl, align_corners=True)
    xh_c = jnp.split(xh, 4, axis=-1)
    xl_c = jnp.split(xl, 4, axis=-1)
    d_list = (1, 2, 5, 7)
    parts = []
    for i in range(4):
        gi = p['g'][i]
        xi = jnp.concatenate([xh_c[i], xl_c[i], mask], axis=-1)
        xi = channels_first_ln(xi, gi['ln'], 1e-6)
        xi = pallas_depthwise_conv3x3(xi, gi['conv']['w'], gi['conv']['b'],
                                      dilation=d_list[i])
        parts.append(xi)
    x = jnp.concatenate(parts, axis=-1)          # [B, H, W, 2*Cl + 4]
    # channel attention: M == batch -> overhead-dominated, keep in plain JAX.
    avg = jnp.mean(x, axis=(1, 2))
    h = jnp.maximum(avg @ p['ca_w1'].T, 0.0)
    att = jax.nn.sigmoid(h @ p['ca_w2'].T)
    x = x * att[:, None, None, :]
    # spatial attention: 7x7 conv (direct Pallas conv, 49 in-kernel taps) -> sigmoid
    sa = conv2d_direct(x, p['sa']['w'], p['sa']['b'])
    x = x * jax.nn.sigmoid(sa)
    # tail: channels-first LN + 1x1 conv, residual with low
    x = channels_first_ln(x, p['tail_ln'], 1e-6)
    x = conv1x1(x, p['tail_conv']['w'], p['tail_conv']['b'])
    return x + low


def unext_forward(P, x_nchw):
    x = jnp.transpose(x_nchw, (0, 2, 3, 1)).astype(jnp.float32)   # -> NHWC
    B = x.shape[0]

    out = jnp.maximum(maxpool2(conv_layer_fwd(P['encoder1'], x)), 0.0);  t1 = out
    out = jnp.maximum(maxpool2(conv_layer_fwd(P['encoder2'], out)), 0.0); t2 = out
    out = jnp.maximum(maxpool2(conv_layer_fwd(P['encoder3'], out)), 0.0); t3 = out

    tok, H, W = patch_embed_fwd(P['patch_embed3'], out)
    tok = kan_block_fwd(P['block1'], tok, H, W)
    tok = layernorm_lastdim(tok, P['norm3'], 1e-5)
    out = tok.reshape(B, H, W, -1); t4 = out

    tok, H, W = patch_embed_fwd(P['patch_embed4'], out)
    tok = kan_block_fwd(P['block2'], tok, H, W)
    tok = layernorm_lastdim(tok, P['norm4'], 1e-5)
    out = tok.reshape(B, H, W, -1); t5 = out

    # ---- decoder stage 1 ----
    out = conv_layer_fwd(P['decoder1'], out)
    out = jnp.maximum(bilinear_resize(out, out.shape[1] * 2, out.shape[2] * 2, False), 0.0)
    gt_pre4 = conv1x1(out, P['gt_conv1']['w'], P['gt_conv1']['b'])
    t4 = gab_fwd(P['GAB4'], t5, t4, gt_pre4)
    gt4 = bilinear_resize(gt_pre4, gt_pre4.shape[1] * 16, gt_pre4.shape[2] * 16, True)
    out = out + t4

    H, W = out.shape[1], out.shape[2]
    tok = out.reshape(B, H * W, -1)
    tok = kan_block_fwd(P['dblock1'], tok, H, W)
    tok = layernorm_lastdim(tok, P['dnorm3'], 1e-5)
    out = tok.reshape(B, H, W, -1)

    # ---- decoder stage 2 ----
    out = conv_layer_fwd(P['decoder2'], out)
    out = jnp.maximum(bilinear_resize(out, out.shape[1] * 2, out.shape[2] * 2, False), 0.0)
    gt_pre3 = conv1x1(out, P['gt_conv2']['w'], P['gt_conv2']['b'])
    t3 = gab_fwd(P['GAB3'], t4, t3, gt_pre3)
    gt3 = bilinear_resize(gt_pre3, gt_pre3.shape[1] * 8, gt_pre3.shape[2] * 8, True)
    out = out + t3

    H, W = out.shape[1], out.shape[2]
    tok = out.reshape(B, H * W, -1)
    tok = kan_block_fwd(P['dblock2'], tok, H, W)
    tok = layernorm_lastdim(tok, P['dnorm4'], 1e-5)
    out = tok.reshape(B, H, W, -1)

    # ---- decoder stage 3 ----
    out = conv_layer_fwd(P['decoder3'], out)
    out = jnp.maximum(bilinear_resize(out, out.shape[1] * 2, out.shape[2] * 2, False), 0.0)
    gt_pre2 = conv1x1(out, P['gt_conv3']['w'], P['gt_conv3']['b'])
    t2 = gab_fwd(P['GAB2'], t3, t2, gt_pre2)
    gt2 = bilinear_resize(gt_pre2, gt_pre2.shape[1] * 4, gt_pre2.shape[2] * 4, True)
    out = out + t2

    # ---- decoder stage 4 ----
    out = conv_layer_fwd(P['decoder4'], out)
    out = jnp.maximum(bilinear_resize(out, out.shape[1] * 2, out.shape[2] * 2, False), 0.0)
    gt_pre1 = conv1x1(out, P['gt_conv4']['w'], P['gt_conv4']['b'])
    t1 = gab_fwd(P['GAB1'], t2, t1, gt_pre1)
    gt1 = bilinear_resize(gt_pre1, gt_pre1.shape[1] * 2, gt_pre1.shape[2] * 2, True)
    out = out + t1

    # ---- decoder stage 5 ----
    out = conv_layer_fwd(P['decoder5'], out)
    out = jnp.maximum(bilinear_resize(out, out.shape[1] * 2, out.shape[2] * 2, False), 0.0)
    final = conv1x1(out, P['final']['w'], P['final']['b'])

    to_nchw = lambda a: jnp.transpose(a, (0, 3, 1, 2))
    return ((to_nchw(gt4), to_nchw(gt3), to_nchw(gt2), to_nchw(gt1)),
            to_nchw(final))


# ----------------------------------------------------------------------------
# Deterministic parameter initialization
# ----------------------------------------------------------------------------
_KEY = [jax.random.PRNGKey(0)]


def _next_key():
    _KEY[0], k = jax.random.split(_KEY[0])
    return k


def randn(shape, std=0.05):
    return (std * jax.random.normal(_next_key(), shape)).astype(jnp.float32)


def bn_params(c):
    gamma = 1.0 + randn((c,), 0.05)
    beta = randn((c,), 0.05)
    # eval-mode BN, running_mean=0 / running_var=1 (PyTorch defaults), folded.
    # (general fold: scale = gamma/sqrt(var+eps), shift = beta - mean*scale)
    scale = gamma / jnp.sqrt(1.0 + 1e-5)
    return {'scale': scale, 'shift': beta}


def ln_params(c):
    return {'g': 1.0 + randn((c,), 0.05), 'b': randn((c,), 0.05)}


def conv_params(o, i, k):
    return {'w': randn((o, i, k, k), 0.05), 'b': randn((o,), 0.02)}


def dwconv_params(c):
    return {'w': randn((c, 3, 3), 0.05), 'b': randn((c,), 0.02)}


def conv_layer_params(ci, co):
    return {'c1': conv_params(co, ci, 3), 'bn1': bn_params(co),
            'c2': conv_params(co, co, 3), 'bn2': bn_params(co)}


def d_conv_layer_params(ci, co):
    return {'c1': conv_params(ci, ci, 3), 'bn1': bn_params(ci),
            'c2': conv_params(co, ci, 3), 'bn2': bn_params(co)}


def fourier_kan_params(ci, co, grid=5):
    s = 1.0 / float((ci * grid) ** 0.5)
    return {'cc': randn((grid, ci, co), s), 'cs': randn((grid, ci, co), s),
            'b': jnp.zeros((co,), jnp.float32)}


def dw_bn_relu_params(dim):
    return {'dw': dwconv_params(dim), 'bn': bn_params(dim)}


def kan_layer_params(dim):
    return {'fc1': fourier_kan_params(dim, dim),
            'fc2': fourier_kan_params(dim, dim),
            'fc3': fourier_kan_params(dim, dim),
            'dw1': dw_bn_relu_params(dim),
            'dw2': dw_bn_relu_params(dim),
            'dw3': dw_bn_relu_params(dim)}


def kan_block_params(dim):
    return {'norm2': ln_params(dim), 'layer': kan_layer_params(dim)}


def patch_embed_params(ci, dim):
    return {'proj': conv_params(dim, ci, 3), 'norm': ln_params(dim)}


def gab_params(dim_xh, dim_xl):
    gs = dim_xl // 2
    C = dim_xl * 2 + 4
    def gblock():
        return {'ln': ln_params(gs + 1), 'conv': dwconv_params(gs + 1)}
    return {'pre': conv_params(dim_xl, dim_xh, 1),
            'g': [gblock() for _ in range(4)],
            'ca_w1': randn((C // 16, C), 0.05),
            'ca_w2': randn((C, C // 16), 0.05),
            'sa': conv_params(1, C, 7),
            'tail_ln': ln_params(C),
            'tail_conv': conv_params(dim_xl, C, 1)}


def init_params(num_classes=4):
    P = {}
    P['encoder1'] = conv_layer_params(3, 16)
    P['encoder2'] = conv_layer_params(16, 32)
    P['encoder3'] = conv_layer_params(32, 128)
    P['patch_embed3'] = patch_embed_params(128, 160)
    P['patch_embed4'] = patch_embed_params(160, 256)
    P['block1'] = kan_block_params(160)
    P['block2'] = kan_block_params(256)
    P['dblock1'] = kan_block_params(160)
    P['dblock2'] = kan_block_params(128)
    P['norm3'] = ln_params(160)
    P['norm4'] = ln_params(256)
    P['dnorm3'] = ln_params(160)
    P['dnorm4'] = ln_params(128)
    P['GAB1'] = gab_params(32, 16)
    P['GAB2'] = gab_params(128, 32)
    P['GAB3'] = gab_params(160, 128)
    P['GAB4'] = gab_params(256, 160)
    P['gt_conv1'] = conv_params(1, 160, 1)
    P['gt_conv2'] = conv_params(1, 128, 1)
    P['gt_conv3'] = conv_params(1, 32, 1)
    P['gt_conv4'] = conv_params(1, 16, 1)
    P['decoder1'] = d_conv_layer_params(256, 160)
    P['decoder2'] = d_conv_layer_params(160, 128)
    P['decoder3'] = d_conv_layer_params(128, 32)
    P['decoder4'] = d_conv_layer_params(32, 16)
    P['decoder5'] = d_conv_layer_params(16, 16)
    P['final'] = conv_params(num_classes, 16, 1)
    return P


# ----------------------------------------------------------------------------
if __name__ == "__main__":
    NUM_CLASSES = 4
    params = init_params(NUM_CLASSES)
    x = jax.random.normal(jax.random.PRNGKey(0), (2, 3, 32, 32), jnp.float32)

    (gt4, gt3, gt2, gt1), final = unext_forward(params, x)
    for a in (gt4, gt3, gt2, gt1, final):
        jax.block_until_ready(a)

    assert final.shape == (2, NUM_CLASSES, 32, 32), final.shape
    for g in (gt4, gt3, gt2, gt1):
        assert g.shape == (2, 1, 32, 32), g.shape
        assert bool(jnp.all(jnp.isfinite(g)))
    assert bool(jnp.all(jnp.isfinite(final)))
    print("KERNEL_OK")
</pallas_src>

<mosaic_0001>
module attributes {stable_mosaic.version = 11 : i64} {
  func.func @_conv_direct_kernel(%arg0: i32, %arg1: memref<1x34x34x3xbf16, #tpu.memory_space<vmem>>, %arg2: memref<9x3x16xbf16, #tpu.memory_space<vmem>>, %arg3: memref<1x16xf32, #tpu.memory_space<vmem>>, %arg4: memref<1x32x32x16xf32, #tpu.memory_space<vmem>>) attributes {dimension_semantics = [#tpu.dimension_semantics<parallel>], iteration_bounds = array<i64: 2>, scalar_prefetch = 0 : i64, scratch_operands = 0 : i64, tpu.core_type = #tpu.core_type<tc>, window_params = [{transform_indices = @transform_0, window_bounds = array<i64: 1, 34, 34, 3>}, {pipeline_mode = #tpu.pipeline_mode<synchronous>, transform_indices = @transform_1, window_bounds = array<i64: 9, 3, 16>}, {pipeline_mode = #tpu.pipeline_mode<synchronous>, transform_indices = @transform_2, window_bounds = array<i64: 1, 16>}, {transform_indices = @transform_3, window_bounds = array<i64: 1, 32, 32, 16>}]} {
    %c0 = arith.constant 0 : index
    %c0_0 = arith.constant 0 : index
    %c0_1 = arith.constant 0 : index
    %c0_2 = arith.constant 0 : index
    %0 = vector.load %arg1[%c0, %c0_0, %c0_1, %c0_2] : memref<1x34x34x3xbf16, #tpu.memory_space<vmem>>, vector<1x34x34x3xbf16>
    %1 = vector.shape_cast %0 : vector<1x34x34x3xbf16> to vector<34x34x3xbf16>
    %cst = arith.constant 0.000000e+00 : f32
    %2 = vector.broadcast %cst : f32 to vector<1024x16xf32>
    %3 = vector.extract_strided_slice %1 {offsets = [0, 0, 0], sizes = [32, 32, 3], strides = [1, 1, 1]} : vector<34x34x3xbf16> to vector<32x32x3xbf16>
    %4 = vector.shape_cast %3 : vector<32x32x3xbf16> to vector<1024x3xbf16>
    %c0_3 = arith.constant 0 : index
    %c0_4 = arith.constant 0 : index
    %c0_5 = arith.constant 0 : index
    %5 = vector.load %arg2[%c0_3, %c0_4, %c0_5] : memref<9x3x16xbf16, #tpu.memory_space<vmem>>, vector<1x3x16xbf16>
    %6 = vector.shape_cast %5 : vector<1x3x16xbf16> to vector<3x16xbf16>
    %cst_6 = arith.constant dense<0.000000e+00> : vector<1024x16xf32>
    %7 = tpu.matmul %4, %6, %cst_6 {dimension_numbers = #tpu.dot_dimension_numbers<[1], [0], [0], [1], [0, 0, 1, 1], [], []>} : vector<1024x3xbf16>, vector<3x16xbf16>, vector<1024x16xf32> -> vector<1024x16xf32>
    %8 = arith.addf %2, %7 : vector<1024x16xf32>
    %9 = vector.extract_strided_slice %1 {offsets = [0, 1, 0], sizes = [32, 32, 3], strides = [1, 1, 1]} : vector<34x34x3xbf16> to vector<32x32x3xbf16>
    %10 = vector.shape_cast %9 : vector<32x32x3xbf16> to vector<1024x3xbf16>
    %c1 = arith.constant 1 : index
    %c0_7 = arith.constant 0 : index
    %c0_8 = arith.constant 0 : index
    %11 = vector.load %arg2[%c1, %c0_7, %c0_8] : memref<9x3x16xbf16, #tpu.memory_space<vmem>>, vector<1x3x16xbf16>
    %12 = vector.shape_cast %11 : vector<1x3x16xbf16> to vector<3x16xbf16>
    %cst_9 = arith.constant dense<0.000000e+00> : vector<1024x16xf32>
    %13 = tpu.matmul %10, %12, %cst_9 {dimension_numbers = #tpu.dot_dimension_numbers<[1], [0], [0], [1], [0, 0, 1, 1], [], []>} : vector<1024x3xbf16>, vector<3x16xbf16>, vector<1024x16xf32> -> vector<1024x16xf32>
    %14 = arith.addf %8, %13 : vector<1024x16xf32>
    %15 = vector.extract_strided_slice %1 {offsets = [0, 2, 0], sizes = [32, 32, 3], strides = [1, 1, 1]} : vector<34x34x3xbf16> to vector<32x32x3xbf16>
    %16 = vector.shape_cast %15 : vector<32x32x3xbf16> to vector<1024x3xbf16>
    %c2 = arith.constant 2 : index
    %c0_10 = arith.constant 0 : index
    %c0_11 = arith.constant 0 : index
    %17 = vector.load %arg2[%c2, %c0_10, %c0_11] : memref<9x3x16xbf16, #tpu.memory_space<vmem>>, vector<1x3x16xbf16>
    %18 = vector.shape_cast %17 : vector<1x3x16xbf16> to vector<3x16xbf16>
    %cst_12 = arith.constant dense<0.000000e+00> : vector<1024x16xf32>
    %19 = tpu.matmul %16, %18, %cst_12 {dimension_numbers = #tpu.dot_dimension_numbers<[1], [0], [0], [1], [0, 0, 1, 1], [], []>} : vector<1024x3xbf16>, vector<3x16xbf16>, vector<1024x16xf32> -> vector<1024x16xf32>
    %20 = arith.addf %14, %19 : vector<1024x16xf32>
    %21 = vector.extract_strided_slice %1 {offsets = [1, 0, 0], sizes = [32, 32, 3], strides = [1, 1, 1]} : vector<34x34x3xbf16> to vector<32x32x3xbf16>
    %22 = vector.shape_cast %21 : vector<32x32x3xbf16> to vector<1024x3xbf16>
    %c3 = arith.constant 3 : index
    %c0_13 = arith.constant 0 : index
    %c0_14 = arith.constant 0 : index
    %23 = vector.load %arg2[%c3, %c0_13, %c0_14] : memref<9x3x16xbf16, #tpu.memory_space<vmem>>, vector<1x3x16xbf16>
    %24 = vector.shape_cast %23 : vector<1x3x16xbf16> to vector<3x16xbf16>
    %cst_15 = arith.constant dense<0.000000e+00> : vector<1024x16xf32>
    %25 = tpu.matmul %22, %24, %cst_15 {dimension_numbers = #tpu.dot_dimension_numbers<[1], [0], [0], [1], [0, 0, 1, 1], [], []>} : vector<1024x3xbf16>, vector<3x16xbf16>, vector<1024x16xf32> -> vector<1024x16xf32>
    %26 = arith.addf %20, %25 : vector<1024x16xf32>
    %27 = vector.extract_strided_slice %1 {offsets = [1, 1, 0], sizes = [32, 32, 3], strides = [1, 1, 1]} : vector<34x34x3xbf16> to vector<32x32x3xbf16>
    %28 = vector.shape_cast %27 : vector<32x32x3xbf16> to vector<1024x3xbf16>
    %c4 = arith.constant 4 : index
    %c0_16 = arith.constant 0 : index
    %c0_17 = arith.constant 0 : index
    %29 = vector.load %arg2[%c4, %c0_16, %c0_17] : memref<9x3x16xbf16, #tpu.memory_space<vmem>>, vector<1x3x16xbf16>
    %30 = vector.shape_cast %29 : vector<1x3x16xbf16> to vector<3x16xbf16>
    %cst_18 = arith.constant dense<0.000000e+00> : vector<1024x16xf32>
    %31 = tpu.matmul %28, %30, %cst_18 {dimension_numbers = #tpu.dot_dimension_numbers<[1], [0], [0], [1], [0, 0, 1, 1], [], []>} : vector<1024x3xbf16>, vector<3x16xbf16>, vector<1024x16xf32> -> vector<1024x16xf32>
    %32 = arith.addf %26, %31 : vector<1024x16xf32>
    %33 = vector.extract_strided_slice %1 {offsets = [1, 2, 0], sizes = [32, 32, 3], strides = [1, 1, 1]} : vector<34x34x3xbf16> to vector<32x32x3xbf16>
    %34 = vector.shape_cast %33 : vector<32x32x3xbf16> to vector<1024x3xbf16>
    %c5 = arith.constant 5 : index
    %c0_19 = arith.constant 0 : index
    %c0_20 = arith.constant 0 : index
    %35 = vector.load %arg2[%c5, %c0_19, %c0_20] : memref<9x3x16xbf16, #tpu.memory_space<vmem>>, vector<1x3x16xbf16>
    %36 = vector.shape_cast %35 : vector<1x3x16xbf16> to vector<3x16xbf16>
    %cst_21 = arith.constant dense<0.000000e+00> : vector<1024x16xf32>
    %37 = tpu.matmul %34, %36, %cst_21 {dimension_numbers = #tpu.dot_dimension_numbers<[1], [0], [0], [1], [0, 0, 1, 1], [], []>} : vector<1024x3xbf16>, vector<3x16xbf16>, vector<1024x16xf32> -> vector<1024x16xf32>
    %38 = arith.addf %32, %37 : vector<1024x16xf32>
    %39 = vector.extract_strided_slice %1 {offsets = [2, 0, 0], sizes = [32, 32, 3], strides = [1, 1, 1]} : vector<34x34x3xbf16> to vector<32x32x3xbf16>
    %40 = vector.shape_cast %39 : vector<32x32x3xbf16> to vector<1024x3xbf16>
    %c6 = arith.constant 6 : index
    %c0_22 = arith.constant 0 : index
    %c0_23 = arith.constant 0 : index
    %41 = vector.load %arg2[%c6, %c0_22, %c0_23] : memref<9x3x16xbf16, #tpu.memory_space<vmem>>, vector<1x3x16xbf16>
    %42 = vector.shape_cast %41 : vector<1x3x16xbf16> to vector<3x16xbf16>
    %cst_24 = arith.constant dense<0.000000e+00> : vector<1024x16xf32>
    %43 = tpu.matmul %40, %42, %cst_24 {dimension_numbers = #tpu.dot_dimension_numbers<[1], [0], [0], [1], [0, 0, 1, 1], [], []>} : vector<1024x3xbf16>, vector<3x16xbf16>, vector<1024x16xf32> -> vector<1024x16xf32>
    %44 = arith.addf %38, %43 : vector<1024x16xf32>
    %45 = vector.extract_strided_slice %1 {offsets = [2, 1, 0], sizes = [32, 32, 3], strides = [1, 1, 1]} : vector<34x34x3xbf16> to vector<32x32x3xbf16>
    %46 = vector.shape_cast %45 : vector<32x32x3xbf16> to vector<1024x3xbf16>
    %c7 = arith.constant 7 : index
    %c0_25 = arith.constant 0 : index
    %c0_26 = arith.constant 0 : index
    %47 = vector.load %arg2[%c7, %c0_25, %c0_26] : memref<9x3x16xbf16, #tpu.memory_space<vmem>>, vector<1x3x16xbf16>
    %48 = vector.shape_cast %47 : vector<1x3x16xbf16> to vector<3x16xbf16>
    %cst_27 = arith.constant dense<0.000000e+00> : vector<1024x16xf32>
    %49 = tpu.matmul %46, %48, %cst_27 {dimension_numbers = #tpu.dot_dimension_numbers<[1], [0], [0], [1], [0, 0, 1, 1], [], []>} : vector<1024x3xbf16>, vector<3x16xbf16>, vector<1024x16xf32> -> vector<1024x16xf32>
    %50 = arith.addf %44, %49 : vector<1024x16xf32>
    %51 = vector.extract_strided_slice %1 {offsets = [2, 2, 0], sizes = [32, 32, 3], strides = [1, 1, 1]} : vector<34x34x3xbf16> to vector<32x32x3xbf16>
    %52 = vector.shape_cast %51 : vector<32x32x3xbf16> to vector<1024x3xbf16>
    %c8 = arith.constant 8 : index
    %c0_28 = arith.constant 0 : index
    %c0_29 = arith.constant 0 : index
    %53 = vector.load %arg2[%c8, %c0_28, %c0_29] : memref<9x3x16xbf16, #tpu.memory_space<vmem>>, vector<1x3x16xbf16>
    %54 = vector.shape_cast %53 : vector<1x3x16xbf16> to vector<3x16xbf16>
    %cst_30 = arith.constant dense<0.000000e+00> : vector<1024x16xf32>
    %55 = tpu.matmul %52, %54, %cst_30 {dimension_numbers = #tpu.dot_dimension_numbers<[1], [0], [0], [1], [0, 0, 1, 1], [], []>} : vector<1024x3xbf16>, vector<3x16xbf16>, vector<1024x16xf32> -> vector<1024x16xf32>
    %56 = arith.addf %50, %55 : vector<1024x16xf32>
    %c0_31 = arith.constant 0 : index
    %c0_32 = arith.constant 0 : index
    %57 = vector.load %arg3[%c0_31, %c0_32] : memref<1x16xf32, #tpu.memory_space<vmem>>, vector<1x16xf32>
    %58 = vector.broadcast %57 : vector<1x16xf32> to vector<1024x16xf32>
    %59 = arith.addf %56, %58 : vector<1024x16xf32>
    %cst_33 = arith.constant 0.000000e+00 : f32
    %60 = vector.broadcast %cst_33 : f32 to vector<1024x16xf32>
    %61 = arith.maximumf %59, %60 : vector<1024x16xf32>
    %62 = vector.shape_cast %61 : vector<1024x16xf32> to vector<32x32x16xf32>
    %c0_34 = arith.constant 0 : index
    %c0_35 = arith.constant 0 : index
    %c0_36 = arith.constant 0 : index
    %c0_37 = arith.constant 0 : index
    %63 = vector.load %arg4[%c0_34, %c0_35, %c0_36, %c0_37] : memref<1x32x32x16xf32, #tpu.memory_space<vmem>>, vector<1x32x32x16xf32>
    %64 = vector.shape_cast %63 : vector<1x32x32x16xf32> to vector<32x32x16xf32>
    %65 = vector.shape_cast %62 : vector<32x32x16xf32> to vector<1x32x32x16xf32>
    tpu.vector_store %arg4[%c0_34, %c0_35, %c0_36, %c0_37], %65 {strides = array<i32>} : memref<1x32x32x16xf32, #tpu.memory_space<vmem>>, vector<1x32x32x16xf32>,
    return
  }
  func.func @transform_0(%arg0: i32) -> (i32, i32, i32, i32) {
    %c0_i32 = arith.constant 0 : i32
    %c0_i32_0 = arith.constant 0 : i32
    %c0_i32_1 = arith.constant 0 : i32
    %c0_i32_2 = arith.constant 0 : i32
    return %arg0, %c0_i32, %c0_i32_0, %c0_i32_1 : i32, i32, i32, i32
  }
  func.func @transform_1(%arg0: i32) -> (i32, i32, i32) {
    %c0_i32 = arith.constant 0 : i32
    %c0_i32_0 = arith.constant 0 : i32
    %c0_i32_1 = arith.constant 0 : i32
    %c0_i32_2 = arith.constant 0 : i32
    return %c0_i32, %c0_i32_0, %c0_i32_1 : i32, i32, i32
  }
  func.func @transform_2(%arg0: i32) -> (i32, i32) {
    %c0_i32 = arith.constant 0 : i32
    %c0_i32_0 = arith.constant 0 : i32
    %c0_i32_1 = arith.constant 0 : i32
    return %c0_i32, %c0_i32_0 : i32, i32
  }
  func.func @transform_3(%arg0: i32) -> (i32, i32, i32, i32) {
    %c0_i32 = arith.constant 0 : i32
    %c0_i32_0 = arith.constant 0 : i32
    %c0_i32_1 = arith.constant 0 : i32
    %c0_i32_2 = arith.constant 0 : i32
    return %arg0, %c0_i32, %c0_i32_0, %c0_i32_1 : i32, i32, i32, i32
  }
}

</mosaic_0001>

<llo_original>
// kernel: tpu_custom_call.1
$region0: #{tpu_custom_call.1}
  #allocation0 [shape = 'u32[]', space=smem, size = 0x4, offset = 0x4, fixed_abs, tag = 'smem constant byte address 0x4 - core index']
  #allocation1 [shape = 'u32[144,128]{1,0:T(1,128)}', space=vmem, size = 0x12000, scoped, tag = 'internal scratch']
  %s0 = inlined_call_operand.vmem [shape: bf16[2,34,34,3], index: 0, kind: input, shape index: {}]
  %s1 = inlined_call_operand.vmem [shape: bf16[9,3,16], index: 1, kind: input, shape index: {}]
  %s2 = inlined_call_operand.vmem [shape: f32[1,16], index: 2, kind: input, shape index: {}]
  %s3 = inlined_call_operand.vmem [shape: f32[2,32,32,16], index: 3, kind: output, shape index: {}]
  %s4 = sld [smem:[#allocation0]]
  $region45: #{tpu_custom_call.1} parent=0
    _
  %s6 = ssub.s32 1, %s4
  %s7 = scalar_select 0, %s6, %s4
  loop: start=0, step=1, limit=4
  $region2: #{tpu_custom_call.1} parent=0 // loop_pre_header
    _
  $region3: #{tpu_custom_call.1} parent=0 // loop_header
    %s9 = sphi 0, %s13
    %p10 = scmp.ge.s32.totalorder %s9, 4
    %s19 = sphi 0, %s21
    %s22 = sphi 0, %s19
    %s23 = sphi 0, %s22
    %s39 = sphi 0, %s23
    %s43 = sphi 0, %s43
    %s45 = sphi 0, %s43
    %s46 = sphi 0, %s45
    %s60 = sphi 0, %s46
    %s64 = sphi 0, %s64
    %s66 = sphi 0, %s64
    %s67 = sphi 0, %s66
    %s81 = sphi 0, %s67
    %s87 = sphi 0, %s89
    %s90 = sphi 0, %s87
    %s91 = sphi 0, %s90
    %s107 = sphi 0, %s91
  $region4: #{tpu_custom_call.1} parent=0 // loop_header_branch
    %12 = sbr.rel (%p10) target = $region8
  $region5: #{tpu_custom_call.1} parent=0 // loop_body
    %s14 = ssub.s32 %s9, 1
    %s15 = ssub.s32 %s9, 2
    %s16 = sadd.s32 %s9, 1
    %s17 = ssub.s32 %s9, %s16
    %p18 = scmp.eq.s32.totalorder %s17, 0
    %s20 = sadd.s32 %s19, 1
    %s21 = scalar_select %p18, %s19, %s20
    %p24 = pneg %p18
    %p25 = scmp.eq.s32.totalorder %s9, 1
    %p26 = por %p24, %p25
    %p27 = scmp.ne.s32.totalorder %s19, %s22
    %p28 = scmp.eq.s32.totalorder %s9, 0
    %p29 = por %p27, %p28
    %p30 = scmp.ne.s32.totalorder %s19, %s22
    %p31 = scmp.eq.s32.totalorder %s14, 1
    %p32 = por %p30, %p31
    %p33 = scmp.ne.s32.totalorder %s22, %s23
    %p34 = scmp.eq.s32.totalorder %s14, 0
    %p35 = por %p33, %p34
    %p36 = scmp.ne.s32.totalorder %s22, %s23
    %p37 = scmp.eq.s32.totalorder %s15, 1
    %p38 = por %p36, %p37
    %p40 = scmp.ne.s32.totalorder %s23, %s39
    %p41 = scmp.eq.s32.totalorder %s15, 0
    %p42 = por %p40, %p41
    %s44 = sadd.s32 %s43, 1
    %p47 = scmp.eq.s32.totalorder %s9, 1
    %p48 = scmp.ne.s32.totalorder %s43, %s45
    %p49 = scmp.eq.s32.totalorder %s9, 0
    %p50 = por %p48, %p49
    %p51 = scmp.ne.s32.totalorder %s43, %s45
    %p52 = scmp.eq.s32.totalorder %s14, 1
    %p53 = por %p51, %p52
    %p54 = scmp.ne.s32.totalorder %s45, %s46
    %p55 = scmp.eq.s32.totalorder %s14, 0
    %p56 = por %p54, %p55
    %p57 = scmp.ne.s32.totalorder %s45, %s46
    %p58 = scmp.eq.s32.totalorder %s15, 1
    %p59 = por %p57, %p58
    %p61 = scmp.ne.s32.totalorder %s46, %s60
    %p62 = scmp.eq.s32.totalorder %s15, 0
    %p63 = por %p61, %p62
    %s65 = sadd.s32 %s64, 1
    %p68 = scmp.eq.s32.totalorder %s9, 1
    %p69 = scmp.ne.s32.totalorder %s64, %s66
    %p70 = scmp.eq.s32.totalorder %s9, 0
    %p71 = por %p69, %p70
    %p72 = scmp.ne.s32.totalorder %s64, %s66
    %p73 = scmp.eq.s32.totalorder %s14, 1
    %p74 = por %p72, %p73
    %p75 = scmp.ne.s32.totalorder %s66, %s67
    %p76 = scmp.eq.s32.totalorder %s14, 0
    %p77 = por %p75, %p76
    %p78 = scmp.ne.s32.totalorder %s66, %s67
    %p79 = scmp.eq.s32.totalorder %s15, 1
    %p80 = por %p78, %p79
    %p82 = scmp.ne.s32.totalorder %s67, %s81
    %p83 = scmp.eq.s32.totalorder %s15, 0
    %p84 = por %p82, %p83
    %s85 = ssub.s32 %s9, %s16
    %p86 = scmp.eq.s32.totalorder %s85, 0
    %s88 = sadd.s32 %s87, 1
    %s89 = scalar_select %p86, %s87, %s88
    %p92 = pneg %p86
    %p93 = scmp.eq.s32.totalorder %s9, 1
    %p94 = por %p92, %p93
    %p95 = scmp.ne.s32.totalorder %s87, %s90
    %p96 = scmp.eq.s32.totalorder %s9, 0
    %p97 = por %p95, %p96
    %p98 = scmp.ne.s32.totalorder %s87, %s90
    %p99 = scmp.eq.s32.totalorder %s14, 1
    %p100 = por %p98, %p99
    %p101 = scmp.ne.s32.totalorder %s90, %s91
    %p102 = scmp.eq.s32.totalorder %s14, 0
    %p103 = por %p101, %p102
    %p104 = scmp.ne.s32.totalorder %s90, %s91
    %p105 = scmp.eq.s32.totalorder %s15, 1
    %p106 = por %p104, %p105
    %p108 = scmp.ne.s32.totalorder %s91, %s107
    %p109 = scmp.eq.s32.totalorder %s15, 0
    %p110 = por %p108, %p109
    %p111 = scmp.le.s32.totalorder 1, %s9
    %p112 = scmp.lt.s32.totalorder %s9, 3
    %p113 = pnand %p111, %p112
    %p114 = pneg %p113
    // Predicated region
    $region9: #{tpu_custom_call.1} parent=5 // pred_check
      _
    $region10: #{tpu_custom_call.1} parent=5 // pred_check_branch
      %116 = sbr.rel (%p113) target = $region12
    $region11: #{tpu_custom_call.1} parent=5 // pred_region
      %s117 = ssub.s32 %s9, 1
      // Predicated region
      $region13: #{tpu_custom_call.1} parent=11 // pred_check
        %p118 = pneg %p56
      $region14: #{tpu_custom_call.1} parent=11 // pred_check_branch
        %120 = sbr.rel (%p118) target = $region16
      $region15: #{tpu_custom_call.1} parent=11 // pred_region
        _
      $region16: #{tpu_custom_call.1} parent=11 // pred_fallthru
        _
      // Predicated region
      $region17: #{tpu_custom_call.1} parent=11 // pred_check
        %p121 = pneg %p77
      $region18: #{tpu_custom_call.1} parent=11 // pred_check_branch
        %123 = sbr.rel (%p121) target = $region20
      $region19: #{tpu_custom_call.1} parent=11 // pred_region
        _
      $region20: #{tpu_custom_call.1} parent=11 // pred_fallthru
        _
    $region12: #{tpu_custom_call.1} parent=5 // pred_fallthru
      _
    %p124 = scmp.lt.s32.totalorder %s9, 2
    // Predicated region
    $region21: #{tpu_custom_call.1} parent=5 // pred_check
      %p125 = pneg %p124
    $region22: #{tpu_custom_call.1} parent=5 // pred_check_branch
      %127 = sbr.rel (%p125) target = $region24
    $region23: #{tpu_custom_call.1} parent=5 // pred_region
      // Predicated region
      $region25: #{tpu_custom_call.1} parent=23 // pred_check
        %p128 = pneg %p29
      $region26: #{tpu_custom_call.1} parent=23 // pred_check_branch
        %130 = sbr.rel (%p128) target = $region28
      $region27: #{tpu_custom_call.1} parent=23 // pred_region
        %p131 = scmp.lt.s32.totalorder %s9, 1
        %s132 = scalar_select %p131, %s9, 1
        %s133 = smul.addr %s132, 170
        %s134 = smul.addr %s133, 4
        %s135 = scalar_lea.vmem %s0, %s134
      $region28: #{tpu_custom_call.1} parent=23 // pred_fallthru
        _
    $region24: #{tpu_custom_call.1} parent=5 // pred_fallthru
      _
    %p136 = scmp.le.s32.totalorder 1, %s9
    %p137 = scmp.lt.s32.totalorder %s9, 3
    %p138 = pnand %p136, %p137
    %p139 = pneg %p138
    // Predicated region
    $region29: #{tpu_custom_call.1} parent=5 // pred_check
      _
    $region30: #{tpu_custom_call.1} parent=5 // pred_check_branch
      %141 = sbr.rel (%p138) target = $region32
    $region31: #{tpu_custom_call.1} parent=5 // pred_region
      %s142 = ssub.s32 %s9, 1
      %p143 = scmp.lt.s32.totalorder %s14, 1
      %s144 = scalar_select %p143, %s14, 1
      %s145 = smul.addr %s144, 170
      %s146 = smul.addr %s145, 4
      %s147 = scalar_lea.vmem %s0, %s146
      %p148 = pneg %p35
      %p149 = pneg %p32
      %p150 = pneg %p56
      %p151 = pneg %p53
      %p152 = pneg %p77
      %p153 = pneg %p74
      %p154 = pneg %p103
      %p155 = pneg %p100
      %p156 = scmp.lt.s32.totalorder %s14, 1
      %s157 = scalar_select %p156, %s14, 1
      %s158 = smul.addr %s157, 128
      %s159 = smul.addr %s158, 8
      %s160 = scalar_lea.vmem %s3, %s159
      %p161 = scmp.lt.s32.totalorder %s14, 1
      %s162 = scalar_select %p161, %s14, 1
      %s163 = smul.addr %s162, 170
      %s164 = smul.addr %s163, 4
      %s165 = scalar_lea.vmem %s0, %s164
      %p166 = scmp.lt.s32.totalorder %s14, 1
      %s167 = scalar_select %p166, %s14, 1
      %s168 = smul.addr %s167, 128
      %s169 = smul.addr %s168, 8
      %s170 = scalar_lea.vmem %s3, %s169
      %v172 = vld [vmem:[%s165] sm:$0xf]
      %v173 = vld [vmem:[%s165 + $0x4] sm:$0xf]
      %v174 = vld [vmem:[%s165 + $0x8] sm:$0xf]
      %v175 = vld [vmem:[%s165 + $0xc] sm:$0xf]
      %v176 = vld [vmem:[%s165 + $0x10] sm:$0x1]
      %v177 = vld [vmem:[%s165 + $0x14] sm:$0xf]
      %v178 = vld [vmem:[%s165 + $0x18] sm:$0xf]
      %v179 = vld [vmem:[%s165 + $0x1c] sm:$0xf]
      %v180 = vld [vmem:[%s165 + $0x20] sm:$0xf]
      %v181 = vld [vmem:[%s165 + $0x24] sm:$0x1]
      %v182 = vld [vmem:[%s165 + $0x28] sm:$0xf]
      %v183 = vld [vmem:[%s165 + $0x2c] sm:$0xf]
      %v184 = vld [vmem:[%s165 + $0x30] sm:$0xf]
      %v185 = vld [vmem:[%s165 + $0x34] sm:$0xf]
      %v186 = vld [vmem:[%s165 + $0x38] sm:$0x1]
      %v187 = vld [vmem:[%s165 + $0x3c] sm:$0xf]
      %v188 = vld [vmem:[%s165 + $0x40] sm:$0xf]
      %v189 = vld [vmem:[%s165 + $0x44] sm:$0xf]
      %v190 = vld [vmem:[%s165 + $0x48] sm:$0xf]
      %v191 = vld [vmem:[%s165 + $0x4c] sm:$0x1]
      %v192 = vld [vmem:[%s165 + $0x50] sm:$0xf]
      %v193 = vld [vmem:[%s165 + $0x54] sm:$0xf]
      %v194 = vld [vmem:[%s165 + $0x58] sm:$0xf]
      %v195 = vld [vmem:[%s165 + $0x5c] sm:$0xf]
      %v196 = vld [vmem:[%s165 + $0x60] sm:$0x1]
      %v197 = vld [vmem:[%s165 + $0x64] sm:$0xf]
      %v198 = vld [vmem:[%s165 + $0x68] sm:$0xf]
      %v199 = vld [vmem:[%s165 + $0x6c] sm:$0xf]
      %v200 = vld [vmem:[%s165 + $0x70] sm:$0xf]
      %v201 = vld [vmem:[%s165 + $0x74] sm:$0x1]
      %v202 = vld [vmem:[%s165 + $0x78] sm:$0xf]
      %v203 = vld [vmem:[%s165 + $0x7c] sm:$0xf]
      %v204 = vld [vmem:[%s165 + $0x80] sm:$0xf]
      %v205 = vld [vmem:[%s165 + $0x84] sm:$0xf]
      %v206 = vld [vmem:[%s165 + $0x88] sm:$0x1]
      %v207 = vld [vmem:[%s165 + $0x8c] sm:$0xf]
      %v208 = vld [vmem:[%s165 + $0x90] sm:$0xf]
      %v209 = vld [vmem:[%s165 + $0x94] sm:$0xf]
      %v210 = vld [vmem:[%s165 + $0x98] sm:$0xf]
      %v211 = vld [vmem:[%s165 + $0x9c] sm:$0x1]
      %v212 = vld [vmem:[%s165 + $0xa0] sm:$0xf]
      %v213 = vld [vmem:[%s165 + $0xa4] sm:$0xf]
      %v214 = vld [vmem:[%s165 + $0xa8] sm:$0xf]
      %v215 = vld [vmem:[%s165 + $0xac] sm:$0xf]
      %v216 = vld [vmem:[%s165 + $0xb0] sm:$0x1]
      %v217 = vld [vmem:[%s165 + $0xb4] sm:$0xf]
      %v218 = vld [vmem:[%s165 + $0xb8] sm:$0xf]
      %v219 = vld [vmem:[%s165 + $0xbc] sm:$0xf]
      %v220 = vld [vmem:[%s165 + $0xc0] sm:$0xf]
      %v221 = vld [vmem:[%s165 + $0xc4] sm:$0x1]
      %v222 = vld [vmem:[%s165 + $0xc8] sm:$0xf]
      %v223 = vld [vmem:[%s165 + $0xcc] sm:$0xf]
      %v224 = vld [vmem:[%s165 + $0xd0] sm:$0xf]
      %v225 = vld [vmem:[%s165 + $0xd4] sm:$0xf]
      %v226 = vld [vmem:[%s165 + $0xd8] sm:$0x1]
      %v227 = vld [vmem:[%s165 + $0xdc] sm:$0xf]
      %v228 = vld [vmem:[%s165 + $0xe0] sm:$0xf]
      %v229 = vld [vmem:[%s165 + $0xe4] sm:$0xf]
      %v230 = vld [vmem:[%s165 + $0xe8] sm:$0xf]
      %v231 = vld [vmem:[%s165 + $0xec] sm:$0x1]
      %v232 = vld [vmem:[%s165 + $0xf0] sm:$0xf]
      %v233 = vld [vmem:[%s165 + $0xf4] sm:$0xf]
      %v234 = vld [vmem:[%s165 + $0xf8] sm:$0xf]
      %v235 = vld [vmem:[%s165 + $0xfc] sm:$0xf]
      %v236 = vld [vmem:[%s165 + $0x100] sm:$0x1]
      %v237 = vld [vmem:[%s165 + $0x104] sm:$0xf]
      %v238 = vld [vmem:[%s165 + $0x108] sm:$0xf]
      %v239 = vld [vmem:[%s165 + $0x10c] sm:$0xf]
      %v240 = vld [vmem:[%s165 + $0x110] sm:$0xf]
      %v241 = vld [vmem:[%s165 + $0x114] sm:$0x1]
      %v242 = vld [vmem:[%s165 + $0x118] sm:$0xf]
      %v243 = vld [vmem:[%s165 + $0x11c] sm:$0xf]
      %v244 = vld [vmem:[%s165 + $0x120] sm:$0xf]
      %v245 = vld [vmem:[%s165 + $0x124] sm:$0xf]
      %v246 = vld [vmem:[%s165 + $0x128] sm:$0x1]
      %v247 = vld [vmem:[%s165 + $0x12c] sm:$0xf]
      %v248 = vld [vmem:[%s165 + $0x130] sm:$0xf]
      %v249 = vld [vmem:[%s165 + $0x134] sm:$0xf]
      %v250 = vld [vmem:[%s165 + $0x138] sm:$0xf]
      %v251 = vld [vmem:[%s165 + $0x13c] sm:$0x1]
      %v252 = vld [vmem:[%s165 + $0x140] sm:$0xf]
      %v253 = vld [vmem:[%s165 + $0x144] sm:$0xf]
      %v254 = vld [vmem:[%s165 + $0x148] sm:$0xf]
      %v255 = vld [vmem:[%s165 + $0x14c] sm:$0xf]
      %v256 = vld [vmem:[%s165 + $0x150] sm:$0x1]
      %v257 = vld [vmem:[%s165 + $0x154] sm:$0xf]
      %v258 = vld [vmem:[%s165 + $0x158] sm:$0xf]
      %v259 = vld [vmem:[%s165 + $0x15c] sm:$0xf]
      %v260 = vld [vmem:[%s165 + $0x160] sm:$0xf]
      %v261 = vld [vmem:[%s165 + $0x164] sm:$0x1]
      %v262 = vld [vmem:[%s165 + $0x168] sm:$0xf]
      %v263 = vld [vmem:[%s165 + $0x16c] sm:$0xf]
      %v264 = vld [vmem:[%s165 + $0x170] sm:$0xf]
      %v265 = vld [vmem:[%s165 + $0x174] sm:$0xf]
      %v266 = vld [vmem:[%s165 + $0x178] sm:$0x1]
      %v267 = vld [vmem:[%s165 + $0x17c] sm:$0xf]
      %v268 = vld [vmem:[%s165 + $0x180] sm:$0xf]
      %v269 = vld [vmem:[%s165 + $0x184] sm:$0xf]
      %v270 = vld [vmem:[%s165 + $0x188] sm:$0xf]
      %v271 = vld [vmem:[%s165 + $0x18c] sm:$0x1]
      %v272 = vld [vmem:[%s165 + $0x190] sm:$0xf]
      %v273 = vld [vmem:[%s165 + $0x194] sm:$0xf]
      %v274 = vld [vmem:[%s165 + $0x198] sm:$0xf]
      %v275 = vld [vmem:[%s165 + $0x19c] sm:$0xf]
      %v276 = vld [vmem:[%s165 + $0x1a0] sm:$0x1]
      %v277 = vld [vmem:[%s165 + $0x1a4] sm:$0xf]
      %v278 = vld [vmem:[%s165 + $0x1a8] sm:$0xf]
      %v279 = vld [vmem:[%s165 + $0x1ac] sm:$0xf]
      %v280 = vld [vmem:[%s165 + $0x1b0] sm:$0xf]
      %v281 = vld [vmem:[%s165 + $0x1b4] sm:$0x1]
      %v282 = vld [vmem:[%s165 + $0x1b8] sm:$0xf]
      %v283 = vld [vmem:[%s165 + $0x1bc] sm:$0xf]
      %v284 = vld [vmem:[%s165 + $0x1c0] sm:$0xf]
      %v285 = vld [vmem:[%s165 + $0x1c4] sm:$0xf]
      %v286 = vld [vmem:[%s165 + $0x1c8] sm:$0x1]
      %v287 = vld [vmem:[%s165 + $0x1cc] sm:$0xf]
      %v288 = vld [vmem:[%s165 + $0x1d0] sm:$0xf]
      %v289 = vld [vmem:[%s165 + $0x1d4] sm:$0xf]
      %v290 = vld [vmem:[%s165 + $0x1d8] sm:$0xf]
      %v291 = vld [vmem:[%s165 + $0x1dc] sm:$0x1]
      %v292 = vld [vmem:[%s165 + $0x1e0] sm:$0xf]
      %v293 = vld [vmem:[%s165 + $0x1e4] sm:$0xf]
      %v294 = vld [vmem:[%s165 + $0x1e8] sm:$0xf]
      %v295 = vld [vmem:[%s165 + $0x1ec] sm:$0xf]
      %v296 = vld [vmem:[%s165 + $0x1f0] sm:$0x1]
      %v297 = vld [vmem:[%s165 + $0x1f4] sm:$0xf]
      %v298 = vld [vmem:[%s165 + $0x1f8] sm:$0xf]
      %v299 = vld [vmem:[%s165 + $0x1fc] sm:$0xf]
      %v300 = vld [vmem:[%s165 + $0x200] sm:$0xf]
      %v301 = vld [vmem:[%s165 + $0x204] sm:$0x1]
      %v302 = vld [vmem:[%s165 + $0x208] sm:$0xf]
      %v303 = vld [vmem:[%s165 + $0x20c] sm:$0xf]
      %v304 = vld [vmem:[%s165 + $0x210] sm:$0xf]
      %v305 = vld [vmem:[%s165 + $0x214] sm:$0xf]
      %v306 = vld [vmem:[%s165 + $0x218] sm:$0x1]
      %v307 = vld [vmem:[%s165 + $0x21c] sm:$0xf]
      %v308 = vld [vmem:[%s165 + $0x220] sm:$0xf]
      %v309 = vld [vmem:[%s165 + $0x224] sm:$0xf]
      %v310 = vld [vmem:[%s165 + $0x228] sm:$0xf]
      %v311 = vld [vmem:[%s165 + $0x22c] sm:$0x1]
      %v312 = vld [vmem:[%s165 + $0x230] sm:$0xf]
      %v313 = vld [vmem:[%s165 + $0x234] sm:$0xf]
      %v314 = vld [vmem:[%s165 + $0x238] sm:$0xf]
      %v315 = vld [vmem:[%s165 + $0x23c] sm:$0xf]
      %v316 = vld [vmem:[%s165 + $0x240] sm:$0x1]
      %v317 = vld [vmem:[%s165 + $0x244] sm:$0xf]
      %v318 = vld [vmem:[%s165 + $0x248] sm:$0xf]
      %v319 = vld [vmem:[%s165 + $0x24c] sm:$0xf]
      %v320 = vld [vmem:[%s165 + $0x250] sm:$0xf]
      %v321 = vld [vmem:[%s165 + $0x254] sm:$0x1]
      %v322 = vld [vmem:[%s165 + $0x258] sm:$0xf]
      %v323 = vld [vmem:[%s165 + $0x25c] sm:$0xf]
      %v324 = vld [vmem:[%s165 + $0x260] sm:$0xf]
      %v325 = vld [vmem:[%s165 + $0x264] sm:$0xf]
      %v326 = vld [vmem:[%s165 + $0x268] sm:$0x1]
      %v327 = vld [vmem:[%s165 + $0x26c] sm:$0xf]
      %v328 = vld [vmem:[%s165 + $0x270] sm:$0xf]
      %v329 = vld [vmem:[%s165 + $0x274] sm:$0xf]
      %v330 = vld [vmem:[%s165 + $0x278] sm:$0xf]
      %v331 = vld [vmem:[%s165 + $0x27c] sm:$0x1]
      %v332 = vld [vmem:[%s165 + $0x280] sm:$0xf]
      %v333 = vld [vmem:[%s165 + $0x284] sm:$0xf]
      %v334 = vld [vmem:[%s165 + $0x288] sm:$0xf]
      %v335 = vld [vmem:[%s165 + $0x28c] sm:$0xf]
      %v336 = vld [vmem:[%s165 + $0x290] sm:$0x1]
      %v337 = vld [vmem:[%s165 + $0x294] sm:$0xf]
      %v338 = vld [vmem:[%s165 + $0x298] sm:$0xf]
      %v339 = vld [vmem:[%s165 + $0x29c] sm:$0xf]
      %v340 = vld [vmem:[%s165 + $0x2a0] sm:$0xf]
      %v341 = vld [vmem:[%s165 + $0x2a4] sm:$0x1]
      %v342 = vld [vmem:[%s1] sm:$0x3]
      %vm343 = vsmask.f32 3328
      %vm344 = vsmask.f32 7440
      %vm345 = vmor %vm343, %vm344
      %v347 = vshrl.u32 %v172, 16
      %v349 = vrot.slane %v347, 4
      %v350 = vshll.u32 %v172, 16
      %v352 = vrot.slane %v350, 5
      %v353 = vor.u32 %v349, %v352
      %v354 = vrot.slane %v353, 4
      %v356 = vshll.u32 %v173, 16
      %v358 = vrot.slane %v356, 5
      %v359 = vsel %vm345, %v354, %v358
      %v360 = vshrl.u32 %v173, 16
      %v362 = vrot.slane %v360, 4
      %v363 = vor.u32 %v362, %v358
      %v364 = vrot.slane %v363, 4
      %v366 = vshll.u32 %v174, 16
      %v368 = vrot.slane %v366, 5
      %v369 = vsel %vm345, %v364, %v368
      %v370 = vshrl.u32 %v174, 16
      %v372 = vrot.slane %v370, 4
      %v373 = vor.u32 %v372, %v368
      %v374 = vrot.slane %v373, 4
      %v376 = vshll.u32 %v175, 16
      %v378 = vrot.slane %v376, 5
      %v379 = vsel %vm345, %v374, %v378
      %v380 = vshrl.u32 %v175, 16
      %v382 = vrot.slane %v380, 4
      %v383 = vor.u32 %v382, %v378
      %v384 = vrot.slane %v383, 4
      %v386 = vshll.u32 %v176, 16
      %v388 = vrot.slane %v386, 5
      %v389 = vsel %vm345, %v384, %v388
      %v391 = vshrl.u32 %v177, 16
      %v393 = vrot.slane %v391, 4
      %v394 = vshll.u32 %v177, 16
      %v396 = vrot.slane %v394, 5
      %v397 = vor.u32 %v393, %v396
      %v398 = vrot.slane %v397, 4
      %v400 = vshll.u32 %v178, 16
      %v402 = vrot.slane %v400, 5
      %v403 = vsel %vm345, %v398, %v402
      %v404 = vshrl.u32 %v178, 16
      %v406 = vrot.slane %v404, 4
      %v407 = vor.u32 %v406, %v402
      %v408 = vrot.slane %v407, 4
      %v410 = vshll.u32 %v179, 16
      %v412 = vrot.slane %v410, 5
      %v413 = vsel %vm345, %v408, %v412
      %v414 = vshrl.u32 %v179, 16
      %v416 = vrot.slane %v414, 4
      %v417 = vor.u32 %v416, %v412
      %v418 = vrot.slane %v417, 4
      %v420 = vshll.u32 %v180, 16
      %v422 = vrot.slane %v420, 5
      %v423 = vsel %vm345, %v418, %v422
      %v424 = vshrl.u32 %v180, 16
      %v426 = vrot.slane %v424, 4
      %v427 = vor.u32 %v426, %v422
      %v428 = vrot.slane %v427, 4
      %v430 = vshll.u32 %v181, 16
      %v432 = vrot.slane %v430, 5
      %v433 = vsel %vm345, %v428, %v432
      %v435 = vshrl.u32 %v182, 16
      %v437 = vrot.slane %v435, 4
      %v438 = vshll.u32 %v182, 16
      %v440 = vrot.slane %v438, 5
      %v441 = vor.u32 %v437, %v440
      %v442 = vrot.slane %v441, 4
      %v444 = vshll.u32 %v183, 16
      %v446 = vrot.slane %v444, 5
      %v447 = vsel %vm345, %v442, %v446
      %v448 = vshrl.u32 %v183, 16
      %v450 = vrot.slane %v448, 4
      %v451 = vor.u32 %v450, %v446
      %v452 = vrot.slane %v451, 4
      %v454 = vshll.u32 %v184, 16
      %v456 = vrot.slane %v454, 5
      %v457 = vsel %vm345, %v452, %v456
      %v458 = vshrl.u32 %v184, 16
      %v460 = vrot.slane %v458, 4
      %v461 = vor.u32 %v460, %v456
      %v462 = vrot.slane %v461, 4
      %v464 = vshll.u32 %v185, 16
      %v466 = vrot.slane %v464, 5
      %v467 = vsel %vm345, %v462, %v466
      %v468 = vshrl.u32 %v185, 16
      %v470 = vrot.slane %v468, 4
      %v471 = vor.u32 %v470, %v466
      %v472 = vrot.slane %v471, 4
      %v474 = vshll.u32 %v186, 16
      %v476 = vrot.slane %v474, 5
      %v477 = vsel %vm345, %v472, %v476
      %v479 = vshrl.u32 %v187, 16
      %v481 = vrot.slane %v479, 4
      %v482 = vshll.u32 %v187, 16
      %v484 = vrot.slane %v482, 5
      %v485 = vor.u32 %v481, %v484
      %v486 = vrot.slane %v485, 4
      %v488 = vshll.u32 %v188, 16
      %v490 = vrot.slane %v488, 5
      %v491 = vsel %vm345, %v486, %v490
      %v492 = vshrl.u32 %v188, 16
      %v494 = vrot.slane %v492, 4
      %v495 = vor.u32 %v494, %v490
      %v496 = vrot.slane %v495, 4
      %v498 = vshll.u32 %v189, 16
      %v500 = vrot.slane %v498, 5
      %v501 = vsel %vm345, %v496, %v500
      %v502 = vshrl.u32 %v189, 16
      %v504 = vrot.slane %v502, 4
      %v505 = vor.u32 %v504, %v500
      %v506 = vrot.slane %v505, 4
      %v508 = vshll.u32 %v190, 16
      %v510 = vrot.slane %v508, 5
      %v511 = vsel %vm345, %v506, %v510
      %v512 = vshrl.u32 %v190, 16
      %v514 = vrot.slane %v512, 4
      %v515 = vor.u32 %v514, %v510
      %v516 = vrot.slane %v515, 4
      %v518 = vshll.u32 %v191, 16
      %v520 = vrot.slane %v518, 5
      %v521 = vsel %vm345, %v516, %v520
      %v523 = vshrl.u32 %v192, 16
      %v525 = vrot.slane %v523, 4
      %v526 = vshll.u32 %v192, 16
      %v528 = vrot.slane %v526, 5
      %v529 = vor.u32 %v525, %v528
      %v530 = vrot.slane %v529, 4
      %v532 = vshll.u32 %v193, 16
      %v534 = vrot.slane %v532, 5
      %v535 = vsel %vm345, %v530, %v534
      %v536 = vshrl.u32 %v193, 16
      %v538 = vrot.slane %v536, 4
      %v539 = vor.u32 %v538, %v534
      %v540 = vrot.slane %v539, 4
      %v542 = vshll.u32 %v194, 16
      %v544 = vrot.slane %v542, 5
      %v545 = vsel %vm345, %v540, %v544
      %v546 = vshrl.u32 %v194, 16
      %v548 = vrot.slane %v546, 4
      %v549 = vor.u32 %v548, %v544
      %v550 = vrot.slane %v549, 4
      %v552 = vshll.u32 %v195, 16
      %v554 = vrot.slane %v552, 5
      %v555 = vsel %vm345, %v550, %v554
      %v556 = vshrl.u32 %v195, 16
      %v558 = vrot.slane %v556, 4
      %v559 = vor.u32 %v558, %v554
      %v560 = vrot.slane %v559, 4
      %v562 = vshll.u32 %v196, 16
      %v564 = vrot.slane %v562, 5
      %v565 = vsel %vm345, %v560, %v564
      %v567 = vshrl.u32 %v197, 16
      %v569 = vrot.slane %v567, 4
      %v570 = vshll.u32 %v197, 16
      %v572 = vrot.slane %v570, 5
      %v573 = vor.u32 %v569, %v572
      %v574 = vrot.slane %v573, 4
      %v576 = vshll.u32 %v198, 16
      %v578 = vrot.slane %v576, 5
      %v579 = vsel %vm345, %v574, %v578
      %v580 = vshrl.u32 %v198, 16
      %v582 = vrot.slane %v580, 4
      %v583 = vor.u32 %v582, %v578
      %v584 = vrot.slane %v583, 4
      %v586 = vshll.u32 %v199, 16
      %v588 = vrot.slane %v586, 5
      %v589 = vsel %vm345, %v584, %v588
      %v590 = vshrl.u32 %v199, 16
      %v592 = vrot.slane %v590, 4
      %v593 = vor.u32 %v592, %v588
      %v594 = vrot.slane %v593, 4
      %v596 = vshll.u32 %v200, 16
      %v598 = vrot.slane %v596, 5
      %v599 = vsel %vm345, %v594, %v598
      %v600 = vshrl.u32 %v200, 16
      %v602 = vrot.slane %v600, 4
      %v603 = vor.u32 %v602, %v598
      %v604 = vrot.slane %v603, 4
      %v606 = vshll.u32 %v201, 16
      %v608 = vrot.slane %v606, 5
      %v609 = vsel %vm345, %v604, %v608
      %v611 = vshrl.u32 %v202, 16
      %v613 = vrot.slane %v611, 4
      %v614 = vshll.u32 %v202, 16
      %v616 = vrot.slane %v614, 5
      %v617 = vor.u32 %v613, %v616
      %v618 = vrot.slane %v617, 4
      %v620 = vshll.u32 %v203, 16
      %v622 = vrot.slane %v620, 5
      %v623 = vsel %vm345, %v618, %v622
      %v624 = vshrl.u32 %v203, 16
      %v626 = vrot.slane %v624, 4
      %v627 = vor.u32 %v626, %v622
      %v628 = vrot.slane %v627, 4
      %v630 = vshll.u32 %v204, 16
      %v632 = vrot.slane %v630, 5
      %v633 = vsel %vm345, %v628, %v632
      %v634 = vshrl.u32 %v204, 16
      %v636 = vrot.slane %v634, 4
      %v637 = vor.u32 %v636, %v632
      %v638 = vrot.slane %v637, 4
      %v640 = vshll.u32 %v205, 16
      %v642 = vrot.slane %v640, 5
      %v643 = vsel %vm345, %v638, %v642
      %v644 = vshrl.u32 %v205, 16
      %v646 = vrot.slane %v644, 4
      %v647 = vor.u32 %v646, %v642
      %v648 = vrot.slane %v647, 4
      %v650 = vshll.u32 %v206, 16
      %v652 = vrot.slane %v650, 5
      %v653 = vsel %vm345, %v648, %v652
      %v655 = vshrl.u32 %v207, 16
      %v657 = vrot.slane %v655, 4
      %v658 = vshll.u32 %v207, 16
      %v660 = vrot.slane %v658, 5
      %v661 = vor.u32 %v657, %v660
      %v662 = vrot.slane %v661, 4
      %v664 = vshll.u32 %v208, 16
      %v666 = vrot.slane %v664, 5
      %v667 = vsel %vm345, %v662, %v666
      %v668 = vshrl.u32 %v208, 16
      %v670 = vrot.slane %v668, 4
      %v671 = vor.u32 %v670, %v666
      %v672 = vrot.slane %v671, 4
      %v674 = vshll.u32 %v209, 16
      %v676 = vrot.slane %v674, 5
      %v677 = vsel %vm345, %v672, %v676
      %v678 = vshrl.u32 %v209, 16
      %v680 = vrot.slane %v678, 4
      %v681 = vor.u32 %v680, %v676
      %v682 = vrot.slane %v681, 4
      %v684 = vshll.u32 %v210, 16
      %v686 = vrot.slane %v684, 5
      %v687 = vsel %vm345, %v682, %v686
      %v688 = vshrl.u32 %v210, 16
      %v690 = vrot.slane %v688, 4
      %v691 = vor.u32 %v690, %v686
      %v692 = vrot.slane %v691, 4
      %v694 = vshll.u32 %v211, 16
      %v696 = vrot.slane %v694, 5
      %v697 = vsel %vm345, %v692, %v696
      %v699 = vshrl.u32 %v212, 16
      %v701 = vrot.slane %v699, 4
      %v702 = vshll.u32 %v212, 16
      %v704 = vrot.slane %v702, 5
      %v705 = vor.u32 %v701, %v704
      %v706 = vrot.slane %v705, 4
      %v708 = vshll.u32 %v213, 16
      %v710 = vrot.slane %v708, 5
      %v711 = vsel %vm345, %v706, %v710
      %v712 = vshrl.u32 %v213, 16
      %v714 = vrot.slane %v712, 4
      %v715 = vor.u32 %v714, %v710
      %v716 = vrot.slane %v715, 4
      %v718 = vshll.u32 %v214, 16
      %v720 = vrot.slane %v718, 5
      %v721 = vsel %vm345, %v716, %v720
      %v722 = vshrl.u32 %v214, 16
      %v724 = vrot.slane %v722, 4
      %v725 = vor.u32 %v724, %v720
      %v726 = vrot.slane %v725, 4
      %v728 = vshll.u32 %v215, 16
      %v730 = vrot.slane %v728, 5
      %v731 = vsel %vm345, %v726, %v730
      %v732 = vshrl.u32 %v215, 16
      %v734 = vrot.slane %v732, 4
      %v735 = vor.u32 %v734, %v730
      %v736 = vrot.slane %v735, 4
      %v738 = vshll.u32 %v216, 16
      %v740 = vrot.slane %v738, 5
      %v741 = vsel %vm345, %v736, %v740
      %v743 = vshrl.u32 %v217, 16
      %v745 = vrot.slane %v743, 4
      %v746 = vshll.u32 %v217, 16
      %v748 = vrot.slane %v746, 5
      %v749 = vor.u32 %v745, %v748
      %v750 = vrot.slane %v749, 4
      %v752 = vshll.u32 %v218, 16
      %v754 = vrot.slane %v752, 5
      %v755 = vsel %vm345, %v750, %v754
      %v756 = vshrl.u32 %v218, 16
      %v758 = vrot.slane %v756, 4
      %v759 = vor.u32 %v758, %v754
      %v760 = vrot.slane %v759, 4
      %v762 = vshll.u32 %v219, 16
      %v764 = vrot.slane %v762, 5
      %v765 = vsel %vm345, %v760, %v764
      %v766 = vshrl.u32 %v219, 16
      %v768 = vrot.slane %v766, 4
      %v769 = vor.u32 %v768, %v764
      %v770 = vrot.slane %v769, 4
      %v772 = vshll.u32 %v220, 16
      %v774 = vrot.slane %v772, 5
      %v775 = vsel %vm345, %v770, %v774
      %v776 = vshrl.u32 %v220, 16
      %v778 = vrot.slane %v776, 4
      %v779 = vor.u32 %v778, %v774
      %v780 = vrot.slane %v779, 4
      %v782 = vshll.u32 %v221, 16
      %v784 = vrot.slane %v782, 5
      %v785 = vsel %vm345, %v780, %v784
      %v787 = vshrl.u32 %v222, 16
      %v789 = vrot.slane %v787, 4
      %v790 = vshll.u32 %v222, 16
      %v792 = vrot.slane %v790, 5
      %v793 = vor.u32 %v789, %v792
      %v794 = vrot.slane %v793, 4
      %v796 = vshll.u32 %v223, 16
      %v798 = vrot.slane %v796, 5
      %v799 = vsel %vm345, %v794, %v798
      %v800 = vshrl.u32 %v223, 16
      %v802 = vrot.slane %v800, 4
      %v803 = vor.u32 %v802, %v798
      %v804 = vrot.slane %v803, 4
      %v806 = vshll.u32 %v224, 16
      %v808 = vrot.slane %v806, 5
      %v809 = vsel %vm345, %v804, %v808
      %v810 = vshrl.u32 %v224, 16
      %v812 = vrot.slane %v810, 4
      %v813 = vor.u32 %v812, %v808
      %v814 = vrot.slane %v813, 4
      %v816 = vshll.u32 %v225, 16
      %v818 = vrot.slane %v816, 5
      %v819 = vsel %vm345, %v814, %v818
      %v820 = vshrl.u32 %v225, 16
      %v822 = vrot.slane %v820, 4
      %v823 = vor.u32 %v822, %v818
      %v824 = vrot.slane %v823, 4
      %v826 = vshll.u32 %v226, 16
      %v828 = vrot.slane %v826, 5
      %v829 = vsel %vm345, %v824, %v828
      %v831 = vshrl.u32 %v227, 16
      %v833 = vrot.slane %v831, 4
      %v834 = vshll.u32 %v227, 16
      %v836 = vrot.slane %v834, 5
      %v837 = vor.u32 %v833, %v836
      %v838 = vrot.slane %v837, 4
      %v840 = vshll.u32 %v228, 16
      %v842 = vrot.slane %v840, 5
      %v843 = vsel %vm345, %v838, %v842
      %v844 = vshrl.u32 %v228, 16
      %v846 = vrot.slane %v844, 4
      %v847 = vor.u32 %v846, %v842
      %v848 = vrot.slane %v847, 4
      %v850 = vshll.u32 %v229, 16
      %v852 = vrot.slane %v850, 5
      %v853 = vsel %vm345, %v848, %v852
      %v854 = vshrl.u32 %v229, 16
      %v856 = vrot.slane %v854, 4
      %v857 = vor.u32 %v856, %v852
      %v858 = vrot.slane %v857, 4
      %v860 = vshll.u32 %v230, 16
      %v862 = vrot.slane %v860, 5
      %v863 = vsel %vm345, %v858, %v862
      %v864 = vshrl.u32 %v230, 16
      %v866 = vrot.slane %v864, 4
      %v867 = vor.u32 %v866, %v862
      %v868 = vrot.slane %v867, 4
      %v870 = vshll.u32 %v231, 16
      %v872 = vrot.slane %v870, 5
      %v873 = vsel %vm345, %v868, %v872
      %v875 = vshrl.u32 %v232, 16
      %v877 = vrot.slane %v875, 4
      %v878 = vshll.u32 %v232, 16
      %v880 = vrot.slane %v878, 5
      %v881 = vor.u32 %v877, %v880
      %v882 = vrot.slane %v881, 4
      %v884 = vshll.u32 %v233, 16
      %v886 = vrot.slane %v884, 5
      %v887 = vsel %vm345, %v882, %v886
      %v888 = vshrl.u32 %v233, 16
      %v890 = vrot.slane %v888, 4
      %v891 = vor.u32 %v890, %v886
      %v892 = vrot.slane %v891, 4
      %v894 = vshll.u32 %v234, 16
      %v896 = vrot.slane %v894, 5
      %v897 = vsel %vm345, %v892, %v896
      %v898 = vshrl.u32 %v234, 16
      %v900 = vrot.slane %v898, 4
      %v901 = vor.u32 %v900, %v896
      %v902 = vrot.slane %v901, 4
      %v904 = vshll.u32 %v235, 16
      %v906 = vrot.slane %v904, 5
      %v907 = vsel %vm345, %v902, %v906
      %v908 = vshrl.u32 %v235, 16
      %v910 = vrot.slane %v908, 4
      %v911 = vor.u32 %v910, %v906
      %v912 = vrot.slane %v911, 4
      %v914 = vshll.u32 %v236, 16
      %v916 = vrot.slane %v914, 5
      %v917 = vsel %vm345, %v912, %v916
      %v919 = vshrl.u32 %v237, 16
      %v921 = vrot.slane %v919, 4
      %v922 = vshll.u32 %v237, 16
      %v924 = vrot.slane %v922, 5
      %v925 = vor.u32 %v921, %v924
      %v926 = vrot.slane %v925, 4
      %v928 = vshll.u32 %v238, 16
      %v930 = vrot.slane %v928, 5
      %v931 = vsel %vm345, %v926, %v930
      %v932 = vshrl.u32 %v238, 16
      %v934 = vrot.slane %v932, 4
      %v935 = vor.u32 %v934, %v930
      %v936 = vrot.slane %v935, 4
      %v938 = vshll.u32 %v239, 16
      %v940 = vrot.slane %v938, 5
      %v941 = vsel %vm345, %v936, %v940
      %v942 = vshrl.u32 %v239, 16
      %v944 = vrot.slane %v942, 4
      %v945 = vor.u32 %v944, %v940
      %v946 = vrot.slane %v945, 4
      %v948 = vshll.u32 %v240, 16
      %v950 = vrot.slane %v948, 5
      %v951 = vsel %vm345, %v946, %v950
      %v952 = vshrl.u32 %v240, 16
      %v954 = vrot.slane %v952, 4
      %v955 = vor.u32 %v954, %v950
      %v956 = vrot.slane %v955, 4
      %v958 = vshll.u32 %v241, 16
      %v960 = vrot.slane %v958, 5
      %v961 = vsel %vm345, %v956, %v960
      %v963 = vshrl.u32 %v242, 16
      %v965 = vrot.slane %v963, 4
      %v966 = vshll.u32 %v242, 16
      %v968 = vrot.slane %v966, 5
      %v969 = vor.u32 %v965, %v968
      %v970 = vrot.slane %v969, 4
      %v972 = vshll.u32 %v243, 16
      %v974 = vrot.slane %v972, 5
      %v975 = vsel %vm345, %v970, %v974
      %v976 = vshrl.u32 %v243, 16
      %v978 = vrot.slane %v976, 4
      %v979 = vor.u32 %v978, %v974
      %v980 = vrot.slane %v979, 4
      %v982 = vshll.u32 %v244, 16
      %v984 = vrot.slane %v982, 5
      %v985 = vsel %vm345, %v980, %v984
      %v986 = vshrl.u32 %v244, 16
      %v988 = vrot.slane %v986, 4
      %v989 = vor.u32 %v988, %v984
      %v990 = vrot.slane %v989, 4
      %v992 = vshll.u32 %v245, 16
      %v994 = vrot.slane %v992, 5
      %v995 = vsel %vm345, %v990, %v994
      %v996 = vshrl.u32 %v245, 16
      %v998 = vrot.slane %v996, 4
      %v999 = vor.u32 %v998, %v994
      %v1000 = vrot.slane %v999, 4
      %v1002 = vshll.u32 %v246, 16
      %v1004 = vrot.slane %v1002, 5
      %v1005 = vsel %vm345, %v1000, %v1004
      %v1007 = vshrl.u32 %v247, 16
      %v1009 = vrot.slane %v1007, 4
      %v1010 = vshll.u32 %v247, 16
      %v1012 = vrot.slane %v1010, 5
      %v1013 = vor.u32 %v1009, %v1012
      %v1014 = vrot.slane %v1013, 4
      %v1016 = vshll.u32 %v248, 16
      %v1018 = vrot.slane %v1016, 5
      %v1019 = vsel %vm345, %v1014, %v1018
      %v1020 = vshrl.u32 %v248, 16
      %v1022 = vrot.slane %v1020, 4
      %v1023 = vor.u32 %v1022, %v1018
      %v1024 = vrot.slane %v1023, 4
      %v1026 = vshll.u32 %v249, 16
      %v1028 = vrot.slane %v1026, 5
      %v1029 = vsel %vm345, %v1024, %v1028
      %v1030 = vshrl.u32 %v249, 16
      %v1032 = vrot.slane %v1030, 4
      %v1033 = vor.u32 %v1032, %v1028
      %v1034 = vrot.slane %v1033, 4
      %v1036 = vshll.u32 %v250, 16
      %v1038 = vrot.slane %v1036, 5
      %v1039 = vsel %vm345, %v1034, %v1038
      %v1040 = vshrl.u32 %v250, 16
      %v1042 = vrot.slane %v1040, 4
      %v1043 = vor.u32 %v1042, %v1038
      %v1044 = vrot.slane %v1043, 4
      %v1046 = vshll.u32 %v251, 16
      %v1048 = vrot.slane %v1046, 5
      %v1049 = vsel %vm345, %v1044, %v1048
      %v1051 = vshrl.u32 %v252, 16
      %v1053 = vrot.slane %v1051, 4
      %v1054 = vshll.u32 %v252, 16
      %v1056 = vrot.slane %v1054, 5
      %v1057 = vor.u32 %v1053, %v1056
      %v1058 = vrot.slane %v1057, 4
      %v1060 = vshll.u32 %v253, 16
      %v1062 = vrot.slane %v1060, 5
      %v1063 = vsel %vm345, %v1058, %v1062
      %v1064 = vshrl.u32 %v253, 16
      %v1066 = vrot.slane %v1064, 4
      %v1067 = vor.u32 %v1066, %v1062
      %v1068 = vrot.slane %v1067, 4
      %v1070 = vshll.u32 %v254, 16
      %v1072 = vrot.slane %v1070, 5
      %v1073 = vsel %vm345, %v1068, %v1072
      %v1074 = vshrl.u32 %v254, 16
      %v1076 = vrot.slane %v1074, 4
      %v1077 = vor.u32 %v1076, %v1072
      %v1078 = vrot.slane %v1077, 4
      %v1080 = vshll.u32 %v255, 16
      %v1082 = vrot.slane %v1080, 5
      %v1083 = vsel %vm345, %v1078, %v1082
      %v1084 = vshrl.u32 %v255, 16
      %v1086 = vrot.slane %v1084, 4
      %v1087 = vor.u32 %v1086, %v1082
      %v1088 = vrot.slane %v1087, 4
      %v1090 = vshll.u32 %v256, 16
      %v1092 = vrot.slane %v1090, 5
      %v1093 = vsel %vm345, %v1088, %v1092
      %v1095 = vshrl.u32 %v257, 16
      %v1097 = vrot.slane %v1095, 4
      %v1098 = vshll.u32 %v257, 16
      %v1100 = vrot.slane %v1098, 5
      %v1101 = vor.u32 %v1097, %v1100
      %v1102 = vrot.slane %v1101, 4
      %v1104 = vshll.u32 %v258, 16
      %v1106 = vrot.slane %v1104, 5
      %v1107 = vsel %vm345, %v1102, %v1106
      %v1108 = vshrl.u32 %v258, 16
      %v1110 = vrot.slane %v1108, 4
      %v1111 = vor.u32 %v1110, %v1106
      %v1112 = vrot.slane %v1111, 4
      %v1114 = vshll.u32 %v259, 16
      %v1116 = vrot.slane %v1114, 5
      %v1117 = vsel %vm345, %v1112, %v1116
      %v1118 = vshrl.u32 %v259, 16
      %v1120 = vrot.slane %v1118, 4
      %v1121 = vor.u32 %v1120, %v1116
      %v1122 = vrot.slane %v1121, 4
      %v1124 = vshll.u32 %v260, 16
      %v1126 = vrot.slane %v1124, 5
      %v1127 = vsel %vm345, %v1122, %v1126
      %v1128 = vshrl.u32 %v260, 16
      %v1130 = vrot.slane %v1128, 4
      %v1131 = vor.u32 %v1130, %v1126
      %v1132 = vrot.slane %v1131, 4
      %v1134 = vshll.u32 %v261, 16
      %v1136 = vrot.slane %v1134, 5
      %v1137 = vsel %vm345, %v1132, %v1136
      %v1139 = vshrl.u32 %v262, 16
      %v1141 = vrot.slane %v1139, 4
      %v1142 = vshll.u32 %v262, 16
      %v1144 = vrot.slane %v1142, 5
      %v1145 = vor.u32 %v1141, %v1144
      %v1146 = vrot.slane %v1145, 4
      %v1148 = vshll.u32 %v263, 16
      %v1150 = vrot.slane %v1148, 5
      %v1151 = vsel %vm345, %v1146, %v1150
      %v1152 = vshrl.u32 %v263, 16
      %v1154 = vrot.slane %v1152, 4
      %v1155 = vor.u32 %v1154, %v1150
      %v1156 = vrot.slane %v1155, 4
      %v1158 = vshll.u32 %v264, 16
      %v1160 = vrot.slane %v1158, 5
      %v1161 = vsel %vm345, %v1156, %v1160
      %v1162 = vshrl.u32 %v264, 16
      %v1164 = vrot.slane %v1162, 4
      %v1165 = vor.u32 %v1164, %v1160
      %v1166 = vrot.slane %v1165, 4
      %v1168 = vshll.u32 %v265, 16
      %v1170 = vrot.slane %v1168, 5
      %v1171 = vsel %vm345, %v1166, %v1170
      %v1172 = vshrl.u32 %v265, 16
      %v1174 = vrot.slane %v1172, 4
      %v1175 = vor.u32 %v1174, %v1170
      %v1176 = vrot.slane %v1175, 4
      %v1178 = vshll.u32 %v266, 16
      %v1180 = vrot.slane %v1178, 5
      %v1181 = vsel %vm345, %v1176, %v1180
      %v1183 = vshrl.u32 %v267, 16
      %v1185 = vrot.slane %v1183, 4
      %v1186 = vshll.u32 %v267, 16
      %v1188 = vrot.slane %v1186, 5
      %v1189 = vor.u32 %v1185, %v1188
      %v1190 = vrot.slane %v1189, 4
      %v1192 = vshll.u32 %v268, 16
      %v1194 = vrot.slane %v1192, 5
      %v1195 = vsel %vm345, %v1190, %v1194
      %v1196 = vshrl.u32 %v268, 16
      %v1198 = vrot.slane %v1196, 4
      %v1199 = vor.u32 %v1198, %v1194
      %v1200 = vrot.slane %v1199, 4
      %v1202 = vshll.u32 %v269, 16
      %v1204 = vrot.slane %v1202, 5
      %v1205 = vsel %vm345, %v1200, %v1204
      %v1206 = vshrl.u32 %v269, 16
      %v1208 = vrot.slane %v1206, 4
      %v1209 = vor.u32 %v1208, %v1204
      %v1210 = vrot.slane %v1209, 4
      %v1212 = vshll.u32 %v270, 16
      %v1214 = vrot.slane %v1212, 5
      %v1215 = vsel %vm345, %v1210, %v1214
      %v1216 = vshrl.u32 %v270, 16
      %v1218 = vrot.slane %v1216, 4
      %v1219 = vor.u32 %v1218, %v1214
      %v1220 = vrot.slane %v1219, 4
      %v1222 = vshll.u32 %v271, 16
      %v1224 = vrot.slane %v1222, 5
      %v1225 = vsel %vm345, %v1220, %v1224
      %v1227 = vshrl.u32 %v272, 16
      %v1229 = vrot.slane %v1227, 4
      %v1230 = vshll.u32 %v272, 16
      %v1232 = vrot.slane %v1230, 5
      %v1233 = vor.u32 %v1229, %v1232
      %v1234 = vrot.slane %v1233, 4
      %v1236 = vshll.u32 %v273, 16
      %v1238 = vrot.slane %v1236, 5
      %v1239 = vsel %vm345, %v1234, %v1238
      %v1240 = vshrl.u32 %v273, 16
      %v1242 = vrot.slane %v1240, 4
      %v1243 = vor.u32 %v1242, %v1238
      %v1244 = vrot.slane %v1243, 4
      %v1246 = vshll.u32 %v274, 16
      %v1248 = vrot.slane %v1246, 5
      %v1249 = vsel %vm345, %v1244, %v1248
      %v1250 = vshrl.u32 %v274, 16
      %v1252 = vrot.slane %v1250, 4
      %v1253 = vor.u32 %v1252, %v1248
      %v1254 = vrot.slane %v1253, 4
      %v1256 = vshll.u32 %v275, 16
      %v1258 = vrot.slane %v1256, 5
      %v1259 = vsel %vm345, %v1254, %v1258
      %v1260 = vshrl.u32 %v275, 16
      %v1262 = vrot.slane %v1260, 4
      %v1263 = vor.u32 %v1262, %v1258
      %v1264 = vrot.slane %v1263, 4
      %v1266 = vshll.u32 %v276, 16
      %v1268 = vrot.slane %v1266, 5
      %v1269 = vsel %vm345, %v1264, %v1268
      %v1271 = vshrl.u32 %v277, 16
      %v1273 = vrot.slane %v1271, 4
      %v1274 = vshll.u32 %v277, 16
      %v1276 = vrot.slane %v1274, 5
      %v1277 = vor.u32 %v1273, %v1276
      %v1278 = vrot.slane %v1277, 4
      %v1280 = vshll.u32 %v278, 16
      %v1282 = vrot.slane %v1280, 5
      %v1283 = vsel %vm345, %v1278, %v1282
      %v1284 = vshrl.u32 %v278, 16
      %v1286 = vrot.slane %v1284, 4
      %v1287 = vor.u32 %v1286, %v1282
      %v1288 = vrot.slane %v1287, 4
      %v1290 = vshll.u32 %v279, 16
      %v1292 = vrot.slane %v1290, 5
      %v1293 = vsel %vm345, %v1288, %v1292
      %v1294 = vshrl.u32 %v279, 16
      %v1296 = vrot.slane %v1294, 4
      %v1297 = vor.u32 %v1296, %v1292
      %v1298 = vrot.slane %v1297, 4
      %v1300 = vshll.u32 %v280, 16
      %v1302 = vrot.slane %v1300, 5
      %v1303 = vsel %vm345, %v1298, %v1302
      %v1304 = vshrl.u32 %v280, 16
      %v1306 = vrot.slane %v1304, 4
      %v1307 = vor.u32 %v1306, %v1302
      %v1308 = vrot.slane %v1307, 4
      %v1310 = vshll.u32 %v281, 16
      %v1312 = vrot.slane %v1310, 5
      %v1313 = vsel %vm345, %v1308, %v1312
      %v1315 = vshrl.u32 %v282, 16
      %v1317 = vrot.slane %v1315, 4
      %v1318 = vshll.u32 %v282, 16
      %v1320 = vrot.slane %v1318, 5
      %v1321 = vor.u32 %v1317, %v1320
      %v1322 = vrot.slane %v1321, 4
      %v1324 = vshll.u32 %v283, 16
      %v1326 = vrot.slane %v1324, 5
      %v1327 = vsel %vm345, %v1322, %v1326
      %v1328 = vshrl.u32 %v283, 16
      %v1330 = vrot.slane %v1328, 4
      %v1331 = vor.u32 %v1330, %v1326
      %v1332 = vrot.slane %v1331, 4
      %v1334 = vshll.u32 %v284, 16
      %v1336 = vrot.slane %v1334, 5
      %v1337 = vsel %vm345, %v1332, %v1336
      %v1338 = vshrl.u32 %v284, 16
      %v1340 = vrot.slane %v1338, 4
      %v1341 = vor.u32 %v1340, %v1336
      %v1342 = vrot.slane %v1341, 4
      %v1344 = vshll.u32 %v285, 16
      %v1346 = vrot.slane %v1344, 5
      %v1347 = vsel %vm345, %v1342, %v1346
      %v1348 = vshrl.u32 %v285, 16
      %v1350 = vrot.slane %v1348, 4
      %v1351 = vor.u32 %v1350, %v1346
      %v1352 = vrot.slane %v1351, 4
      %v1354 = vshll.u32 %v286, 16
      %v1356 = vrot.slane %v1354, 5
      %v1357 = vsel %vm345, %v1352, %v1356
      %v1359 = vshrl.u32 %v287, 16
      %v1361 = vrot.slane %v1359, 4
      %v1362 = vshll.u32 %v287, 16
      %v1364 = vrot.slane %v1362, 5
      %v1365 = vor.u32 %v1361, %v1364
      %v1366 = vrot.slane %v1365, 4
      %v1368 = vshll.u32 %v288, 16
      %v1370 = vrot.slane %v1368, 5
      %v1371 = vsel %vm345, %v1366, %v1370
      %v1372 = vshrl.u32 %v288, 16
      %v1374 = vrot.slane %v1372, 4
      %v1375 = vor.u32 %v1374, %v1370
      %v1376 = vrot.slane %v1375, 4
      %v1378 = vshll.u32 %v289, 16
      %v1380 = vrot.slane %v1378, 5
      %v1381 = vsel %vm345, %v1376, %v1380
      %v1382 = vshrl.u32 %v289, 16
      %v1384 = vrot.slane %v1382, 4
      %v1385 = vor.u32 %v1384, %v1380
      %v1386 = vrot.slane %v1385, 4
      %v1388 = vshll.u32 %v290, 16
      %v1390 = vrot.slane %v1388, 5
      %v1391 = vsel %vm345, %v1386, %v1390
      %v1392 = vshrl.u32 %v290, 16
      %v1394 = vrot.slane %v1392, 4
      %v1395 = vor.u32 %v1394, %v1390
      %v1396 = vrot.slane %v1395, 4
      %v1398 = vshll.u32 %v291, 16
      %v1400 = vrot.slane %v1398, 5
      %v1401 = vsel %vm345, %v1396, %v1400
      %v1403 = vshrl.u32 %v292, 16
      %v1405 = vrot.slane %v1403, 4
      %v1406 = vshll.u32 %v292, 16
      %v1408 = vrot.slane %v1406, 5
      %v1409 = vor.u32 %v1405, %v1408
      %v1410 = vrot.slane %v1409, 4
      %v1412 = vshll.u32 %v293, 16
      %v1414 = vrot.slane %v1412, 5
      %v1415 = vsel %vm345, %v1410, %v1414
      %v1416 = vshrl.u32 %v293, 16
      %v1418 = vrot.slane %v1416, 4
      %v1419 = vor.u32 %v1418, %v1414
      %v1420 = vrot.slane %v1419, 4
      %v1422 = vshll.u32 %v294, 16
      %v1424 = vrot.slane %v1422, 5
      %v1425 = vsel %vm345, %v1420, %v1424
      %v1426 = vshrl.u32 %v294, 16
      %v1428 = vrot.slane %v1426, 4
      %v1429 = vor.u32 %v1428, %v1424
      %v1430 = vrot.slane %v1429, 4
      %v1432 = vshll.u32 %v295, 16
      %v1434 = vrot.slane %v1432, 5
      %v1435 = vsel %vm345, %v1430, %v1434
      %v1436 = vshrl.u32 %v295, 16
      %v1438 = vrot.slane %v1436, 4
      %v1439 = vor.u32 %v1438, %v1434
      %v1440 = vrot.slane %v1439, 4
      %v1442 = vshll.u32 %v296, 16
      %v1444 = vrot.slane %v1442, 5
      %v1445 = vsel %vm345, %v1440, %v1444
      %v1447 = vshrl.u32 %v297, 16
      %v1449 = vrot.slane %v1447, 4
      %v1450 = vshll.u32 %v297, 16
      %v1452 = vrot.slane %v1450, 5
      %v1453 = vor.u32 %v1449, %v1452
      %v1454 = vrot.slane %v1453, 4
      %v1456 = vshll.u32 %v298, 16
      %v1458 = vrot.slane %v1456, 5
      %v1459 = vsel %vm345, %v1454, %v1458
      %v1460 = vshrl.u32 %v298, 16
      %v1462 = vrot.slane %v1460, 4
      %v1463 = vor.u32 %v1462, %v1458
      %v1464 = vrot.slane %v1463, 4
      %v1466 = vshll.u32 %v299, 16
      %v1468 = vrot.slane %v1466, 5
      %v1469 = vsel %vm345, %v1464, %v1468
      %v1470 = vshrl.u32 %v299, 16
      %v1472 = vrot.slane %v1470, 4
      %v1473 = vor.u32 %v1472, %v1468
      %v1474 = vrot.slane %v1473, 4
      %v1476 = vshll.u32 %v300, 16
      %v1478 = vrot.slane %v1476, 5
      %v1479 = vsel %vm345, %v1474, %v1478
      %v1480 = vshrl.u32 %v300, 16
      %v1482 = vrot.slane %v1480, 4
      %v1483 = vor.u32 %v1482, %v1478
      %v1484 = vrot.slane %v1483, 4
      %v1486 = vshll.u32 %v301, 16
      %v1488 = vrot.slane %v1486, 5
      %v1489 = vsel %vm345, %v1484, %v1488
      %v1491 = vshrl.u32 %v302, 16
      %v1493 = vrot.slane %v1491, 4
      %v1494 = vshll.u32 %v302, 16
      %v1496 = vrot.slane %v1494, 5
      %v1497 = vor.u32 %v1493, %v1496
      %v1498 = vrot.slane %v1497, 4
      %v1500 = vshll.u32 %v303, 16
      %v1502 = vrot.slane %v1500, 5
      %v1503 = vsel %vm345, %v1498, %v1502
      %v1504 = vshrl.u32 %v303, 16
      %v1506 = vrot.slane %v1504, 4
      %v1507 = vor.u32 %v1506, %v1502
      %v1508 = vrot.slane %v1507, 4
      %v1510 = vshll.u32 %v304, 16
      %v1512 = vrot.slane %v1510, 5
      %v1513 = vsel %vm345, %v1508, %v1512
      %v1514 = vshrl.u32 %v304, 16
      %v1516 = vrot.slane %v1514, 4
      %v1517 = vor.u32 %v1516, %v1512
      %v1518 = vrot.slane %v1517, 4
      %v1520 = vshll.u32 %v305, 16
      %v1522 = vrot.slane %v1520, 5
      %v1523 = vsel %vm345, %v1518, %v1522
      %v1524 = vshrl.u32 %v305, 16
      %v1526 = vrot.slane %v1524, 4
      %v1527 = vor.u32 %v1526, %v1522
      %v1528 = vrot.slane %v1527, 4
      %v1530 = vshll.u32 %v306, 16
      %v1532 = vrot.slane %v1530, 5
      %v1533 = vsel %vm345, %v1528, %v1532
      %v1535 = vshrl.u32 %v307, 16
      %v1537 = vrot.slane %v1535, 4
      %v1538 = vshll.u32 %v307, 16
      %v1540 = vrot.slane %v1538, 5
      %v1541 = vor.u32 %v1537, %v1540
      %v1542 = vrot.slane %v1541, 4
      %v1544 = vshll.u32 %v308, 16
      %v1546 = vrot.slane %v1544, 5
      %v1547 = vsel %vm345, %v1542, %v1546
      %v1548 = vshrl.u32 %v308, 16
      %v1550 = vrot.slane %v1548, 4
      %v1551 = vor.u32 %v1550, %v1546
      %v1552 = vrot.slane %v1551, 4
      %v1554 = vshll.u32 %v309, 16
      %v1556 = vrot.slane %v1554, 5
      %v1557 = vsel %vm345, %v1552, %v1556
      %v1558 = vshrl.u32 %v309, 16
      %v1560 = vrot.slane %v1558, 4
      %v1561 = vor.u32 %v1560, %v1556
      %v1562 = vrot.slane %v1561, 4
      %v1564 = vshll.u32 %v310, 16
      %v1566 = vrot.slane %v1564, 5
      %v1567 = vsel %vm345, %v1562, %v1566
      %v1568 = vshrl.u32 %v310, 16
      %v1570 = vrot.slane %v1568, 4
      %v1571 = vor.u32 %v1570, %v1566
      %v1572 = vrot.slane %v1571, 4
      %v1574 = vshll.u32 %v311, 16
      %v1576 = vrot.slane %v1574, 5
      %v1577 = vsel %vm345, %v1572, %v1576
      %v1579 = vshrl.u32 %v312, 16
      %v1581 = vrot.slane %v1579, 4
      %v1582 = vshll.u32 %v312, 16
      %v1584 = vrot.slane %v1582, 5
      %v1585 = vor.u32 %v1581, %v1584
      %v1586 = vrot.slane %v1585, 4
      %v1588 = vshll.u32 %v313, 16
      %v1590 = vrot.slane %v1588, 5
      %v1591 = vsel %vm345, %v1586, %v1590
      %v1592 = vshrl.u32 %v313, 16
      %v1594 = vrot.slane %v1592, 4
      %v1595 = vor.u32 %v1594, %v1590
      %v1596 = vrot.slane %v1595, 4
      %v1598 = vshll.u32 %v314, 16
      %v1600 = vrot.slane %v1598, 5
      %v1601 = vsel %vm345, %v1596, %v1600
      %v1602 = vshrl.u32 %v314, 16
      %v1604 = vrot.slane %v1602, 4
      %v1605 = vor.u32 %v1604, %v1600
      %v1606 = vrot.slane %v1605, 4
      %v1608 = vshll.u32 %v315, 16
      %v1610 = vrot.slane %v1608, 5
      %v1611 = vsel %vm345, %v1606, %v1610
      %v1612 = vshrl.u32 %v315, 16
      %v1614 = vrot.slane %v1612, 4
      %v1615 = vor.u32 %v1614, %v1610
      %v1616 = vrot.slane %v1615, 4
      %v1618 = vshll.u32 %v316, 16
      %v1620 = vrot.slane %v1618, 5
      %v1621 = vsel %vm345, %v1616, %v1620
      %v1623 = vshrl.u32 %v317, 16
      %v1625 = vrot.slane %v1623, 4
      %v1626 = vshll.u32 %v317, 16
      %v1628 = vrot.slane %v1626, 5
      %v1629 = vor.u32 %v1625, %v1628
      %v1630 = vrot.slane %v1629, 4
      %v1632 = vshll.u32 %v318, 16
      %v1634 = vrot.slane %v1632, 5
      %v1635 = vsel %vm345, %v1630, %v1634
      %v1636 = vshrl.u32 %v318, 16
      %v1638 = vrot.slane %v1636, 4
      %v1639 = vor.u32 %v1638, %v1634
      %v1640 = vrot.slane %v1639, 4
      %v1642 = vshll.u32 %v319, 16
      %v1644 = vrot.slane %v1642, 5
      %v1645 = vsel %vm345, %v1640, %v1644
      %v1646 = vshrl.u32 %v319, 16
      %v1648 = vrot.slane %v1646, 4
      %v1649 = vor.u32 %v1648, %v1644
      %v1650 = vrot.slane %v1649, 4
      %v1652 = vshll.u32 %v320, 16
      %v1654 = vrot.slane %v1652, 5
      %v1655 = vsel %vm345, %v1650, %v1654
      %v1656 = vshrl.u32 %v320, 16
      %v1658 = vrot.slane %v1656, 4
      %v1659 = vor.u32 %v1658, %v1654
      %v1660 = vrot.slane %v1659, 4
      %v1662 = vshll.u32 %v321, 16
      %v1664 = vrot.slane %v1662, 5
      %v1665 = vsel %vm345, %v1660, %v1664
      %v1667 = vshrl.u32 %v322, 16
      %v1669 = vrot.slane %v1667, 4
      %v1670 = vshll.u32 %v322, 16
      %v1672 = vrot.slane %v1670, 5
      %v1673 = vor.u32 %v1669, %v1672
      %v1674 = vrot.slane %v1673, 4
      %v1676 = vshll.u32 %v323, 16
      %v1678 = vrot.slane %v1676, 5
      %v1679 = vsel %vm345, %v1674, %v1678
      %v1680 = vshrl.u32 %v323, 16
      %v1682 = vrot.slane %v1680, 4
      %v1683 = vor.u32 %v1682, %v1678
      %v1684 = vrot.slane %v1683, 4
      %v1686 = vshll.u32 %v324, 16
      %v1688 = vrot.slane %v1686, 5
      %v1689 = vsel %vm345, %v1684, %v1688
      %v1690 = vshrl.u32 %v324, 16
      %v1692 = vrot.slane %v1690, 4
      %v1693 = vor.u32 %v1692, %v1688
      %v1694 = vrot.slane %v1693, 4
      %v1696 = vshll.u32 %v325, 16
      %v1698 = vrot.slane %v1696, 5
      %v1699 = vsel %vm345, %v1694, %v1698
      %v1700 = vshrl.u32 %v325, 16
      %v1702 = vrot.slane %v1700, 4
      %v1703 = vor.u32 %v1702, %v1698
      %v1704 = vrot.slane %v1703, 4
      %v1706 = vshll.u32 %v326, 16
      %v1708 = vrot.slane %v1706, 5
      %v1709 = vsel %vm345, %v1704, %v1708
      %v1711 = vshrl.u32 %v327, 16
      %v1713 = vrot.slane %v1711, 4
      %v1714 = vshll.u32 %v327, 16
      %v1716 = vrot.slane %v1714, 5
      %v1717 = vor.u32 %v1713, %v1716
      %v1718 = vrot.slane %v1717, 4
      %v1720 = vshll.u32 %v328, 16
      %v1722 = vrot.slane %v1720, 5
      %v1723 = vsel %vm345, %v1718, %v1722
      %v1724 = vshrl.u32 %v328, 16
      %v1726 = vrot.slane %v1724, 4
      %v1727 = vor.u32 %v1726, %v1722
      %v1728 = vrot.slane %v1727, 4
      %v1730 = vshll.u32 %v329, 16
      %v1732 = vrot.slane %v1730, 5
      %v1733 = vsel %vm345, %v1728, %v1732
      %v1734 = vshrl.u32 %v329, 16
      %v1736 = vrot.slane %v1734, 4
      %v1737 = vor.u32 %v1736, %v1732
      %v1738 = vrot.slane %v1737, 4
      %v1740 = vshll.u32 %v330, 16
      %v1742 = vrot.slane %v1740, 5
      %v1743 = vsel %vm345, %v1738, %v1742
      %v1744 = vshrl.u32 %v330, 16
      %v1746 = vrot.slane %v1744, 4
      %v1747 = vor.u32 %v1746, %v1742
      %v1748 = vrot.slane %v1747, 4
      %v1750 = vshll.u32 %v331, 16
      %v1752 = vrot.slane %v1750, 5
      %v1753 = vsel %vm345, %v1748, %v1752
      %s1754 = scalar_lea.vmem %s1, 2
      %v1755 = vld [vmem:[%s1754] sm:$0x3]
      %v1756 = vunpack.c.l.b16 %v359
      %v1757 = vunpack.c.l.b16 %v369
      %v1758 = vunpack.c.l.b16 %v379
      %v1759 = vunpack.c.l.b16 %v389
      %v1760 = vunpack.c.l.b16 %v403
      %v1761 = vunpack.c.l.b16 %v413
      %v1762 = vunpack.c.l.b16 %v423
      %v1763 = vunpack.c.l.b16 %v433
      %v1764 = vunpack.c.l.b16 %v447
      %v1765 = vunpack.c.l.b16 %v457
      %v1766 = vunpack.c.l.b16 %v467
      %v1767 = vunpack.c.l.b16 %v477
      %v1768 = vunpack.c.l.b16 %v491
      %v1769 = vunpack.c.l.b16 %v501
      %v1770 = vunpack.c.l.b16 %v511
      %v1771 = vunpack.c.l.b16 %v521
      %v1772 = vunpack.c.l.b16 %v535
      %v1773 = vunpack.c.l.b16 %v545
      %v1774 = vunpack.c.l.b16 %v555
      %v1775 = vunpack.c.l.b16 %v565
      %v1776 = vunpack.c.l.b16 %v579
      %v1777 = vunpack.c.l.b16 %v589
      %v1778 = vunpack.c.l.b16 %v599
      %v1779 = vunpack.c.l.b16 %v609
      %v1780 = vunpack.c.l.b16 %v623
      %v1781 = vunpack.c.l.b16 %v633
      %v1782 = vunpack.c.l.b16 %v643
      %v1783 = vunpack.c.l.b16 %v653
      %v1784 = vunpack.c.l.b16 %v667
      %v1785 = vunpack.c.l.b16 %v677
      %v1786 = vunpack.c.l.b16 %v687
      %v1787 = vunpack.c.l.b16 %v697
      %v1788 = vunpack.c.l.b16 %v711
      %v1789 = vunpack.c.l.b16 %v721
      %v1790 = vunpack.c.l.b16 %v731
      %v1791 = vunpack.c.l.b16 %v741
      %v1792 = vunpack.c.l.b16 %v755
      %v1793 = vunpack.c.l.b16 %v765
      %v1794 = vunpack.c.l.b16 %v775
      %v1795 = vunpack.c.l.b16 %v785
      %v1796 = vunpack.c.l.b16 %v799
      %v1797 = vunpack.c.l.b16 %v809
      %v1798 = vunpack.c.l.b16 %v819
      %v1799 = vunpack.c.l.b16 %v829
      %v1800 = vunpack.c.l.b16 %v843
      %v1801 = vunpack.c.l.b16 %v853
      %v1802 = vunpack.c.l.b16 %v863
      %v1803 = vunpack.c.l.b16 %v873
      %v1804 = vunpack.c.l.b16 %v887
      %v1805 = vunpack.c.l.b16 %v897
      %v1806 = vunpack.c.l.b16 %v907
      %v1807 = vunpack.c.l.b16 %v917
      %v1808 = vunpack.c.l.b16 %v931
      %v1809 = vunpack.c.l.b16 %v941
      %v1810 = vunpack.c.l.b16 %v951
      %v1811 = vunpack.c.l.b16 %v961
      %v1812 = vunpack.c.l.b16 %v975
      %v1813 = vunpack.c.l.b16 %v985
      %v1814 = vunpack.c.l.b16 %v995
      %v1815 = vunpack.c.l.b16 %v1005
      %v1816 = vunpack.c.l.b16 %v1019
      %v1817 = vunpack.c.l.b16 %v1029
      %v1818 = vunpack.c.l.b16 %v1039
      %v1819 = vunpack.c.l.b16 %v1049
      %v1820 = vunpack.c.l.b16 %v1063
      %v1821 = vunpack.c.l.b16 %v1073
      %v1822 = vunpack.c.l.b16 %v1083
      %v1823 = vunpack.c.l.b16 %v1093
      %v1824 = vunpack.c.l.b16 %v1107
      %v1825 = vunpack.c.l.b16 %v1117
      %v1826 = vunpack.c.l.b16 %v1127
      %v1827 = vunpack.c.l.b16 %v1137
      %v1828 = vunpack.c.l.b16 %v1151
      %v1829 = vunpack.c.l.b16 %v1161
      %v1830 = vunpack.c.l.b16 %v1171
      %v1831 = vunpack.c.l.b16 %v1181
      %v1832 = vunpack.c.l.b16 %v1195
      %v1833 = vunpack.c.l.b16 %v1205
      %v1834 = vunpack.c.l.b16 %v1215
      %v1835 = vunpack.c.l.b16 %v1225
      %v1836 = vunpack.c.l.b16 %v1239
      %v1837 = vunpack.c.l.b16 %v1249
      %v1838 = vunpack.c.l.b16 %v1259
      %v1839 = vunpack.c.l.b16 %v1269
      %v1840 = vunpack.c.l.b16 %v1283
      %v1841 = vunpack.c.l.b16 %v1293
      %v1842 = vunpack.c.l.b16 %v1303
      %v1843 = vunpack.c.l.b16 %v1313
      %v1844 = vunpack.c.l.b16 %v1327
      %v1845 = vunpack.c.l.b16 %v1337
      %v1846 = vunpack.c.l.b16 %v1347
      %v1847 = vunpack.c.l.b16 %v1357
      %v1848 = vunpack.c.l.b16 %v1371
      %v1849 = vunpack.c.l.b16 %v1381
      %v1850 = vunpack.c.l.b16 %v1391
      %v1851 = vunpack.c.l.b16 %v1401
      %v1852 = vunpack.c.l.b16 %v1415
      %v1853 = vunpack.c.l.b16 %v1425
      %v1854 = vunpack.c.l.b16 %v1435
      %v1855 = vunpack.c.l.b16 %v1445
      %v1856 = vunpack.c.l.b16 %v1459
      %v1857 = vunpack.c.l.b16 %v1469
      %v1858 = vunpack.c.l.b16 %v1479
      %v1859 = vunpack.c.l.b16 %v1489
      %v1860 = vunpack.c.l.b16 %v1503
      %v1861 = vunpack.c.l.b16 %v1513
      %v1862 = vunpack.c.l.b16 %v1523
      %v1863 = vunpack.c.l.b16 %v1533
      %v1864 = vunpack.c.l.b16 %v1547
      %v1865 = vunpack.c.l.b16 %v1557
      %v1866 = vunpack.c.l.b16 %v1567
      %v1867 = vunpack.c.l.b16 %v1577
      %v1868 = vunpack.c.l.b16 %v1591
      %v1869 = vunpack.c.l.b16 %v1601
      %v1870 = vunpack.c.l.b16 %v1611
      %v1871 = vunpack.c.l.b16 %v1621
      %v1872 = vunpack.c.l.b16 %v1635
      %v1873 = vunpack.c.l.b16 %v1645
      %v1874 = vunpack.c.l.b16 %v1655
      %v1875 = vunpack.c.l.b16 %v1665
      %v1876 = vunpack.c.l.b16 %v1679
      %v1877 = vunpack.c.l.b16 %v1689
      %v1878 = vunpack.c.l.b16 %v1699
      %v1879 = vunpack.c.l.b16 %v1709
      %v1880 = vunpack.c.l.b16 %v1723
      %v1881 = vunpack.c.l.b16 %v1733
      %v1882 = vunpack.c.l.b16 %v1743
      %v1883 = vunpack.c.l.b16 %v1753
      %v1884 = vpack.c.b16 %v1757, %v1756
      %v1885 = vpack.c.b16 %v1759, %v1758
      %v1886 = vpack.c.b16 %v1761, %v1760
      %v1887 = vpack.c.b16 %v1763, %v1762
      %v1888 = vpack.c.b16 %v1765, %v1764
      %v1889 = vpack.c.b16 %v1767, %v1766
      %v1890 = vpack.c.b16 %v1769, %v1768
      %v1891 = vpack.c.b16 %v1771, %v1770
      %v1892 = vpack.c.b16 %v1773, %v1772
      %v1893 = vpack.c.b16 %v1775, %v1774
      %v1894 = vpack.c.b16 %v1777, %v1776
      %v1895 = vpack.c.b16 %v1779, %v1778
      %v1896 = vpack.c.b16 %v1781, %v1780
      %v1897 = vpack.c.b16 %v1783, %v1782
      %v1898 = vpack.c.b16 %v1785, %v1784
      %v1899 = vpack.c.b16 %v1787, %v1786
      %v1900 = vpack.c.b16 %v1789, %v1788
      %v1901 = vpack.c.b16 %v1791, %v1790
      %v1902 = vpack.c.b16 %v1793, %v1792
      %v1903 = vpack.c.b16 %v1795, %v1794
      %v1904 = vpack.c.b16 %v1797, %v1796
      %v1905 = vpack.c.b16 %v1799, %v1798
      %v1906 = vpack.c.b16 %v1801, %v1800
      %v1907 = vpack.c.b16 %v1803, %v1802
      %v1908 = vpack.c.b16 %v1805, %v1804
      %v1909 = vpack.c.b16 %v1807, %v1806
      %v1910 = vpack.c.b16 %v1809, %v1808
      %v1911 = vpack.c.b16 %v1811, %v1810
      %v1912 = vpack.c.b16 %v1813, %v1812
      %v1913 = vpack.c.b16 %v1815, %v1814
      %v1914 = vpack.c.b16 %v1817, %v1816
      %v1915 = vpack.c.b16 %v1819, %v1818
      %v1916 = vpack.c.b16 %v1821, %v1820
      %v1917 = vpack.c.b16 %v1823, %v1822
      %v1918 = vpack.c.b16 %v1825, %v1824
      %v1919 = vpack.c.b16 %v1827, %v1826
      %v1920 = vpack.c.b16 %v1829, %v1828
      %v1921 = vpack.c.b16 %v1831, %v1830
      %v1922 = vpack.c.b16 %v1833, %v1832
      %v1923 = vpack.c.b16 %v1835, %v1834
      %v1924 = vpack.c.b16 %v1837, %v1836
      %v1925 = vpack.c.b16 %v1839, %v1838
      %v1926 = vpack.c.b16 %v1841, %v1840
      %v1927 = vpack.c.b16 %v1843, %v1842
      %v1928 = vpack.c.b16 %v1845, %v1844
      %v1929 = vpack.c.b16 %v1847, %v1846
      %v1930 = vpack.c.b16 %v1849, %v1848
      %v1931 = vpack.c.b16 %v1851, %v1850
      %v1932 = vpack.c.b16 %v1853, %v1852
      %v1933 = vpack.c.b16 %v1855, %v1854
      %v1934 = vpack.c.b16 %v1857, %v1856
      %v1935 = vpack.c.b16 %v1859, %v1858
      %v1936 = vpack.c.b16 %v1861, %v1860
      %v1937 = vpack.c.b16 %v1863, %v1862
      %v1938 = vpack.c.b16 %v1865, %v1864
      %v1939 = vpack.c.b16 %v1867, %v1866
      %v1940 = vpack.c.b16 %v1869, %v1868
      %v1941 = vpack.c.b16 %v1871, %v1870
      %v1942 = vpack.c.b16 %v1873, %v1872
      %v1943 = vpack.c.b16 %v1875, %v1874
      %v1944 = vpack.c.b16 %v1877, %v1876
      %v1945 = vpack.c.b16 %v1879, %v1878
      %v1946 = vpack.c.b16 %v1881, %v1880
      %v1947 = vpack.c.b16 %v1883, %v1882
      %vm1948 = vcmask 23552
      %v1950 = vsel %vm1948, %v1884, 0
      %v1953 = vsel %vm1948, %v1885, 0
      %v1956 = vsel %vm1948, %v1886, 0
      %v1959 = vsel %vm1948, %v1887, 0
      %v1962 = vsel %vm1948, %v1888, 0
      %v1965 = vsel %vm1948, %v1889, 0
      %v1968 = vsel %vm1948, %v1890, 0
      %v1971 = vsel %vm1948, %v1891, 0
      %v1974 = vsel %vm1948, %v1892, 0
      %v1977 = vsel %vm1948, %v1893, 0
      %v1980 = vsel %vm1948, %v1894, 0
      %v1983 = vsel %vm1948, %v1895, 0
      %v1986 = vsel %vm1948, %v1896, 0
      %v1989 = vsel %vm1948, %v1897, 0
      %v1992 = vsel %vm1948, %v1898, 0
      %v1995 = vsel %vm1948, %v1899, 0
      %v1998 = vsel %vm1948, %v1900, 0
      %v2001 = vsel %vm1948, %v1901, 0
      %v2004 = vsel %vm1948, %v1902, 0
      %v2007 = vsel %vm1948, %v1903, 0
      %v2010 = vsel %vm1948, %v1904, 0
      %v2013 = vsel %vm1948, %v1905, 0
      %v2016 = vsel %vm1948, %v1906, 0
      %v2019 = vsel %vm1948, %v1907, 0
      %v2022 = vsel %vm1948, %v1908, 0
      %v2025 = vsel %vm1948, %v1909, 0
      %v2028 = vsel %vm1948, %v1910, 0
      %v2031 = vsel %vm1948, %v1911, 0
      %v2034 = vsel %vm1948, %v1912, 0
      %v2037 = vsel %vm1948, %v1913, 0
      %v2040 = vsel %vm1948, %v1914, 0
      %v2043 = vsel %vm1948, %v1915, 0
      %v2046 = vsel %vm1948, %v1916, 0
      %v2049 = vsel %vm1948, %v1917, 0
      %v2052 = vsel %vm1948, %v1918, 0
      %v2055 = vsel %vm1948, %v1919, 0
      %v2058 = vsel %vm1948, %v1920, 0
      %v2061 = vsel %vm1948, %v1921, 0
      %v2064 = vsel %vm1948, %v1922, 0
      %v2067 = vsel %vm1948, %v1923, 0
      %v2070 = vsel %vm1948, %v1924, 0
      %v2073 = vsel %vm1948, %v1925, 0
      %v2076 = vsel %vm1948, %v1926, 0
      %v2079 = vsel %vm1948, %v1927, 0
      %v2082 = vsel %vm1948, %v1928, 0
      %v2085 = vsel %vm1948, %v1929, 0
      %v2088 = vsel %vm1948, %v1930, 0
      %v2091 = vsel %vm1948, %v1931, 0
      %v2094 = vsel %vm1948, %v1932, 0
      %v2097 = vsel %vm1948, %v1933, 0
      %v2100 = vsel %vm1948, %v1934, 0
      %v2103 = vsel %vm1948, %v1935, 0
      %v2106 = vsel %vm1948, %v1936, 0
      %v2109 = vsel %vm1948, %v1937, 0
      %v2112 = vsel %vm1948, %v1938, 0
      %v2115 = vsel %vm1948, %v1939, 0
      %v2118 = vsel %vm1948, %v1940, 0
      %v2121 = vsel %vm1948, %v1941, 0
      %v2124 = vsel %vm1948, %v1942, 0
      %v2127 = vsel %vm1948, %v1943, 0
      %v2130 = vsel %vm1948, %v1944, 0
      %v2133 = vsel %vm1948, %v1945, 0
      %v2136 = vsel %vm1948, %v1946, 0
      %v2139 = vsel %vm1948, %v1947, 0
      %vm2141 = vcmask 1040384
      %vm2142 = vcmask 1041408
      %v2143 = vsel %vm2141, 4294967295, 65535
      %v2144 = vsel %vm2142, %v2143, 0
      %v2146 = vand.u32 %v1755, %v2144
      %2148 = vmatprep.subr.bf16.mxu0 0
      %2149 = vmatpush1.bf16.msra.mxu0 %v2146
      %2150 = vmatprep.subr.bf16.mxu0 0
      %2151 = vmatpush1.bf16.msra.mxu0 0
      %2152 = vmatprep.subr.bf16.mxu0 0
      %2153 = vmatpush1.bf16.msra.mxu0 0
      %2154 = vmatprep.subr.bf16.mxu0 0
      %2155 = vmatpush1.bf16.msra.mxu0 0
      %2156 = vmatprep.subr.bf16.mxu0 0
      %2157 = vmatpush1.bf16.msra.mxu0 0
      %2158 = vmatprep.subr.bf16.mxu0 0
      %2159 = vmatpush1.bf16.msra.mxu0 0
      %2160 = vmatprep.subr.bf16.mxu0 0
      %2161 = vmatpush1.bf16.msra.mxu0 0
      %2162 = vmatprep.subr.bf16.mxu0 0
      %2163 = vmatpush1.bf16.msra.mxu0 0
      %2164 = vmatprep.subr.bf16.mxu0 0
      %2165 = vmatpush1.bf16.msra.mxu0 0
      %2166 = vmatprep.subr.bf16.mxu0 0
      %2167 = vmatpush1.bf16.msra.mxu0 0
      %2168 = vmatprep.subr.bf16.mxu0 0
      %2169 = vmatpush1.bf16.msra.mxu0 0
      %2170 = vmatprep.subr.bf16.mxu0 0
      %2171 = vmatpush1.bf16.msra.mxu0 0
      %2172 = vmatprep.subr.bf16.mxu0 0
      %2173 = vmatpush1.bf16.msra.mxu0 0
      %2174 = vmatprep.subr.bf16.mxu0 0
      %2175 = vmatpush1.bf16.msra.mxu0 0
      %2176 = vmatprep.subr.bf16.mxu0 0
      %2177 = vmatpush1.bf16.msra.mxu0 0
      %2178 = vmatprep.subr.bf16.mxu0 0
      %2179 = vmatpush1.bf16.msra.mxu0 0
      %2180 = vmatprep.mubr.bf16.mxu0 0
      %2181 = vmatmul.mubr.bf16.gmra.mrb[0].mxu0 %v1950
      %v2182 = vpop.f32.mrb[0].mxu0
      %v2183 = vadd.f32 0.0, %v2182
      %v2184 = vpop.f32.mrb[0].mxu0
      %v2185 = vpop.f32.mrb[0].mxu0
      %v2186 = vadd.f32 0.0, %v2185
      %v2187 = vpop.f32.mrb[0].mxu0
      %2188 = vmatprep.mubr.bf16.mxu0 0
      %2189 = vmatmul.mubr.bf16.gmra.mrb[0].mxu0 %v1953
      %v2190 = vpop.f32.mrb[0].mxu0
      %v2191 = vadd.f32 0.0, %v2190
      %v2192 = vpop.f32.mrb[0].mxu0
      %v2193 = vpop.f32.mrb[0].mxu0
      %v2194 = vadd.f32 0.0, %v2193
      %v2195 = vpop.f32.mrb[0].mxu0
      %2196 = vmatprep.mubr.bf16.mxu0 0
      %2197 = vmatmul.mubr.bf16.gmra.mrb[0].mxu0 %v1956
      %v2198 = vpop.f32.mrb[0].mxu0
      %v2199 = vadd.f32 0.0, %v2198
      %v2200 = vpop.f32.mrb[0].mxu0
      %v2201 = vpop.f32.mrb[0].mxu0
      %v2202 = vadd.f32 0.0, %v2201
      %v2203 = vpop.f32.mrb[0].mxu0
      %2204 = vmatprep.mubr.bf16.mxu0 0
      %2205 = vmatmul.mubr.bf16.gmra.mrb[0].mxu0 %v1959
      %v2206 = vpop.f32.mrb[0].mxu0
      %v2207 = vadd.f32 0.0, %v2206
      %v2208 = vpop.f32.mrb[0].mxu0
      %v2209 = vpop.f32.mrb[0].mxu0
      %v2210 = vadd.f32 0.0, %v2209
      %v2211 = vpop.f32.mrb[0].mxu0
      %2212 = vmatprep.mubr.bf16.mxu0 0
      %2213 = vmatmul.mubr.bf16.gmra.mrb[0].mxu0 %v1962
      %v2214 = vpop.f32.mrb[0].mxu0
      %v2215 = vadd.f32 0.0, %v2214
      %v2216 = vpop.f32.mrb[0].mxu0
      %v2217 = vpop.f32.mrb[0].mxu0
      %v2218 = vadd.f32 0.0, %v2217
      %v2219 = vpop.f32.mrb[0].mxu0
      %2220 = vmatprep.mubr.bf16.mxu0 0
      %2221 = vmatmul.mubr.bf16.gmra.mrb[0].mxu0 %v1965
      %v2222 = vpop.f32.mrb[0].mxu0
      %v2223 = vadd.f32 0.0, %v2222
      %v2224 = vpop.f32.mrb[0].mxu0
      %v2225 = vpop.f32.mrb[0].mxu0
      %v2226 = vadd.f32 0.0, %v2225
      %v2227 = vpop.f32.mrb[0].mxu0
      %2228 = vmatprep.mubr.bf16.mxu0 0
      %2229 = vmatmul.mubr.bf16.gmra.mrb[0].mxu0 %v1968
      %v2230 = vpop.f32.mrb[0].mxu0
      %v2231 = vadd.f32 0.0, %v2230
      %v2232 = vpop.f32.mrb[0].mxu0
      %v2233 = vpop.f32.mrb[0].mxu0
      %v2234 = vadd.f32 0.0, %v2233
      %v2235 = vpop.f32.mrb[0].mxu0
      %2236 = vmatprep.mubr.bf16.mxu0 0
      %2237 = vmatmul.mubr.bf16.gmra.mrb[0].mxu0 %v1971
      %v2238 = vpop.f32.mrb[0].mxu0
      %v2239 = vadd.f32 0.0, %v2238
      %v2240 = vpop.f32.mrb[0].mxu0
      %v2241 = vpop.f32.mrb[0].mxu0
      %v2242 = vadd.f32 0.0, %v2241
      %v2243 = vpop.f32.mrb[0].mxu0
      %2244 = vmatprep.mubr.bf16.mxu0 0
      %2245 = vmatmul.mubr.bf16.gmra.mrb[0].mxu0 %v1974
      %v2246 = vpop.f32.mrb[0].mxu0
      %v2247 = vadd.f32 0.0, %v2246
      %v2248 = vpop.f32.mrb[0].mxu0
      %v2249 = vpop.f32.mrb[0].mxu0
      %v2250 = vadd.f32 0.0, %v2249
      %v2251 = vpop.f32.mrb[0].mxu0
      %2252 = vmatprep.mubr.bf16.mxu0 0
      %2253 = vmatmul.mubr.bf16.gmra.mrb[0].mxu0 %v1977
      %v2254 = vpop.f32.mrb[0].mxu0
      %v2255 = vadd.f32 0.0, %v2254
      %v2256 = vpop.f32.mrb[0].mxu0
      %v2257 = vpop.f32.mrb[0].mxu0
      %v2258 = vadd.f32 0.0, %v2257
      %v2259 = vpop.f32.mrb[0].mxu0
      %2260 = vmatprep.mubr.bf16.mxu0 0
      %2261 = vmatmul.mubr.bf16.gmra.mrb[0].mxu0 %v1980
      %v2262 = vpop.f32.mrb[0].mxu0
      %v2263 = vadd.f32 0.0, %v2262
      %v2264 = vpop.f32.mrb[0].mxu0
      %v2265 = vpop.f32.mrb[0].mxu0
      %v2266 = vadd.f32 0.0, %v2265
      %v2267 = vpop.f32.mrb[0].mxu0
      %2268 = vmatprep.mubr.bf16.mxu0 0
      %2269 = vmatmul.mubr.bf16.gmra.mrb[0].mxu0 %v1983
      %v2270 = vpop.f32.mrb[0].mxu0
      %v2271 = vadd.f32 0.0, %v2270
      %v2272 = vpop.f32.mrb[0].mxu0
      %v2273 = vpop.f32.mrb[0].mxu0
      %v2274 = vadd.f32 0.0, %v2273
      %v2275 = vpop.f32.mrb[0].mxu0
      %2276 = vmatprep.mubr.bf16.mxu0 0
      %2277 = vmatmul.mubr.bf16.gmra.mrb[0].mxu0 %v1986
      %v2278 = vpop.f32.mrb[0].mxu0
      %v2279 = vadd.f32 0.0, %v2278
      %v2280 = vpop.f32.mrb[0].mxu0
      %v2281 = vpop.f32.mrb[0].mxu0
      %v2282 = vadd.f32 0.0, %v2281
      %v2283 = vpop.f32.mrb[0].mxu0
      %2284 = vmatprep.mubr.bf16.mxu0 0
      %2285 = vmatmul.mubr.bf16.gmra.mrb[0].mxu0 %v1989
      %v2286 = vpop.f32.mrb[0].mxu0
      %v2287 = vadd.f32 0.0, %v2286
      %v2288 = vpop.f32.mrb[0].mxu0
      %v2289 = vpop.f32.mrb[0].mxu0
      %v2290 = vadd.f32 0.0, %v2289
      %v2291 = vpop.f32.mrb[0].mxu0
      %2292 = vmatprep.mubr.bf16.mxu0 0
      %2293 = vmatmul.mubr.bf16.gmra.mrb[0].mxu0 %v1992
      %v2294 = vpop.f32.mrb[0].mxu0
      %v2295 = vadd.f32 0.0, %v2294
      %v2296 = vpop.f32.mrb[0].mxu0
      %v2297 = vpop.f32.mrb[0].mxu0
      %v2298 = vadd.f32 0.0, %v2297
      %v2299 = vpop.f32.mrb[0].mxu0
      %2300 = vmatprep.mubr.bf16.mxu0 0
      %2301 = vmatmul.mubr.bf16.gmra.mrb[0].mxu0 %v1995
      %v2302 = vpop.f32.mrb[0].mxu0
      %v2303 = vadd.f32 0.0, %v2302
      %v2304 = vpop.f32.mrb[0].mxu0
      %v2305 = vpop.f32.mrb[0].mxu0
      %v2306 = vadd.f32 0.0, %v2305
      %v2307 = vpop.f32.mrb[0].mxu0
      %2308 = vmatprep.mubr.bf16.mxu0 0
      %2309 = vmatmul.mubr.bf16.gmra.mrb[0].mxu0 %v1998
      %v2310 = vpop.f32.mrb[0].mxu0
      %v2311 = vadd.f32 0.0, %v2310
      %v2312 = vpop.f32.mrb[0].mxu0
      %v2313 = vpop.f32.mrb[0].mxu0
      %v2314 = vadd.f32 0.0, %v2313
      %v2315 = vpop.f32.mrb[0].mxu0
      %2316 = vmatprep.mubr.bf16.mxu0 0
      %2317 = vmatmul.mubr.bf16.gmra.mrb[0].mxu0 %v2001
      %v2318 = vpop.f32.mrb[0].mxu0
      %v2319 = vadd.f32 0.0, %v2318
      %v2320 = vpop.f32.mrb[0].mxu0
      %v2321 = vpop.f32.mrb[0].mxu0
      %v2322 = vadd.f32 0.0, %v2321
      %v2323 = vpop.f32.mrb[0].mxu0
      %2324 = vmatprep.mubr.bf16.mxu0 0
      %2325 = vmatmul.mubr.bf16.gmra.mrb[0].mxu0 %v2004
      %v2326 = vpop.f32.mrb[0].mxu0
      %v2327 = vadd.f32 0.0, %v2326
      %v2328 = vpop.f32.mrb[0].mxu0
      %v2329 = vpop.f32.mrb[0].mxu0
      %v2330 = vadd.f32 0.0, %v2329
      %v2331 = vpop.f32.mrb[0].mxu0
      %2332 = vmatprep.mubr.bf16.mxu0 0
      %2333 = vmatmul.mubr.bf16.gmra.mrb[0].mxu0 %v2007
      %v2334 = vpop.f32.mrb[0].mxu0
      %v2335 = vadd.f32 0.0, %v2334
      %v2336 = vpop.f32.mrb[0].mxu0
      %v2337 = vpop.f32.mrb[0].mxu0
      %v2338 = vadd.f32 0.0, %v2337
      %v2339 = vpop.f32.mrb[0].mxu0
      %2340 = vmatprep.mubr.bf16.mxu0 0
      %2341 = vmatmul.mubr.bf16.gmra.mrb[0].mxu0 %v2010
      %v2342 = vpop.f32.mrb[0].mxu0
      %v2343 = vadd.f32 0.0, %v2342
      %v2344 = vpop.f32.mrb[0].mxu0
      %v2345 = vpop.f32.mrb[0].mxu0
      %v2346 = vadd.f32 0.0, %v2345
      %v2347 = vpop.f32.mrb[0].mxu0
      %2348 = vmatprep.mubr.bf16.mxu0 0
      %2349 = vmatmul.mubr.bf16.gmra.mrb[0].mxu0 %v2013
      %v2350 = vpop.f32.mrb[0].mxu0
      %v2351 = vadd.f32 0.0, %v2350
      %v2352 = vpop.f32.mrb[0].mxu0
      %v2353 = vpop.f32.mrb[0].mxu0
      %v2354 = vadd.f32 0.0, %v2353
      %v2355 = vpop.f32.mrb[0].mxu0
      %2356 = vmatprep.mubr.bf16.mxu0 0
      %2357 = vmatmul.mubr.bf16.gmra.mrb[0].mxu0 %v2016
      %v2358 = vpop.f32.mrb[0].mxu0
      %v2359 = vadd.f32 0.0, %v2358
      %v2360 = vpop.f32.mrb[0].mxu0
      %v2361 = vpop.f32.mrb[0].mxu0
      %v2362 = vadd.f32 0.0, %v2361
      %v2363 = vpop.f32.mrb[0].mxu0
      %2364 = vmatprep.mubr.bf16.mxu0 0
      %2365 = vmatmul.mubr.bf16.gmra.mrb[0].mxu0 %v2019
      %v2366 = vpop.f32.mrb[0].mxu0
      %v2367 = vadd.f32 0.0, %v2366
      %v2368 = vpop.f32.mrb[0].mxu0
      %v2369 = vpop.f32.mrb[0].mxu0
      %v2370 = vadd.f32 0.0, %v2369
      %v2371 = vpop.f32.mrb[0].mxu0
      %2372 = vmatprep.mubr.bf16.mxu0 0
      %2373 = vmatmul.mubr.bf16.gmra.mrb[0].mxu0 %v2022
      %v2374 = vpop.f32.mrb[0].mxu0
      %v2375 = vadd.f32 0.0, %v2374
      %v2376 = vpop.f32.mrb[0].mxu0
      %v2377 = vpop.f32.mrb[0].mxu0
      %v2378 = vadd.f32 0.0, %v2377
      %v2379 = vpop.f32.mrb[0].mxu0
      %2380 = vmatprep.mubr.bf16.mxu0 0
      %2381 = vmatmul.mubr.bf16.gmra.mrb[0].mxu0 %v2025
      %v2382 = vpop.f32.mrb[0].mxu0
      %v2383 = vadd.f32 0.0, %v2382
      %v2384 = vpop.f32.mrb[0].mxu0
      %v2385 = vpop.f32.mrb[0].mxu0
      %v2386 = vadd.f32 0.0, %v2385
      %v2387 = vpop.f32.mrb[0].mxu0
      %2388 = vmatprep.mubr.bf16.mxu0 0
      %2389 = vmatmul.mubr.bf16.gmra.mrb[0].mxu0 %v2028
      %v2390 = vpop.f32.mrb[0].mxu0
      %v2391 = vadd.f32 0.0, %v2390
      %v2392 = vpop.f32.mrb[0].mxu0
      %v2393 = vpop.f32.mrb[0].mxu0
      %v2394 = vadd.f32 0.0, %v2393
      %v2395 = vpop.f32.mrb[0].mxu0
      %2396 = vmatprep.mubr.bf16.mxu0 0
      %2397 = vmatmul.mubr.bf16.gmra.mrb[0].mxu0 %v2031
      %v2398 = vpop.f32.mrb[0].mxu0
      %v2399 = vadd.f32 0.0, %v2398
      %v2400 = vpop.f32.mrb[0].mxu0
      %v2401 = vpop.f32.mrb[0].mxu0
      %v2402 = vadd.f32 0.0, %v2401
      %v2403 = vpop.f32.mrb[0].mxu0
      %2404 = vmatprep.mubr.bf16.mxu0 0
      %2405 = vmatmul.mubr.bf16.gmra.mrb[0].mxu0 %v2034
      %v2406 = vpop.f32.mrb[0].mxu0
      %v2407 = vadd.f32 0.0, %v2406
      %v2408 = vpop.f32.mrb[0].mxu0
      %v2409 = vpop.f32.mrb[0].mxu0
      %v2410 = vadd.f32 0.0, %v2409
      %v2411 = vpop.f32.mrb[0].mxu0
      %2412 = vmatprep.mubr.bf16.mxu0 0
      %2413 = vmatmul.mubr.bf16.gmra.mrb[0].mxu0 %v2037
      %v2414 = vpop.f32.mrb[0].mxu0
      %v2415 = vadd.f32 0.0, %v2414
      %v2416 = vpop.f32.mrb[0].mxu0
      %v2417 = vpop.f32.mrb[0].mxu0
      %v2418 = vadd.f32 0.0, %v2417
      %v2419 = vpop.f32.mrb[0].mxu0
      %2420 = vmatprep.mubr.bf16.mxu0 0
      %2421 = vmatmul.mubr.bf16.gmra.mrb[0].mxu0 %v2040
      %v2422 = vpop.f32.mrb[0].mxu0
      %v2423 = vadd.f32 0.0, %v2422
      %v2424 = vpop.f32.mrb[0].mxu0
      %v2425 = vpop.f32.mrb[0].mxu0
      %v2426 = vadd.f32 0.0, %v2425
      %v2427 = vpop.f32.mrb[0].mxu0
      %2428 = vmatprep.mubr.bf16.mxu0 0
      %2429 = vmatmul.mubr.bf16.gmra.mrb[0].mxu0 %v2043
      %v2430 = vpop.f32.mrb[0].mxu0
      %v2431 = vadd.f32 0.0, %v2430
      %v2432 = vpop.f32.mrb[0].mxu0
      %v2433 = vpop.f32.mrb[0].mxu0
      %v2434 = vadd.f32 0.0, %v2433
      %v2435 = vpop.f32.mrb[0].mxu0
      %2436 = vmatprep.mubr.bf16.mxu0 0
      %2437 = vmatmul.mubr.bf16.gmra.mrb[0].mxu0 %v2046
      %v2438 = vpop.f32.mrb[0].mxu0
      %v2439 = vadd.f32 0.0, %v2438
      %v2440 = vpop.f32.mrb[0].mxu0
      %v2441 = vpop.f32.mrb[0].mxu0
      %v2442 = vadd.f32 0.0, %v2441
      %v2443 = vpop.f32.mrb[0].mxu0
      %2444 = vmatprep.mubr.bf16.mxu0 0
      %2445 = vmatmul.mubr.bf16.gmra.mrb[0].mxu0 %v2049
      %v2446 = vpop.f32.mrb[0].mxu0
      %v2447 = vadd.f32 0.0, %v2446
      %v2448 = vpop.f32.mrb[0].mxu0
      %v2449 = vpop.f32.mrb[0].mxu0
      %v2450 = vadd.f32 0.0, %v2449
      %v2451 = vpop.f32.mrb[0].mxu0
      %2452 = vmatprep.mubr.bf16.mxu0 0
      %2453 = vmatmul.mubr.bf16.gmra.mrb[0].mxu0 %v2052
      %v2454 = vpop.f32.mrb[0].mxu0
      %v2455 = vadd.f32 0.0, %v2454
      %v2456 = vpop.f32.mrb[0].mxu0
      %v2457 = vpop.f32.mrb[0].mxu0
      %v2458 = vadd.f32 0.0, %v2457
      %v2459 = vpop.f32.mrb[0].mxu0
      %2460 = vmatprep.mubr.bf16.mxu0 0
      %2461 = vmatmul.mubr.bf16.gmra.mrb[0].mxu0 %v2055
      %v2462 = vpop.f32.mrb[0].mxu0
      %v2463 = vadd.f32 0.0, %v2462
      %v2464 = vpop.f32.mrb[0].mxu0
      %v2465 = vpop.f32.mrb[0].mxu0
      %v2466 = vadd.f32 0.0, %v2465
      %v2467 = vpop.f32.mrb[0].mxu0
      %2468 = vmatprep.mubr.bf16.mxu0 0
      %2469 = vmatmul.mubr.bf16.gmra.mrb[0].mxu0 %v2058
      %v2470 = vpop.f32.mrb[0].mxu0
      %v2471 = vadd.f32 0.0, %v2470
      %v2472 = vpop.f32.mrb[0].mxu0
      %v2473 = vpop.f32.mrb[0].mxu0
      %v2474 = vadd.f32 0.0, %v2473
      %v2475 = vpop.f32.mrb[0].mxu0
      %2476 = vmatprep.mubr.bf16.mxu0 0
      %2477 = vmatmul.mubr.bf16.gmra.mrb[0].mxu0 %v2061
      %v2478 = vpop.f32.mrb[0].mxu0
      %v2479 = vadd.f32 0.0, %v2478
      %v2480 = vpop.f32.mrb[0].mxu0
      %v2481 = vpop.f32.mrb[0].mxu0
      %v2482 = vadd.f32 0.0, %v2481
      %v2483 = vpop.f32.mrb[0].mxu0
      %2484 = vmatprep.mubr.bf16.mxu0 0
      %2485 = vmatmul.mubr.bf16.gmra.mrb[0].mxu0 %v2064
      %v2486 = vpop.f32.mrb[0].mxu0
      %v2487 = vadd.f32 0.0, %v2486
      %v2488 = vpop.f32.mrb[0].mxu0
      %v2489 = vpop.f32.mrb[0].mxu0
      %v2490 = vadd.f32 0.0, %v2489
      %v2491 = vpop.f32.mrb[0].mxu0
      %2492 = vmatprep.mubr.bf16.mxu0 0
      %2493 = vmatmul.mubr.bf16.gmra.mrb[0].mxu0 %v2067
      %v2494 = vpop.f32.mrb[0].mxu0
      %v2495 = vadd.f32 0.0, %v2494
      %v2496 = vpop.f32.mrb[0].mxu0
      %v2497 = vpop.f32.mrb[0].mxu0
      %v2498 = vadd.f32 0.0, %v2497
      %v2499 = vpop.f32.mrb[0].mxu0
      %2500 = vmatprep.mubr.bf16.mxu0 0
      %2501 = vmatmul.mubr.bf16.gmra.mrb[0].mxu0 %v2070
      %v2502 = vpop.f32.mrb[0].mxu0
      %v2503 = vadd.f32 0.0, %v2502
      %v2504 = vpop.f32.mrb[0].mxu0
      %v2505 = vpop.f32.mrb[0].mxu0
      %v2506 = vadd.f32 0.0, %v2505
      %v2507 = vpop.f32.mrb[0].mxu0
      %2508 = vmatprep.mubr.bf16.mxu0 0
      %2509 = vmatmul.mubr.bf16.gmra.mrb[0].mxu0 %v2073
      %v2510 = vpop.f32.mrb[0].mxu0
      %v2511 = vadd.f32 0.0, %v2510
      %v2512 = vpop.f32.mrb[0].mxu0
      %v2513 = vpop.f32.mrb[0].mxu0
      %v2514 = vadd.f32 0.0, %v2513
      %v2515 = vpop.f32.mrb[0].mxu0
      %2516 = vmatprep.mubr.bf16.mxu0 0
      %2517 = vmatmul.mubr.bf16.gmra.mrb[0].mxu0 %v2076
      %v2518 = vpop.f32.mrb[0].mxu0
      %v2519 = vadd.f32 0.0, %v2518
      %v2520 = vpop.f32.mrb[0].mxu0
      %v2521 = vpop.f32.mrb[0].mxu0
      %v2522 = vadd.f32 0.0, %v2521
      %v2523 = vpop.f32.mrb[0].mxu0
      %2524 = vmatprep.mubr.bf16.mxu0 0
      %2525 = vmatmul.mubr.bf16.gmra.mrb[0].mxu0 %v2079
      %v2526 = vpop.f32.mrb[0].mxu0
      %v2527 = vadd.f32 0.0, %v2526
      %v2528 = vpop.f32.mrb[0].mxu0
      %v2529 = vpop.f32.mrb[0].mxu0
      %v2530 = vadd.f32 0.0, %v2529
      %v2531 = vpop.f32.mrb[0].mxu0
      %2532 = vmatprep.mubr.bf16.mxu0 0
      %2533 = vmatmul.mubr.bf16.gmra.mrb[0].mxu0 %v2082
      %v2534 = vpop.f32.mrb[0].mxu0
      %v2535 = vadd.f32 0.0, %v2534
      %v2536 = vpop.f32.mrb[0].mxu0
      %v2537 = vpop.f32.mrb[0].mxu0
      %v2538 = vadd.f32 0.0, %v2537
      %v2539 = vpop.f32.mrb[0].mxu0
      %2540 = vmatprep.mubr.bf16.mxu0 0
      %2541 = vmatmul.mubr.bf16.gmra.mrb[0].mxu0 %v2085
      %v2542 = vpop.f32.mrb[0].mxu0
      %v2543 = vadd.f32 0.0, %v2542
      %v2544 = vpop.f32.mrb[0].mxu0
      %v2545 = vpop.f32.mrb[0].mxu0
      %v2546 = vadd.f32 0.0, %v2545
      %v2547 = vpop.f32.mrb[0].mxu0
      %2548 = vmatprep.mubr.bf16.mxu0 0
      %2549 = vmatmul.mubr.bf16.gmra.mrb[0].mxu0 %v2088
      %v2550 = vpop.f32.mrb[0].mxu0
      %v2551 = vadd.f32 0.0, %v2550
      %v2552 = vpop.f32.mrb[0].mxu0
      %v2553 = vpop.f32.mrb[0].mxu0
      %v2554 = vadd.f32 0.0, %v2553
      %v2555 = vpop.f32.mrb[0].mxu0
      %2556 = vmatprep.mubr.bf16.mxu0 0
      %2557 = vmatmul.mubr.bf16.gmra.mrb[0].mxu0 %v2091
      %v2558 = vpop.f32.mrb[0].mxu0
      %v2559 = vadd.f32 0.0, %v2558
      %v2560 = vpop.f32.mrb[0].mxu0
      %v2561 = vpop.f32.mrb[0].mxu0
      %v2562 = vadd.f32 0.0, %v2561
      %v2563 = vpop.f32.mrb[0].mxu0
      %2564 = vmatprep.mubr.bf16.mxu0 0
      %2565 = vmatmul.mubr.bf16.gmra.mrb[0].mxu0 %v2094
      %v2566 = vpop.f32.mrb[0].mxu0
      %v2567 = vadd.f32 0.0, %v2566
      %v2568 = vpop.f32.mrb[0].mxu0
      %v2569 = vpop.f32.mrb[0].mxu0
      %v2570 = vadd.f32 0.0, %v2569
      %v2571 = vpop.f32.mrb[0].mxu0
      %2572 = vmatprep.mubr.bf16.mxu0 0
      %2573 = vmatmul.mubr.bf16.gmra.mrb[0].mxu0 %v2097
      %v2574 = vpop.f32.mrb[0].mxu0
      %v2575 = vadd.f32 0.0, %v2574
      %v2576 = vpop.f32.mrb[0].mxu0
      %v2577 = vpop.f32.mrb[0].mxu0
      %v2578 = vadd.f32 0.0, %v2577
      %v2579 = vpop.f32.mrb[0].mxu0
      %2580 = vmatprep.mubr.bf16.mxu0 0
      %2581 = vmatmul.mubr.bf16.gmra.mrb[0].mxu0 %v2100
      %v2582 = vpop.f32.mrb[0].mxu0
      %v2583 = vadd.f32 0.0, %v2582
      %v2584 = vpop.f32.mrb[0].mxu0
      %v2585 = vpop.f32.mrb[0].mxu0
      %v2586 = vadd.f32 0.0, %v2585
      %v2587 = vpop.f32.mrb[0].mxu0
      %2588 = vmatprep.mubr.bf16.mxu0 0
      %2589 = vmatmul.mubr.bf16.gmra.mrb[0].mxu0 %v2103
      %v2590 = vpop.f32.mrb[0].mxu0
      %v2591 = vadd.f32 0.0, %v2590
      %v2592 = vpop.f32.mrb[0].mxu0
      %v2593 = vpop.f32.mrb[0].mxu0
      %v2594 = vadd.f32 0.0, %v2593
      %v2595 = vpop.f32.mrb[0].mxu0
      %2596 = vmatprep.mubr.bf16.mxu0 0
      %2597 = vmatmul.mubr.bf16.gmra.mrb[0].mxu0 %v2106
      %v2598 = vpop.f32.mrb[0].mxu0
      %v2599 = vadd.f32 0.0, %v2598
      %v2600 = vpop.f32.mrb[0].mxu0
      %v2601 = vpop.f32.mrb[0].mxu0
      %v2602 = vadd.f32 0.0, %v2601
      %v2603 = vpop.f32.mrb[0].mxu0
      %2604 = vmatprep.mubr.bf16.mxu0 0
      %2605 = vmatmul.mubr.bf16.gmra.mrb[0].mxu0 %v2109
      %v2606 = vpop.f32.mrb[0].mxu0
      %v2607 = vadd.f32 0.0, %v2606
      %v2608 = vpop.f32.mrb[0].mxu0
      %v2609 = vpop.f32.mrb[0].mxu0
      %v2610 = vadd.f32 0.0, %v2609
      %v2611 = vpop.f32.mrb[0].mxu0
      %2612 = vmatprep.mubr.bf16.mxu0 0
      %2613 = vmatmul.mubr.bf16.gmra.mrb[0].mxu0 %v2112
      %v2614 = vpop.f32.mrb[0].mxu0
      %v2615 = vadd.f32 0.0, %v2614
      %v2616 = vpop.f32.mrb[0].mxu0
      %v2617 = vpop.f32.mrb[0].mxu0
      %v2618 = vadd.f32 0.0, %v2617
      %v2619 = vpop.f32.mrb[0].mxu0
      %2620 = vmatprep.mubr.bf16.mxu0 0
      %2621 = vmatmul.mubr.bf16.gmra.mrb[0].mxu0 %v2115
      %v2622 = vpop.f32.mrb[0].mxu0
      %v2623 = vadd.f32 0.0, %v2622
      %v2624 = vpop.f32.mrb[0].mxu0
      %v2625 = vpop.f32.mrb[0].mxu0
      %v2626 = vadd.f32 0.0, %v2625
      %v2627 = vpop.f32.mrb[0].mxu0
      %2628 = vmatprep.mubr.bf16.mxu0 0
      %2629 = vmatmul.mubr.bf16.gmra.mrb[0].mxu0 %v2118
      %v2630 = vpop.f32.mrb[0].mxu0
      %v2631 = vadd.f32 0.0, %v2630
      %v2632 = vpop.f32.mrb[0].mxu0
      %v2633 = vpop.f32.mrb[0].mxu0
      %v2634 = vadd.f32 0.0, %v2633
      %v2635 = vpop.f32.mrb[0].mxu0
      %2636 = vmatprep.mubr.bf16.mxu0 0
      %2637 = vmatmul.mubr.bf16.gmra.mrb[0].mxu0 %v2121
      %v2638 = vpop.f32.mrb[0].mxu0
      %v2639 = vadd.f32 0.0, %v2638
      %v2640 = vpop.f32.mrb[0].mxu0
      %v2641 = vpop.f32.mrb[0].mxu0
      %v2642 = vadd.f32 0.0, %v2641
      %v2643 = vpop.f32.mrb[0].mxu0
      %2644 = vmatprep.mubr.bf16.mxu0 0
      %2645 = vmatmul.mubr.bf16.gmra.mrb[0].mxu0 %v2124
      %v2646 = vpop.f32.mrb[0].mxu0
      %v2647 = vadd.f32 0.0, %v2646
      %v2648 = vpop.f32.mrb[0].mxu0
      %v2649 = vpop.f32.mrb[0].mxu0
      %v2650 = vadd.f32 0.0, %v2649
      %v2651 = vpop.f32.mrb[0].mxu0
      %2652 = vmatprep.mubr.bf16.mxu0 0
      %2653 = vmatmul.mubr.bf16.gmra.mrb[0].mxu0 %v2127
      %v2654 = vpop.f32.mrb[0].mxu0
      %v2655 = vadd.f32 0.0, %v2654
      %v2656 = vpop.f32.mrb[0].mxu0
      %v2657 = vpop.f32.mrb[0].mxu0
      %v2658 = vadd.f32 0.0, %v2657
      %v2659 = vpop.f32.mrb[0].mxu0
      %2660 = vmatprep.mubr.bf16.mxu0 0
      %2661 = vmatmul.mubr.bf16.gmra.mrb[0].mxu0 %v2130
      %v2662 = vpop.f32.mrb[0].mxu0
      %v2663 = vadd.f32 0.0, %v2662
      %v2664 = vpop.f32.mrb[0].mxu0
      %v2665 = vpop.f32.mrb[0].mxu0
      %v2666 = vadd.f32 0.0, %v2665
      %v2667 = vpop.f32.mrb[0].mxu0
      %2668 = vmatprep.mubr.bf16.mxu0 0
      %2669 = vmatmul.mubr.bf16.gmra.mrb[0].mxu0 %v2133
      %v2670 = vpop.f32.mrb[0].mxu0
      %v2671 = vadd.f32 0.0, %v2670
      %v2672 = vpop.f32.mrb[0].mxu0
      %v2673 = vpop.f32.mrb[0].mxu0
      %v2674 = vadd.f32 0.0, %v2673
      %v2675 = vpop.f32.mrb[0].mxu0
      %2676 = vmatprep.mubr.bf16.mxu0 0
      %2677 = vmatmul.mubr.bf16.gmra.mrb[0].mxu0 %v2136
      %v2678 = vpop.f32.mrb[0].mxu0
      %v2679 = vadd.f32 0.0, %v2678
      %v2680 = vpop.f32.mrb[0].mxu0
      %v2681 = vpop.f32.mrb[0].mxu0
      %v2682 = vadd.f32 0.0, %v2681
      %v2683 = vpop.f32.mrb[0].mxu0
      %2684 = vmatprep.mubr.bf16.mxu0 0
      %2685 = vmatmul.mubr.bf16.gmra.mrb[0].mxu0 %v2139
      %v2686 = vpop.f32.mrb[0].mxu0
      %v2687 = vadd.f32 0.0, %v2686
      %v2688 = vpop.f32.mrb[0].mxu0
      %v2689 = vpop.f32.mrb[0].mxu0
      %v2690 = vadd.f32 0.0, %v2689
      %v2691 = vpop.f32.mrb[0].mxu0
      %2692 = vdwg.mxu0
      %v2821 = vunpack.c.l.b16 %v172
      %v2822 = vunpack.c.l.b16 %v173
      %v2823 = vunpack.c.l.b16 %v174
      %v2824 = vunpack.c.l.b16 %v175
      %v2825 = vunpack.c.l.b16 %v177
      %v2826 = vunpack.c.l.b16 %v178
      %v2827 = vunpack.c.l.b16 %v179
      %v2828 = vunpack.c.l.b16 %v180
      %v2829 = vunpack.c.l.b16 %v182
      %v2830 = vunpack.c.l.b16 %v183
      %v2831 = vunpack.c.l.b16 %v184
      %v2832 = vunpack.c.l.b16 %v185
      %v2833 = vunpack.c.l.b16 %v187
      %v2834 = vunpack.c.l.b16 %v188
      %v2835 = vunpack.c.l.b16 %v189
      %v2836 = vunpack.c.l.b16 %v190
      %v2837 = vunpack.c.l.b16 %v192
      %v2838 = vunpack.c.l.b16 %v193
      %v2839 = vunpack.c.l.b16 %v194
      %v2840 = vunpack.c.l.b16 %v195
      %v2841 = vunpack.c.l.b16 %v197
      %v2842 = vunpack.c.l.b16 %v198
      %v2843 = vunpack.c.l.b16 %v199
      %v2844 = vunpack.c.l.b16 %v200
      %v2845 = vunpack.c.l.b16 %v202
      %v2846 = vunpack.c.l.b16 %v203
      %v2847 = vunpack.c.l.b16 %v204
      %v2848 = vunpack.c.l.b16 %v205
      %v2849 = vunpack.c.l.b16 %v207
      %v2850 = vunpack.c.l.b16 %v208
      %v2851 = vunpack.c.l.b16 %v209
      %v2852 = vunpack.c.l.b16 %v210
      %v2853 = vunpack.c.l.b16 %v212
      %v2854 = vunpack.c.l.b16 %v213
      %v2855 = vunpack.c.l.b16 %v214
      %v2856 = vunpack.c.l.b16 %v215
      %v2857 = vunpack.c.l.b16 %v217
      %v2858 = vunpack.c.l.b16 %v218
      %v2859 = vunpack.c.l.b16 %v219
      %v2860 = vunpack.c.l.b16 %v220
      %v2861 = vunpack.c.l.b16 %v222
      %v2862 = vunpack.c.l.b16 %v223
      %v2863 = vunpack.c.l.b16 %v224
      %v2864 = vunpack.c.l.b16 %v225
      %v2865 = vunpack.c.l.b16 %v227
      %v2866 = vunpack.c.l.b16 %v228
      %v2867 = vunpack.c.l.b16 %v229
      %v2868 = vunpack.c.l.b16 %v230
      %v2869 = vunpack.c.l.b16 %v232
      %v2870 = vunpack.c.l.b16 %v233
      %v2871 = vunpack.c.l.b16 %v234
      %v2872 = vunpack.c.l.b16 %v235
      %v2873 = vunpack.c.l.b16 %v237
      %v2874 = vunpack.c.l.b16 %v238
      %v2875 = vunpack.c.l.b16 %v239
      %v2876 = vunpack.c.l.b16 %v240
      %v2877 = vunpack.c.l.b16 %v242
      %v2878 = vunpack.c.l.b16 %v243
      %v2879 = vunpack.c.l.b16 %v244
      %v2880 = vunpack.c.l.b16 %v245
      %v2881 = vunpack.c.l.b16 %v247
      %v2882 = vunpack.c.l.b16 %v248
      %v2883 = vunpack.c.l.b16 %v249
      %v2884 = vunpack.c.l.b16 %v250
      %v2885 = vunpack.c.l.b16 %v252
      %v2886 = vunpack.c.l.b16 %v253
      %v2887 = vunpack.c.l.b16 %v254
      %v2888 = vunpack.c.l.b16 %v255
      %v2889 = vunpack.c.l.b16 %v257
      %v2890 = vunpack.c.l.b16 %v258
      %v2891 = vunpack.c.l.b16 %v259
      %v2892 = vunpack.c.l.b16 %v260
      %v2893 = vunpack.c.l.b16 %v262
      %v2894 = vunpack.c.l.b16 %v263
      %v2895 = vunpack.c.l.b16 %v264
      %v2896 = vunpack.c.l.b16 %v265
      %v2897 = vunpack.c.l.b16 %v267
      %v2898 = vunpack.c.l.b16 %v268
      %v2899 = vunpack.c.l.b16 %v269
      %v2900 = vunpack.c.l.b16 %v270
      %v2901 = vunpack.c.l.b16 %v272
      %v2902 = vunpack.c.l.b16 %v273
      %v2903 = vunpack.c.l.b16 %v274
      %v2904 = vunpack.c.l.b16 %v275
      %v2905 = vunpack.c.l.b16 %v277
      %v2906 = vunpack.c.l.b16 %v278
      %v2907 = vunpack.c.l.b16 %v279
      %v2908 = vunpack.c.l.b16 %v280
      %v2909 = vunpack.c.l.b16 %v282
      %v2910 = vunpack.c.l.b16 %v283
      %v2911 = vunpack.c.l.b16 %v284
      %v2912 = vunpack.c.l.b16 %v285
      %v2913 = vunpack.c.l.b16 %v287
      %v2914 = vunpack.c.l.b16 %v288
      %v2915 = vunpack.c.l.b16 %v289
      %v2916 = vunpack.c.l.b16 %v290
      %v2917 = vunpack.c.l.b16 %v292
      %v2918 = vunpack.c.l.b16 %v293
      %v2919 = vunpack.c.l.b16 %v294
      %v2920 = vunpack.c.l.b16 %v295
      %v2921 = vunpack.c.l.b16 %v297
      %v2922 = vunpack.c.l.b16 %v298
      %v2923 = vunpack.c.l.b16 %v299
      %v2924 = vunpack.c.l.b16 %v300
      %v2925 = vunpack.c.l.b16 %v302
      %v2926 = vunpack.c.l.b16 %v303
      %v2927 = vunpack.c.l.b16 %v304
      %v2928 = vunpack.c.l.b16 %v305
      %v2929 = vunpack.c.l.b16 %v307
      %v2930 = vunpack.c.l.b16 %v308
      %v2931 = vunpack.c.l.b16 %v309
      %v2932 = vunpack.c.l.b16 %v310
      %v2933 = vunpack.c.l.b16 %v312
      %v2934 = vunpack.c.l.b16 %v313
      %v2935 = vunpack.c.l.b16 %v314
      %v2936 = vunpack.c.l.b16 %v315
      %v2937 = vunpack.c.l.b16 %v317
      %v2938 = vunpack.c.l.b16 %v318
      %v2939 = vunpack.c.l.b16 %v319
      %v2940 = vunpack.c.l.b16 %v320
      %v2941 = vunpack.c.l.b16 %v322
      %v2942 = vunpack.c.l.b16 %v323
      %v2943 = vunpack.c.l.b16 %v324
      %v2944 = vunpack.c.l.b16 %v325
      %v2945 = vunpack.c.l.b16 %v327
      %v2946 = vunpack.c.l.b16 %v328
      %v2947 = vunpack.c.l.b16 %v329
      %v2948 = vunpack.c.l.b16 %v330
      %v2949 = vpack.c.b16 %v2822, %v2821
      %v2950 = vpack.c.b16 %v2824, %v2823
      %v2951 = vpack.c.b16 %v2826, %v2825
      %v2952 = vpack.c.b16 %v2828, %v2827
      %v2953 = vpack.c.b16 %v2830, %v2829
      %v2954 = vpack.c.b16 %v2832, %v2831
      %v2955 = vpack.c.b16 %v2834, %v2833
      %v2956 = vpack.c.b16 %v2836, %v2835
      %v2957 = vpack.c.b16 %v2838, %v2837
      %v2958 = vpack.c.b16 %v2840, %v2839
      %v2959 = vpack.c.b16 %v2842, %v2841
      %v2960 = vpack.c.b16 %v2844, %v2843
      %v2961 = vpack.c.b16 %v2846, %v2845
      %v2962 = vpack.c.b16 %v2848, %v2847
      %v2963 = vpack.c.b16 %v2850, %v2849
      %v2964 = vpack.c.b16 %v2852, %v2851
      %v2965 = vpack.c.b16 %v2854, %v2853
      %v2966 = vpack.c.b16 %v2856, %v2855
      %v2967 = vpack.c.b16 %v2858, %v2857
      %v2968 = vpack.c.b16 %v2860, %v2859
      %v2969 = vpack.c.b16 %v2862, %v2861
      %v2970 = vpack.c.b16 %v2864, %v2863
      %v2971 = vpack.c.b16 %v2866, %v2865
      %v2972 = vpack.c.b16 %v2868, %v2867
      %v2973 = vpack.c.b16 %v2870, %v2869
      %v2974 = vpack.c.b16 %v2872, %v2871
      %v2975 = vpack.c.b16 %v2874, %v2873
      %v2976 = vpack.c.b16 %v2876, %v2875
      %v2977 = vpack.c.b16 %v2878, %v2877
      %v2978 = vpack.c.b16 %v2880, %v2879
      %v2979 = vpack.c.b16 %v2882, %v2881
      %v2980 = vpack.c.b16 %v2884, %v2883
      %v2981 = vpack.c.b16 %v2886, %v2885
      %v2982 = vpack.c.b16 %v2888, %v2887
      %v2983 = vpack.c.b16 %v2890, %v2889
      %v2984 = vpack.c.b16 %v2892, %v2891
      %v2985 = vpack.c.b16 %v2894, %v2893
      %v2986 = vpack.c.b16 %v2896, %v2895
      %v2987 = vpack.c.b16 %v2898, %v2897
      %v2988 = vpack.c.b16 %v2900, %v2899
      %v2989 = vpack.c.b16 %v2902, %v2901
      %v2990 = vpack.c.b16 %v2904, %v2903
      %v2991 = vpack.c.b16 %v2906, %v2905
      %v2992 = vpack.c.b16 %v2908, %v2907
      %v2993 = vpack.c.b16 %v2910, %v2909
      %v2994 = vpack.c.b16 %v2912, %v2911
      %v2995 = vpack.c.b16 %v2914, %v2913
      %v2996 = vpack.c.b16 %v2916, %v2915
      %v2997 = vpack.c.b16 %v2918, %v2917
      %v2998 = vpack.c.b16 %v2920, %v2919
      %v2999 = vpack.c.b16 %v2922, %v2921
      %v3000 = vpack.c.b16 %v2924, %v2923
      %v3001 = vpack.c.b16 %v2926, %v2925
      %v3002 = vpack.c.b16 %v2928, %v2927
      %v3003 = vpack.c.b16 %v2930, %v2929
      %v3004 = vpack.c.b16 %v2932, %v2931
      %v3005 = vpack.c.b16 %v2934, %v2933
      %v3006 = vpack.c.b16 %v2936, %v2935
      %v3007 = vpack.c.b16 %v2938, %v2937
      %v3008 = vpack.c.b16 %v2940, %v2939
      %v3009 = vpack.c.b16 %v2942, %v2941
      %v3010 = vpack.c.b16 %v2944, %v2943
      %v3011 = vpack.c.b16 %v2946, %v2945
      %v3012 = vpack.c.b16 %v2948, %v2947
      %v3014 = vsel %vm1948, %v2949, 0
      %v3017 = vsel %vm1948, %v2950, 0
      %v3020 = vsel %vm1948, %v2951, 0
      %v3023 = vsel %vm1948, %v2952, 0
      %v3026 = vsel %vm1948, %v2953, 0
      %v3029 = vsel %vm1948, %v2954, 0
      %v3032 = vsel %vm1948, %v2955, 0
      %v3035 = vsel %vm1948, %v2956, 0
      %v3038 = vsel %vm1948, %v2957, 0
      %v3041 = vsel %vm1948, %v2958, 0
      %v3044 = vsel %vm1948, %v2959, 0
      %v3047 = vsel %vm1948, %v2960, 0
      %v3050 = vsel %vm1948, %v2961, 0
      %v3053 = vsel %vm1948, %v2962, 0
      %v3056 = vsel %vm1948, %v2963, 0
      %v3059 = vsel %vm1948, %v2964, 0
      %v3062 = vsel %vm1948, %v2965, 0
      %v3065 = vsel %vm1948, %v2966, 0
      %v3068 = vsel %vm1948, %v2967, 0
      %v3071 = vsel %vm1948, %v2968, 0
      %v3074 = vsel %vm1948, %v2969, 0
      %v3077 = vsel %vm1948, %v2970, 0
      %v3080 = vsel %vm1948, %v2971, 0
      %v3083 = vsel %vm1948, %v2972, 0
      %v3086 = vsel %vm1948, %v2973, 0
      %v3089 = vsel %vm1948, %v2974, 0
      %v3092 = vsel %vm1948, %v2975, 0
      %v3095 = vsel %vm1948, %v2976, 0
      %v3098 = vsel %vm1948, %v2977, 0
      %v3101 = vsel %vm1948, %v2978, 0
      %v3104 = vsel %vm1948, %v2979, 0
      %v3107 = vsel %vm1948, %v2980, 0
      %v3110 = vsel %vm1948, %v2981, 0
      %v3113 = vsel %vm1948, %v2982, 0
      %v3116 = vsel %vm1948, %v2983, 0
      %v3119 = vsel %vm1948, %v2984, 0
      %v3122 = vsel %vm1948, %v2985, 0
      %v3125 = vsel %vm1948, %v2986, 0
      %v3128 = vsel %vm1948, %v2987, 0
      %v3131 = vsel %vm1948, %v2988, 0
      %v3134 = vsel %vm1948, %v2989, 0
      %v3137 = vsel %vm1948, %v2990, 0
      %v3140 = vsel %vm1948, %v2991, 0
      %v3143 = vsel %vm1948, %v2992, 0
      %v3146 = vsel %vm1948, %v2993, 0
      %v3149 = vsel %vm1948, %v2994, 0
      %v3152 = vsel %vm1948, %v2995, 0
      %v3155 = vsel %vm1948, %v2996, 0
      %v3158 = vsel %vm1948, %v2997, 0
      %v3161 = vsel %vm1948, %v2998, 0
      %v3164 = vsel %vm1948, %v2999, 0
      %v3167 = vsel %vm1948, %v3000, 0
      %v3170 = vsel %vm1948, %v3001, 0
      %v3173 = vsel %vm1948, %v3002, 0
      %v3176 = vsel %vm1948, %v3003, 0
      %v3179 = vsel %vm1948, %v3004, 0
      %v3182 = vsel %vm1948, %v3005, 0
      %v3185 = vsel %vm1948, %v3006, 0
      %v3188 = vsel %vm1948, %v3007, 0
      %v3191 = vsel %vm1948, %v3008, 0
      %v3194 = vsel %vm1948, %v3009, 0
      %v3197 = vsel %vm1948, %v3010, 0
      %v3200 = vsel %vm1948, %v3011, 0
      %v3203 = vsel %vm1948, %v3012, 0
      %v3206 = vand.u32 %v342, %v2144
      %3208 = vmatprep.subr.bf16.mxu0 0
      %3209 = vmatpush1.bf16.msra.mxu0 %v3206
      %3210 = vmatprep.subr.bf16.mxu0 0
      %3211 = vmatpush1.bf16.msra.mxu0 0
      %3212 = vmatprep.subr.bf16.mxu0 0
      %3213 = vmatpush1.bf16.msra.mxu0 0
      %3214 = vmatprep.subr.bf16.mxu0 0
      %3215 = vmatpush1.bf16.msra.mxu0 0
      %3216 = vmatprep.subr.bf16.mxu0 0
      %3217 = vmatpush1.bf16.msra.mxu0 0
      %3218 = vmatprep.subr.bf16.mxu0 0
      %3219 = vmatpush1.bf16.msra.mxu0 0
      %3220 = vmatprep.subr.bf16.mxu0 0
      %3221 = vmatpush1.bf16.msra.mxu0 0
      %3222 = vmatprep.subr.bf16.mxu0 0
      %3223 = vmatpush1.bf16.msra.mxu0 0
      %3224 = vmatprep.subr.bf16.mxu0 0
      %3225 = vmatpush1.bf16.msra.mxu0 0
      %3226 = vmatprep.subr.bf16.mxu0 0
      %3227 = vmatpush1.bf16.msra.mxu0 0
      %3228 = vmatprep.subr.bf16.mxu0 0
      %3229 = vmatpush1.bf16.msra.mxu0 0
      %3230 = vmatprep.subr.bf16.mxu0 0
      %3231 = vmatpush1.bf16.msra.mxu0 0
      %3232 = vmatprep.subr.bf16.mxu0 0
      %3233 = vmatpush1.bf16.msra.mxu0 0
      %3234 = vmatprep.subr.bf16.mxu0 0
      %3235 = vmatpush1.bf16.msra.mxu0 0
      %3236 = vmatprep.subr.bf16.mxu0 0
      %3237 = vmatpush1.bf16.msra.mxu0 0
      %3238 = vmatprep.subr.bf16.mxu0 0
      %3239 = vmatpush1.bf16.msra.mxu0 0
      %3240 = vmatprep.mubr.bf16.mxu0 0
      %3241 = vmatmul.mubr.bf16.gmra.mrb[0].mxu0 %v3014
      %v3242 = vpop.f32.mrb[0].mxu0
      %v3243 = vadd.f32 %v2183, %v3242
      %v3244 = vpop.f32.mrb[0].mxu0
      %v3245 = vpop.f32.mrb[0].mxu0
      %v3246 = vadd.f32 %v2186, %v3245
      %v3247 = vpop.f32.mrb[0].mxu0
      %3248 = vmatprep.mubr.bf16.mxu0 0
      %3249 = vmatmul.mubr.bf16.gmra.mrb[0].mxu0 %v3017
      %v3250 = vpop.f32.mrb[0].mxu0
      %v3251 = vadd.f32 %v2191, %v3250
      %v3252 = vpop.f32.mrb[0].mxu0
      %v3253 = vpop.f32.mrb[0].mxu0
      %v3254 = vadd.f32 %v2194, %v3253
      %v3255 = vpop.f32.mrb[0].mxu0
      %3256 = vmatprep.mubr.bf16.mxu0 0
      %3257 = vmatmul.mubr.bf16.gmra.mrb[0].mxu0 %v3020
      %v3258 = vpop.f32.mrb[0].mxu0
      %v3259 = vadd.f32 %v2199, %v3258
      %v3260 = vpop.f32.mrb[0].mxu0
      %v3261 = vpop.f32.mrb[0].mxu0
      %v3262 = vadd.f32 %v2202, %v3261
      %v3263 = vpop.f32.mrb[0].mxu0
      %3264 = vmatprep.mubr.bf16.mxu0 0
      %3265 = vmatmul.mubr.bf16.gmra.mrb[0].mxu0 %v3023
      %v3266 = vpop.f32.mrb[0].mxu0
      %v3267 = vadd.f32 %v2207, %v3266
      %v3268 = vpop.f32.mrb[0].mxu0
      %v3269 = vpop.f32.mrb[0].mxu0
      %v3270 = vadd.f32 %v2210, %v3269
      %v3271 = vpop.f32.mrb[0].mxu0
      %3272 = vmatprep.mubr.bf16.mxu0 0
      %3273 = vmatmul.mubr.bf16.gmra.mrb[0].mxu0 %v3026
      %v3274 = vpop.f32.mrb[0].mxu0
      %v3275 = vadd.f32 %v2215, %v3274
      %v3276 = vpop.f32.mrb[0].mxu0
      %v3277 = vpop.f32.mrb[0].mxu0
      %v3278 = vadd.f32 %v2218, %v3277
      %v3279 = vpop.f32.mrb[0].mxu0
      %3280 = vmatprep.mubr.bf16.mxu0 0
      %3281 = vmatmul.mubr.bf16.gmra.mrb[0].mxu0 %v3029
      %v3282 = vpop.f32.mrb[0].mxu0
      %v3283 = vadd.f32 %v2223, %v3282
      %v3284 = vpop.f32.mrb[0].mxu0
      %v3285 = vpop.f32.mrb[0].mxu0
      %v3286 = vadd.f32 %v2226, %v3285
      %v3287 = vpop.f32.mrb[0].mxu0
      %3288 = vmatprep.mubr.bf16.mxu0 0
      %3289 = vmatmul.mubr.bf16.gmra.mrb[0].mxu0 %v3032
      %v3290 = vpop.f32.mrb[0].mxu0
      %v3291 = vadd.f32 %v2231, %v3290
      %v3292 = vpop.f32.mrb[0].mxu0
      %v3293 = vpop.f32.mrb[0].mxu0
      %v3294 = vadd.f32 %v2234, %v3293
      %v3295 = vpop.f32.mrb[0].mxu0
      %3296 = vmatprep.mubr.bf16.mxu0 0
      %3297 = vmatmul.mubr.bf16.gmra.mrb[0].mxu0 %v3035
      %v3298 = vpop.f32.mrb[0].mxu0
      %v3299 = vadd.f32 %v2239, %v3298
      %v3300 = vpop.f32.mrb[0].mxu0
      %v3301 = vpop.f32.mrb[0].mxu0
      %v3302 = vadd.f32 %v2242, %v3301
      %v3303 = vpop.f32.mrb[0].mxu0
      %3304 = vmatprep.mubr.bf16.mxu0 0
      %3305 = vmatmul.mubr.bf16.gmra.mrb[0].mxu0 %v3038
      %v3306 = vpop.f32.mrb[0].mxu0
      %v3307 = vadd.f32 %v2247, %v3306
      %v3308 = vpop.f32.mrb[0].mxu0
      %v3309 = vpop.f32.mrb[0].mxu0
      %v3310 = vadd.f32 %v2250, %v3309
      %v3311 = vpop.f32.mrb[0].mxu0
      %3312 = vmatprep.mubr.bf16.mxu0 0
      %3313 = vmatmul.mubr.bf16.gmra.mrb[0].mxu0 %v3041
      %v3314 = vpop.f32.mrb[0].mxu0
      %v3315 = vadd.f32 %v2255, %v3314
      %v3316 = vpop.f32.mrb[0].mxu0
      %v3317 = vpop.f32.mrb[0].mxu0
      %v3318 = vadd.f32 %v2258, %v3317
      %v3319 = vpop.f32.mrb[0].mxu0
      %3320 = vmatprep.mubr.bf16.mxu0 0
      %3321 = vmatmul.mubr.bf16.gmra.mrb[0].mxu0 %v3044
      %v3322 = vpop.f32.mrb[0].mxu0
      %v3323 = vadd.f32 %v2263, %v3322
      %v3324 = vpop.f32.mrb[0].mxu0
      %v3325 = vpop.f32.mrb[0].mxu0
      %v3326 = vadd.f32 %v2266, %v3325
      %v3327 = vpop.f32.mrb[0].mxu0
      %3328 = vmatprep.mubr.bf16.mxu0 0
      %3329 = vmatmul.mubr.bf16.gmra.mrb[0].mxu0 %v3047
      %v3330 = vpop.f32.mrb[0].mxu0
      %v3331 = vadd.f32 %v2271, %v3330
      %v3332 = vpop.f32.mrb[0].mxu0
      %v3333 = vpop.f32.mrb[0].mxu0
      %v3334 = vadd.f32 %v2274, %v3333
      %v3335 = vpop.f32.mrb[0].mxu0
      %3336 = vmatprep.mubr.bf16.mxu0 0
      %3337 = vmatmul.mubr.bf16.gmra.mrb[0].mxu0 %v3050
      %v3338 = vpop.f32.mrb[0].mxu0
      %v3339 = vadd.f32 %v2279, %v3338
      %v3340 = vpop.f32.mrb[0].mxu0
      %v3341 = vpop.f32.mrb[0].mxu0
      %v3342 = vadd.f32 %v2282, %v3341
      %v3343 = vpop.f32.mrb[0].mxu0
      %3344 = vmatprep.mubr.bf16.mxu0 0
      %3345 = vmatmul.mubr.bf16.gmra.mrb[0].mxu0 %v3053
      %v3346 = vpop.f32.mrb[0].mxu0
      %v3347 = vadd.f32 %v2287, %v3346
      %v3348 = vpop.f32.mrb[0].mxu0
      %v3349 = vpop.f32.mrb[0].mxu0
      %v3350 = vadd.f32 %v2290, %v3349
      %v3351 = vpop.f32.mrb[0].mxu0
      %3352 = vmatprep.mubr.bf16.mxu0 0
      %3353 = vmatmul.mubr.bf16.gmra.mrb[0].mxu0 %v3056
      %v3354 = vpop.f32.mrb[0].mxu0
      %v3355 = vadd.f32 %v2295, %v3354
      %v3356 = vpop.f32.mrb[0].mxu0
      %v3357 = vpop.f32.mrb[0].mxu0
      %v3358 = vadd.f32 %v2298, %v3357
      %v3359 = vpop.f32.mrb[0].mxu0
      %3360 = vmatprep.mubr.bf16.mxu0 0
      %3361 = vmatmul.mubr.bf16.gmra.mrb[0].mxu0 %v3059
      %v3362 = vpop.f32.mrb[0].mxu0
      %v3363 = vadd.f32 %v2303, %v3362
      %v3364 = vpop.f32.mrb[0].mxu0
      %v3365 = vpop.f32.mrb[0].mxu0
      %v3366 = vadd.f32 %v2306, %v3365
      %v3367 = vpop.f32.mrb[0].mxu0
      %3368 = vmatprep.mubr.bf16.mxu0 0
      %3369 = vmatmul.mubr.bf16.gmra.mrb[0].mxu0 %v3062
      %v3370 = vpop.f32.mrb[0].mxu0
      %v3371 = vadd.f32 %v2311, %v3370
      %v3372 = vpop.f32.mrb[0].mxu0
      %v3373 = vpop.f32.mrb[0].mxu0
      %v3374 = vadd.f32 %v2314, %v3373
      %v3375 = vpop.f32.mrb[0].mxu0
      %3376 = vmatprep.mubr.bf16.mxu0 0
      %3377 = vmatmul.mubr.bf16.gmra.mrb[0].mxu0 %v3065
      %v3378 = vpop.f32.mrb[0].mxu0
      %v3379 = vadd.f32 %v2319, %v3378
      %v3380 = vpop.f32.mrb[0].mxu0
      %v3381 = vpop.f32.mrb[0].mxu0
      %v3382 = vadd.f32 %v2322, %v3381
      %v3383 = vpop.f32.mrb[0].mxu0
      %3384 = vmatprep.mubr.bf16.mxu0 0
      %3385 = vmatmul.mubr.bf16.gmra.mrb[0].mxu0 %v3068
      %v3386 = vpop.f32.mrb[0].mxu0
      %v3387 = vadd.f32 %v2327, %v3386
      %v3388 = vpop.f32.mrb[0].mxu0
      %v3389 = vpop.f32.mrb[0].mxu0
      %v3390 = vadd.f32 %v2330, %v3389
      %v3391 = vpop.f32.mrb[0].mxu0
      %3392 = vmatprep.mubr.bf16.mxu0 0
      %3393 = vmatmul.mubr.bf16.gmra.mrb[0].mxu0 %v3071
      %v3394 = vpop.f32.mrb[0].mxu0
      %v3395 = vadd.f32 %v2335, %v3394
      %v3396 = vpop.f32.mrb[0].mxu0
      %v3397 = vpop.f32.mrb[0].mxu0
      %v3398 = vadd.f32 %v2338, %v3397
      %v3399 = vpop.f32.mrb[0].mxu0
      %3400 = vmatprep.mubr.bf16.mxu0 0
      %3401 = vmatmul.mubr.bf16.gmra.mrb[0].mxu0 %v3074
      %v3402 = vpop.f32.mrb[0].mxu0
      %v3403 = vadd.f32 %v2343, %v3402
      %v3404 = vpop.f32.mrb[0].mxu0
      %v3405 = vpop.f32.mrb[0].mxu0
      %v3406 = vadd.f32 %v2346, %v3405
      %v3407 = vpop.f32.mrb[0].mxu0
      %3408 = vmatprep.mubr.bf16.mxu0 0
      %3409 = vmatmul.mubr.bf16.gmra.mrb[0].mxu0 %v3077
      %v3410 = vpop.f32.mrb[0].mxu0
      %v3411 = vadd.f32 %v2351, %v3410
      %v3412 = vpop.f32.mrb[0].mxu0
      %v3413 = vpop.f32.mrb[0].mxu0
      %v3414 = vadd.f32 %v2354, %v3413
      %v3415 = vpop.f32.mrb[0].mxu0
      %3416 = vmatprep.mubr.bf16.mxu0 0
      %3417 = vmatmul.mubr.bf16.gmra.mrb[0].mxu0 %v3080
      %v3418 = vpop.f32.mrb[0].mxu0
      %v3419 = vadd.f32 %v2359, %v3418
      %v3420 = vpop.f32.mrb[0].mxu0
      %v3421 = vpop.f32.mrb[0].mxu0
      %v3422 = vadd.f32 %v2362, %v3421
      %v3423 = vpop.f32.mrb[0].mxu0
      %3424 = vmatprep.mubr.bf16.mxu0 0
      %3425 = vmatmul.mubr.bf16.gmra.mrb[0].mxu0 %v3083
      %v3426 = vpop.f32.mrb[0].mxu0
      %v3427 = vadd.f32 %v2367, %v3426
      %v3428 = vpop.f32.mrb[0].mxu0
      %v3429 = vpop.f32.mrb[0].mxu0
      %v3430 = vadd.f32 %v2370, %v3429
      %v3431 = vpop.f32.mrb[0].mxu0
      %3432 = vmatprep.mubr.bf16.mxu0 0
      %3433 = vmatmul.mubr.bf16.gmra.mrb[0].mxu0 %v3086
      %v3434 = vpop.f32.mrb[0].mxu0
      %v3435 = vadd.f32 %v2375, %v3434
      %v3436 = vpop.f32.mrb[0].mxu0
      %v3437 = vpop.f32.mrb[0].mxu0
      %v3438 = vadd.f32 %v2378, %v3437
      %v3439 = vpop.f32.mrb[0].mxu0
      %3440 = vmatprep.mubr.bf16.mxu0 0
      %3441 = vmatmul.mubr.bf16.gmra.mrb[0].mxu0 %v3089
      %v3442 = vpop.f32.mrb[0].mxu0
      %v3443 = vadd.f32 %v2383, %v3442
      %v3444 = vpop.f32.mrb[0].mxu0
      %v3445 = vpop.f32.mrb[0].mxu0
      %v3446 = vadd.f32 %v2386, %v3445
      %v3447 = vpop.f32.mrb[0].mxu0
      %3448 = vmatprep.mubr.bf16.mxu0 0
      %3449 = vmatmul.mubr.bf16.gmra.mrb[0].mxu0 %v3092
      %v3450 = vpop.f32.mrb[0].mxu0
      %v3451 = vadd.f32 %v2391, %v3450
      %v3452 = vpop.f32.mrb[0].mxu0
      %v3453 = vpop.f32.mrb[0].mxu0
      %v3454 = vadd.f32 %v2394, %v3453
      %v3455 = vpop.f32.mrb[0].mxu0
      %3456 = vmatprep.mubr.bf16.mxu0 0
      %3457 = vmatmul.mubr.bf16.gmra.mrb[0].mxu0 %v3095
      %v3458 = vpop.f32.mrb[0].mxu0
      %v3459 = vadd.f32 %v2399, %v3458
      %v3460 = vpop.f32.mrb[0].mxu0
      %v3461 = vpop.f32.mrb[0].mxu0
      %v3462 = vadd.f32 %v2402, %v3461
      %v3463 = vpop.f32.mrb[0].mxu0
      %3464 = vmatprep.mubr.bf16.mxu0 0
      %3465 = vmatmul.mubr.bf16.gmra.mrb[0].mxu0 %v3098
      %v3466 = vpop.f32.mrb[0].mxu0
      %v3467 = vadd.f32 %v2407, %v3466
      %v3468 = vpop.f32.mrb[0].mxu0
      %v3469 = vpop.f32.mrb[0].mxu0
      %v3470 = vadd.f32 %v2410, %v3469
      %v3471 = vpop.f32.mrb[0].mxu0
      %3472 = vmatprep.mubr.bf16.mxu0 0
      %3473 = vmatmul.mubr.bf16.gmra.mrb[0].mxu0 %v3101
      %v3474 = vpop.f32.mrb[0].mxu0
      %v3475 = vadd.f32 %v2415, %v3474
      %v3476 = vpop.f32.mrb[0].mxu0
      %v3477 = vpop.f32.mrb[0].mxu0
      %v3478 = vadd.f32 %v2418, %v3477
      %v3479 = vpop.f32.mrb[0].mxu0
      %3480 = vmatprep.mubr.bf16.mxu0 0
      %3481 = vmatmul.mubr.bf16.gmra.mrb[0].mxu0 %v3104
      %v3482 = vpop.f32.mrb[0].mxu0
      %v3483 = vadd.f32 %v2423, %v3482
      %v3484 = vpop.f32.mrb[0].mxu0
      %v3485 = vpop.f32.mrb[0].mxu0
      %v3486 = vadd.f32 %v2426, %v3485
      %v3487 = vpop.f32.mrb[0].mxu0
      %3488 = vmatprep.mubr.bf16.mxu0 0
      %3489 = vmatmul.mubr.bf16.gmra.mrb[0].mxu0 %v3107
      %v3490 = vpop.f32.mrb[0].mxu0
      %v3491 = vadd.f32 %v2431, %v3490
      %v3492 = vpop.f32.mrb[0].mxu0
      %v3493 = vpop.f32.mrb[0].mxu0
      %v3494 = vadd.f32 %v2434, %v3493
      %v3495 = vpop.f32.mrb[0].mxu0
      %3496 = vmatprep.mubr.bf16.mxu0 0
      %3497 = vmatmul.mubr.bf16.gmra.mrb[0].mxu0 %v3110
      %v3498 = vpop.f32.mrb[0].mxu0
      %v3499 = vadd.f32 %v2439, %v3498
      %v3500 = vpop.f32.mrb[0].mxu0
      %v3501 = vpop.f32.mrb[0].mxu0
      %v3502 = vadd.f32 %v2442, %v3501
      %v3503 = vpop.f32.mrb[0].mxu0
      %3504 = vmatprep.mubr.bf16.mxu0 0
      %3505 = vmatmul.mubr.bf16.gmra.mrb[0].mxu0 %v3113
      %v3506 = vpop.f32.mrb[0].mxu0
      %v3507 = vadd.f32 %v2447, %v3506
      %v3508 = vpop.f32.mrb[0].mxu0
      %v3509 = vpop.f32.mrb[0].mxu0
      %v3510 = vadd.f32 %v2450, %v3509
      %v3511 = vpop.f32.mrb[0].mxu0
      %3512 = vmatprep.mubr.bf16.mxu0 0
      %3513 = vmatmul.mubr.bf16.gmra.mrb[0].mxu0 %v3116
      %v3514 = vpop.f32.mrb[0].mxu0
      %v3515 = vadd.f32 %v2455, %v3514
      %v3516 = vpop.f32.mrb[0].mxu0
      %v3517 = vpop.f32.mrb[0].mxu0
      %v3518 = vadd.f32 %v2458, %v3517
      %v3519 = vpop.f32.mrb[0].mxu0
      %3520 = vmatprep.mubr.bf16.mxu0 0
      %3521 = vmatmul.mubr.bf16.gmra.mrb[0].mxu0 %v3119
      %v3522 = vpop.f32.mrb[0].mxu0
      %v3523 = vadd.f32 %v2463, %v3522
      %v3524 = vpop.f32.mrb[0].mxu0
      %v3525 = vpop.f32.mrb[0].mxu0
      %v3526 = vadd.f32 %v2466, %v3525
      %v3527 = vpop.f32.mrb[0].mxu0
      %3528 = vmatprep.mubr.bf16.mxu0 0
      %3529 = vmatmul.mubr.bf16.gmra.mrb[0].mxu0 %v3122
      %v3530 = vpop.f32.mrb[0].mxu0
      %v3531 = vadd.f32 %v2471, %v3530
      %v3532 = vpop.f32.mrb[0].mxu0
      %v3533 = vpop.f32.mrb[0].mxu0
      %v3534 = vadd.f32 %v2474, %v3533
      %v3535 = vpop.f32.mrb[0].mxu0
      %3536 = vmatprep.mubr.bf16.mxu0 0
      %3537 = vmatmul.mubr.bf16.gmra.mrb[0].mxu0 %v3125
      %v3538 = vpop.f32.mrb[0].mxu0
      %v3539 = vadd.f32 %v2479, %v3538
      %v3540 = vpop.f32.mrb[0].mxu0
      %v3541 = vpop.f32.mrb[0].mxu0
      %v3542 = vadd.f32 %v2482, %v3541
      %v3543 = vpop.f32.mrb[0].mxu0
      %3544 = vmatprep.mubr.bf16.mxu0 0
      %3545 = vmatmul.mubr.bf16.gmra.mrb[0].mxu0 %v3128
      %v3546 = vpop.f32.mrb[0].mxu0
      %v3547 = vadd.f32 %v2487, %v3546
      %v3548 = vpop.f32.mrb[0].mxu0
      %v3549 = vpop.f32.mrb[0].mxu0
      %v3550 = vadd.f32 %v2490, %v3549
      %v3551 = vpop.f32.mrb[0].mxu0
      %3552 = vmatprep.mubr.bf16.mxu0 0
      %3553 = vmatmul.mubr.bf16.gmra.mrb[0].mxu0 %v3131
      %v3554 = vpop.f32.mrb[0].mxu0
      %v3555 = vadd.f32 %v2495, %v3554
      %v3556 = vpop.f32.mrb[0].mxu0
      %v3557 = vpop.f32.mrb[0].mxu0
      %v3558 = vadd.f32 %v2498, %v3557
      %v3559 = vpop.f32.mrb[0].mxu0
      %3560 = vmatprep.mubr.bf16.mxu0 0
      %3561 = vmatmul.mubr.bf16.gmra.mrb[0].mxu0 %v3134
      %v3562 = vpop.f32.mrb[0].mxu0
      %v3563 = vadd.f32 %v2503, %v3562
      %v3564 = vpop.f32.mrb[0].mxu0
      %v3565 = vpop.f32.mrb[0].mxu0
      %v3566 = vadd.f32 %v2506, %v3565
      %v3567 = vpop.f32.mrb[0].mxu0
      %3568 = vmatprep.mubr.bf16.mxu0 0
      %3569 = vmatmul.mubr.bf16.gmra.mrb[0].mxu0 %v3137
      %v3570 = vpop.f32.mrb[0].mxu0
      %v3571 = vadd.f32 %v2511, %v3570
      %v3572 = vpop.f32.mrb[0].mxu0
      %v3573 = vpop.f32.mrb[0].mxu0
      %v3574 = vadd.f32 %v2514, %v3573
      %v3575 = vpop.f32.mrb[0].mxu0
      %3576 = vmatprep.mubr.bf16.mxu0 0
      %3577 = vmatmul.mubr.bf16.gmra.mrb[0].mxu0 %v3140
      %v3578 = vpop.f32.mrb[0].mxu0
      %v3579 = vadd.f32 %v2519, %v3578
      %v3580 = vpop.f32.mrb[0].mxu0
      %v3581 = vpop.f32.mrb[0].mxu0
      %v3582 = vadd.f32 %v2522, %v3581
      %v3583 = vpop.f32.mrb[0].mxu0
      %3584 = vmatprep.mubr.bf16.mxu0 0
      %3585 = vmatmul.mubr.bf16.gmra.mrb[0].mxu0 %v3143
      %v3586 = vpop.f32.mrb[0].mxu0
      %v3587 = vadd.f32 %v2527, %v3586
      %v3588 = vpop.f32.mrb[0].mxu0
      %v3589 = vpop.f32.mrb[0].mxu0
      %v3590 = vadd.f32 %v2530, %v3589
      %v3591 = vpop.f32.mrb[0].mxu0
      %3592 = vmatprep.mubr.bf16.mxu0 0
      %3593 = vmatmul.mubr.bf16.gmra.mrb[0].mxu0 %v3146
      %v3594 = vpop.f32.mrb[0].mxu0
      %v3595 = vadd.f32 %v2535, %v3594
      %v3596 = vpop.f32.mrb[0].mxu0
      %v3597 = vpop.f32.mrb[0].mxu0
      %v3598 = vadd.f32 %v2538, %v3597
      %v3599 = vpop.f32.mrb[0].mxu0
      %3600 = vmatprep.mubr.bf16.mxu0 0
      %3601 = vmatmul.mubr.bf16.gmra.mrb[0].mxu0 %v3149
      %v3602 = vpop.f32.mrb[0].mxu0
      %v3603 = vadd.f32 %v2543, %v3602
      %v3604 = vpop.f32.mrb[0].mxu0
      %v3605 = vpop.f32.mrb[0].mxu0
      %v3606 = vadd.f32 %v2546, %v3605
      %v3607 = vpop.f32.mrb[0].mxu0
      %3608 = vmatprep.mubr.bf16.mxu0 0
      %3609 = vmatmul.mubr.bf16.gmra.mrb[0].mxu0 %v3152
      %v3610 = vpop.f32.mrb[0].mxu0
      %v3611 = vadd.f32 %v2551, %v3610
      %v3612 = vpop.f32.mrb[0].mxu0
      %v3613 = vpop.f32.mrb[0].mxu0
      %v3614 = vadd.f32 %v2554, %v3613
      %v3615 = vpop.f32.mrb[0].mxu0
      %3616 = vmatprep.mubr.bf16.mxu0 0
      %3617 = vmatmul.mubr.bf16.gmra.mrb[0].mxu0 %v3155
      %v3618 = vpop.f32.mrb[0].mxu0
      %v3619 = vadd.f32 %v2559, %v3618
      %v3620 = vpop.f32.mrb[0].mxu0
      %v3621 = vpop.f32.mrb[0].mxu0
      %v3622 = vadd.f32 %v2562, %v3621
      %v3623 = vpop.f32.mrb[0].mxu0
      %3624 = vmatprep.mubr.bf16.mxu0 0
      %3625 = vmatmul.mubr.bf16.gmra.mrb[0].mxu0 %v3158
      %v3626 = vpop.f32.mrb[0].mxu0
      %v3627 = vadd.f32 %v2567, %v3626
      %v3628 = vpop.f32.mrb[0].mxu0
      %v3629 = vpop.f32.mrb[0].mxu0
      %v3630 = vadd.f32 %v2570, %v3629
      %v3631 = vpop.f32.mrb[0].mxu0
      %3632 = vmatprep.mubr.bf16.mxu0 0
      %3633 = vmatmul.mubr.bf16.gmra.mrb[0].mxu0 %v3161
      %v3634 = vpop.f32.mrb[0].mxu0
      %v3635 = vadd.f32 %v2575, %v3634
      %v3636 = vpop.f32.mrb[0].mxu0
      %v3637 = vpop.f32.mrb[0].mxu0
      %v3638 = vadd.f32 %v2578, %v3637
      %v3639 = vpop.f32.mrb[0].mxu0
      %3640 = vmatprep.mubr.bf16.mxu0 0
      %3641 = vmatmul.mubr.bf16.gmra.mrb[0].mxu0 %v3164
      %v3642 = vpop.f32.mrb[0].mxu0
      %v3643 = vadd.f32 %v2583, %v3642
      %v3644 = vpop.f32.mrb[0].mxu0
      %v3645 = vpop.f32.mrb[0].mxu0
      %v3646 = vadd.f32 %v2586, %v3645
      %v3647 = vpop.f32.mrb[0].mxu0
      %3648 = vmatprep.mubr.bf16.mxu0 0
      %3649 = vmatmul.mubr.bf16.gmra.mrb[0].mxu0 %v3167
      %v3650 = vpop.f32.mrb[0].mxu0
      %v3651 = vadd.f32 %v2591, %v3650
      %v3652 = vpop.f32.mrb[0].mxu0
      %v3653 = vpop.f32.mrb[0].mxu0
      %v3654 = vadd.f32 %v2594, %v3653
      %v3655 = vpop.f32.mrb[0].mxu0
      %3656 = vmatprep.mubr.bf16.mxu0 0
      %3657 = vmatmul.mubr.bf16.gmra.mrb[0].mxu0 %v3170
      %v3658 = vpop.f32.mrb[0].mxu0
      %v3659 = vadd.f32 %v2599, %v3658
      %v3660 = vpop.f32.mrb[0].mxu0
      %v3661 = vpop.f32.mrb[0].mxu0
      %v3662 = vadd.f32 %v2602, %v3661
      %v3663 = vpop.f32.mrb[0].mxu0
      %3664 = vmatprep.mubr.bf16.mxu0 0
      %3665 = vmatmul.mubr.bf16.gmra.mrb[0].mxu0 %v3173
      %v3666 = vpop.f32.mrb[0].mxu0
      %v3667 = vadd.f32 %v2607, %v3666
      %v3668 = vpop.f32.mrb[0].mxu0
      %v3669 = vpop.f32.mrb[0].mxu0
      %v3670 = vadd.f32 %v2610, %v3669
      %v3671 = vpop.f32.mrb[0].mxu0
      %3672 = vmatprep.mubr.bf16.mxu0 0
      %3673 = vmatmul.mubr.bf16.gmra.mrb[0].mxu0 %v3176
      %v3674 = vpop.f32.mrb[0].mxu0
      %v3675 = vadd.f32 %v2615, %v3674
      %v3676 = vpop.f32.mrb[0].mxu0
      %v3677 = vpop.f32.mrb[0].mxu0
      %v3678 = vadd.f32 %v2618, %v3677
      %v3679 = vpop.f32.mrb[0].mxu0
      %3680 = vmatprep.mubr.bf16.mxu0 0
      %3681 = vmatmul.mubr.bf16.gmra.mrb[0].mxu0 %v3179
      %v3682 = vpop.f32.mrb[0].mxu0
      %v3683 = vadd.f32 %v2623, %v3682
      %v3684 = vpop.f32.mrb[0].mxu0
      %v3685 = vpop.f32.mrb[0].mxu0
      %v3686 = vadd.f32 %v2626, %v3685
      %v3687 = vpop.f32.mrb[0].mxu0
      %3688 = vmatprep.mubr.bf16.mxu0 0
      %3689 = vmatmul.mubr.bf16.gmra.mrb[0].mxu0 %v3182
      %v3690 = vpop.f32.mrb[0].mxu0
      %v3691 = vadd.f32 %v2631, %v3690
      %v3692 = vpop.f32.mrb[0].mxu0
      %v3693 = vpop.f32.mrb[0].mxu0
      %v3694 = vadd.f32 %v2634, %v3693
      %v3695 = vpop.f32.mrb[0].mxu0
      %3696 = vmatprep.mubr.bf16.mxu0 0
      %3697 = vmatmul.mubr.bf16.gmra.mrb[0].mxu0 %v3185
      %v3698 = vpop.f32.mrb[0].mxu0
      %v3699 = vadd.f32 %v2639, %v3698
      %v3700 = vpop.f32.mrb[0].mxu0
      %v3701 = vpop.f32.mrb[0].mxu0
      %v3702 = vadd.f32 %v2642, %v3701
      %v3703 = vpop.f32.mrb[0].mxu0
      %3704 = vmatprep.mubr.bf16.mxu0 0
      %3705 = vmatmul.mubr.bf16.gmra.mrb[0].mxu0 %v3188
      %v3706 = vpop.f32.mrb[0].mxu0
      %v3707 = vadd.f32 %v2647, %v3706
      %v3708 = vpop.f32.mrb[0].mxu0
      %v3709 = vpop.f32.mrb[0].mxu0
      %v3710 = vadd.f32 %v2650, %v3709
      %v3711 = vpop.f32.mrb[0].mxu0
      %3712 = vmatprep.mubr.bf16.mxu0 0
      %3713 = vmatmul.mubr.bf16.gmra.mrb[0].mxu0 %v3191
      %v3714 = vpop.f32.mrb[0].mxu0
      %v3715 = vadd.f32 %v2655, %v3714
      %v3716 = vpop.f32.mrb[0].mxu0
      %v3717 = vpop.f32.mrb[0].mxu0
      %v3718 = vadd.f32 %v2658, %v3717
      %v3719 = vpop.f32.mrb[0].mxu0
      %3720 = vmatprep.mubr.bf16.mxu0 0
      %3721 = vmatmul.mubr.bf16.gmra.mrb[0].mxu0 %v3194
      %v3722 = vpop.f32.mrb[0].mxu0
      %v3723 = vadd.f32 %v2663, %v3722
      %v3724 = vpop.f32.mrb[0].mxu0
      %v3725 = vpop.f32.mrb[0].mxu0
      %v3726 = vadd.f32 %v2666, %v3725
      %v3727 = vpop.f32.mrb[0].mxu0
      %3728 = vmatprep.mubr.bf16.mxu0 0
      %3729 = vmatmul.mubr.bf16.gmra.mrb[0].mxu0 %v3197
      %v3730 = vpop.f32.mrb[0].mxu0
      %v3731 = vadd.f32 %v2671, %v3730
      %v3732 = vpop.f32.mrb[0].mxu0
      %v3733 = vpop.f32.mrb[0].mxu0
      %v3734 = vadd.f32 %v2674, %v3733
      %v3735 = vpop.f32.mrb[0].mxu0
      %3736 = vmatprep.mubr.bf16.mxu0 0
      %3737 = vmatmul.mubr.bf16.gmra.mrb[0].mxu0 %v3200
      %v3738 = vpop.f32.mrb[0].mxu0
      %v3739 = vadd.f32 %v2679, %v3738
      %v3740 = vpop.f32.mrb[0].mxu0
      %v3741 = vpop.f32.mrb[0].mxu0
      %v3742 = vadd.f32 %v2682, %v3741
      %v3743 = vpop.f32.mrb[0].mxu0
      %3744 = vmatprep.mubr.bf16.mxu0 0
      %3745 = vmatmul.mubr.bf16.gmra.mrb[0].mxu0 %v3203
      %v3746 = vpop.f32.mrb[0].mxu0
      %v3747 = vadd.f32 %v2687, %v3746
      %v3748 = vpop.f32.mrb[0].mxu0
      %v3749 = vpop.f32.mrb[0].mxu0
      %v3750 = vadd.f32 %v2690, %v3749
      %v3751 = vpop.f32.mrb[0].mxu0
      %3752 = vdwg.mxu0
      %vm3785 = vcmask 1042432
      %vm3786 = vcmask 1046532
      %vm3787 = vmor %vm3785, %vm3786
      %v3788 = vrot.slane %v172, 5
      %v3789 = vrot.slane %v3788, 4
      %v3790 = vrot.slane %v173, 5
      %v3791 = vsel %vm3787, %v3789, %v3790
      %v3792 = vrot.slane %v3790, 4
      %v3793 = vrot.slane %v174, 5
      %v3794 = vsel %vm3787, %v3792, %v3793
      %v3795 = vrot.slane %v3793, 4
      %v3796 = vrot.slane %v175, 5
      %v3797 = vsel %vm3787, %v3795, %v3796
      %v3798 = vrot.slane %v3796, 4
      %v3799 = vrot.slane %v176, 5
      %v3800 = vsel %vm3787, %v3798, %v3799
      %v3801 = vrot.slane %v177, 5
      %v3802 = vrot.slane %v3801, 4
      %v3803 = vrot.slane %v178, 5
      %v3804 = vsel %vm3787, %v3802, %v3803
      %v3805 = vrot.slane %v3803, 4
      %v3806 = vrot.slane %v179, 5
      %v3807 = vsel %vm3787, %v3805, %v3806
      %v3808 = vrot.slane %v3806, 4
      %v3809 = vrot.slane %v180, 5
      %v3810 = vsel %vm3787, %v3808, %v3809
      %v3811 = vrot.slane %v3809, 4
      %v3812 = vrot.slane %v181, 5
      %v3813 = vsel %vm3787, %v3811, %v3812
      %v3814 = vrot.slane %v182, 5
      %v3815 = vrot.slane %v3814, 4
      %v3816 = vrot.slane %v183, 5
      %v3817 = vsel %vm3787, %v3815, %v3816
      %v3818 = vrot.slane %v3816, 4
      %v3819 = vrot.slane %v184, 5
      %v3820 = vsel %vm3787, %v3818, %v3819
      %v3821 = vrot.slane %v3819, 4
      %v3822 = vrot.slane %v185, 5
      %v3823 = vsel %vm3787, %v3821, %v3822
      %v3824 = vrot.slane %v3822, 4
      %v3825 = vrot.slane %v186, 5
      %v3826 = vsel %vm3787, %v3824, %v3825
      %v3827 = vrot.slane %v187, 5
      %v3828 = vrot.slane %v3827, 4
      %v3829 = vrot.slane %v188, 5
      %v3830 = vsel %vm3787, %v3828, %v3829
      %v3831 = vrot.slane %v3829, 4
      %v3832 = vrot.slane %v189, 5
      %v3833 = vsel %vm3787, %v3831, %v3832
      %v3834 = vrot.slane %v3832, 4
      %v3835 = vrot.slane %v190, 5
      %v3836 = vsel %vm3787, %v3834, %v3835
      %v3837 = vrot.slane %v3835, 4
      %v3838 = vrot.slane %v191, 5
      %v3839 = vsel %vm3787, %v3837, %v3838
      %v3840 = vrot.slane %v192, 5
      %v3841 = vrot.slane %v3840, 4
      %v3842 = vrot.slane %v193, 5
      %v3843 = vsel %vm3787, %v3841, %v3842
      %v3844 = vrot.slane %v3842, 4
      %v3845 = vrot.slane %v194, 5
      %v3846 = vsel %vm3787, %v3844, %v3845
      %v3847 = vrot.slane %v3845, 4
      %v3848 = vrot.slane %v195, 5
      %v3849 = vsel %vm3787, %v3847, %v3848
      %v3850 = vrot.slane %v3848, 4
      %v3851 = vrot.slane %v196, 5
      %v3852 = vsel %vm3787, %v3850, %v3851
      %v3853 = vrot.slane %v197, 5
      %v3854 = vrot.slane %v3853, 4
      %v3855 = vrot.slane %v198, 5
      %v3856 = vsel %vm3787, %v3854, %v3855
      %v3857 = vrot.slane %v3855, 4
      %v3858 = vrot.slane %v199, 5
      %v3859 = vsel %vm3787, %v3857, %v3858
      %v3860 = vrot.slane %v3858, 4
      %v3861 = vrot.slane %v200, 5
      %v3862 = vsel %vm3787, %v3860, %v3861
      %v3863 = vrot.slane %v3861, 4
      %v3864 = vrot.slane %v201, 5
      %v3865 = vsel %vm3787, %v3863, %v3864
      %v3866 = vrot.slane %v202, 5
      %v3867 = vrot.slane %v3866, 4
      %v3868 = vrot.slane %v203, 5
      %v3869 = vsel %vm3787, %v3867, %v3868
      %v3870 = vrot.slane %v3868, 4
      %v3871 = vrot.slane %v204, 5
      %v3872 = vsel %vm3787, %v3870, %v3871
      %v3873 = vrot.slane %v3871, 4
      %v3874 = vrot.slane %v205, 5
      %v3875 = vsel %vm3787, %v3873, %v3874
      %v3876 = vrot.slane %v3874, 4
      %v3877 = vrot.slane %v206, 5
      %v3878 = vsel %vm3787, %v3876, %v3877
      %v3879 = vrot.slane %v207, 5
      %v3880 = vrot.slane %v3879, 4
      %v3881 = vrot.slane %v208, 5
      %v3882 = vsel %vm3787, %v3880, %v3881
      %v3883 = vrot.slane %v3881, 4
      %v3884 = vrot.slane %v209, 5
      %v3885 = vsel %vm3787, %v3883, %v3884
      %v3886 = vrot.slane %v3884, 4
      %v3887 = vrot.slane %v210, 5
      %v3888 = vsel %vm3787, %v3886, %v3887
      %v3889 = vrot.slane %v3887, 4
      %v3890 = vrot.slane %v211, 5
      %v3891 = vsel %vm3787, %v3889, %v3890
      %v3892 = vrot.slane %v212, 5
      %v3893 = vrot.slane %v3892, 4
      %v3894 = vrot.slane %v213, 5
      %v3895 = vsel %vm3787, %v3893, %v3894
      %v3896 = vrot.slane %v3894, 4
      %v3897 = vrot.slane %v214, 5
      %v3898 = vsel %vm3787, %v3896, %v3897
      %v3899 = vrot.slane %v3897, 4
      %v3900 = vrot.slane %v215, 5
      %v3901 = vsel %vm3787, %v3899, %v3900
      %v3902 = vrot.slane %v3900, 4
      %v3903 = vrot.slane %v216, 5
      %v3904 = vsel %vm3787, %v3902, %v3903
      %v3905 = vrot.slane %v217, 5
      %v3906 = vrot.slane %v3905, 4
      %v3907 = vrot.slane %v218, 5
      %v3908 = vsel %vm3787, %v3906, %v3907
      %v3909 = vrot.slane %v3907, 4
      %v3910 = vrot.slane %v219, 5
      %v3911 = vsel %vm3787, %v3909, %v3910
      %v3912 = vrot.slane %v3910, 4
      %v3913 = vrot.slane %v220, 5
      %v3914 = vsel %vm3787, %v3912, %v3913
      %v3915 = vrot.slane %v3913, 4
      %v3916 = vrot.slane %v221, 5
      %v3917 = vsel %vm3787, %v3915, %v3916
      %v3918 = vrot.slane %v222, 5
      %v3919 = vrot.slane %v3918, 4
      %v3920 = vrot.slane %v223, 5
      %v3921 = vsel %vm3787, %v3919, %v3920
      %v3922 = vrot.slane %v3920, 4
      %v3923 = vrot.slane %v224, 5
      %v3924 = vsel %vm3787, %v3922, %v3923
      %v3925 = vrot.slane %v3923, 4
      %v3926 = vrot.slane %v225, 5
      %v3927 = vsel %vm3787, %v3925, %v3926
      %v3928 = vrot.slane %v3926, 4
      %v3929 = vrot.slane %v226, 5
      %v3930 = vsel %vm3787, %v3928, %v3929
      %v3931 = vrot.slane %v227, 5
      %v3932 = vrot.slane %v3931, 4
      %v3933 = vrot.slane %v228, 5
      %v3934 = vsel %vm3787, %v3932, %v3933
      %v3935 = vrot.slane %v3933, 4
      %v3936 = vrot.slane %v229, 5
      %v3937 = vsel %vm3787, %v3935, %v3936
      %v3938 = vrot.slane %v3936, 4
      %v3939 = vrot.slane %v230, 5
      %v3940 = vsel %vm3787, %v3938, %v3939
      %v3941 = vrot.slane %v3939, 4
      %v3942 = vrot.slane %v231, 5
      %v3943 = vsel %vm3787, %v3941, %v3942
      %v3944 = vrot.slane %v232, 5
      %v3945 = vrot.slane %v3944, 4
      %v3946 = vrot.slane %v233, 5
      %v3947 = vsel %vm3787, %v3945, %v3946
      %v3948 = vrot.slane %v3946, 4
      %v3949 = vrot.slane %v234, 5
      %v3950 = vsel %vm3787, %v3948, %v3949
      %v3951 = vrot.slane %v3949, 4
      %v3952 = vrot.slane %v235, 5
      %v3953 = vsel %vm3787, %v3951, %v3952
      %v3954 = vrot.slane %v3952, 4
      %v3955 = vrot.slane %v236, 5
      %v3956 = vsel %vm3787, %v3954, %v3955
      %v3957 = vrot.slane %v237, 5
      %v3958 = vrot.slane %v3957, 4
      %v3959 = vrot.slane %v238, 5
      %v3960 = vsel %vm3787, %v3958, %v3959
      %v3961 = vrot.slane %v3959, 4
      %v3962 = vrot.slane %v239, 5
      %v3963 = vsel %vm3787, %v3961, %v3962
      %v3964 = vrot.slane %v3962, 4
      %v3965 = vrot.slane %v240, 5
      %v3966 = vsel %vm3787, %v3964, %v3965
      %v3967 = vrot.slane %v3965, 4
      %v3968 = vrot.slane %v241, 5
      %v3969 = vsel %vm3787, %v3967, %v3968
      %v3970 = vrot.slane %v242, 5
      %v3971 = vrot.slane %v3970, 4
      %v3972 = vrot.slane %v243, 5
      %v3973 = vsel %vm3787, %v3971, %v3972
      %v3974 = vrot.slane %v3972, 4
      %v3975 = vrot.slane %v244, 5
      %v3976 = vsel %vm3787, %v3974, %v3975
      %v3977 = vrot.slane %v3975, 4
      %v3978 = vrot.slane %v245, 5
      %v3979 = vsel %vm3787, %v3977, %v3978
      %v3980 = vrot.slane %v3978, 4
      %v3981 = vrot.slane %v246, 5
      %v3982 = vsel %vm3787, %v3980, %v3981
      %v3983 = vrot.slane %v247, 5
      %v3984 = vrot.slane %v3983, 4
      %v3985 = vrot.slane %v248, 5
      %v3986 = vsel %vm3787, %v3984, %v3985
      %v3987 = vrot.slane %v3985, 4
      %v3988 = vrot.slane %v249, 5
      %v3989 = vsel %vm3787, %v3987, %v3988
      %v3990 = vrot.slane %v3988, 4
      %v3991 = vrot.slane %v250, 5
      %v3992 = vsel %vm3787, %v3990, %v3991
      %v3993 = vrot.slane %v3991, 4
      %v3994 = vrot.slane %v251, 5
      %v3995 = vsel %vm3787, %v3993, %v3994
      %v3996 = vrot.slane %v252, 5
      %v3997 = vrot.slane %v3996, 4
      %v3998 = vrot.slane %v253, 5
      %v3999 = vsel %vm3787, %v3997, %v3998
      %v4000 = vrot.slane %v3998, 4
      %v4001 = vrot.slane %v254, 5
      %v4002 = vsel %vm3787, %v4000, %v4001
      %v4003 = vrot.slane %v4001, 4
      %v4004 = vrot.slane %v255, 5
      %v4005 = vsel %vm3787, %v4003, %v4004
      %v4006 = vrot.slane %v4004, 4
      %v4007 = vrot.slane %v256, 5
      %v4008 = vsel %vm3787, %v4006, %v4007
      %v4009 = vrot.slane %v257, 5
      %v4010 = vrot.slane %v4009, 4
      %v4011 = vrot.slane %v258, 5
      %v4012 = vsel %vm3787, %v4010, %v4011
      %v4013 = vrot.slane %v4011, 4
      %v4014 = vrot.slane %v259, 5
      %v4015 = vsel %vm3787, %v4013, %v4014
      %v4016 = vrot.slane %v4014, 4
      %v4017 = vrot.slane %v260, 5
      %v4018 = vsel %vm3787, %v4016, %v4017
      %v4019 = vrot.slane %v4017, 4
      %v4020 = vrot.slane %v261, 5
      %v4021 = vsel %vm3787, %v4019, %v4020
      %v4022 = vrot.slane %v262, 5
      %v4023 = vrot.slane %v4022, 4
      %v4024 = vrot.slane %v263, 5
      %v4025 = vsel %vm3787, %v4023, %v4024
      %v4026 = vrot.slane %v4024, 4
      %v4027 = vrot.slane %v264, 5
      %v4028 = vsel %vm3787, %v4026, %v4027
      %v4029 = vrot.slane %v4027, 4
      %v4030 = vrot.slane %v265, 5
      %v4031 = vsel %vm3787, %v4029, %v4030
      %v4032 = vrot.slane %v4030, 4
      %v4033 = vrot.slane %v266, 5
      %v4034 = vsel %vm3787, %v4032, %v4033
      %v4035 = vrot.slane %v267, 5
      %v4036 = vrot.slane %v4035, 4
      %v4037 = vrot.slane %v268, 5
      %v4038 = vsel %vm3787, %v4036, %v4037
      %v4039 = vrot.slane %v4037, 4
      %v4040 = vrot.slane %v269, 5
      %v4041 = vsel %vm3787, %v4039, %v4040
      %v4042 = vrot.slane %v4040, 4
      %v4043 = vrot.slane %v270, 5
      %v4044 = vsel %vm3787, %v4042, %v4043
      %v4045 = vrot.slane %v4043, 4
      %v4046 = vrot.slane %v271, 5
      %v4047 = vsel %vm3787, %v4045, %v4046
      %v4048 = vrot.slane %v272, 5
      %v4049 = vrot.slane %v4048, 4
      %v4050 = vrot.slane %v273, 5
      %v4051 = vsel %vm3787, %v4049, %v4050
      %v4052 = vrot.slane %v4050, 4
      %v4053 = vrot.slane %v274, 5
      %v4054 = vsel %vm3787, %v4052, %v4053
      %v4055 = vrot.slane %v4053, 4
      %v4056 = vrot.slane %v275, 5
      %v4057 = vsel %vm3787, %v4055, %v4056
      %v4058 = vrot.slane %v4056, 4
      %v4059 = vrot.slane %v276, 5
      %v4060 = vsel %vm3787, %v4058, %v4059
      %v4061 = vrot.slane %v277, 5
      %v4062 = vrot.slane %v4061, 4
      %v4063 = vrot.slane %v278, 5
      %v4064 = vsel %vm3787, %v4062, %v4063
      %v4065 = vrot.slane %v4063, 4
      %v4066 = vrot.slane %v279, 5
      %v4067 = vsel %vm3787, %v4065, %v4066
      %v4068 = vrot.slane %v4066, 4
      %v4069 = vrot.slane %v280, 5
      %v4070 = vsel %vm3787, %v4068, %v4069
      %v4071 = vrot.slane %v4069, 4
      %v4072 = vrot.slane %v281, 5
      %v4073 = vsel %vm3787, %v4071, %v4072
      %v4074 = vrot.slane %v282, 5
      %v4075 = vrot.slane %v4074, 4
      %v4076 = vrot.slane %v283, 5
      %v4077 = vsel %vm3787, %v4075, %v4076
      %v4078 = vrot.slane %v4076, 4
      %v4079 = vrot.slane %v284, 5
      %v4080 = vsel %vm3787, %v4078, %v4079
      %v4081 = vrot.slane %v4079, 4
      %v4082 = vrot.slane %v285, 5
      %v4083 = vsel %vm3787, %v4081, %v4082
      %v4084 = vrot.slane %v4082, 4
      %v4085 = vrot.slane %v286, 5
      %v4086 = vsel %vm3787, %v4084, %v4085
      %v4087 = vrot.slane %v287, 5
      %v4088 = vrot.slane %v4087, 4
      %v4089 = vrot.slane %v288, 5
      %v4090 = vsel %vm3787, %v4088, %v4089
      %v4091 = vrot.slane %v4089, 4
      %v4092 = vrot.slane %v289, 5
      %v4093 = vsel %vm3787, %v4091, %v4092
      %v4094 = vrot.slane %v4092, 4
      %v4095 = vrot.slane %v290, 5
      %v4096 = vsel %vm3787, %v4094, %v4095
      %v4097 = vrot.slane %v4095, 4
      %v4098 = vrot.slane %v291, 5
      %v4099 = vsel %vm3787, %v4097, %v4098
      %v4100 = vrot.slane %v292, 5
      %v4101 = vrot.slane %v4100, 4
      %v4102 = vrot.slane %v293, 5
      %v4103 = vsel %vm3787, %v4101, %v4102
      %v4104 = vrot.slane %v4102, 4
      %v4105 = vrot.slane %v294, 5
      %v4106 = vsel %vm3787, %v4104, %v4105
      %v4107 = vrot.slane %v4105, 4
      %v4108 = vrot.slane %v295, 5
      %v4109 = vsel %vm3787, %v4107, %v4108
      %v4110 = vrot.slane %v4108, 4
      %v4111 = vrot.slane %v296, 5
      %v4112 = vsel %vm3787, %v4110, %v4111
      %v4113 = vrot.slane %v297, 5
      %v4114 = vrot.slane %v4113, 4
      %v4115 = vrot.slane %v298, 5
      %v4116 = vsel %vm3787, %v4114, %v4115
      %v4117 = vrot.slane %v4115, 4
      %v4118 = vrot.slane %v299, 5
      %v4119 = vsel %vm3787, %v4117, %v4118
      %v4120 = vrot.slane %v4118, 4
      %v4121 = vrot.slane %v300, 5
      %v4122 = vsel %vm3787, %v4120, %v4121
      %v4123 = vrot.slane %v4121, 4
      %v4124 = vrot.slane %v301, 5
      %v4125 = vsel %vm3787, %v4123, %v4124
      %v4126 = vrot.slane %v302, 5
      %v4127 = vrot.slane %v4126, 4
      %v4128 = vrot.slane %v303, 5
      %v4129 = vsel %vm3787, %v4127, %v4128
      %v4130 = vrot.slane %v4128, 4
      %v4131 = vrot.slane %v304, 5
      %v4132 = vsel %vm3787, %v4130, %v4131
      %v4133 = vrot.slane %v4131, 4
      %v4134 = vrot.slane %v305, 5
      %v4135 = vsel %vm3787, %v4133, %v4134
      %v4136 = vrot.slane %v4134, 4
      %v4137 = vrot.slane %v306, 5
      %v4138 = vsel %vm3787, %v4136, %v4137
      %v4139 = vrot.slane %v307, 5
      %v4140 = vrot.slane %v4139, 4
      %v4141 = vrot.slane %v308, 5
      %v4142 = vsel %vm3787, %v4140, %v4141
      %v4143 = vrot.slane %v4141, 4
      %v4144 = vrot.slane %v309, 5
      %v4145 = vsel %vm3787, %v4143, %v4144
      %v4146 = vrot.slane %v4144, 4
      %v4147 = vrot.slane %v310, 5
      %v4148 = vsel %vm3787, %v4146, %v4147
      %v4149 = vrot.slane %v4147, 4
      %v4150 = vrot.slane %v311, 5
      %v4151 = vsel %vm3787, %v4149, %v4150
      %v4152 = vrot.slane %v312, 5
      %v4153 = vrot.slane %v4152, 4
      %v4154 = vrot.slane %v313, 5
      %v4155 = vsel %vm3787, %v4153, %v4154
      %v4156 = vrot.slane %v4154, 4
      %v4157 = vrot.slane %v314, 5
      %v4158 = vsel %vm3787, %v4156, %v4157
      %v4159 = vrot.slane %v4157, 4
      %v4160 = vrot.slane %v315, 5
      %v4161 = vsel %vm3787, %v4159, %v4160
      %v4162 = vrot.slane %v4160, 4
      %v4163 = vrot.slane %v316, 5
      %v4164 = vsel %vm3787, %v4162, %v4163
      %v4165 = vrot.slane %v317, 5
      %v4166 = vrot.slane %v4165, 4
      %v4167 = vrot.slane %v318, 5
      %v4168 = vsel %vm3787, %v4166, %v4167
      %v4169 = vrot.slane %v4167, 4
      %v4170 = vrot.slane %v319, 5
      %v4171 = vsel %vm3787, %v4169, %v4170
      %v4172 = vrot.slane %v4170, 4
      %v4173 = vrot.slane %v320, 5
      %v4174 = vsel %vm3787, %v4172, %v4173
      %v4175 = vrot.slane %v4173, 4
      %v4176 = vrot.slane %v321, 5
      %v4177 = vsel %vm3787, %v4175, %v4176
      %v4178 = vrot.slane %v322, 5
      %v4179 = vrot.slane %v4178, 4
      %v4180 = vrot.slane %v323, 5
      %v4181 = vsel %vm3787, %v4179, %v4180
      %v4182 = vrot.slane %v4180, 4
      %v4183 = vrot.slane %v324, 5
      %v4184 = vsel %vm3787, %v4182, %v4183
      %v4185 = vrot.slane %v4183, 4
      %v4186 = vrot.slane %v325, 5
      %v4187 = vsel %vm3787, %v4185, %v4186
      %v4188 = vrot.slane %v4186, 4
      %v4189 = vrot.slane %v326, 5
      %v4190 = vsel %vm3787, %v4188, %v4189
      %v4191 = vrot.slane %v327, 5
      %v4192 = vrot.slane %v4191, 4
      %v4193 = vrot.slane %v328, 5
      %v4194 = vsel %vm3787, %v4192, %v4193
      %v4195 = vrot.slane %v4193, 4
      %v4196 = vrot.slane %v329, 5
      %v4197 = vsel %vm3787, %v4195, %v4196
      %v4198 = vrot.slane %v4196, 4
      %v4199 = vrot.slane %v330, 5
      %v4200 = vsel %vm3787, %v4198, %v4199
      %v4201 = vrot.slane %v4199, 4
      %v4202 = vrot.slane %v331, 5
      %v4203 = vsel %vm3787, %v4201, %v4202
      %s4204 = scalar_lea.vmem %s1, 4
      %v4205 = vld [vmem:[%s4204] sm:$0x3]
      %v4206 = vunpack.c.l.b16 %v3791
      %v4207 = vunpack.c.l.b16 %v3794
      %v4208 = vunpack.c.l.b16 %v3797
      %v4209 = vunpack.c.l.b16 %v3800
      %v4210 = vunpack.c.l.b16 %v3804
      %v4211 = vunpack.c.l.b16 %v3807
      %v4212 = vunpack.c.l.b16 %v3810
      %v4213 = vunpack.c.l.b16 %v3813
      %v4214 = vunpack.c.l.b16 %v3817
      %v4215 = vunpack.c.l.b16 %v3820
      %v4216 = vunpack.c.l.b16 %v3823
      %v4217 = vunpack.c.l.b16 %v3826
      %v4218 = vunpack.c.l.b16 %v3830
      %v4219 = vunpack.c.l.b16 %v3833
      %v4220 = vunpack.c.l.b16 %v3836
      %v4221 = vunpack.c.l.b16 %v3839
      %v4222 = vunpack.c.l.b16 %v3843
      %v4223 = vunpack.c.l.b16 %v3846
      %v4224 = vunpack.c.l.b16 %v3849
      %v4225 = vunpack.c.l.b16 %v3852
      %v4226 = vunpack.c.l.b16 %v3856
      %v4227 = vunpack.c.l.b16 %v3859
      %v4228 = vunpack.c.l.b16 %v3862
      %v4229 = vunpack.c.l.b16 %v3865
      %v4230 = vunpack.c.l.b16 %v3869
      %v4231 = vunpack.c.l.b16 %v3872
      %v4232 = vunpack.c.l.b16 %v3875
      %v4233 = vunpack.c.l.b16 %v3878
      %v4234 = vunpack.c.l.b16 %v3882
      %v4235 = vunpack.c.l.b16 %v3885
      %v4236 = vunpack.c.l.b16 %v3888
      %v4237 = vunpack.c.l.b16 %v3891
      %v4238 = vunpack.c.l.b16 %v3895
      %v4239 = vunpack.c.l.b16 %v3898
      %v4240 = vunpack.c.l.b16 %v3901
      %v4241 = vunpack.c.l.b16 %v3904
      %v4242 = vunpack.c.l.b16 %v3908
      %v4243 = vunpack.c.l.b16 %v3911
      %v4244 = vunpack.c.l.b16 %v3914
      %v4245 = vunpack.c.l.b16 %v3917
      %v4246 = vunpack.c.l.b16 %v3921
      %v4247 = vunpack.c.l.b16 %v3924
      %v4248 = vunpack.c.l.b16 %v3927
      %v4249 = vunpack.c.l.b16 %v3930
      %v4250 = vunpack.c.l.b16 %v3934
      %v4251 = vunpack.c.l.b16 %v3937
      %v4252 = vunpack.c.l.b16 %v3940
      %v4253 = vunpack.c.l.b16 %v3943
      %v4254 = vunpack.c.l.b16 %v3947
      %v4255 = vunpack.c.l.b16 %v3950
      %v4256 = vunpack.c.l.b16 %v3953
      %v4257 = vunpack.c.l.b16 %v3956
      %v4258 = vunpack.c.l.b16 %v3960
      %v4259 = vunpack.c.l.b16 %v3963
      %v4260 = vunpack.c.l.b16 %v3966
      %v4261 = vunpack.c.l.b16 %v3969
      %v4262 = vunpack.c.l.b16 %v3973
      %v4263 = vunpack.c.l.b16 %v3976
      %v4264 = vunpack.c.l.b16 %v3979
      %v4265 = vunpack.c.l.b16 %v3982
      %v4266 = vunpack.c.l.b16 %v3986
      %v4267 = vunpack.c.l.b16 %v3989
      %v4268 = vunpack.c.l.b16 %v3992
      %v4269 = vunpack.c.l.b16 %v3995
      %v4270 = vunpack.c.l.b16 %v3999
      %v4271 = vunpack.c.l.b16 %v4002
      %v4272 = vunpack.c.l.b16 %v4005
      %v4273 = vunpack.c.l.b16 %v4008
      %v4274 = vunpack.c.l.b16 %v4012
      %v4275 = vunpack.c.l.b16 %v4015
      %v4276 = vunpack.c.l.b16 %v4018
      %v4277 = vunpack.c.l.b16 %v4021
      %v4278 = vunpack.c.l.b16 %v4025
      %v4279 = vunpack.c.l.b16 %v4028
      %v4280 = vunpack.c.l.b16 %v4031
      %v4281 = vunpack.c.l.b16 %v4034
      %v4282 = vunpack.c.l.b16 %v4038
      %v4283 = vunpack.c.l.b16 %v4041
      %v4284 = vunpack.c.l.b16 %v4044
      %v4285 = vunpack.c.l.b16 %v4047
      %v4286 = vunpack.c.l.b16 %v4051
      %v4287 = vunpack.c.l.b16 %v4054
      %v4288 = vunpack.c.l.b16 %v4057
      %v4289 = vunpack.c.l.b16 %v4060
      %v4290 = vunpack.c.l.b16 %v4064
      %v4291 = vunpack.c.l.b16 %v4067
      %v4292 = vunpack.c.l.b16 %v4070
      %v4293 = vunpack.c.l.b16 %v4073
      %v4294 = vunpack.c.l.b16 %v4077
      %v4295 = vunpack.c.l.b16 %v4080
      %v4296 = vunpack.c.l.b16 %v4083
      %v4297 = vunpack.c.l.b16 %v4086
      %v4298 = vunpack.c.l.b16 %v4090
      %v4299 = vunpack.c.l.b16 %v4093
      %v4300 = vunpack.c.l.b16 %v4096
      %v4301 = vunpack.c.l.b16 %v4099
      %v4302 = vunpack.c.l.b16 %v4103
      %v4303 = vunpack.c.l.b16 %v4106
      %v4304 = vunpack.c.l.b16 %v4109
      %v4305 = vunpack.c.l.b16 %v4112
      %v4306 = vunpack.c.l.b16 %v4116
      %v4307 = vunpack.c.l.b16 %v4119
      %v4308 = vunpack.c.l.b16 %v4122
      %v4309 = vunpack.c.l.b16 %v4125
      %v4310 = vunpack.c.l.b16 %v4129
      %v4311 = vunpack.c.l.b16 %v4132
      %v4312 = vunpack.c.l.b16 %v4135
      %v4313 = vunpack.c.l.b16 %v4138
      %v4314 = vunpack.c.l.b16 %v4142
      %v4315 = vunpack.c.l.b16 %v4145
      %v4316 = vunpack.c.l.b16 %v4148
      %v4317 = vunpack.c.l.b16 %v4151
      %v4318 = vunpack.c.l.b16 %v4155
      %v4319 = vunpack.c.l.b16 %v4158
      %v4320 = vunpack.c.l.b16 %v4161
      %v4321 = vunpack.c.l.b16 %v4164
      %v4322 = vunpack.c.l.b16 %v4168
      %v4323 = vunpack.c.l.b16 %v4171
      %v4324 = vunpack.c.l.b16 %v4174
      %v4325 = vunpack.c.l.b16 %v4177
      %v4326 = vunpack.c.l.b16 %v4181
      %v4327 = vunpack.c.l.b16 %v4184
      %v4328 = vunpack.c.l.b16 %v4187
      %v4329 = vunpack.c.l.b16 %v4190
      %v4330 = vunpack.c.l.b16 %v4194
      %v4331 = vunpack.c.l.b16 %v4197
      %v4332 = vunpack.c.l.b16 %v4200
      %v4333 = vunpack.c.l.b16 %v4203
      %v4334 = vpack.c.b16 %v4207, %v4206
      %v4335 = vpack.c.b16 %v4209, %v4208
      %v4336 = vpack.c.b16 %v4211, %v4210
      %v4337 = vpack.c.b16 %v4213, %v4212
      %v4338 = vpack.c.b16 %v4215, %v4214
      %v4339 = vpack.c.b16 %v4217, %v4216
      %v4340 = vpack.c.b16 %v4219, %v4218
      %v4341 = vpack.c.b16 %v4221, %v4220
      %v4342 = vpack.c.b16 %v4223, %v4222
      %v4343 = vpack.c.b16 %v4225, %v4224
      %v4344 = vpack.c.b16 %v4227, %v4226
      %v4345 = vpack.c.b16 %v4229, %v4228
      %v4346 = vpack.c.b16 %v4231, %v4230
      %v4347 = vpack.c.b16 %v4233, %v4232
      %v4348 = vpack.c.b16 %v4235, %v4234
      %v4349 = vpack.c.b16 %v4237, %v4236
      %v4350 = vpack.c.b16 %v4239, %v4238
      %v4351 = vpack.c.b16 %v4241, %v4240
      %v4352 = vpack.c.b16 %v4243, %v4242
      %v4353 = vpack.c.b16 %v4245, %v4244
      %v4354 = vpack.c.b16 %v4247, %v4246
      %v4355 = vpack.c.b16 %v4249, %v4248
      %v4356 = vpack.c.b16 %v4251, %v4250
      %v4357 = vpack.c.b16 %v4253, %v4252
      %v4358 = vpack.c.b16 %v4255, %v4254
      %v4359 = vpack.c.b16 %v4257, %v4256
      %v4360 = vpack.c.b16 %v4259, %v4258
      %v4361 = vpack.c.b16 %v4261, %v4260
      %v4362 = vpack.c.b16 %v4263, %v4262
      %v4363 = vpack.c.b16 %v4265, %v4264
      %v4364 = vpack.c.b16 %v4267, %v4266
      %v4365 = vpack.c.b16 %v4269, %v4268
      %v4366 = vpack.c.b16 %v4271, %v4270
      %v4367 = vpack.c.b16 %v4273, %v4272
      %v4368 = vpack.c.b16 %v4275, %v4274
      %v4369 = vpack.c.b16 %v4277, %v4276
      %v4370 = vpack.c.b16 %v4279, %v4278
      %v4371 = vpack.c.b16 %v4281, %v4280
      %v4372 = vpack.c.b16 %v4283, %v4282
      %v4373 = vpack.c.b16 %v4285, %v4284
      %v4374 = vpack.c.b16 %v4287, %v4286
      %v4375 = vpack.c.b16 %v4289, %v4288
      %v4376 = vpack.c.b16 %v4291, %v4290
      %v4377 = vpack.c.b16 %v4293, %v4292
      %v4378 = vpack.c.b16 %v4295, %v4294
      %v4379 = vpack.c.b16 %v4297, %v4296
      %v4380 = vpack.c.b16 %v4299, %v4298
      %v4381 = vpack.c.b16 %v4301, %v4300
      %v4382 = vpack.c.b16 %v4303, %v4302
      %v4383 = vpack.c.b16 %v4305, %v4304
      %v4384 = vpack.c.b16 %v4307, %v4306
      %v4385 = vpack.c.b16 %v4309, %v4308
      %v4386 = vpack.c.b16 %v4311, %v4310
      %v4387 = vpack.c.b16 %v4313, %v4312
      %v4388 = vpack.c.b16 %v4315, %v4314
      %v4389 = vpack.c.b16 %v4317, %v4316
      %v4390 = vpack.c.b16 %v4319, %v4318
      %v4391 = vpack.c.b16 %v4321, %v4320
      %v4392 = vpack.c.b16 %v4323, %v4322
      %v4393 = vpack.c.b16 %v4325, %v4324
      %v4394 = vpack.c.b16 %v4327, %v4326
      %v4395 = vpack.c.b16 %v4329, %v4328
      %v4396 = vpack.c.b16 %v4331, %v4330
      %v4397 = vpack.c.b16 %v4333, %v4332
      %v4399 = vsel %vm1948, %v4334, 0
      %v4402 = vsel %vm1948, %v4335, 0
      %v4405 = vsel %vm1948, %v4336, 0
      %v4408 = vsel %vm1948, %v4337, 0
      %v4411 = vsel %vm1948, %v4338, 0
      %v4414 = vsel %vm1948, %v4339, 0
      %v4417 = vsel %vm1948, %v4340, 0
      %v4420 = vsel %vm1948, %v4341, 0
      %v4423 = vsel %vm1948, %v4342, 0
      %v4426 = vsel %vm1948, %v4343, 0
      %v4429 = vsel %vm1948, %v4344, 0
      %v4432 = vsel %vm1948, %v4345, 0
      %v4435 = vsel %vm1948, %v4346, 0
      %v4438 = vsel %vm1948, %v4347, 0
      %v4441 = vsel %vm1948, %v4348, 0
      %v4444 = vsel %vm1948, %v4349, 0
      %v4447 = vsel %vm1948, %v4350, 0
      %v4450 = vsel %vm1948, %v4351, 0
      %v4453 = vsel %vm1948, %v4352, 0
      %v4456 = vsel %vm1948, %v4353, 0
      %v4459 = vsel %vm1948, %v4354, 0
      %v4462 = vsel %vm1948, %v4355, 0
      %v4465 = vsel %vm1948, %v4356, 0
      %v4468 = vsel %vm1948, %v4357, 0
      %v4471 = vsel %vm1948, %v4358, 0
      %v4474 = vsel %vm1948, %v4359, 0
      %v4477 = vsel %vm1948, %v4360, 0
      %v4480 = vsel %vm1948, %v4361, 0
      %v4483 = vsel %vm1948, %v4362, 0
      %v4486 = vsel %vm1948, %v4363, 0
      %v4489 = vsel %vm1948, %v4364, 0
      %v4492 = vsel %vm1948, %v4365, 0
      %v4495 = vsel %vm1948, %v4366, 0
      %v4498 = vsel %vm1948, %v4367, 0
      %v4501 = vsel %vm1948, %v4368, 0
      %v4504 = vsel %vm1948, %v4369, 0
      %v4507 = vsel %vm1948, %v4370, 0
      %v4510 = vsel %vm1948, %v4371, 0
      %v4513 = vsel %vm1948, %v4372, 0
      %v4516 = vsel %vm1948, %v4373, 0
      %v4519 = vsel %vm1948, %v4374, 0
      %v4522 = vsel %vm1948, %v4375, 0
      %v4525 = vsel %vm1948, %v4376, 0
      %v4528 = vsel %vm1948, %v4377, 0
      %v4531 = vsel %vm1948, %v4378, 0
      %v4534 = vsel %vm1948, %v4379, 0
      %v4537 = vsel %vm1948, %v4380, 0
      %v4540 = vsel %vm1948, %v4381, 0
      %v4543 = vsel %vm1948, %v4382, 0
      %v4546 = vsel %vm1948, %v4383, 0
      %v4549 = vsel %vm1948, %v4384, 0
      %v4552 = vsel %vm1948, %v4385, 0
      %v4555 = vsel %vm1948, %v4386, 0
      %v4558 = vsel %vm1948, %v4387, 0
      %v4561 = vsel %vm1948, %v4388, 0
      %v4564 = vsel %vm1948, %v4389, 0
      %v4567 = vsel %vm1948, %v4390, 0
      %v4570 = vsel %vm1948, %v4391, 0
      %v4573 = vsel %vm1948, %v4392, 0
      %v4576 = vsel %vm1948, %v4393, 0
      %v4579 = vsel %vm1948, %v4394, 0
      %v4582 = vsel %vm1948, %v4395, 0
      %v4585 = vsel %vm1948, %v4396, 0
      %v4588 = vsel %vm1948, %v4397, 0
      %v4591 = vand.u32 %v4205, %v2144
      %4593 = vmatprep.subr.bf16.mxu0 0
      %4594 = vmatpush1.bf16.msra.mxu0 %v4591
      %4595 = vmatprep.subr.bf16.mxu0 0
      %4596 = vmatpush1.bf16.msra.mxu0 0
      %4597 = vmatprep.subr.bf16.mxu0 0
      %4598 = vmatpush1.bf16.msra.mxu0 0
      %4599 = vmatprep.subr.bf16.mxu0 0
      %4600 = vmatpush1.bf16.msra.mxu0 0
      %4601 = vmatprep.subr.bf16.mxu0 0
      %4602 = vmatpush1.bf16.msra.mxu0 0
      %4603 = vmatprep.subr.bf16.mxu0 0
      %4604 = vmatpush1.bf16.msra.mxu0 0
      %4605 = vmatprep.subr.bf16.mxu0 0
      %4606 = vmatpush1.bf16.msra.mxu0 0
      %4607 = vmatprep.subr.bf16.mxu0 0
      %4608 = vmatpush1.bf16.msra.mxu0 0
      %4609 = vmatprep.subr.bf16.mxu0 0
      %4610 = vmatpush1.bf16.msra.mxu0 0
      %4611 = vmatprep.subr.bf16.mxu0 0
      %4612 = vmatpush1.bf16.msra.mxu0 0
      %4613 = vmatprep.subr.bf16.mxu0 0
      %4614 = vmatpush1.bf16.msra.mxu0 0
      %4615 = vmatprep.subr.bf16.mxu0 0
      %4616 = vmatpush1.bf16.msra.mxu0 0
      %4617 = vmatprep.subr.bf16.mxu0 0
      %4618 = vmatpush1.bf16.msra.mxu0 0
      %4619 = vmatprep.subr.bf16.mxu0 0
      %4620 = vmatpush1.bf16.msra.mxu0 0
      %4621 = vmatprep.subr.bf16.mxu0 0
      %4622 = vmatpush1.bf16.msra.mxu0 0
      %4623 = vmatprep.subr.bf16.mxu0 0
      %4624 = vmatpush1.bf16.msra.mxu0 0
      %4625 = vmatprep.mubr.bf16.mxu0 0
      %4626 = vmatmul.mubr.bf16.gmra.mrb[0].mxu0 %v4399
      %v4627 = vpop.f32.mrb[0].mxu0
      %v4628 = vadd.f32 0.0, %v4627
      %v4629 = vpop.f32.mrb[0].mxu0
      %v4630 = vpop.f32.mrb[0].mxu0
      %v4631 = vadd.f32 0.0, %v4630
      %v4632 = vpop.f32.mrb[0].mxu0
      %4633 = vmatprep.mubr.bf16.mxu0 0
      %4634 = vmatmul.mubr.bf16.gmra.mrb[0].mxu0 %v4402
      %v4635 = vpop.f32.mrb[0].mxu0
      %v4636 = vadd.f32 0.0, %v4635
      %v4637 = vpop.f32.mrb[0].mxu0
      %v4638 = vpop.f32.mrb[0].mxu0
      %v4639 = vadd.f32 0.0, %v4638
      %v4640 = vpop.f32.mrb[0].mxu0
      %4641 = vmatprep.mubr.bf16.mxu0 0
      %4642 = vmatmul.mubr.bf16.gmra.mrb[0].mxu0 %v4405
      %v4643 = vpop.f32.mrb[0].mxu0
      %v4644 = vadd.f32 0.0, %v4643
      %v4645 = vpop.f32.mrb[0].mxu0
      %v4646 = vpop.f32.mrb[0].mxu0
      %v4647 = vadd.f32 0.0, %v4646
      %v4648 = vpop.f32.mrb[0].mxu0
      %4649 = vmatprep.mubr.bf16.mxu0 0
      %4650 = vmatmul.mubr.bf16.gmra.mrb[0].mxu0 %v4408
      %v4651 = vpop.f32.mrb[0].mxu0
      %v4652 = vadd.f32 0.0, %v4651
      %v4653 = vpop.f32.mrb[0].mxu0
      %v4654 = vpop.f32.mrb[0].mxu0
      %v4655 = vadd.f32 0.0, %v4654
      %v4656 = vpop.f32.mrb[0].mxu0
      %4657 = vmatprep.mubr.bf16.mxu0 0
      %4658 = vmatmul.mubr.bf16.gmra.mrb[0].mxu0 %v4411
      %v4659 = vpop.f32.mrb[0].mxu0
      %v4660 = vadd.f32 0.0, %v4659
      %v4661 = vpop.f32.mrb[0].mxu0
      %v4662 = vpop.f32.mrb[0].mxu0
      %v4663 = vadd.f32 0.0, %v4662
      %v4664 = vpop.f32.mrb[0].mxu0
      %4665 = vmatprep.mubr.bf16.mxu0 0
      %4666 = vmatmul.mubr.bf16.gmra.mrb[0].mxu0 %v4414
      %v4667 = vpop.f32.mrb[0].mxu0
      %v4668 = vadd.f32 0.0, %v4667
      %v4669 = vpop.f32.mrb[0].mxu0
      %v4670 = vpop.f32.mrb[0].mxu0
      %v4671 = vadd.f32 0.0, %v4670
      %v4672 = vpop.f32.mrb[0].mxu0
      %4673 = vmatprep.mubr.bf16.mxu0 0
      %4674 = vmatmul.mubr.bf16.gmra.mrb[0].mxu0 %v4417
      %v4675 = vpop.f32.mrb[0].mxu0
      %v4676 = vadd.f32 0.0, %v4675
      %v4677 = vpop.f32.mrb[0].mxu0
      %v4678 = vpop.f32.mrb[0].mxu0
      %v4679 = vadd.f32 0.0, %v4678
      %v4680 = vpop.f32.mrb[0].mxu0
      %4681 = vmatprep.mubr.bf16.mxu0 0
      %4682 = vmatmul.mubr.bf16.gmra.mrb[0].mxu0 %v4420
      %v4683 = vpop.f32.mrb[0].mxu0
      %v4684 = vadd.f32 0.0, %v4683
      %v4685 = vpop.f32.mrb[0].mxu0
      %v4686 = vpop.f32.mrb[0].mxu0
      %v4687 = vadd.f32 0.0, %v4686
      %v4688 = vpop.f32.mrb[0].mxu0
      %4689 = vmatprep.mubr.bf16.mxu0 0
      %4690 = vmatmul.mubr.bf16.gmra.mrb[0].mxu0 %v4423
      %v4691 = vpop.f32.mrb[0].mxu0
      %v4692 = vadd.f32 0.0, %v4691
      %v4693 = vpop.f32.mrb[0].mxu0
      %v4694 = vpop.f32.mrb[0].mxu0
      %v4695 = vadd.f32 0.0, %v4694
      %v4696 = vpop.f32.mrb[0].mxu0
      %4697 = vmatprep.mubr.bf16.mxu0 0
      %4698 = vmatmul.mubr.bf16.gmra.mrb[0].mxu0 %v4426
      %v4699 = vpop.f32.mrb[0].mxu0
      %v4700 = vadd.f32 0.0, %v4699
      %v4701 = vpop.f32.mrb[0].mxu0
      %v4702 = vpop.f32.mrb[0].mxu0
      %v4703 = vadd.f32 0.0, %v4702
      %v4704 = vpop.f32.mrb[0].mxu0
      %4705 = vmatprep.mubr.bf16.mxu0 0
      %4706 = vmatmul.mubr.bf16.gmra.mrb[0].mxu0 %v4429
      %v4707 = vpop.f32.mrb[0].mxu0
      %v4708 = vadd.f32 0.0, %v4707
      %v4709 = vpop.f32.mrb[0].mxu0
      %v4710 = vpop.f32.mrb[0].mxu0
      %v4711 = vadd.f32 0.0, %v4710
      %v4712 = vpop.f32.mrb[0].mxu0
      %4713 = vmatprep.mubr.bf16.mxu0 0
      %4714 = vmatmul.mubr.bf16.gmra.mrb[0].mxu0 %v4432
      %v4715 = vpop.f32.mrb[0].mxu0
      %v4716 = vadd.f32 0.0, %v4715
      %v4717 = vpop.f32.mrb[0].mxu0
      %v4718 = vpop.f32.mrb[0].mxu0
      %v4719 = vadd.f32 0.0, %v4718
      %v4720 = vpop.f32.mrb[0].mxu0
      %4721 = vmatprep.mubr.bf16.mxu0 0
      %4722 = vmatmul.mubr.bf16.gmra.mrb[0].mxu0 %v4435
      %v4723 = vpop.f32.mrb[0].mxu0
      %v4724 = vadd.f32 0.0, %v4723
      %v4725 = vpop.f32.mrb[0].mxu0
      %v4726 = vpop.f32.mrb[0].mxu0
      %v4727 = vadd.f32 0.0, %v4726
      %v4728 = vpop.f32.mrb[0].mxu0
      %4729 = vmatprep.mubr.bf16.mxu0 0
      %4730 = vmatmul.mubr.bf16.gmra.mrb[0].mxu0 %v4438
      %v4731 = vpop.f32.mrb[0].mxu0
      %v4732 = vadd.f32 0.0, %v4731
      %v4733 = vpop.f32.mrb[0].mxu0
      %v4734 = vpop.f32.mrb[0].mxu0
      %v4735 = vadd.f32 0.0, %v4734
      %v4736 = vpop.f32.mrb[0].mxu0
      %4737 = vmatprep.mubr.bf16.mxu0 0
      %4738 = vmatmul.mubr.bf16.gmra.mrb[0].mxu0 %v4441
      %v4739 = vpop.f32.mrb[0].mxu0
      %v4740 = vadd.f32 0.0, %v4739
      %v4741 = vpop.f32.mrb[0].mxu0
      %v4742 = vpop.f32.mrb[0].mxu0
      %v4743 = vadd.f32 0.0, %v4742
      %v4744 = vpop.f32.mrb[0].mxu0
      %4745 = vmatprep.mubr.bf16.mxu0 0
      %4746 = vmatmul.mubr.bf16.gmra.mrb[0].mxu0 %v4444
      %v4747 = vpop.f32.mrb[0].mxu0
      %v4748 = vadd.f32 0.0, %v4747
      %v4749 = vpop.f32.mrb[0].mxu0
      %v4750 = vpop.f32.mrb[0].mxu0
      %v4751 = vadd.f32 0.0, %v4750
      %v4752 = vpop.f32.mrb[0].mxu0
      %4753 = vmatprep.mubr.bf16.mxu0 0
      %4754 = vmatmul.mubr.bf16.gmra.mrb[0].mxu0 %v4447
      %v4755 = vpop.f32.mrb[0].mxu0
      %v4756 = vadd.f32 0.0, %v4755
      %v4757 = vpop.f32.mrb[0].mxu0
      %v4758 = vpop.f32.mrb[0].mxu0
      %v4759 = vadd.f32 0.0, %v4758
      %v4760 = vpop.f32.mrb[0].mxu0
      %4761 = vmatprep.mubr.bf16.mxu0 0
      %4762 = vmatmul.mubr.bf16.gmra.mrb[0].mxu0 %v4450
      %v4763 = vpop.f32.mrb[0].mxu0
      %v4764 = vadd.f32 0.0, %v4763
      %v4765 = vpop.f32.mrb[0].mxu0
      %v4766 = vpop.f32.mrb[0].mxu0
      %v4767 = vadd.f32 0.0, %v4766
      %v4768 = vpop.f32.mrb[0].mxu0
      %4769 = vmatprep.mubr.bf16.mxu0 0
      %4770 = vmatmul.mubr.bf16.gmra.mrb[0].mxu0 %v4453
      %v4771 = vpop.f32.mrb[0].mxu0
      %v4772 = vadd.f32 0.0, %v4771
      %v4773 = vpop.f32.mrb[0].mxu0
      %v4774 = vpop.f32.mrb[0].mxu0
      %v4775 = vadd.f32 0.0, %v4774
      %v4776 = vpop.f32.mrb[0].mxu0
      %4777 = vmatprep.mubr.bf16.mxu0 0
      %4778 = vmatmul.mubr.bf16.gmra.mrb[0].mxu0 %v4456
      %v4779 = vpop.f32.mrb[0].mxu0
      %v4780 = vadd.f32 0.0, %v4779
      %v4781 = vpop.f32.mrb[0].mxu0
      %v4782 = vpop.f32.mrb[0].mxu0
      %v4783 = vadd.f32 0.0, %v4782
      %v4784 = vpop.f32.mrb[0].mxu0
      %4785 = vmatprep.mubr.bf16.mxu0 0
      %4786 = vmatmul.mubr.bf16.gmra.mrb[0].mxu0 %v4459
      %v4787 = vpop.f32.mrb[0].mxu0
      %v4788 = vadd.f32 0.0, %v4787
      %v4789 = vpop.f32.mrb[0].mxu0
      %v4790 = vpop.f32.mrb[0].mxu0
      %v4791 = vadd.f32 0.0, %v4790
      %v4792 = vpop.f32.mrb[0].mxu0
      %4793 = vmatprep.mubr.bf16.mxu0 0
      %4794 = vmatmul.mubr.bf16.gmra.mrb[0].mxu0 %v4462
      %v4795 = vpop.f32.mrb[0].mxu0
      %v4796 = vadd.f32 0.0, %v4795
      %v4797 = vpop.f32.mrb[0].mxu0
      %v4798 = vpop.f32.mrb[0].mxu0
      %v4799 = vadd.f32 0.0, %v4798
      %v4800 = vpop.f32.mrb[0].mxu0
      %4801 = vmatprep.mubr.bf16.mxu0 0
      %4802 = vmatmul.mubr.bf16.gmra.mrb[0].mxu0 %v4465
      %v4803 = vpop.f32.mrb[0].mxu0
      %v4804 = vadd.f32 0.0, %v4803
      %v4805 = vpop.f32.mrb[0].mxu0
      %v4806 = vpop.f32.mrb[0].mxu0
      %v4807 = vadd.f32 0.0, %v4806
      %v4808 = vpop.f32.mrb[0].mxu0
      %4809 = vmatprep.mubr.bf16.mxu0 0
      %4810 = vmatmul.mubr.bf16.gmra.mrb[0].mxu0 %v4468
      %v4811 = vpop.f32.mrb[0].mxu0
      %v4812 = vadd.f32 0.0, %v4811
      %v4813 = vpop.f32.mrb[0].mxu0
      %v4814 = vpop.f32.mrb[0].mxu0
      %v4815 = vadd.f32 0.0, %v4814
      %v4816 = vpop.f32.mrb[0].mxu0
      %4817 = vmatprep.mubr.bf16.mxu0 0
      %4818 = vmatmul.mubr.bf16.gmra.mrb[0].mxu0 %v4471
      %v4819 = vpop.f32.mrb[0].mxu0
      %v4820 = vadd.f32 0.0, %v4819
      %v4821 = vpop.f32.mrb[0].mxu0
      %v4822 = vpop.f32.mrb[0].mxu0
      %v4823 = vadd.f32 0.0, %v4822
      %v4824 = vpop.f32.mrb[0].mxu0
      %4825 = vmatprep.mubr.bf16.mxu0 0
      %4826 = vmatmul.mubr.bf16.gmra.mrb[0].mxu0 %v4474
      %v4827 = vpop.f32.mrb[0].mxu0
      %v4828 = vadd.f32 0.0, %v4827
      %v4829 = vpop.f32.mrb[0].mxu0
      %v4830 = vpop.f32.mrb[0].mxu0
      %v4831 = vadd.f32 0.0, %v4830
      %v4832 = vpop.f32.mrb[0].mxu0
      %4833 = vmatprep.mubr.bf16.mxu0 0
      %4834 = vmatmul.mubr.bf16.gmra.mrb[0].mxu0 %v4477
      %v4835 = vpop.f32.mrb[0].mxu0
      %v4836 = vadd.f32 0.0, %v4835
      %v4837 = vpop.f32.mrb[0].mxu0
      %v4838 = vpop.f32.mrb[0].mxu0
      %v4839 = vadd.f32 0.0, %v4838
      %v4840 = vpop.f32.mrb[0].mxu0
      %4841 = vmatprep.mubr.bf16.mxu0 0
      %4842 = vmatmul.mubr.bf16.gmra.mrb[0].mxu0 %v4480
      %v4843 = vpop.f32.mrb[0].mxu0
      %v4844 = vadd.f32 0.0, %v4843
      %v4845 = vpop.f32.mrb[0].mxu0
      %v4846 = vpop.f32.mrb[0].mxu0
      %v4847 = vadd.f32 0.0, %v4846
      %v4848 = vpop.f32.mrb[0].mxu0
      %4849 = vmatprep.mubr.bf16.mxu0 0
      %4850 = vmatmul.mubr.bf16.gmra.mrb[0].mxu0 %v4483
      %v4851 = vpop.f32.mrb[0].mxu0
      %v4852 = vadd.f32 0.0, %v4851
      %v4853 = vpop.f32.mrb[0].mxu0
      %v4854 = vpop.f32.mrb[0].mxu0
      %v4855 = vadd.f32 0.0, %v4854
      %v4856 = vpop.f32.mrb[0].mxu0
      %4857 = vmatprep.mubr.bf16.mxu0 0
      %4858 = vmatmul.mubr.bf16.gmra.mrb[0].mxu0 %v4486
      %v4859 = vpop.f32.mrb[0].mxu0
      %v4860 = vadd.f32 0.0, %v4859
      %v4861 = vpop.f32.mrb[0].mxu0
      %v4862 = vpop.f32.mrb[0].mxu0
      %v4863 = vadd.f32 0.0, %v4862
      %v4864 = vpop.f32.mrb[0].mxu0
      %4865 = vmatprep.mubr.bf16.mxu0 0
      %4866 = vmatmul.mubr.bf16.gmra.mrb[0].mxu0 %v4489
      %v4867 = vpop.f32.mrb[0].mxu0
      %v4868 = vadd.f32 0.0, %v4867
      %v4869 = vpop.f32.mrb[0].mxu0
      %v4870 = vpop.f32.mrb[0].mxu0
      %v4871 = vadd.f32 0.0, %v4870
      %v4872 = vpop.f32.mrb[0].mxu0
      %4873 = vmatprep.mubr.bf16.mxu0 0
      %4874 = vmatmul.mubr.bf16.gmra.mrb[0].mxu0 %v4492
      %v4875 = vpop.f32.mrb[0].mxu0
      %v4876 = vadd.f32 0.0, %v4875
      %v4877 = vpop.f32.mrb[0].mxu0
      %v4878 = vpop.f32.mrb[0].mxu0
      %v4879 = vadd.f32 0.0, %v4878
      %v4880 = vpop.f32.mrb[0].mxu0
      %4881 = vmatprep.mubr.bf16.mxu0 0
      %4882 = vmatmul.mubr.bf16.gmra.mrb[0].mxu0 %v4495
      %v4883 = vpop.f32.mrb[0].mxu0
      %v4884 = vadd.f32 0.0, %v4883
      %v4885 = vpop.f32.mrb[0].mxu0
      %v4886 = vpop.f32.mrb[0].mxu0
      %v4887 = vadd.f32 0.0, %v4886
      %v4888 = vpop.f32.mrb[0].mxu0
      %4889 = vmatprep.mubr.bf16.mxu0 0
      %4890 = vmatmul.mubr.bf16.gmra.mrb[0].mxu0 %v4498
      %v4891 = vpop.f32.mrb[0].mxu0
      %v4892 = vadd.f32 0.0, %v4891
      %v4893 = vpop.f32.mrb[0].mxu0
      %v4894 = vpop.f32.mrb[0].mxu0
      %v4895 = vadd.f32 0.0, %v4894
      %v4896 = vpop.f32.mrb[0].mxu0
      %4897 = vmatprep.mubr.bf16.mxu0 0
      %4898 = vmatmul.mubr.bf16.gmra.mrb[0].mxu0 %v4501
      %v4899 = vpop.f32.mrb[0].mxu0
      %v4900 = vadd.f32 0.0, %v4899
      %v4901 = vpop.f32.mrb[0].mxu0
      %v4902 = vpop.f32.mrb[0].mxu0
      %v4903 = vadd.f32 0.0, %v4902
      %v4904 = vpop.f32.mrb[0].mxu0
      %4905 = vmatprep.mubr.bf16.mxu0 0
      %4906 = vmatmul.mubr.bf16.gmra.mrb[0].mxu0 %v4504
      %v4907 = vpop.f32.mrb[0].mxu0
      %v4908 = vadd.f32 0.0, %v4907
      %v4909 = vpop.f32.mrb[0].mxu0
      %v4910 = vpop.f32.mrb[0].mxu0
      %v4911 = vadd.f32 0.0, %v4910
      %v4912 = vpop.f32.mrb[0].mxu0
      %4913 = vmatprep.mubr.bf16.mxu0 0
      %4914 = vmatmul.mubr.bf16.gmra.mrb[0].mxu0 %v4507
      %v4915 = vpop.f32.mrb[0].mxu0
      %v4916 = vadd.f32 0.0, %v4915
      %v4917 = vpop.f32.mrb[0].mxu0
      %v4918 = vpop.f32.mrb[0].mxu0
      %v4919 = vadd.f32 0.0, %v4918
      %v4920 = vpop.f32.mrb[0].mxu0
      %4921 = vmatprep.mubr.bf16.mxu0 0
      %4922 = vmatmul.mubr.bf16.gmra.mrb[0].mxu0 %v4510
      %v4923 = vpop.f32.mrb[0].mxu0
      %v4924 = vadd.f32 0.0, %v4923
      %v4925 = vpop.f32.mrb[0].mxu0
      %v4926 = vpop.f32.mrb[0].mxu0
      %v4927 = vadd.f32 0.0, %v4926
      %v4928 = vpop.f32.mrb[0].mxu0
      %4929 = vmatprep.mubr.bf16.mxu0 0
      %4930 = vmatmul.mubr.bf16.gmra.mrb[0].mxu0 %v4513
      %v4931 = vpop.f32.mrb[0].mxu0
      %v4932 = vadd.f32 0.0, %v4931
      %v4933 = vpop.f32.mrb[0].mxu0
      %v4934 = vpop.f32.mrb[0].mxu0
      %v4935 = vadd.f32 0.0, %v4934
      %v4936 = vpop.f32.mrb[0].mxu0
      %4937 = vmatprep.mubr.bf16.mxu0 0
      %4938 = vmatmul.mubr.bf16.gmra.mrb[0].mxu0 %v4516
      %v4939 = vpop.f32.mrb[0].mxu0
      %v4940 = vadd.f32 0.0, %v4939
      %v4941 = vpop.f32.mrb[0].mxu0
      %v4942 = vpop.f32.mrb[0].mxu0
      %v4943 = vadd.f32 0.0, %v4942
      %v4944 = vpop.f32.mrb[0].mxu0
      %4945 = vmatprep.mubr.bf16.mxu0 0
      %4946 = vmatmul.mubr.bf16.gmra.mrb[0].mxu0 %v4519
      %v4947 = vpop.f32.mrb[0].mxu0
      %v4948 = vadd.f32 0.0, %v4947
      %v4949 = vpop.f32.mrb[0].mxu0
      %v4950 = vpop.f32.mrb[0].mxu0
      %v4951 = vadd.f32 0.0, %v4950
      %v4952 = vpop.f32.mrb[0].mxu0
      %4953 = vmatprep.mubr.bf16.mxu0 0
      %4954 = vmatmul.mubr.bf16.gmra.mrb[0].mxu0 %v4522
      %v4955 = vpop.f32.mrb[0].mxu0
      %v4956 = vadd.f32 0.0, %v4955
      %v4957 = vpop.f32.mrb[0].mxu0
      %v4958 = vpop.f32.mrb[0].mxu0
      %v4959 = vadd.f32 0.0, %v4958
      %v4960 = vpop.f32.mrb[0].mxu0
      %4961 = vmatprep.mubr.bf16.mxu0 0
      %4962 = vmatmul.mubr.bf16.gmra.mrb[0].mxu0 %v4525
      %v4963 = vpop.f32.mrb[0].mxu0
      %v4964 = vadd.f32 0.0, %v4963
      %v4965 = vpop.f32.mrb[0].mxu0
      %v4966 = vpop.f32.mrb[0].mxu0
      %v4967 = vadd.f32 0.0, %v4966
      %v4968 = vpop.f32.mrb[0].mxu0
      %4969 = vmatprep.mubr.bf16.mxu0 0
      %4970 = vmatmul.mubr.bf16.gmra.mrb[0].mxu0 %v4528
      %v4971 = vpop.f32.mrb[0].mxu0
      %v4972 = vadd.f32 0.0, %v4971
      %v4973 = vpop.f32.mrb[0].mxu0
      %v4974 = vpop.f32.mrb[0].mxu0
      %v4975 = vadd.f32 0.0, %v4974
      %v4976 = vpop.f32.mrb[0].mxu0
      %4977 = vmatprep.mubr.bf16.mxu0 0
      %4978 = vmatmul.mubr.bf16.gmra.mrb[0].mxu0 %v4531
      %v4979 = vpop.f32.mrb[0].mxu0
      %v4980 = vadd.f32 0.0, %v4979
      %v4981 = vpop.f32.mrb[0].mxu0
      %v4982 = vpop.f32.mrb[0].mxu0
      %v4983 = vadd.f32 0.0, %v4982
      %v4984 = vpop.f32.mrb[0].mxu0
      %4985 = vmatprep.mubr.bf16.mxu0 0
      %4986 = vmatmul.mubr.bf16.gmra.mrb[0].mxu0 %v4534
      %v4987 = vpop.f32.mrb[0].mxu0
      %v4988 = vadd.f32 0.0, %v4987
      %v4989 = vpop.f32.mrb[0].mxu0
      %v4990 = vpop.f32.mrb[0].mxu0
      %v4991 = vadd.f32 0.0, %v4990
      %v4992 = vpop.f32.mrb[0].mxu0
      %4993 = vmatprep.mubr.bf16.mxu0 0
      %4994 = vmatmul.mubr.bf16.gmra.mrb[0].mxu0 %v4537
      %v4995 = vpop.f32.mrb[0].mxu0
      %v4996 = vadd.f32 0.0, %v4995
      %v4997 = vpop.f32.mrb[0].mxu0
      %v4998 = vpop.f32.mrb[0].mxu0
      %v4999 = vadd.f32 0.0, %v4998
      %v5000 = vpop.f32.mrb[0].mxu0
      %5001 = vmatprep.mubr.bf16.mxu0 0
      %5002 = vmatmul.mubr.bf16.gmra.mrb[0].mxu0 %v4540
      %v5003 = vpop.f32.mrb[0].mxu0
      %v5004 = vadd.f32 0.0, %v5003
      %v5005 = vpop.f32.mrb[0].mxu0
      %v5006 = vpop.f32.mrb[0].mxu0
      %v5007 = vadd.f32 0.0, %v5006
      %v5008 = vpop.f32.mrb[0].mxu0
      %5009 = vmatprep.mubr.bf16.mxu0 0
      %5010 = vmatmul.mubr.bf16.gmra.mrb[0].mxu0 %v4543
      %v5011 = vpop.f32.mrb[0].mxu0
      %v5012 = vadd.f32 0.0, %v5011
      %v5013 = vpop.f32.mrb[0].mxu0
      %v5014 = vpop.f32.mrb[0].mxu0
      %v5015 = vadd.f32 0.0, %v5014
      %v5016 = vpop.f32.mrb[0].mxu0
      %5017 = vmatprep.mubr.bf16.mxu0 0
      %5018 = vmatmul.mubr.bf16.gmra.mrb[0].mxu0 %v4546
      %v5019 = vpop.f32.mrb[0].mxu0
      %v5020 = vadd.f32 0.0, %v5019
      %v5021 = vpop.f32.mrb[0].mxu0
      %v5022 = vpop.f32.mrb[0].mxu0
      %v5023 = vadd.f32 0.0, %v5022
      %v5024 = vpop.f32.mrb[0].mxu0
      %5025 = vmatprep.mubr.bf16.mxu0 0
      %5026 = vmatmul.mubr.bf16.gmra.mrb[0].mxu0 %v4549
      %v5027 = vpop.f32.mrb[0].mxu0
      %v5028 = vadd.f32 0.0, %v5027
      %v5029 = vpop.f32.mrb[0].mxu0
      %v5030 = vpop.f32.mrb[0].mxu0
      %v5031 = vadd.f32 0.0, %v5030
      %v5032 = vpop.f32.mrb[0].mxu0
      %5033 = vmatprep.mubr.bf16.mxu0 0
      %5034 = vmatmul.mubr.bf16.gmra.mrb[0].mxu0 %v4552
      %v5035 = vpop.f32.mrb[0].mxu0
      %v5036 = vadd.f32 0.0, %v5035
      %v5037 = vpop.f32.mrb[0].mxu0
      %v5038 = vpop.f32.mrb[0].mxu0
      %v5039 = vadd.f32 0.0, %v5038
      %v5040 = vpop.f32.mrb[0].mxu0
      %5041 = vmatprep.mubr.bf16.mxu0 0
      %5042 = vmatmul.mubr.bf16.gmra.mrb[0].mxu0 %v4555
      %v5043 = vpop.f32.mrb[0].mxu0
      %v5044 = vadd.f32 0.0, %v5043
      %v5045 = vpop.f32.mrb[0].mxu0
      %v5046 = vpop.f32.mrb[0].mxu0
      %v5047 = vadd.f32 0.0, %v5046
      %v5048 = vpop.f32.mrb[0].mxu0
      %5049 = vmatprep.mubr.bf16.mxu0 0
      %5050 = vmatmul.mubr.bf16.gmra.mrb[0].mxu0 %v4558
      %v5051 = vpop.f32.mrb[0].mxu0
      %v5052 = vadd.f32 0.0, %v5051
      %v5053 = vpop.f32.mrb[0].mxu0
      %v5054 = vpop.f32.mrb[0].mxu0
      %v5055 = vadd.f32 0.0, %v5054
      %v5056 = vpop.f32.mrb[0].mxu0
      %5057 = vmatprep.mubr.bf16.mxu0 0
      %5058 = vmatmul.mubr.bf16.gmra.mrb[0].mxu0 %v4561
      %v5059 = vpop.f32.mrb[0].mxu0
      %v5060 = vadd.f32 0.0, %v5059
      %v5061 = vpop.f32.mrb[0].mxu0
      %v5062 = vpop.f32.mrb[0].mxu0
      %v5063 = vadd.f32 0.0, %v5062
      %v5064 = vpop.f32.mrb[0].mxu0
      %5065 = vmatprep.mubr.bf16.mxu0 0
      %5066 = vmatmul.mubr.bf16.gmra.mrb[0].mxu0 %v4564
      %v5067 = vpop.f32.mrb[0].mxu0
      %v5068 = vadd.f32 0.0, %v5067
      %v5069 = vpop.f32.mrb[0].mxu0
      %v5070 = vpop.f32.mrb[0].mxu0
      %v5071 = vadd.f32 0.0, %v5070
      %v5072 = vpop.f32.mrb[0].mxu0
      %5073 = vmatprep.mubr.bf16.mxu0 0
      %5074 = vmatmul.mubr.bf16.gmra.mrb[0].mxu0 %v4567
      %v5075 = vpop.f32.mrb[0].mxu0
      %v5076 = vadd.f32 0.0, %v5075
      %v5077 = vpop.f32.mrb[0].mxu0
      %v5078 = vpop.f32.mrb[0].mxu0
      %v5079 = vadd.f32 0.0, %v5078
      %v5080 = vpop.f32.mrb[0].mxu0
      %5081 = vmatprep.mubr.bf16.mxu0 0
      %5082 = vmatmul.mubr.bf16.gmra.mrb[0].mxu0 %v4570
      %v5083 = vpop.f32.mrb[0].mxu0
      %v5084 = vadd.f32 0.0, %v5083
      %v5085 = vpop.f32.mrb[0].mxu0
      %v5086 = vpop.f32.mrb[0].mxu0
      %v5087 = vadd.f32 0.0, %v5086
      %v5088 = vpop.f32.mrb[0].mxu0
      %5089 = vmatprep.mubr.bf16.mxu0 0
      %5090 = vmatmul.mubr.bf16.gmra.mrb[0].mxu0 %v4573
      %v5091 = vpop.f32.mrb[0].mxu0
      %v5092 = vadd.f32 0.0, %v5091
      %v5093 = vpop.f32.mrb[0].mxu0
      %v5094 = vpop.f32.mrb[0].mxu0
      %v5095 = vadd.f32 0.0, %v5094
      %v5096 = vpop.f32.mrb[0].mxu0
      %5097 = vmatprep.mubr.bf16.mxu0 0
      %5098 = vmatmul.mubr.bf16.gmra.mrb[0].mxu0 %v4576
      %v5099 = vpop.f32.mrb[0].mxu0
      %v5100 = vadd.f32 0.0, %v5099
      %v5101 = vpop.f32.mrb[0].mxu0
      %v5102 = vpop.f32.mrb[0].mxu0
      %v5103 = vadd.f32 0.0, %v5102
      %v5104 = vpop.f32.mrb[0].mxu0
      %5105 = vmatprep.mubr.bf16.mxu0 0
      %5106 = vmatmul.mubr.bf16.gmra.mrb[0].mxu0 %v4579
      %v5107 = vpop.f32.mrb[0].mxu0
      %v5108 = vadd.f32 0.0, %v5107
      %v5109 = vpop.f32.mrb[0].mxu0
      %v5110 = vpop.f32.mrb[0].mxu0
      %v5111 = vadd.f32 0.0, %v5110
      %v5112 = vpop.f32.mrb[0].mxu0
      %5113 = vmatprep.mubr.bf16.mxu0 0
      %5114 = vmatmul.mubr.bf16.gmra.mrb[0].mxu0 %v4582
      %v5115 = vpop.f32.mrb[0].mxu0
      %v5116 = vadd.f32 0.0, %v5115
      %v5117 = vpop.f32.mrb[0].mxu0
      %v5118 = vpop.f32.mrb[0].mxu0
      %v5119 = vadd.f32 0.0, %v5118
      %v5120 = vpop.f32.mrb[0].mxu0
      %5121 = vmatprep.mubr.bf16.mxu0 0
      %5122 = vmatmul.mubr.bf16.gmra.mrb[0].mxu0 %v4585
      %v5123 = vpop.f32.mrb[0].mxu0
      %v5124 = vadd.f32 0.0, %v5123
      %v5125 = vpop.f32.mrb[0].mxu0
      %v5126 = vpop.f32.mrb[0].mxu0
      %v5127 = vadd.f32 0.0, %v5126
      %v5128 = vpop.f32.mrb[0].mxu0
      %5129 = vmatprep.mubr.bf16.mxu0 0
      %5130 = vmatmul.mubr.bf16.gmra.mrb[0].mxu0 %v4588
      %v5131 = vpop.f32.mrb[0].mxu0
      %v5132 = vadd.f32 0.0, %v5131
      %v5133 = vpop.f32.mrb[0].mxu0
      %v5134 = vpop.f32.mrb[0].mxu0
      %v5135 = vadd.f32 0.0, %v5134
      %v5136 = vpop.f32.mrb[0].mxu0
      %5137 = vdwg.mxu0
      %v5138 = vadd.f32 %v3243, %v4628
      %v5139 = vadd.f32 %v3246, %v4631
      %v5140 = vadd.f32 %v3251, %v4636
      %v5141 = vadd.f32 %v3254, %v4639
      %v5142 = vadd.f32 %v3259, %v4644
      %v5143 = vadd.f32 %v3262, %v4647
      %v5144 = vadd.f32 %v3267, %v4652
      %v5145 = vadd.f32 %v3270, %v4655
      %v5146 = vadd.f32 %v3275, %v4660
      %v5147 = vadd.f32 %v3278, %v4663
      %v5148 = vadd.f32 %v3283, %v4668
      %v5149 = vadd.f32 %v3286, %v4671
      %v5150 = vadd.f32 %v3291, %v4676
      %v5151 = vadd.f32 %v3294, %v4679
      %v5152 = vadd.f32 %v3299, %v4684
      %v5153 = vadd.f32 %v3302, %v4687
      %v5154 = vadd.f32 %v3307, %v4692
      %v5155 = vadd.f32 %v3310, %v4695
      %v5156 = vadd.f32 %v3315, %v4700
      %v5157 = vadd.f32 %v3318, %v4703
      %v5158 = vadd.f32 %v3323, %v4708
      %v5159 = vadd.f32 %v3326, %v4711
      %v5160 = vadd.f32 %v3331, %v4716
      %v5161 = vadd.f32 %v3334, %v4719
      %v5162 = vadd.f32 %v3339, %v4724
      %v5163 = vadd.f32 %v3342, %v4727
      %v5164 = vadd.f32 %v3347, %v4732
      %v5165 = vadd.f32 %v3350, %v4735
      %v5166 = vadd.f32 %v3355, %v4740
      %v5167 = vadd.f32 %v3358, %v4743
      %v5168 = vadd.f32 %v3363, %v4748
      %v5169 = vadd.f32 %v3366, %v4751
      %v5170 = vadd.f32 %v3371, %v4756
      %v5171 = vadd.f32 %v3374, %v4759
      %v5172 = vadd.f32 %v3379, %v4764
      %v5173 = vadd.f32 %v3382, %v4767
      %v5174 = vadd.f32 %v3387, %v4772
      %v5175 = vadd.f32 %v3390, %v4775
      %v5176 = vadd.f32 %v3395, %v4780
      %v5177 = vadd.f32 %v3398, %v4783
      %v5178 = vadd.f32 %v3403, %v4788
      %v5179 = vadd.f32 %v3406, %v4791
      %v5180 = vadd.f32 %v3411, %v4796
      %v5181 = vadd.f32 %v3414, %v4799
      %v5182 = vadd.f32 %v3419, %v4804
      %v5183 = vadd.f32 %v3422, %v4807
      %v5184 = vadd.f32 %v3427, %v4812
      %v5185 = vadd.f32 %v3430, %v4815
      %v5186 = vadd.f32 %v3435, %v4820
      %v5187 = vadd.f32 %v3438, %v4823
      %v5188 = vadd.f32 %v3443, %v4828
      %v5189 = vadd.f32 %v3446, %v4831
      %v5190 = vadd.f32 %v3451, %v4836
      %v5191 = vadd.f32 %v3454, %v4839
      %v5192 = vadd.f32 %v3459, %v4844
      %v5193 = vadd.f32 %v3462, %v4847
      %v5194 = vadd.f32 %v3467, %v4852
      %v5195 = vadd.f32 %v3470, %v4855
      %v5196 = vadd.f32 %v3475, %v4860
      %v5197 = vadd.f32 %v3478, %v4863
      %v5198 = vadd.f32 %v3483, %v4868
      %v5199 = vadd.f32 %v3486, %v4871
      %v5200 = vadd.f32 %v3491, %v4876
      %v5201 = vadd.f32 %v3494, %v4879
      %v5202 = vadd.f32 %v3499, %v4884
      %v5203 = vadd.f32 %v3502, %v4887
      %v5204 = vadd.f32 %v3507, %v4892
      %v5205 = vadd.f32 %v3510, %v4895
      %v5206 = vadd.f32 %v3515, %v4900
      %v5207 = vadd.f32 %v3518, %v4903
      %v5208 = vadd.f32 %v3523, %v4908
      %v5209 = vadd.f32 %v3526, %v4911
      %v5210 = vadd.f32 %v3531, %v4916
      %v5211 = vadd.f32 %v3534, %v4919
      %v5212 = vadd.f32 %v3539, %v4924
      %v5213 = vadd.f32 %v3542, %v4927
      %v5214 = vadd.f32 %v3547, %v4932
      %v5215 = vadd.f32 %v3550, %v4935
      %v5216 = vadd.f32 %v3555, %v4940
      %v5217 = vadd.f32 %v3558, %v4943
      %v5218 = vadd.f32 %v3563, %v4948
      %v5219 = vadd.f32 %v3566, %v4951
      %v5220 = vadd.f32 %v3571, %v4956
      %v5221 = vadd.f32 %v3574, %v4959
      %v5222 = vadd.f32 %v3579, %v4964
      %v5223 = vadd.f32 %v3582, %v4967
      %v5224 = vadd.f32 %v3587, %v4972
      %v5225 = vadd.f32 %v3590, %v4975
      %v5226 = vadd.f32 %v3595, %v4980
      %v5227 = vadd.f32 %v3598, %v4983
      %v5228 = vadd.f32 %v3603, %v4988
      %v5229 = vadd.f32 %v3606, %v4991
      %v5230 = vadd.f32 %v3611, %v4996
      %v5231 = vadd.f32 %v3614, %v4999
      %v5232 = vadd.f32 %v3619, %v5004
      %v5233 = vadd.f32 %v3622, %v5007
      %v5234 = vadd.f32 %v3627, %v5012
      %v5235 = vadd.f32 %v3630, %v5015
      %v5236 = vadd.f32 %v3635, %v5020
      %v5237 = vadd.f32 %v3638, %v5023
      %v5238 = vadd.f32 %v3643, %v5028
      %v5239 = vadd.f32 %v3646, %v5031
      %v5240 = vadd.f32 %v3651, %v5036
      %v5241 = vadd.f32 %v3654, %v5039
      %v5242 = vadd.f32 %v3659, %v5044
      %v5243 = vadd.f32 %v3662, %v5047
      %v5244 = vadd.f32 %v3667, %v5052
      %v5245 = vadd.f32 %v3670, %v5055
      %v5246 = vadd.f32 %v3675, %v5060
      %v5247 = vadd.f32 %v3678, %v5063
      %v5248 = vadd.f32 %v3683, %v5068
      %v5249 = vadd.f32 %v3686, %v5071
      %v5250 = vadd.f32 %v3691, %v5076
      %v5251 = vadd.f32 %v3694, %v5079
      %v5252 = vadd.f32 %v3699, %v5084
      %v5253 = vadd.f32 %v3702, %v5087
      %v5254 = vadd.f32 %v3707, %v5092
      %v5255 = vadd.f32 %v3710, %v5095
      %v5256 = vadd.f32 %v3715, %v5100
      %v5257 = vadd.f32 %v3718, %v5103
      %v5258 = vadd.f32 %v3723, %v5108
      %v5259 = vadd.f32 %v3726, %v5111
      %v5260 = vadd.f32 %v3731, %v5116
      %v5261 = vadd.f32 %v3734, %v5119
      %v5262 = vadd.f32 %v3739, %v5124
      %v5263 = vadd.f32 %v3742, %v5127
      %v5264 = vadd.f32 %v3747, %v5132
      %v5265 = vadd.f32 %v3750, %v5135
      %s5266 = scalar_lea.vmem %s1, 6
      %v5267 = vld [vmem:[%s5266] sm:$0x3]
      %v5272 = vunpack.c.l.b16 %v332
      %v5273 = vunpack.c.l.b16 %v333
      %v5274 = vunpack.c.l.b16 %v334
      %v5275 = vunpack.c.l.b16 %v335
      %v5276 = vpack.c.b16 %v5273, %v5272
      %v5277 = vpack.c.b16 %v5275, %v5274
      %v5279 = vsel %vm1948, %v5276, 0
      %v5282 = vsel %vm1948, %v5277, 0
      %v5285 = vand.u32 %v5267, %v2144
      %5287 = vmatprep.subr.bf16.mxu0 0
      %5288 = vmatpush1.bf16.msra.mxu0 %v5285
      %5289 = vmatprep.subr.bf16.mxu0 0
      %5290 = vmatpush1.bf16.msra.mxu0 0
      %5291 = vmatprep.subr.bf16.mxu0 0
      %5292 = vmatpush1.bf16.msra.mxu0 0
      %5293 = vmatprep.subr.bf16.mxu0 0
      %5294 = vmatpush1.bf16.msra.mxu0 0
      %5295 = vmatprep.subr.bf16.mxu0 0
      %5296 = vmatpush1.bf16.msra.mxu0 0
      %5297 = vmatprep.subr.bf16.mxu0 0
      %5298 = vmatpush1.bf16.msra.mxu0 0
      %5299 = vmatprep.subr.bf16.mxu0 0
      %5300 = vmatpush1.bf16.msra.mxu0 0
      %5301 = vmatprep.subr.bf16.mxu0 0
      %5302 = vmatpush1.bf16.msra.mxu0 0
      %5303 = vmatprep.subr.bf16.mxu0 0
      %5304 = vmatpush1.bf16.msra.mxu0 0
      %5305 = vmatprep.subr.bf16.mxu0 0
      %5306 = vmatpush1.bf16.msra.mxu0 0
      %5307 = vmatprep.subr.bf16.mxu0 0
      %5308 = vmatpush1.bf16.msra.mxu0 0
      %5309 = vmatprep.subr.bf16.mxu0 0
      %5310 = vmatpush1.bf16.msra.mxu0 0
      %5311 = vmatprep.subr.bf16.mxu0 0
      %5312 = vmatpush1.bf16.msra.mxu0 0
      %5313 = vmatprep.subr.bf16.mxu0 0
      %5314 = vmatpush1.bf16.msra.mxu0 0
      %5315 = vmatprep.subr.bf16.mxu0 0
      %5316 = vmatpush1.bf16.msra.mxu0 0
      %5317 = vmatprep.subr.bf16.mxu0 0
      %5318 = vmatpush1.bf16.msra.mxu0 0
      %5319 = vmatprep.mubr.bf16.mxu0 0
      %5320 = vmatmul.mubr.bf16.gmra.mrb[0].mxu0 %v3020
      %v5321 = vpop.f32.mrb[0].mxu0
      %v5322 = vadd.f32 0.0, %v5321
      %v5323 = vpop.f32.mrb[0].mxu0
      %v5324 = vpop.f32.mrb[0].mxu0
      %v5325 = vadd.f32 0.0, %v5324
      %v5326 = vpop.f32.mrb[0].mxu0
      %5327 = vmatprep.mubr.bf16.mxu0 0
      %5328 = vmatmul.mubr.bf16.gmra.mrb[0].mxu0 %v3023
      %v5329 = vpop.f32.mrb[0].mxu0
      %v5330 = vadd.f32 0.0, %v5329
      %v5331 = vpop.f32.mrb[0].mxu0
      %v5332 = vpop.f32.mrb[0].mxu0
      %v5333 = vadd.f32 0.0, %v5332
      %v5334 = vpop.f32.mrb[0].mxu0
      %5335 = vmatprep.mubr.bf16.mxu0 0
      %5336 = vmatmul.mubr.bf16.gmra.mrb[0].mxu0 %v3026
      %v5337 = vpop.f32.mrb[0].mxu0
      %v5338 = vadd.f32 0.0, %v5337
      %v5339 = vpop.f32.mrb[0].mxu0
      %v5340 = vpop.f32.mrb[0].mxu0
      %v5341 = vadd.f32 0.0, %v5340
      %v5342 = vpop.f32.mrb[0].mxu0
      %5343 = vmatprep.mubr.bf16.mxu0 0
      %5344 = vmatmul.mubr.bf16.gmra.mrb[0].mxu0 %v3029
      %v5345 = vpop.f32.mrb[0].mxu0
      %v5346 = vadd.f32 0.0, %v5345
      %v5347 = vpop.f32.mrb[0].mxu0
      %v5348 = vpop.f32.mrb[0].mxu0
      %v5349 = vadd.f32 0.0, %v5348
      %v5350 = vpop.f32.mrb[0].mxu0
      %5351 = vmatprep.mubr.bf16.mxu0 0
      %5352 = vmatmul.mubr.bf16.gmra.mrb[0].mxu0 %v3032
      %v5353 = vpop.f32.mrb[0].mxu0
      %v5354 = vadd.f32 0.0, %v5353
      %v5355 = vpop.f32.mrb[0].mxu0
      %v5356 = vpop.f32.mrb[0].mxu0
      %v5357 = vadd.f32 0.0, %v5356
      %v5358 = vpop.f32.mrb[0].mxu0
      %5359 = vmatprep.mubr.bf16.mxu0 0
      %5360 = vmatmul.mubr.bf16.gmra.mrb[0].mxu0 %v3035
      %v5361 = vpop.f32.mrb[0].mxu0
      %v5362 = vadd.f32 0.0, %v5361
      %v5363 = vpop.f32.mrb[0].mxu0
      %v5364 = vpop.f32.mrb[0].mxu0
      %v5365 = vadd.f32 0.0, %v5364
      %v5366 = vpop.f32.mrb[0].mxu0
      %5367 = vmatprep.mubr.bf16.mxu0 0
      %5368 = vmatmul.mubr.bf16.gmra.mrb[0].mxu0 %v3038
      %v5369 = vpop.f32.mrb[0].mxu0
      %v5370 = vadd.f32 0.0, %v5369
      %v5371 = vpop.f32.mrb[0].mxu0
      %v5372 = vpop.f32.mrb[0].mxu0
      %v5373 = vadd.f32 0.0, %v5372
      %v5374 = vpop.f32.mrb[0].mxu0
      %5375 = vmatprep.mubr.bf16.mxu0 0
      %5376 = vmatmul.mubr.bf16.gmra.mrb[0].mxu0 %v3041
      %v5377 = vpop.f32.mrb[0].mxu0
      %v5378 = vadd.f32 0.0, %v5377
      %v5379 = vpop.f32.mrb[0].mxu0
      %v5380 = vpop.f32.mrb[0].mxu0
      %v5381 = vadd.f32 0.0, %v5380
      %v5382 = vpop.f32.mrb[0].mxu0
      %5383 = vmatprep.mubr.bf16.mxu0 0
      %5384 = vmatmul.mubr.bf16.gmra.mrb[0].mxu0 %v3044
      %v5385 = vpop.f32.mrb[0].mxu0
      %v5386 = vadd.f32 0.0, %v5385
      %v5387 = vpop.f32.mrb[0].mxu0
      %v5388 = vpop.f32.mrb[0].mxu0
      %v5389 = vadd.f32 0.0, %v5388
      %v5390 = vpop.f32.mrb[0].mxu0
      %5391 = vmatprep.mubr.bf16.mxu0 0
      %5392 = vmatmul.mubr.bf16.gmra.mrb[0].mxu0 %v3047
      %v5393 = vpop.f32.mrb[0].mxu0
      %v5394 = vadd.f32 0.0, %v5393
      %v5395 = vpop.f32.mrb[0].mxu0
      %v5396 = vpop.f32.mrb[0].mxu0
      %v5397 = vadd.f32 0.0, %v5396
      %v5398 = vpop.f32.mrb[0].mxu0
      %5399 = vmatprep.mubr.bf16.mxu0 0
      %5400 = vmatmul.mubr.bf16.gmra.mrb[0].mxu0 %v3050
      %v5401 = vpop.f32.mrb[0].mxu0
      %v5402 = vadd.f32 0.0, %v5401
      %v5403 = vpop.f32.mrb[0].mxu0
      %v5404 = vpop.f32.mrb[0].mxu0
      %v5405 = vadd.f32 0.0, %v5404
      %v5406 = vpop.f32.mrb[0].mxu0
      %5407 = vmatprep.mubr.bf16.mxu0 0
      %5408 = vmatmul.mubr.bf16.gmra.mrb[0].mxu0 %v3053
      %v5409 = vpop.f32.mrb[0].mxu0
      %v5410 = vadd.f32 0.0, %v5409
      %v5411 = vpop.f32.mrb[0].mxu0
      %v5412 = vpop.f32.mrb[0].mxu0
      %v5413 = vadd.f32 0.0, %v5412
      %v5414 = vpop.f32.mrb[0].mxu0
      %5415 = vmatprep.mubr.bf16.mxu0 0
      %5416 = vmatmul.mubr.bf16.gmra.mrb[0].mxu0 %v3056
      %v5417 = vpop.f32.mrb[0].mxu0
      %v5418 = vadd.f32 0.0, %v5417
      %v5419 = vpop.f32.mrb[0].mxu0
      %v5420 = vpop.f32.mrb[0].mxu0
      %v5421 = vadd.f32 0.0, %v5420
      %v5422 = vpop.f32.mrb[0].mxu0
      %5423 = vmatprep.mubr.bf16.mxu0 0
      %5424 = vmatmul.mubr.bf16.gmra.mrb[0].mxu0 %v3059
      %v5425 = vpop.f32.mrb[0].mxu0
      %v5426 = vadd.f32 0.0, %v5425
      %v5427 = vpop.f32.mrb[0].mxu0
      %v5428 = vpop.f32.mrb[0].mxu0
      %v5429 = vadd.f32 0.0, %v5428
      %v5430 = vpop.f32.mrb[0].mxu0
      %5431 = vmatprep.mubr.bf16.mxu0 0
      %5432 = vmatmul.mubr.bf16.gmra.mrb[0].mxu0 %v3062
      %v5433 = vpop.f32.mrb[0].mxu0
      %v5434 = vadd.f32 0.0, %v5433
      %v5435 = vpop.f32.mrb[0].mxu0
      %v5436 = vpop.f32.mrb[0].mxu0
      %v5437 = vadd.f32 0.0, %v5436
      %v5438 = vpop.f32.mrb[0].mxu0
      %5439 = vmatprep.mubr.bf16.mxu0 0
      %5440 = vmatmul.mubr.bf16.gmra.mrb[0].mxu0 %v3065
      %v5441 = vpop.f32.mrb[0].mxu0
      %v5442 = vadd.f32 0.0, %v5441
      %v5443 = vpop.f32.mrb[0].mxu0
      %v5444 = vpop.f32.mrb[0].mxu0
      %v5445 = vadd.f32 0.0, %v5444
      %v5446 = vpop.f32.mrb[0].mxu0
      %5447 = vmatprep.mubr.bf16.mxu0 0
      %5448 = vmatmul.mubr.bf16.gmra.mrb[0].mxu0 %v3068
      %v5449 = vpop.f32.mrb[0].mxu0
      %v5450 = vadd.f32 0.0, %v5449
      %v5451 = vpop.f32.mrb[0].mxu0
      %v5452 = vpop.f32.mrb[0].mxu0
      %v5453 = vadd.f32 0.0, %v5452
      %v5454 = vpop.f32.mrb[0].mxu0
      %5455 = vmatprep.mubr.bf16.mxu0 0
      %5456 = vmatmul.mubr.bf16.gmra.mrb[0].mxu0 %v3071
      %v5457 = vpop.f32.mrb[0].mxu0
      %v5458 = vadd.f32 0.0, %v5457
      %v5459 = vpop.f32.mrb[0].mxu0
      %v5460 = vpop.f32.mrb[0].mxu0
      %v5461 = vadd.f32 0.0, %v5460
      %v5462 = vpop.f32.mrb[0].mxu0
      %5463 = vmatprep.mubr.bf16.mxu0 0
      %5464 = vmatmul.mubr.bf16.gmra.mrb[0].mxu0 %v3074
      %v5465 = vpop.f32.mrb[0].mxu0
      %v5466 = vadd.f32 0.0, %v5465
      %v5467 = vpop.f32.mrb[0].mxu0
      %v5468 = vpop.f32.mrb[0].mxu0
      %v5469 = vadd.f32 0.0, %v5468
      %v5470 = vpop.f32.mrb[0].mxu0
      %5471 = vmatprep.mubr.bf16.mxu0 0
      %5472 = vmatmul.mubr.bf16.gmra.mrb[0].mxu0 %v3077
      %v5473 = vpop.f32.mrb[0].mxu0
      %v5474 = vadd.f32 0.0, %v5473
      %v5475 = vpop.f32.mrb[0].mxu0
      %v5476 = vpop.f32.mrb[0].mxu0
      %v5477 = vadd.f32 0.0, %v5476
      %v5478 = vpop.f32.mrb[0].mxu0
      %5479 = vmatprep.mubr.bf16.mxu0 0
      %5480 = vmatmul.mubr.bf16.gmra.mrb[0].mxu0 %v3080
      %v5481 = vpop.f32.mrb[0].mxu0
      %v5482 = vadd.f32 0.0, %v5481
      %v5483 = vpop.f32.mrb[0].mxu0
      %v5484 = vpop.f32.mrb[0].mxu0
      %v5485 = vadd.f32 0.0, %v5484
      %v5486 = vpop.f32.mrb[0].mxu0
      %5487 = vmatprep.mubr.bf16.mxu0 0
      %5488 = vmatmul.mubr.bf16.gmra.mrb[0].mxu0 %v3083
      %v5489 = vpop.f32.mrb[0].mxu0
      %v5490 = vadd.f32 0.0, %v5489
      %v5491 = vpop.f32.mrb[0].mxu0
      %v5492 = vpop.f32.mrb[0].mxu0
      %v5493 = vadd.f32 0.0, %v5492
      %v5494 = vpop.f32.mrb[0].mxu0
      %5495 = vmatprep.mubr.bf16.mxu0 0
      %5496 = vmatmul.mubr.bf16.gmra.mrb[0].mxu0 %v3086
      %v5497 = vpop.f32.mrb[0].mxu0
      %v5498 = vadd.f32 0.0, %v5497
      %v5499 = vpop.f32.mrb[0].mxu0
      %v5500 = vpop.f32.mrb[0].mxu0
      %v5501 = vadd.f32 0.0, %v5500
      %v5502 = vpop.f32.mrb[0].mxu0
      %5503 = vmatprep.mubr.bf16.mxu0 0
      %5504 = vmatmul.mubr.bf16.gmra.mrb[0].mxu0 %v3089
      %v5505 = vpop.f32.mrb[0].mxu0
      %v5506 = vadd.f32 0.0, %v5505
      %v5507 = vpop.f32.mrb[0].mxu0
      %v5508 = vpop.f32.mrb[0].mxu0
      %v5509 = vadd.f32 0.0, %v5508
      %v5510 = vpop.f32.mrb[0].mxu0
      %5511 = vmatprep.mubr.bf16.mxu0 0
      %5512 = vmatmul.mubr.bf16.gmra.mrb[0].mxu0 %v3092
      %v5513 = vpop.f32.mrb[0].mxu0
      %v5514 = vadd.f32 0.0, %v5513
      %v5515 = vpop.f32.mrb[0].mxu0
      %v5516 = vpop.f32.mrb[0].mxu0
      %v5517 = vadd.f32 0.0, %v5516
      %v5518 = vpop.f32.mrb[0].mxu0
      %5519 = vmatprep.mubr.bf16.mxu0 0
      %5520 = vmatmul.mubr.bf16.gmra.mrb[0].mxu0 %v3095
      %v5521 = vpop.f32.mrb[0].mxu0
      %v5522 = vadd.f32 0.0, %v5521
      %v5523 = vpop.f32.mrb[0].mxu0
      %v5524 = vpop.f32.mrb[0].mxu0
      %v5525 = vadd.f32 0.0, %v5524
      %v5526 = vpop.f32.mrb[0].mxu0
      %5527 = vmatprep.mubr.bf16.mxu0 0
      %5528 = vmatmul.mubr.bf16.gmra.mrb[0].mxu0 %v3098
      %v5529 = vpop.f32.mrb[0].mxu0
      %v5530 = vadd.f32 0.0, %v5529
      %v5531 = vpop.f32.mrb[0].mxu0
      %v5532 = vpop.f32.mrb[0].mxu0
      %v5533 = vadd.f32 0.0, %v5532
      %v5534 = vpop.f32.mrb[0].mxu0
      %5535 = vmatprep.mubr.bf16.mxu0 0
      %5536 = vmatmul.mubr.bf16.gmra.mrb[0].mxu0 %v3101
      %v5537 = vpop.f32.mrb[0].mxu0
      %v5538 = vadd.f32 0.0, %v5537
      %v5539 = vpop.f32.mrb[0].mxu0
      %v5540 = vpop.f32.mrb[0].mxu0
      %v5541 = vadd.f32 0.0, %v5540
      %v5542 = vpop.f32.mrb[0].mxu0
      %5543 = vmatprep.mubr.bf16.mxu0 0
      %5544 = vmatmul.mubr.bf16.gmra.mrb[0].mxu0 %v3104
      %v5545 = vpop.f32.mrb[0].mxu0
      %v5546 = vadd.f32 0.0, %v5545
      %v5547 = vpop.f32.mrb[0].mxu0
      %v5548 = vpop.f32.mrb[0].mxu0
      %v5549 = vadd.f32 0.0, %v5548
      %v5550 = vpop.f32.mrb[0].mxu0
      %5551 = vmatprep.mubr.bf16.mxu0 0
      %5552 = vmatmul.mubr.bf16.gmra.mrb[0].mxu0 %v3107
      %v5553 = vpop.f32.mrb[0].mxu0
      %v5554 = vadd.f32 0.0, %v5553
      %v5555 = vpop.f32.mrb[0].mxu0
      %v5556 = vpop.f32.mrb[0].mxu0
      %v5557 = vadd.f32 0.0, %v5556
      %v5558 = vpop.f32.mrb[0].mxu0
      %5559 = vmatprep.mubr.bf16.mxu0 0
      %5560 = vmatmul.mubr.bf16.gmra.mrb[0].mxu0 %v3110
      %v5561 = vpop.f32.mrb[0].mxu0
      %v5562 = vadd.f32 0.0, %v5561
      %v5563 = vpop.f32.mrb[0].mxu0
      %v5564 = vpop.f32.mrb[0].mxu0
      %v5565 = vadd.f32 0.0, %v5564
      %v5566 = vpop.f32.mrb[0].mxu0
      %5567 = vmatprep.mubr.bf16.mxu0 0
      %5568 = vmatmul.mubr.bf16.gmra.mrb[0].mxu0 %v3113
      %v5569 = vpop.f32.mrb[0].mxu0
      %v5570 = vadd.f32 0.0, %v5569
      %v5571 = vpop.f32.mrb[0].mxu0
      %v5572 = vpop.f32.mrb[0].mxu0
      %v5573 = vadd.f32 0.0, %v5572
      %v5574 = vpop.f32.mrb[0].mxu0
      %5575 = vmatprep.mubr.bf16.mxu0 0
      %5576 = vmatmul.mubr.bf16.gmra.mrb[0].mxu0 %v3116
      %v5577 = vpop.f32.mrb[0].mxu0
      %v5578 = vadd.f32 0.0, %v5577
      %v5579 = vpop.f32.mrb[0].mxu0
      %v5580 = vpop.f32.mrb[0].mxu0
      %v5581 = vadd.f32 0.0, %v5580
      %v5582 = vpop.f32.mrb[0].mxu0
      %5583 = vmatprep.mubr.bf16.mxu0 0
      %5584 = vmatmul.mubr.bf16.gmra.mrb[0].mxu0 %v3119
      %v5585 = vpop.f32.mrb[0].mxu0
      %v5586 = vadd.f32 0.0, %v5585
      %v5587 = vpop.f32.mrb[0].mxu0
      %v5588 = vpop.f32.mrb[0].mxu0
      %v5589 = vadd.f32 0.0, %v5588
      %v5590 = vpop.f32.mrb[0].mxu0
      %5591 = vmatprep.mubr.bf16.mxu0 0
      %5592 = vmatmul.mubr.bf16.gmra.mrb[0].mxu0 %v3122
      %v5593 = vpop.f32.mrb[0].mxu0
      %v5594 = vadd.f32 0.0, %v5593
      %v5595 = vpop.f32.mrb[0].mxu0
      %v5596 = vpop.f32.mrb[0].mxu0
      %v5597 = vadd.f32 0.0, %v5596
      %v5598 = vpop.f32.mrb[0].mxu0
      %5599 = vmatprep.mubr.bf16.mxu0 0
      %5600 = vmatmul.mubr.bf16.gmra.mrb[0].mxu0 %v3125
      %v5601 = vpop.f32.mrb[0].mxu0
      %v5602 = vadd.f32 0.0, %v5601
      %v5603 = vpop.f32.mrb[0].mxu0
      %v5604 = vpop.f32.mrb[0].mxu0
      %v5605 = vadd.f32 0.0, %v5604
      %v5606 = vpop.f32.mrb[0].mxu0
      %5607 = vmatprep.mubr.bf16.mxu0 0
      %5608 = vmatmul.mubr.bf16.gmra.mrb[0].mxu0 %v3128
      %v5609 = vpop.f32.mrb[0].mxu0
      %v5610 = vadd.f32 0.0, %v5609
      %v5611 = vpop.f32.mrb[0].mxu0
      %v5612 = vpop.f32.mrb[0].mxu0
      %v5613 = vadd.f32 0.0, %v5612
      %v5614 = vpop.f32.mrb[0].mxu0
      %5615 = vmatprep.mubr.bf16.mxu0 0
      %5616 = vmatmul.mubr.bf16.gmra.mrb[0].mxu0 %v3131
      %v5617 = vpop.f32.mrb[0].mxu0
      %v5618 = vadd.f32 0.0, %v5617
      %v5619 = vpop.f32.mrb[0].mxu0
      %v5620 = vpop.f32.mrb[0].mxu0
      %v5621 = vadd.f32 0.0, %v5620
      %v5622 = vpop.f32.mrb[0].mxu0
      %5623 = vmatprep.mubr.bf16.mxu0 0
      %5624 = vmatmul.mubr.bf16.gmra.mrb[0].mxu0 %v3134
      %v5625 = vpop.f32.mrb[0].mxu0
      %v5626 = vadd.f32 0.0, %v5625
      %v5627 = vpop.f32.mrb[0].mxu0
      %v5628 = vpop.f32.mrb[0].mxu0
      %v5629 = vadd.f32 0.0, %v5628
      %v5630 = vpop.f32.mrb[0].mxu0
      %5631 = vmatprep.mubr.bf16.mxu0 0
      %5632 = vmatmul.mubr.bf16.gmra.mrb[0].mxu0 %v3137
      %v5633 = vpop.f32.mrb[0].mxu0
      %v5634 = vadd.f32 0.0, %v5633
      %v5635 = vpop.f32.mrb[0].mxu0
      %v5636 = vpop.f32.mrb[0].mxu0
      %v5637 = vadd.f32 0.0, %v5636
      %v5638 = vpop.f32.mrb[0].mxu0
      %5639 = vmatprep.mubr.bf16.mxu0 0
      %5640 = vmatmul.mubr.bf16.gmra.mrb[0].mxu0 %v3140
      %v5641 = vpop.f32.mrb[0].mxu0
      %v5642 = vadd.f32 0.0, %v5641
      %v5643 = vpop.f32.mrb[0].mxu0
      %v5644 = vpop.f32.mrb[0].mxu0
      %v5645 = vadd.f32 0.0, %v5644
      %v5646 = vpop.f32.mrb[0].mxu0
      %5647 = vmatprep.mubr.bf16.mxu0 0
      %5648 = vmatmul.mubr.bf16.gmra.mrb[0].mxu0 %v3143
      %v5649 = vpop.f32.mrb[0].mxu0
      %v5650 = vadd.f32 0.0, %v5649
      %v5651 = vpop.f32.mrb[0].mxu0
      %v5652 = vpop.f32.mrb[0].mxu0
      %v5653 = vadd.f32 0.0, %v5652
      %v5654 = vpop.f32.mrb[0].mxu0
      %5655 = vmatprep.mubr.bf16.mxu0 0
      %5656 = vmatmul.mubr.bf16.gmra.mrb[0].mxu0 %v3146
      %v5657 = vpop.f32.mrb[0].mxu0
      %v5658 = vadd.f32 0.0, %v5657
      %v5659 = vpop.f32.mrb[0].mxu0
      %v5660 = vpop.f32.mrb[0].mxu0
      %v5661 = vadd.f32 0.0, %v5660
      %v5662 = vpop.f32.mrb[0].mxu0
      %5663 = vmatprep.mubr.bf16.mxu0 0
      %5664 = vmatmul.mubr.bf16.gmra.mrb[0].mxu0 %v3149
      %v5665 = vpop.f32.mrb[0].mxu0
      %v5666 = vadd.f32 0.0, %v5665
      %v5667 = vpop.f32.mrb[0].mxu0
      %v5668 = vpop.f32.mrb[0].mxu0
      %v5669 = vadd.f32 0.0, %v5668
      %v5670 = vpop.f32.mrb[0].mxu0
      %5671 = vmatprep.mubr.bf16.mxu0 0
      %5672 = vmatmul.mubr.bf16.gmra.mrb[0].mxu0 %v3152
      %v5673 = vpop.f32.mrb[0].mxu0
      %v5674 = vadd.f32 0.0, %v5673
      %v5675 = vpop.f32.mrb[0].mxu0
      %v5676 = vpop.f32.mrb[0].mxu0
      %v5677 = vadd.f32 0.0, %v5676
      %v5678 = vpop.f32.mrb[0].mxu0
      %5679 = vmatprep.mubr.bf16.mxu0 0
      %5680 = vmatmul.mubr.bf16.gmra.mrb[0].mxu0 %v3155
      %v5681 = vpop.f32.mrb[0].mxu0
      %v5682 = vadd.f32 0.0, %v5681
      %v5683 = vpop.f32.mrb[0].mxu0
      %v5684 = vpop.f32.mrb[0].mxu0
      %v5685 = vadd.f32 0.0, %v5684
      %v5686 = vpop.f32.mrb[0].mxu0
      %5687 = vmatprep.mubr.bf16.mxu0 0
      %5688 = vmatmul.mubr.bf16.gmra.mrb[0].mxu0 %v3158
      %v5689 = vpop.f32.mrb[0].mxu0
      %v5690 = vadd.f32 0.0, %v5689
      %v5691 = vpop.f32.mrb[0].mxu0
      %v5692 = vpop.f32.mrb[0].mxu0
      %v5693 = vadd.f32 0.0, %v5692
      %v5694 = vpop.f32.mrb[0].mxu0
      %5695 = vmatprep.mubr.bf16.mxu0 0
      %5696 = vmatmul.mubr.bf16.gmra.mrb[0].mxu0 %v3161
      %v5697 = vpop.f32.mrb[0].mxu0
      %v5698 = vadd.f32 0.0, %v5697
      %v5699 = vpop.f32.mrb[0].mxu0
      %v5700 = vpop.f32.mrb[0].mxu0
      %v5701 = vadd.f32 0.0, %v5700
      %v5702 = vpop.f32.mrb[0].mxu0
      %5703 = vmatprep.mubr.bf16.mxu0 0
      %5704 = vmatmul.mubr.bf16.gmra.mrb[0].mxu0 %v3164
      %v5705 = vpop.f32.mrb[0].mxu0
      %v5706 = vadd.f32 0.0, %v5705
      %v5707 = vpop.f32.mrb[0].mxu0
      %v5708 = vpop.f32.mrb[0].mxu0
      %v5709 = vadd.f32 0.0, %v5708
      %v5710 = vpop.f32.mrb[0].mxu0
      %5711 = vmatprep.mubr.bf16.mxu0 0
      %5712 = vmatmul.mubr.bf16.gmra.mrb[0].mxu0 %v3167
      %v5713 = vpop.f32.mrb[0].mxu0
      %v5714 = vadd.f32 0.0, %v5713
      %v5715 = vpop.f32.mrb[0].mxu0
      %v5716 = vpop.f32.mrb[0].mxu0
      %v5717 = vadd.f32 0.0, %v5716
      %v5718 = vpop.f32.mrb[0].mxu0
      %5719 = vmatprep.mubr.bf16.mxu0 0
      %5720 = vmatmul.mubr.bf16.gmra.mrb[0].mxu0 %v3170
      %v5721 = vpop.f32.mrb[0].mxu0
      %v5722 = vadd.f32 0.0, %v5721
      %v5723 = vpop.f32.mrb[0].mxu0
      %v5724 = vpop.f32.mrb[0].mxu0
      %v5725 = vadd.f32 0.0, %v5724
      %v5726 = vpop.f32.mrb[0].mxu0
      %5727 = vmatprep.mubr.bf16.mxu0 0
      %5728 = vmatmul.mubr.bf16.gmra.mrb[0].mxu0 %v3173
      %v5729 = vpop.f32.mrb[0].mxu0
      %v5730 = vadd.f32 0.0, %v5729
      %v5731 = vpop.f32.mrb[0].mxu0
      %v5732 = vpop.f32.mrb[0].mxu0
      %v5733 = vadd.f32 0.0, %v5732
      %v5734 = vpop.f32.mrb[0].mxu0
      %5735 = vmatprep.mubr.bf16.mxu0 0
      %5736 = vmatmul.mubr.bf16.gmra.mrb[0].mxu0 %v3176
      %v5737 = vpop.f32.mrb[0].mxu0
      %v5738 = vadd.f32 0.0, %v5737
      %v5739 = vpop.f32.mrb[0].mxu0
      %v5740 = vpop.f32.mrb[0].mxu0
      %v5741 = vadd.f32 0.0, %v5740
      %v5742 = vpop.f32.mrb[0].mxu0
      %5743 = vmatprep.mubr.bf16.mxu0 0
      %5744 = vmatmul.mubr.bf16.gmra.mrb[0].mxu0 %v3179
      %v5745 = vpop.f32.mrb[0].mxu0
      %v5746 = vadd.f32 0.0, %v5745
      %v5747 = vpop.f32.mrb[0].mxu0
      %v5748 = vpop.f32.mrb[0].mxu0
      %v5749 = vadd.f32 0.0, %v5748
      %v5750 = vpop.f32.mrb[0].mxu0
      %5751 = vmatprep.mubr.bf16.mxu0 0
      %5752 = vmatmul.mubr.bf16.gmra.mrb[0].mxu0 %v3182
      %v5753 = vpop.f32.mrb[0].mxu0
      %v5754 = vadd.f32 0.0, %v5753
      %v5755 = vpop.f32.mrb[0].mxu0
      %v5756 = vpop.f32.mrb[0].mxu0
      %v5757 = vadd.f32 0.0, %v5756
      %v5758 = vpop.f32.mrb[0].mxu0
      %5759 = vmatprep.mubr.bf16.mxu0 0
      %5760 = vmatmul.mubr.bf16.gmra.mrb[0].mxu0 %v3185
      %v5761 = vpop.f32.mrb[0].mxu0
      %v5762 = vadd.f32 0.0, %v5761
      %v5763 = vpop.f32.mrb[0].mxu0
      %v5764 = vpop.f32.mrb[0].mxu0
      %v5765 = vadd.f32 0.0, %v5764
      %v5766 = vpop.f32.mrb[0].mxu0
      %5767 = vmatprep.mubr.bf16.mxu0 0
      %5768 = vmatmul.mubr.bf16.gmra.mrb[0].mxu0 %v3188
      %v5769 = vpop.f32.mrb[0].mxu0
      %v5770 = vadd.f32 0.0, %v5769
      %v5771 = vpop.f32.mrb[0].mxu0
      %v5772 = vpop.f32.mrb[0].mxu0
      %v5773 = vadd.f32 0.0, %v5772
      %v5774 = vpop.f32.mrb[0].mxu0
      %5775 = vmatprep.mubr.bf16.mxu0 0
      %5776 = vmatmul.mubr.bf16.gmra.mrb[0].mxu0 %v3191
      %v5777 = vpop.f32.mrb[0].mxu0
      %v5778 = vadd.f32 0.0, %v5777
      %v5779 = vpop.f32.mrb[0].mxu0
      %v5780 = vpop.f32.mrb[0].mxu0
      %v5781 = vadd.f32 0.0, %v5780
      %v5782 = vpop.f32.mrb[0].mxu0
      %5783 = vmatprep.mubr.bf16.mxu0 0
      %5784 = vmatmul.mubr.bf16.gmra.mrb[0].mxu0 %v3194
      %v5785 = vpop.f32.mrb[0].mxu0
      %v5786 = vadd.f32 0.0, %v5785
      %v5787 = vpop.f32.mrb[0].mxu0
      %v5788 = vpop.f32.mrb[0].mxu0
      %v5789 = vadd.f32 0.0, %v5788
      %v5790 = vpop.f32.mrb[0].mxu0
      %5791 = vmatprep.mubr.bf16.mxu0 0
      %5792 = vmatmul.mubr.bf16.gmra.mrb[0].mxu0 %v3197
      %v5793 = vpop.f32.mrb[0].mxu0
      %v5794 = vadd.f32 0.0, %v5793
      %v5795 = vpop.f32.mrb[0].mxu0
      %v5796 = vpop.f32.mrb[0].mxu0
      %v5797 = vadd.f32 0.0, %v5796
      %v5798 = vpop.f32.mrb[0].mxu0
      %5799 = vmatprep.mubr.bf16.mxu0 0
      %5800 = vmatmul.mubr.bf16.gmra.mrb[0].mxu0 %v3200
      %v5801 = vpop.f32.mrb[0].mxu0
      %v5802 = vadd.f32 0.0, %v5801
      %v5803 = vpop.f32.mrb[0].mxu0
      %v5804 = vpop.f32.mrb[0].mxu0
      %v5805 = vadd.f32 0.0, %v5804
      %v5806 = vpop.f32.mrb[0].mxu0
      %5807 = vmatprep.mubr.bf16.mxu0 0
      %5808 = vmatmul.mubr.bf16.gmra.mrb[0].mxu0 %v3203
      %v5809 = vpop.f32.mrb[0].mxu0
      %v5810 = vadd.f32 0.0, %v5809
      %v5811 = vpop.f32.mrb[0].mxu0
      %v5812 = vpop.f32.mrb[0].mxu0
      %v5813 = vadd.f32 0.0, %v5812
      %v5814 = vpop.f32.mrb[0].mxu0
      %5815 = vmatprep.mubr.bf16.mxu0 0
      %5816 = vmatmul.mubr.bf16.gmra.mrb[0].mxu0 %v5279
      %v5817 = vpop.f32.mrb[0].mxu0
      %v5818 = vadd.f32 0.0, %v5817
      %v5819 = vpop.f32.mrb[0].mxu0
      %v5820 = vpop.f32.mrb[0].mxu0
      %v5821 = vadd.f32 0.0, %v5820
      %v5822 = vpop.f32.mrb[0].mxu0
      %5823 = vmatprep.mubr.bf16.mxu0 0
      %5824 = vmatmul.mubr.bf16.gmra.mrb[0].mxu0 %v5282
      %v5825 = vpop.f32.mrb[0].mxu0
      %v5826 = vadd.f32 0.0, %v5825
      %v5827 = vpop.f32.mrb[0].mxu0
      %v5828 = vpop.f32.mrb[0].mxu0
      %v5829 = vadd.f32 0.0, %v5828
      %v5830 = vpop.f32.mrb[0].mxu0
      %5831 = vdwg.mxu0
      %v5832 = vadd.f32 %v5138, %v5322
      %v5833 = vadd.f32 %v5139, %v5325
      %v5834 = vadd.f32 %v5140, %v5330
      %v5835 = vadd.f32 %v5141, %v5333
      %v5836 = vadd.f32 %v5142, %v5338
      %v5837 = vadd.f32 %v5143, %v5341
      %v5838 = vadd.f32 %v5144, %v5346
      %v5839 = vadd.f32 %v5145, %v5349
      %v5840 = vadd.f32 %v5146, %v5354
      %v5841 = vadd.f32 %v5147, %v5357
      %v5842 = vadd.f32 %v5148, %v5362
      %v5843 = vadd.f32 %v5149, %v5365
      %v5844 = vadd.f32 %v5150, %v5370
      %v5845 = vadd.f32 %v5151, %v5373
      %v5846 = vadd.f32 %v5152, %v5378
      %v5847 = vadd.f32 %v5153, %v5381
      %v5848 = vadd.f32 %v5154, %v5386
      %v5849 = vadd.f32 %v5155, %v5389
      %v5850 = vadd.f32 %v5156, %v5394
      %v5851 = vadd.f32 %v5157, %v5397
      %v5852 = vadd.f32 %v5158, %v5402
      %v5853 = vadd.f32 %v5159, %v5405
      %v5854 = vadd.f32 %v5160, %v5410
      %v5855 = vadd.f32 %v5161, %v5413
      %v5856 = vadd.f32 %v5162, %v5418
      %v5857 = vadd.f32 %v5163, %v5421
      %v5858 = vadd.f32 %v5164, %v5426
      %v5859 = vadd.f32 %v5165, %v5429
      %v5860 = vadd.f32 %v5166, %v5434
      %v5861 = vadd.f32 %v5167, %v5437
      %v5862 = vadd.f32 %v5168, %v5442
      %v5863 = vadd.f32 %v5169, %v5445
      %v5864 = vadd.f32 %v5170, %v5450
      %v5865 = vadd.f32 %v5171, %v5453
      %v5866 = vadd.f32 %v5172, %v5458
      %v5867 = vadd.f32 %v5173, %v5461
      %v5868 = vadd.f32 %v5174, %v5466
      %v5869 = vadd.f32 %v5175, %v5469
      %v5870 = vadd.f32 %v5176, %v5474
      %v5871 = vadd.f32 %v5177, %v5477
      %v5872 = vadd.f32 %v5178, %v5482
      %v5873 = vadd.f32 %v5179, %v5485
      %v5874 = vadd.f32 %v5180, %v5490
      %v5875 = vadd.f32 %v5181, %v5493
      %v5876 = vadd.f32 %v5182, %v5498
      %v5877 = vadd.f32 %v5183, %v5501
      %v5878 = vadd.f32 %v5184, %v5506
      %v5879 = vadd.f32 %v5185, %v5509
      %v5880 = vadd.f32 %v5186, %v5514
      %v5881 = vadd.f32 %v5187, %v5517
      %v5882 = vadd.f32 %v5188, %v5522
      %v5883 = vadd.f32 %v5189, %v5525
      %v5884 = vadd.f32 %v5190, %v5530
      %v5885 = vadd.f32 %v5191, %v5533
      %v5886 = vadd.f32 %v5192, %v5538
      %v5887 = vadd.f32 %v5193, %v5541
      %v5888 = vadd.f32 %v5194, %v5546
      %v5889 = vadd.f32 %v5195, %v5549
      %v5890 = vadd.f32 %v5196, %v5554
      %v5891 = vadd.f32 %v5197, %v5557
      %v5892 = vadd.f32 %v5198, %v5562
      %v5893 = vadd.f32 %v5199, %v5565
      %v5894 = vadd.f32 %v5200, %v5570
      %v5895 = vadd.f32 %v5201, %v5573
      %v5896 = vadd.f32 %v5202, %v5578
      %v5897 = vadd.f32 %v5203, %v5581
      %v5898 = vadd.f32 %v5204, %v5586
      %v5899 = vadd.f32 %v5205, %v5589
      %v5900 = vadd.f32 %v5206, %v5594
      %v5901 = vadd.f32 %v5207, %v5597
      %v5902 = vadd.f32 %v5208, %v5602
      %v5903 = vadd.f32 %v5209, %v5605
      %v5904 = vadd.f32 %v5210, %v5610
      %v5905 = vadd.f32 %v5211, %v5613
      %v5906 = vadd.f32 %v5212, %v5618
      %v5907 = vadd.f32 %v5213, %v5621
      %v5908 = vadd.f32 %v5214, %v5626
      %v5909 = vadd.f32 %v5215, %v5629
      %v5910 = vadd.f32 %v5216, %v5634
      %v5911 = vadd.f32 %v5217, %v5637
      %v5912 = vadd.f32 %v5218, %v5642
      %v5913 = vadd.f32 %v5219, %v5645
      %v5914 = vadd.f32 %v5220, %v5650
      %v5915 = vadd.f32 %v5221, %v5653
      %v5916 = vadd.f32 %v5222, %v5658
      %v5917 = vadd.f32 %v5223, %v5661
      %v5918 = vadd.f32 %v5224, %v5666
      %v5919 = vadd.f32 %v5225, %v5669
      %v5920 = vadd.f32 %v5226, %v5674
      %v5921 = vadd.f32 %v5227, %v5677
      %v5922 = vadd.f32 %v5228, %v5682
      %v5923 = vadd.f32 %v5229, %v5685
      %v5924 = vadd.f32 %v5230, %v5690
      %v5925 = vadd.f32 %v5231, %v5693
      %v5926 = vadd.f32 %v5232, %v5698
      %v5927 = vadd.f32 %v5233, %v5701
      %v5928 = vadd.f32 %v5234, %v5706
      %v5929 = vadd.f32 %v5235, %v5709
      %v5930 = vadd.f32 %v5236, %v5714
      %v5931 = vadd.f32 %v5237, %v5717
      %v5932 = vadd.f32 %v5238, %v5722
      %v5933 = vadd.f32 %v5239, %v5725
      %v5934 = vadd.f32 %v5240, %v5730
      %v5935 = vadd.f32 %v5241, %v5733
      %v5936 = vadd.f32 %v5242, %v5738
      %v5937 = vadd.f32 %v5243, %v5741
      %v5938 = vadd.f32 %v5244, %v5746
      %v5939 = vadd.f32 %v5245, %v5749
      %v5940 = vadd.f32 %v5246, %v5754
      %v5941 = vadd.f32 %v5247, %v5757
      %v5942 = vadd.f32 %v5248, %v5762
      %v5943 = vadd.f32 %v5249, %v5765
      %v5944 = vadd.f32 %v5250, %v5770
      %v5945 = vadd.f32 %v5251, %v5773
      %v5946 = vadd.f32 %v5252, %v5778
      %v5947 = vadd.f32 %v5253, %v5781
      %v5948 = vadd.f32 %v5254, %v5786
      %v5949 = vadd.f32 %v5255, %v5789
      %v5950 = vadd.f32 %v5256, %v5794
      %v5951 = vadd.f32 %v5257, %v5797
      %v5952 = vadd.f32 %v5258, %v5802
      %v5953 = vadd.f32 %v5259, %v5805
      %v5954 = vadd.f32 %v5260, %v5810
      %v5955 = vadd.f32 %v5261, %v5813
      %v5956 = vadd.f32 %v5262, %v5818
      %v5957 = vadd.f32 %v5263, %v5821
      %v5958 = vadd.f32 %v5264, %v5826
      %v5959 = vadd.f32 %v5265, %v5829
      %v5961 = vshrl.u32 %v332, 16
      %v5963 = vrot.slane %v5961, 4
      %v5964 = vshll.u32 %v332, 16
      %v5966 = vrot.slane %v5964, 5
      %v5967 = vor.u32 %v5963, %v5966
      %v5968 = vrot.slane %v5967, 4
      %v5970 = vshll.u32 %v333, 16
      %v5972 = vrot.slane %v5970, 5
      %v5973 = vsel %vm345, %v5968, %v5972
      %v5974 = vshrl.u32 %v333, 16
      %v5976 = vrot.slane %v5974, 4
      %v5977 = vor.u32 %v5976, %v5972
      %v5978 = vrot.slane %v5977, 4
      %v5980 = vshll.u32 %v334, 16
      %v5982 = vrot.slane %v5980, 5
      %v5983 = vsel %vm345, %v5978, %v5982
      %v5984 = vshrl.u32 %v334, 16
      %v5986 = vrot.slane %v5984, 4
      %v5987 = vor.u32 %v5986, %v5982
      %v5988 = vrot.slane %v5987, 4
      %v5990 = vshll.u32 %v335, 16
      %v5992 = vrot.slane %v5990, 5
      %v5993 = vsel %vm345, %v5988, %v5992
      %v5994 = vshrl.u32 %v335, 16
      %v5996 = vrot.slane %v5994, 4
      %v5997 = vor.u32 %v5996, %v5992
      %v5998 = vrot.slane %v5997, 4
      %v6000 = vshll.u32 %v336, 16
      %v6002 = vrot.slane %v6000, 5
      %v6003 = vsel %vm345, %v5998, %v6002
      %s6004 = scalar_lea.vmem %s1, 8
      %v6005 = vld [vmem:[%s6004] sm:$0x3]
      %v6006 = vunpack.c.l.b16 %v5973
      %v6007 = vunpack.c.l.b16 %v5983
      %v6008 = vunpack.c.l.b16 %v5993
      %v6009 = vunpack.c.l.b16 %v6003
      %v6010 = vpack.c.b16 %v6007, %v6006
      %v6011 = vpack.c.b16 %v6009, %v6008
      %v6013 = vsel %vm1948, %v6010, 0
      %v6016 = vsel %vm1948, %v6011, 0
      %v6019 = vand.u32 %v6005, %v2144
      %6021 = vmatprep.subr.bf16.mxu0 0
      %6022 = vmatpush1.bf16.msra.mxu0 %v6019
      %6023 = vmatprep.subr.bf16.mxu0 0
      %6024 = vmatpush1.bf16.msra.mxu0 0
      %6025 = vmatprep.subr.bf16.mxu0 0
      %6026 = vmatpush1.bf16.msra.mxu0 0
      %6027 = vmatprep.subr.bf16.mxu0 0
      %6028 = vmatpush1.bf16.msra.mxu0 0
      %6029 = vmatprep.subr.bf16.mxu0 0
      %6030 = vmatpush1.bf16.msra.mxu0 0
      %6031 = vmatprep.subr.bf16.mxu0 0
      %6032 = vmatpush1.bf16.msra.mxu0 0
      %6033 = vmatprep.subr.bf16.mxu0 0
      %6034 = vmatpush1.bf16.msra.mxu0 0
      %6035 = vmatprep.subr.bf16.mxu0 0
      %6036 = vmatpush1.bf16.msra.mxu0 0
      %6037 = vmatprep.subr.bf16.mxu0 0
      %6038 = vmatpush1.bf16.msra.mxu0 0
      %6039 = vmatprep.subr.bf16.mxu0 0
      %6040 = vmatpush1.bf16.msra.mxu0 0
      %6041 = vmatprep.subr.bf16.mxu0 0
      %6042 = vmatpush1.bf16.msra.mxu0 0
      %6043 = vmatprep.subr.bf16.mxu0 0
      %6044 = vmatpush1.bf16.msra.mxu0 0
      %6045 = vmatprep.subr.bf16.mxu0 0
      %6046 = vmatpush1.bf16.msra.mxu0 0
      %6047 = vmatprep.subr.bf16.mxu0 0
      %6048 = vmatpush1.bf16.msra.mxu0 0
      %6049 = vmatprep.subr.bf16.mxu0 0
      %6050 = vmatpush1.bf16.msra.mxu0 0
      %6051 = vmatprep.subr.bf16.mxu0 0
      %6052 = vmatpush1.bf16.msra.mxu0 0
      %6053 = vmatprep.mubr.bf16.mxu0 0
      %6054 = vmatmul.mubr.bf16.gmra.mrb[0].mxu0 %v1956
      %v6055 = vpop.f32.mrb[0].mxu0
      %v6056 = vadd.f32 0.0, %v6055
      %v6057 = vpop.f32.mrb[0].mxu0
      %v6058 = vpop.f32.mrb[0].mxu0
      %v6059 = vadd.f32 0.0, %v6058
      %v6060 = vpop.f32.mrb[0].mxu0
      %6061 = vmatprep.mubr.bf16.mxu0 0
      %6062 = vmatmul.mubr.bf16.gmra.mrb[0].mxu0 %v1959
      %v6063 = vpop.f32.mrb[0].mxu0
      %v6064 = vadd.f32 0.0, %v6063
      %v6065 = vpop.f32.mrb[0].mxu0
      %v6066 = vpop.f32.mrb[0].mxu0
      %v6067 = vadd.f32 0.0, %v6066
      %v6068 = vpop.f32.mrb[0].mxu0
      %6069 = vmatprep.mubr.bf16.mxu0 0
      %6070 = vmatmul.mubr.bf16.gmra.mrb[0].mxu0 %v1962
      %v6071 = vpop.f32.mrb[0].mxu0
      %v6072 = vadd.f32 0.0, %v6071
      %v6073 = vpop.f32.mrb[0].mxu0
      %v6074 = vpop.f32.mrb[0].mxu0
      %v6075 = vadd.f32 0.0, %v6074
      %v6076 = vpop.f32.mrb[0].mxu0
      %6077 = vmatprep.mubr.bf16.mxu0 0
      %6078 = vmatmul.mubr.bf16.gmra.mrb[0].mxu0 %v1965
      %v6079 = vpop.f32.mrb[0].mxu0
      %v6080 = vadd.f32 0.0, %v6079
      %v6081 = vpop.f32.mrb[0].mxu0
      %v6082 = vpop.f32.mrb[0].mxu0
      %v6083 = vadd.f32 0.0, %v6082
      %v6084 = vpop.f32.mrb[0].mxu0
      %6085 = vmatprep.mubr.bf16.mxu0 0
      %6086 = vmatmul.mubr.bf16.gmra.mrb[0].mxu0 %v1968
      %v6087 = vpop.f32.mrb[0].mxu0
      %v6088 = vadd.f32 0.0, %v6087
      %v6089 = vpop.f32.mrb[0].mxu0
      %v6090 = vpop.f32.mrb[0].mxu0
      %v6091 = vadd.f32 0.0, %v6090
      %v6092 = vpop.f32.mrb[0].mxu0
      %6093 = vmatprep.mubr.bf16.mxu0 0
      %6094 = vmatmul.mubr.bf16.gmra.mrb[0].mxu0 %v1971
      %v6095 = vpop.f32.mrb[0].mxu0
      %v6096 = vadd.f32 0.0, %v6095
      %v6097 = vpop.f32.mrb[0].mxu0
      %v6098 = vpop.f32.mrb[0].mxu0
      %v6099 = vadd.f32 0.0, %v6098
      %v6100 = vpop.f32.mrb[0].mxu0
      %6101 = vmatprep.mubr.bf16.mxu0 0
      %6102 = vmatmul.mubr.bf16.gmra.mrb[0].mxu0 %v1974
      %v6103 = vpop.f32.mrb[0].mxu0
      %v6104 = vadd.f32 0.0, %v6103
      %v6105 = vpop.f32.mrb[0].mxu0
      %v6106 = vpop.f32.mrb[0].mxu0
      %v6107 = vadd.f32 0.0, %v6106
      %v6108 = vpop.f32.mrb[0].mxu0
      %6109 = vmatprep.mubr.bf16.mxu0 0
      %6110 = vmatmul.mubr.bf16.gmra.mrb[0].mxu0 %v1977
      %v6111 = vpop.f32.mrb[0].mxu0
      %v6112 = vadd.f32 0.0, %v6111
      %v6113 = vpop.f32.mrb[0].mxu0
      %v6114 = vpop.f32.mrb[0].mxu0
      %v6115 = vadd.f32 0.0, %v6114
      %v6116 = vpop.f32.mrb[0].mxu0
      %6117 = vmatprep.mubr.bf16.mxu0 0
      %6118 = vmatmul.mubr.bf16.gmra.mrb[0].mxu0 %v1980
      %v6119 = vpop.f32.mrb[0].mxu0
      %v6120 = vadd.f32 0.0, %v6119
      %v6121 = vpop.f32.mrb[0].mxu0
      %v6122 = vpop.f32.mrb[0].mxu0
      %v6123 = vadd.f32 0.0, %v6122
      %v6124 = vpop.f32.mrb[0].mxu0
      %6125 = vmatprep.mubr.bf16.mxu0 0
      %6126 = vmatmul.mubr.bf16.gmra.mrb[0].mxu0 %v1983
      %v6127 = vpop.f32.mrb[0].mxu0
      %v6128 = vadd.f32 0.0, %v6127
      %v6129 = vpop.f32.mrb[0].mxu0
      %v6130 = vpop.f32.mrb[0].mxu0
      %v6131 = vadd.f32 0.0, %v6130
      %v6132 = vpop.f32.mrb[0].mxu0
      %6133 = vmatprep.mubr.bf16.mxu0 0
      %6134 = vmatmul.mubr.bf16.gmra.mrb[0].mxu0 %v1986
      %v6135 = vpop.f32.mrb[0].mxu0
      %v6136 = vadd.f32 0.0, %v6135
      %v6137 = vpop.f32.mrb[0].mxu0
      %v6138 = vpop.f32.mrb[0].mxu0
      %v6139 = vadd.f32 0.0, %v6138
      %v6140 = vpop.f32.mrb[0].mxu0
      %6141 = vmatprep.mubr.bf16.mxu0 0
      %6142 = vmatmul.mubr.bf16.gmra.mrb[0].mxu0 %v1989
      %v6143 = vpop.f32.mrb[0].mxu0
      %v6144 = vadd.f32 0.0, %v6143
      %v6145 = vpop.f32.mrb[0].mxu0
      %v6146 = vpop.f32.mrb[0].mxu0
      %v6147 = vadd.f32 0.0, %v6146
      %v6148 = vpop.f32.mrb[0].mxu0
      %6149 = vmatprep.mubr.bf16.mxu0 0
      %6150 = vmatmul.mubr.bf16.gmra.mrb[0].mxu0 %v1992
      %v6151 = vpop.f32.mrb[0].mxu0
      %v6152 = vadd.f32 0.0, %v6151
      %v6153 = vpop.f32.mrb[0].mxu0
      %v6154 = vpop.f32.mrb[0].mxu0
      %v6155 = vadd.f32 0.0, %v6154
      %v6156 = vpop.f32.mrb[0].mxu0
      %6157 = vmatprep.mubr.bf16.mxu0 0
      %6158 = vmatmul.mubr.bf16.gmra.mrb[0].mxu0 %v1995
      %v6159 = vpop.f32.mrb[0].mxu0
      %v6160 = vadd.f32 0.0, %v6159
      %v6161 = vpop.f32.mrb[0].mxu0
      %v6162 = vpop.f32.mrb[0].mxu0
      %v6163 = vadd.f32 0.0, %v6162
      %v6164 = vpop.f32.mrb[0].mxu0
      %6165 = vmatprep.mubr.bf16.mxu0 0
      %6166 = vmatmul.mubr.bf16.gmra.mrb[0].mxu0 %v1998
      %v6167 = vpop.f32.mrb[0].mxu0
      %v6168 = vadd.f32 0.0, %v6167
      %v6169 = vpop.f32.mrb[0].mxu0
      %v6170 = vpop.f32.mrb[0].mxu0
      %v6171 = vadd.f32 0.0, %v6170
      %v6172 = vpop.f32.mrb[0].mxu0
      %6173 = vmatprep.mubr.bf16.mxu0 0
      %6174 = vmatmul.mubr.bf16.gmra.mrb[0].mxu0 %v2001
      %v6175 = vpop.f32.mrb[0].mxu0
      %v6176 = vadd.f32 0.0, %v6175
      %v6177 = vpop.f32.mrb[0].mxu0
      %v6178 = vpop.f32.mrb[0].mxu0
      %v6179 = vadd.f32 0.0, %v6178
      %v6180 = vpop.f32.mrb[0].mxu0
      %6181 = vmatprep.mubr.bf16.mxu0 0
      %6182 = vmatmul.mubr.bf16.gmra.mrb[0].mxu0 %v2004
      %v6183 = vpop.f32.mrb[0].mxu0
      %v6184 = vadd.f32 0.0, %v6183
      %v6185 = vpop.f32.mrb[0].mxu0
      %v6186 = vpop.f32.mrb[0].mxu0
      %v6187 = vadd.f32 0.0, %v6186
      %v6188 = vpop.f32.mrb[0].mxu0
      %6189 = vmatprep.mubr.bf16.mxu0 0
      %6190 = vmatmul.mubr.bf16.gmra.mrb[0].mxu0 %v2007
      %v6191 = vpop.f32.mrb[0].mxu0
      %v6192 = vadd.f32 0.0, %v6191
      %v6193 = vpop.f32.mrb[0].mxu0
      %v6194 = vpop.f32.mrb[0].mxu0
      %v6195 = vadd.f32 0.0, %v6194
      %v6196 = vpop.f32.mrb[0].mxu0
      %6197 = vmatprep.mubr.bf16.mxu0 0
      %6198 = vmatmul.mubr.bf16.gmra.mrb[0].mxu0 %v2010
      %v6199 = vpop.f32.mrb[0].mxu0
      %v6200 = vadd.f32 0.0, %v6199
      %v6201 = vpop.f32.mrb[0].mxu0
      %v6202 = vpop.f32.mrb[0].mxu0
      %v6203 = vadd.f32 0.0, %v6202
      %v6204 = vpop.f32.mrb[0].mxu0
      %6205 = vmatprep.mubr.bf16.mxu0 0
      %6206 = vmatmul.mubr.bf16.gmra.mrb[0].mxu0 %v2013
      %v6207 = vpop.f32.mrb[0].mxu0
      %v6208 = vadd.f32 0.0, %v6207
      %v6209 = vpop.f32.mrb[0].mxu0
      %v6210 = vpop.f32.mrb[0].mxu0
      %v6211 = vadd.f32 0.0, %v6210
      %v6212 = vpop.f32.mrb[0].mxu0
      %6213 = vmatprep.mubr.bf16.mxu0 0
      %6214 = vmatmul.mubr.bf16.gmra.mrb[0].mxu0 %v2016
      %v6215 = vpop.f32.mrb[0].mxu0
      %v6216 = vadd.f32 0.0, %v6215
      %v6217 = vpop.f32.mrb[0].mxu0
      %v6218 = vpop.f32.mrb[0].mxu0
      %v6219 = vadd.f32 0.0, %v6218
      %v6220 = vpop.f32.mrb[0].mxu0
      %6221 = vmatprep.mubr.bf16.mxu0 0
      %6222 = vmatmul.mubr.bf16.gmra.mrb[0].mxu0 %v2019
      %v6223 = vpop.f32.mrb[0].mxu0
      %v6224 = vadd.f32 0.0, %v6223
      %v6225 = vpop.f32.mrb[0].mxu0
      %v6226 = vpop.f32.mrb[0].mxu0
      %v6227 = vadd.f32 0.0, %v6226
      %v6228 = vpop.f32.mrb[0].mxu0
      %6229 = vmatprep.mubr.bf16.mxu0 0
      %6230 = vmatmul.mubr.bf16.gmra.mrb[0].mxu0 %v2022
      %v6231 = vpop.f32.mrb[0].mxu0
      %v6232 = vadd.f32 0.0, %v6231
      %v6233 = vpop.f32.mrb[0].mxu0
      %v6234 = vpop.f32.mrb[0].mxu0
      %v6235 = vadd.f32 0.0, %v6234
      %v6236 = vpop.f32.mrb[0].mxu0
      %6237 = vmatprep.mubr.bf16.mxu0 0
      %6238 = vmatmul.mubr.bf16.gmra.mrb[0].mxu0 %v2025
      %v6239 = vpop.f32.mrb[0].mxu0
      %v6240 = vadd.f32 0.0, %v6239
      %v6241 = vpop.f32.mrb[0].mxu0
      %v6242 = vpop.f32.mrb[0].mxu0
      %v6243 = vadd.f32 0.0, %v6242
      %v6244 = vpop.f32.mrb[0].mxu0
      %6245 = vmatprep.mubr.bf16.mxu0 0
      %6246 = vmatmul.mubr.bf16.gmra.mrb[0].mxu0 %v2028
      %v6247 = vpop.f32.mrb[0].mxu0
      %v6248 = vadd.f32 0.0, %v6247
      %v6249 = vpop.f32.mrb[0].mxu0
      %v6250 = vpop.f32.mrb[0].mxu0
      %v6251 = vadd.f32 0.0, %v6250
      %v6252 = vpop.f32.mrb[0].mxu0
      %6253 = vmatprep.mubr.bf16.mxu0 0
      %6254 = vmatmul.mubr.bf16.gmra.mrb[0].mxu0 %v2031
      %v6255 = vpop.f32.mrb[0].mxu0
      %v6256 = vadd.f32 0.0, %v6255
      %v6257 = vpop.f32.mrb[0].mxu0
      %v6258 = vpop.f32.mrb[0].mxu0
      %v6259 = vadd.f32 0.0, %v6258
      %v6260 = vpop.f32.mrb[0].mxu0
      %6261 = vmatprep.mubr.bf16.mxu0 0
      %6262 = vmatmul.mubr.bf16.gmra.mrb[0].mxu0 %v2034
      %v6263 = vpop.f32.mrb[0].mxu0
      %v6264 = vadd.f32 0.0, %v6263
      %v6265 = vpop.f32.mrb[0].mxu0
      %v6266 = vpop.f32.mrb[0].mxu0
      %v6267 = vadd.f32 0.0, %v6266
      %v6268 = vpop.f32.mrb[0].mxu0
      %6269 = vmatprep.mubr.bf16.mxu0 0
      %6270 = vmatmul.mubr.bf16.gmra.mrb[0].mxu0 %v2037
      %v6271 = vpop.f32.mrb[0].mxu0
      %v6272 = vadd.f32 0.0, %v6271
      %v6273 = vpop.f32.mrb[0].mxu0
      %v6274 = vpop.f32.mrb[0].mxu0
      %v6275 = vadd.f32 0.0, %v6274
      %v6276 = vpop.f32.mrb[0].mxu0
      %6277 = vmatprep.mubr.bf16.mxu0 0
      %6278 = vmatmul.mubr.bf16.gmra.mrb[0].mxu0 %v2040
      %v6279 = vpop.f32.mrb[0].mxu0
      %v6280 = vadd.f32 0.0, %v6279
      %v6281 = vpop.f32.mrb[0].mxu0
      %v6282 = vpop.f32.mrb[0].mxu0
      %v6283 = vadd.f32 0.0, %v6282
      %v6284 = vpop.f32.mrb[0].mxu0
      %6285 = vmatprep.mubr.bf16.mxu0 0
      %6286 = vmatmul.mubr.bf16.gmra.mrb[0].mxu0 %v2043
      %v6287 = vpop.f32.mrb[0].mxu0
      %v6288 = vadd.f32 0.0, %v6287
      %v6289 = vpop.f32.mrb[0].mxu0
      %v6290 = vpop.f32.mrb[0].mxu0
      %v6291 = vadd.f32 0.0, %v6290
      %v6292 = vpop.f32.mrb[0].mxu0
      %6293 = vmatprep.mubr.bf16.mxu0 0
      %6294 = vmatmul.mubr.bf16.gmra.mrb[0].mxu0 %v2046
      %v6295 = vpop.f32.mrb[0].mxu0
      %v6296 = vadd.f32 0.0, %v6295
      %v6297 = vpop.f32.mrb[0].mxu0
      %v6298 = vpop.f32.mrb[0].mxu0
      %v6299 = vadd.f32 0.0, %v6298
      %v6300 = vpop.f32.mrb[0].mxu0
      %6301 = vmatprep.mubr.bf16.mxu0 0
      %6302 = vmatmul.mubr.bf16.gmra.mrb[0].mxu0 %v2049
      %v6303 = vpop.f32.mrb[0].mxu0
      %v6304 = vadd.f32 0.0, %v6303
      %v6305 = vpop.f32.mrb[0].mxu0
      %v6306 = vpop.f32.mrb[0].mxu0
      %v6307 = vadd.f32 0.0, %v6306
      %v6308 = vpop.f32.mrb[0].mxu0
      %6309 = vmatprep.mubr.bf16.mxu0 0
      %6310 = vmatmul.mubr.bf16.gmra.mrb[0].mxu0 %v2052
      %v6311 = vpop.f32.mrb[0].mxu0
      %v6312 = vadd.f32 0.0, %v6311
      %v6313 = vpop.f32.mrb[0].mxu0
      %v6314 = vpop.f32.mrb[0].mxu0
      %v6315 = vadd.f32 0.0, %v6314
      %v6316 = vpop.f32.mrb[0].mxu0
      %6317 = vmatprep.mubr.bf16.mxu0 0
      %6318 = vmatmul.mubr.bf16.gmra.mrb[0].mxu0 %v2055
      %v6319 = vpop.f32.mrb[0].mxu0
      %v6320 = vadd.f32 0.0, %v6319
      %v6321 = vpop.f32.mrb[0].mxu0
      %v6322 = vpop.f32.mrb[0].mxu0
      %v6323 = vadd.f32 0.0, %v6322
      %v6324 = vpop.f32.mrb[0].mxu0
      %6325 = vmatprep.mubr.bf16.mxu0 0
      %6326 = vmatmul.mubr.bf16.gmra.mrb[0].mxu0 %v2058
      %v6327 = vpop.f32.mrb[0].mxu0
      %v6328 = vadd.f32 0.0, %v6327
      %v6329 = vpop.f32.mrb[0].mxu0
      %v6330 = vpop.f32.mrb[0].mxu0
      %v6331 = vadd.f32 0.0, %v6330
      %v6332 = vpop.f32.mrb[0].mxu0
      %6333 = vmatprep.mubr.bf16.mxu0 0
      %6334 = vmatmul.mubr.bf16.gmra.mrb[0].mxu0 %v2061
      %v6335 = vpop.f32.mrb[0].mxu0
      %v6336 = vadd.f32 0.0, %v6335
      %v6337 = vpop.f32.mrb[0].mxu0
      %v6338 = vpop.f32.mrb[0].mxu0
      %v6339 = vadd.f32 0.0, %v6338
      %v6340 = vpop.f32.mrb[0].mxu0
      %6341 = vmatprep.mubr.bf16.mxu0 0
      %6342 = vmatmul.mubr.bf16.gmra.mrb[0].mxu0 %v2064
      %v6343 = vpop.f32.mrb[0].mxu0
      %v6344 = vadd.f32 0.0, %v6343
      %v6345 = vpop.f32.mrb[0].mxu0
      %v6346 = vpop.f32.mrb[0].mxu0
      %v6347 = vadd.f32 0.0, %v6346
      %v6348 = vpop.f32.mrb[0].mxu0
      %6349 = vmatprep.mubr.bf16.mxu0 0
      %6350 = vmatmul.mubr.bf16.gmra.mrb[0].mxu0 %v2067
      %v6351 = vpop.f32.mrb[0].mxu0
      %v6352 = vadd.f32 0.0, %v6351
      %v6353 = vpop.f32.mrb[0].mxu0
      %v6354 = vpop.f32.mrb[0].mxu0
      %v6355 = vadd.f32 0.0, %v6354
      %v6356 = vpop.f32.mrb[0].mxu0
      %6357 = vmatprep.mubr.bf16.mxu0 0
      %6358 = vmatmul.mubr.bf16.gmra.mrb[0].mxu0 %v2070
      %v6359 = vpop.f32.mrb[0].mxu0
      %v6360 = vadd.f32 0.0, %v6359
      %v6361 = vpop.f32.mrb[0].mxu0
      %v6362 = vpop.f32.mrb[0].mxu0
      %v6363 = vadd.f32 0.0, %v6362
      %v6364 = vpop.f32.mrb[0].mxu0
      %6365 = vmatprep.mubr.bf16.mxu0 0
      %6366 = vmatmul.mubr.bf16.gmra.mrb[0].mxu0 %v2073
      %v6367 = vpop.f32.mrb[0].mxu0
      %v6368 = vadd.f32 0.0, %v6367
      %v6369 = vpop.f32.mrb[0].mxu0
      %v6370 = vpop.f32.mrb[0].mxu0
      %v6371 = vadd.f32 0.0, %v6370
      %v6372 = vpop.f32.mrb[0].mxu0
      %6373 = vmatprep.mubr.bf16.mxu0 0
      %6374 = vmatmul.mubr.bf16.gmra.mrb[0].mxu0 %v2076
      %v6375 = vpop.f32.mrb[0].mxu0
      %v6376 = vadd.f32 0.0, %v6375
      %v6377 = vpop.f32.mrb[0].mxu0
      %v6378 = vpop.f32.mrb[0].mxu0
      %v6379 = vadd.f32 0.0, %v6378
      %v6380 = vpop.f32.mrb[0].mxu0
      %6381 = vmatprep.mubr.bf16.mxu0 0
      %6382 = vmatmul.mubr.bf16.gmra.mrb[0].mxu0 %v2079
      %v6383 = vpop.f32.mrb[0].mxu0
      %v6384 = vadd.f32 0.0, %v6383
      %v6385 = vpop.f32.mrb[0].mxu0
      %v6386 = vpop.f32.mrb[0].mxu0
      %v6387 = vadd.f32 0.0, %v6386
      %v6388 = vpop.f32.mrb[0].mxu0
      %6389 = vmatprep.mubr.bf16.mxu0 0
      %6390 = vmatmul.mubr.bf16.gmra.mrb[0].mxu0 %v2082
      %v6391 = vpop.f32.mrb[0].mxu0
      %v6392 = vadd.f32 0.0, %v6391
      %v6393 = vpop.f32.mrb[0].mxu0
      %v6394 = vpop.f32.mrb[0].mxu0
      %v6395 = vadd.f32 0.0, %v6394
      %v6396 = vpop.f32.mrb[0].mxu0
      %6397 = vmatprep.mubr.bf16.mxu0 0
      %6398 = vmatmul.mubr.bf16.gmra.mrb[0].mxu0 %v2085
      %v6399 = vpop.f32.mrb[0].mxu0
      %v6400 = vadd.f32 0.0, %v6399
      %v6401 = vpop.f32.mrb[0].mxu0
      %v6402 = vpop.f32.mrb[0].mxu0
      %v6403 = vadd.f32 0.0, %v6402
      %v6404 = vpop.f32.mrb[0].mxu0
      %6405 = vmatprep.mubr.bf16.mxu0 0
      %6406 = vmatmul.mubr.bf16.gmra.mrb[0].mxu0 %v2088
      %v6407 = vpop.f32.mrb[0].mxu0
      %v6408 = vadd.f32 0.0, %v6407
      %v6409 = vpop.f32.mrb[0].mxu0
      %v6410 = vpop.f32.mrb[0].mxu0
      %v6411 = vadd.f32 0.0, %v6410
      %v6412 = vpop.f32.mrb[0].mxu0
      %6413 = vmatprep.mubr.bf16.mxu0 0
      %6414 = vmatmul.mubr.bf16.gmra.mrb[0].mxu0 %v2091
      %v6415 = vpop.f32.mrb[0].mxu0
      %v6416 = vadd.f32 0.0, %v6415
      %v6417 = vpop.f32.mrb[0].mxu0
      %v6418 = vpop.f32.mrb[0].mxu0
      %v6419 = vadd.f32 0.0, %v6418
      %v6420 = vpop.f32.mrb[0].mxu0
      %6421 = vmatprep.mubr.bf16.mxu0 0
      %6422 = vmatmul.mubr.bf16.gmra.mrb[0].mxu0 %v2094
      %v6423 = vpop.f32.mrb[0].mxu0
      %v6424 = vadd.f32 0.0, %v6423
      %v6425 = vpop.f32.mrb[0].mxu0
      %v6426 = vpop.f32.mrb[0].mxu0
      %v6427 = vadd.f32 0.0, %v6426
      %v6428 = vpop.f32.mrb[0].mxu0
      %6429 = vmatprep.mubr.bf16.mxu0 0
      %6430 = vmatmul.mubr.bf16.gmra.mrb[0].mxu0 %v2097
      %v6431 = vpop.f32.mrb[0].mxu0
      %v6432 = vadd.f32 0.0, %v6431
      %v6433 = vpop.f32.mrb[0].mxu0
      %v6434 = vpop.f32.mrb[0].mxu0
      %v6435 = vadd.f32 0.0, %v6434
      %v6436 = vpop.f32.mrb[0].mxu0
      %6437 = vmatprep.mubr.bf16.mxu0 0
      %6438 = vmatmul.mubr.bf16.gmra.mrb[0].mxu0 %v2100
      %v6439 = vpop.f32.mrb[0].mxu0
      %v6440 = vadd.f32 0.0, %v6439
      %v6441 = vpop.f32.mrb[0].mxu0
      %v6442 = vpop.f32.mrb[0].mxu0
      %v6443 = vadd.f32 0.0, %v6442
      %v6444 = vpop.f32.mrb[0].mxu0
      %6445 = vmatprep.mubr.bf16.mxu0 0
      %6446 = vmatmul.mubr.bf16.gmra.mrb[0].mxu0 %v2103
      %v6447 = vpop.f32.mrb[0].mxu0
      %v6448 = vadd.f32 0.0, %v6447
      %v6449 = vpop.f32.mrb[0].mxu0
      %v6450 = vpop.f32.mrb[0].mxu0
      %v6451 = vadd.f32 0.0, %v6450
      %v6452 = vpop.f32.mrb[0].mxu0
      %6453 = vmatprep.mubr.bf16.mxu0 0
      %6454 = vmatmul.mubr.bf16.gmra.mrb[0].mxu0 %v2106
      %v6455 = vpop.f32.mrb[0].mxu0
      %v6456 = vadd.f32 0.0, %v6455
      %v6457 = vpop.f32.mrb[0].mxu0
      %v6458 = vpop.f32.mrb[0].mxu0
      %v6459 = vadd.f32 0.0, %v6458
      %v6460 = vpop.f32.mrb[0].mxu0
      %6461 = vmatprep.mubr.bf16.mxu0 0
      %6462 = vmatmul.mubr.bf16.gmra.mrb[0].mxu0 %v2109
      %v6463 = vpop.f32.mrb[0].mxu0
      %v6464 = vadd.f32 0.0, %v6463
      %v6465 = vpop.f32.mrb[0].mxu0
      %v6466 = vpop.f32.mrb[0].mxu0
      %v6467 = vadd.f32 0.0, %v6466
      %v6468 = vpop.f32.mrb[0].mxu0
      %6469 = vmatprep.mubr.bf16.mxu0 0
      %6470 = vmatmul.mubr.bf16.gmra.mrb[0].mxu0 %v2112
      %v6471 = vpop.f32.mrb[0].mxu0
      %v6472 = vadd.f32 0.0, %v6471
      %v6473 = vpop.f32.mrb[0].mxu0
      %v6474 = vpop.f32.mrb[0].mxu0
      %v6475 = vadd.f32 0.0, %v6474
      %v6476 = vpop.f32.mrb[0].mxu0
      %6477 = vmatprep.mubr.bf16.mxu0 0
      %6478 = vmatmul.mubr.bf16.gmra.mrb[0].mxu0 %v2115
      %v6479 = vpop.f32.mrb[0].mxu0
      %v6480 = vadd.f32 0.0, %v6479
      %v6481 = vpop.f32.mrb[0].mxu0
      %v6482 = vpop.f32.mrb[0].mxu0
      %v6483 = vadd.f32 0.0, %v6482
      %v6484 = vpop.f32.mrb[0].mxu0
      %6485 = vmatprep.mubr.bf16.mxu0 0
      %6486 = vmatmul.mubr.bf16.gmra.mrb[0].mxu0 %v2118
      %v6487 = vpop.f32.mrb[0].mxu0
      %v6488 = vadd.f32 0.0, %v6487
      %v6489 = vpop.f32.mrb[0].mxu0
      %v6490 = vpop.f32.mrb[0].mxu0
      %v6491 = vadd.f32 0.0, %v6490
      %v6492 = vpop.f32.mrb[0].mxu0
      %6493 = vmatprep.mubr.bf16.mxu0 0
      %6494 = vmatmul.mubr.bf16.gmra.mrb[0].mxu0 %v2121
      %v6495 = vpop.f32.mrb[0].mxu0
      %v6496 = vadd.f32 0.0, %v6495
      %v6497 = vpop.f32.mrb[0].mxu0
      %v6498 = vpop.f32.mrb[0].mxu0
      %v6499 = vadd.f32 0.0, %v6498
      %v6500 = vpop.f32.mrb[0].mxu0
      %6501 = vmatprep.mubr.bf16.mxu0 0
      %6502 = vmatmul.mubr.bf16.gmra.mrb[0].mxu0 %v2124
      %v6503 = vpop.f32.mrb[0].mxu0
      %v6504 = vadd.f32 0.0, %v6503
      %v6505 = vpop.f32.mrb[0].mxu0
      %v6506 = vpop.f32.mrb[0].mxu0
      %v6507 = vadd.f32 0.0, %v6506
      %v6508 = vpop.f32.mrb[0].mxu0
      %6509 = vmatprep.mubr.bf16.mxu0 0
      %6510 = vmatmul.mubr.bf16.gmra.mrb[0].mxu0 %v2127
      %v6511 = vpop.f32.mrb[0].mxu0
      %v6512 = vadd.f32 0.0, %v6511
      %v6513 = vpop.f32.mrb[0].mxu0
      %v6514 = vpop.f32.mrb[0].mxu0
      %v6515 = vadd.f32 0.0, %v6514
      %v6516 = vpop.f32.mrb[0].mxu0
      %6517 = vmatprep.mubr.bf16.mxu0 0
      %6518 = vmatmul.mubr.bf16.gmra.mrb[0].mxu0 %v2130
      %v6519 = vpop.f32.mrb[0].mxu0
      %v6520 = vadd.f32 0.0, %v6519
      %v6521 = vpop.f32.mrb[0].mxu0
      %v6522 = vpop.f32.mrb[0].mxu0
      %v6523 = vadd.f32 0.0, %v6522
      %v6524 = vpop.f32.mrb[0].mxu0
      %6525 = vmatprep.mubr.bf16.mxu0 0
      %6526 = vmatmul.mubr.bf16.gmra.mrb[0].mxu0 %v2133
      %v6527 = vpop.f32.mrb[0].mxu0
      %v6528 = vadd.f32 0.0, %v6527
      %v6529 = vpop.f32.mrb[0].mxu0
      %v6530 = vpop.f32.mrb[0].mxu0
      %v6531 = vadd.f32 0.0, %v6530
      %v6532 = vpop.f32.mrb[0].mxu0
      %6533 = vmatprep.mubr.bf16.mxu0 0
      %6534 = vmatmul.mubr.bf16.gmra.mrb[0].mxu0 %v2136
      %v6535 = vpop.f32.mrb[0].mxu0
      %v6536 = vadd.f32 0.0, %v6535
      %v6537 = vpop.f32.mrb[0].mxu0
      %v6538 = vpop.f32.mrb[0].mxu0
      %v6539 = vadd.f32 0.0, %v6538
      %v6540 = vpop.f32.mrb[0].mxu0
      %6541 = vmatprep.mubr.bf16.mxu0 0
      %6542 = vmatmul.mubr.bf16.gmra.mrb[0].mxu0 %v2139
      %v6543 = vpop.f32.mrb[0].mxu0
      %v6544 = vadd.f32 0.0, %v6543
      %v6545 = vpop.f32.mrb[0].mxu0
      %v6546 = vpop.f32.mrb[0].mxu0
      %v6547 = vadd.f32 0.0, %v6546
      %v6548 = vpop.f32.mrb[0].mxu0
      %6549 = vmatprep.mubr.bf16.mxu0 0
      %6550 = vmatmul.mubr.bf16.gmra.mrb[0].mxu0 %v6013
      %v6551 = vpop.f32.mrb[0].mxu0
      %v6552 = vadd.f32 0.0, %v6551
      %v6553 = vpop.f32.mrb[0].mxu0
      %v6554 = vpop.f32.mrb[0].mxu0
      %v6555 = vadd.f32 0.0, %v6554
      %v6556 = vpop.f32.mrb[0].mxu0
      %6557 = vmatprep.mubr.bf16.mxu0 0
      %6558 = vmatmul.mubr.bf16.gmra.mrb[0].mxu0 %v6016
      %v6559 = vpop.f32.mrb[0].mxu0
      %v6560 = vadd.f32 0.0, %v6559
      %v6561 = vpop.f32.mrb[0].mxu0
      %v6562 = vpop.f32.mrb[0].mxu0
      %v6563 = vadd.f32 0.0, %v6562
      %v6564 = vpop.f32.mrb[0].mxu0
      %6565 = vdwg.mxu0
      %v6566 = vadd.f32 %v5832, %v6056
      %v6567 = vadd.f32 %v5833, %v6059
      %v6568 = vadd.f32 %v5834, %v6064
      %v6569 = vadd.f32 %v5835, %v6067
      %v6570 = vadd.f32 %v5836, %v6072
      %v6571 = vadd.f32 %v5837, %v6075
      %v6572 = vadd.f32 %v5838, %v6080
      %v6573 = vadd.f32 %v5839, %v6083
      %v6574 = vadd.f32 %v5840, %v6088
      %v6575 = vadd.f32 %v5841, %v6091
      %v6576 = vadd.f32 %v5842, %v6096
      %v6577 = vadd.f32 %v5843, %v6099
      %v6578 = vadd.f32 %v5844, %v6104
      %v6579 = vadd.f32 %v5845, %v6107
      %v6580 = vadd.f32 %v5846, %v6112
      %v6581 = vadd.f32 %v5847, %v6115
      %v6582 = vadd.f32 %v5848, %v6120
      %v6583 = vadd.f32 %v5849, %v6123
      %v6584 = vadd.f32 %v5850, %v6128
      %v6585 = vadd.f32 %v5851, %v6131
      %v6586 = vadd.f32 %v5852, %v6136
      %v6587 = vadd.f32 %v5853, %v6139
      %v6588 = vadd.f32 %v5854, %v6144
      %v6589 = vadd.f32 %v5855, %v6147
      %v6590 = vadd.f32 %v5856, %v6152
      %v6591 = vadd.f32 %v5857, %v6155
      %v6592 = vadd.f32 %v5858, %v6160
      %v6593 = vadd.f32 %v5859, %v6163
      %v6594 = vadd.f32 %v5860, %v6168
      %v6595 = vadd.f32 %v5861, %v6171
      %v6596 = vadd.f32 %v5862, %v6176
      %v6597 = vadd.f32 %v5863, %v6179
      %v6598 = vadd.f32 %v5864, %v6184
      %v6599 = vadd.f32 %v5865, %v6187
      %v6600 = vadd.f32 %v5866, %v6192
      %v6601 = vadd.f32 %v5867, %v6195
      %v6602 = vadd.f32 %v5868, %v6200
      %v6603 = vadd.f32 %v5869, %v6203
      %v6604 = vadd.f32 %v5870, %v6208
      %v6605 = vadd.f32 %v5871, %v6211
      %v6606 = vadd.f32 %v5872, %v6216
      %v6607 = vadd.f32 %v5873, %v6219
      %v6608 = vadd.f32 %v5874, %v6224
      %v6609 = vadd.f32 %v5875, %v6227
      %v6610 = vadd.f32 %v5876, %v6232
      %v6611 = vadd.f32 %v5877, %v6235
      %v6612 = vadd.f32 %v5878, %v6240
      %v6613 = vadd.f32 %v5879, %v6243
      %v6614 = vadd.f32 %v5880, %v6248
      %v6615 = vadd.f32 %v5881, %v6251
      %v6616 = vadd.f32 %v5882, %v6256
      %v6617 = vadd.f32 %v5883, %v6259
      %v6618 = vadd.f32 %v5884, %v6264
      %v6619 = vadd.f32 %v5885, %v6267
      %v6620 = vadd.f32 %v5886, %v6272
      %v6621 = vadd.f32 %v5887, %v6275
      %v6622 = vadd.f32 %v5888, %v6280
      %v6623 = vadd.f32 %v5889, %v6283
      %v6624 = vadd.f32 %v5890, %v6288
      %v6625 = vadd.f32 %v5891, %v6291
      %v6626 = vadd.f32 %v5892, %v6296
      %v6627 = vadd.f32 %v5893, %v6299
      %v6628 = vadd.f32 %v5894, %v6304
      %v6629 = vadd.f32 %v5895, %v6307
      %v6630 = vadd.f32 %v5896, %v6312
      %v6631 = vadd.f32 %v5897, %v6315
      %v6632 = vadd.f32 %v5898, %v6320
      %v6633 = vadd.f32 %v5899, %v6323
      %v6634 = vadd.f32 %v5900, %v6328
      %v6635 = vadd.f32 %v5901, %v6331
      %v6636 = vadd.f32 %v5902, %v6336
      %v6637 = vadd.f32 %v5903, %v6339
      %v6638 = vadd.f32 %v5904, %v6344
      %v6639 = vadd.f32 %v5905, %v6347
      %v6640 = vadd.f32 %v5906, %v6352
      %v6641 = vadd.f32 %v5907, %v6355
      %v6642 = vadd.f32 %v5908, %v6360
      %v6643 = vadd.f32 %v5909, %v6363
      %v6644 = vadd.f32 %v5910, %v6368
      %v6645 = vadd.f32 %v5911, %v6371
      %v6646 = vadd.f32 %v5912, %v6376
      %v6647 = vadd.f32 %v5913, %v6379
      %v6648 = vadd.f32 %v5914, %v6384
      %v6649 = vadd.f32 %v5915, %v6387
      %v6650 = vadd.f32 %v5916, %v6392
      %v6651 = vadd.f32 %v5917, %v6395
      %v6652 = vadd.f32 %v5918, %v6400
      %v6653 = vadd.f32 %v5919, %v6403
      %v6654 = vadd.f32 %v5920, %v6408
      %v6655 = vadd.f32 %v5921, %v6411
      %v6656 = vadd.f32 %v5922, %v6416
      %v6657 = vadd.f32 %v5923, %v6419
      %v6658 = vadd.f32 %v5924, %v6424
      %v6659 = vadd.f32 %v5925, %v6427
      %v6660 = vadd.f32 %v5926, %v6432
      %v6661 = vadd.f32 %v5927, %v6435
      %v6662 = vadd.f32 %v5928, %v6440
      %v6663 = vadd.f32 %v5929, %v6443
      %v6664 = vadd.f32 %v5930, %v6448
      %v6665 = vadd.f32 %v5931, %v6451
      %v6666 = vadd.f32 %v5932, %v6456
      %v6667 = vadd.f32 %v5933, %v6459
      %v6668 = vadd.f32 %v5934, %v6464
      %v6669 = vadd.f32 %v5935, %v6467
      %v6670 = vadd.f32 %v5936, %v6472
      %v6671 = vadd.f32 %v5937, %v6475
      %v6672 = vadd.f32 %v5938, %v6480
      %v6673 = vadd.f32 %v5939, %v6483
      %v6674 = vadd.f32 %v5940, %v6488
      %v6675 = vadd.f32 %v5941, %v6491
      %v6676 = vadd.f32 %v5942, %v6496
      %v6677 = vadd.f32 %v5943, %v6499
      %v6678 = vadd.f32 %v5944, %v6504
      %v6679 = vadd.f32 %v5945, %v6507
      %v6680 = vadd.f32 %v5946, %v6512
      %v6681 = vadd.f32 %v5947, %v6515
      %v6682 = vadd.f32 %v5948, %v6520
      %v6683 = vadd.f32 %v5949, %v6523
      %v6684 = vadd.f32 %v5950, %v6528
      %v6685 = vadd.f32 %v5951, %v6531
      %v6686 = vadd.f32 %v5952, %v6536
      %v6687 = vadd.f32 %v5953, %v6539
      %v6688 = vadd.f32 %v5954, %v6544
      %v6689 = vadd.f32 %v5955, %v6547
      %v6690 = vadd.f32 %v5956, %v6552
      %v6691 = vadd.f32 %v5957, %v6555
      %v6692 = vadd.f32 %v5958, %v6560
      %v6693 = vadd.f32 %v5959, %v6563
      %v6695 = vrot.slane %v332, 5
      %v6696 = vrot.slane %v6695, 4
      %v6697 = vrot.slane %v333, 5
      %v6698 = vsel %vm3787, %v6696, %v6697
      %v6699 = vrot.slane %v6697, 4
      %v6700 = vrot.slane %v334, 5
      %v6701 = vsel %vm3787, %v6699, %v6700
      %v6702 = vrot.slane %v6700, 4
      %v6703 = vrot.slane %v335, 5
      %v6704 = vsel %vm3787, %v6702, %v6703
      %v6705 = vrot.slane %v6703, 4
      %v6706 = vrot.slane %v336, 5
      %v6707 = vsel %vm3787, %v6705, %v6706
      %s6708 = scalar_lea.vmem %s1, 10
      %v6709 = vld [vmem:[%s6708] sm:$0x3]
      %v6710 = vunpack.c.l.b16 %v6698
      %v6711 = vunpack.c.l.b16 %v6701
      %v6712 = vunpack.c.l.b16 %v6704
      %v6713 = vunpack.c.l.b16 %v6707
      %v6714 = vpack.c.b16 %v6711, %v6710
      %v6715 = vpack.c.b16 %v6713, %v6712
      %v6717 = vsel %vm1948, %v6714, 0
      %v6720 = vsel %vm1948, %v6715, 0
      %v6723 = vand.u32 %v6709, %v2144
      %6725 = vmatprep.subr.bf16.mxu0 0
      %6726 = vmatpush1.bf16.msra.mxu0 %v6723
      %6727 = vmatprep.subr.bf16.mxu0 0
      %6728 = vmatpush1.bf16.msra.mxu0 0
      %6729 = vmatprep.subr.bf16.mxu0 0
      %6730 = vmatpush1.bf16.msra.mxu0 0
      %6731 = vmatprep.subr.bf16.mxu0 0
      %6732 = vmatpush1.bf16.msra.mxu0 0
      %6733 = vmatprep.subr.bf16.mxu0 0
      %6734 = vmatpush1.bf16.msra.mxu0 0
      %6735 = vmatprep.subr.bf16.mxu0 0
      %6736 = vmatpush1.bf16.msra.mxu0 0
      %6737 = vmatprep.subr.bf16.mxu0 0
      %6738 = vmatpush1.bf16.msra.mxu0 0
      %6739 = vmatprep.subr.bf16.mxu0 0
      %6740 = vmatpush1.bf16.msra.mxu0 0
      %6741 = vmatprep.subr.bf16.mxu0 0
      %6742 = vmatpush1.bf16.msra.mxu0 0
      %6743 = vmatprep.subr.bf16.mxu0 0
      %6744 = vmatpush1.bf16.msra.mxu0 0
      %6745 = vmatprep.subr.bf16.mxu0 0
      %6746 = vmatpush1.bf16.msra.mxu0 0
      %6747 = vmatprep.subr.bf16.mxu0 0
      %6748 = vmatpush1.bf16.msra.mxu0 0
      %6749 = vmatprep.subr.bf16.mxu0 0
      %6750 = vmatpush1.bf16.msra.mxu0 0
      %6751 = vmatprep.subr.bf16.mxu0 0
      %6752 = vmatpush1.bf16.msra.mxu0 0
      %6753 = vmatprep.subr.bf16.mxu0 0
      %6754 = vmatpush1.bf16.msra.mxu0 0
      %6755 = vmatprep.subr.bf16.mxu0 0
      %6756 = vmatpush1.bf16.msra.mxu0 0
      %6757 = vmatprep.mubr.bf16.mxu0 0
      %6758 = vmatmul.mubr.bf16.gmra.mrb[0].mxu0 %v4405
      %v6759 = vpop.f32.mrb[0].mxu0
      %v6760 = vadd.f32 0.0, %v6759
      %v6761 = vpop.f32.mrb[0].mxu0
      %v6762 = vpop.f32.mrb[0].mxu0
      %v6763 = vadd.f32 0.0, %v6762
      %v6764 = vpop.f32.mrb[0].mxu0
      %6765 = vmatprep.mubr.bf16.mxu0 0
      %6766 = vmatmul.mubr.bf16.gmra.mrb[0].mxu0 %v4408
      %v6767 = vpop.f32.mrb[0].mxu0
      %v6768 = vadd.f32 0.0, %v6767
      %v6769 = vpop.f32.mrb[0].mxu0
      %v6770 = vpop.f32.mrb[0].mxu0
      %v6771 = vadd.f32 0.0, %v6770
      %v6772 = vpop.f32.mrb[0].mxu0
      %6773 = vmatprep.mubr.bf16.mxu0 0
      %6774 = vmatmul.mubr.bf16.gmra.mrb[0].mxu0 %v4411
      %v6775 = vpop.f32.mrb[0].mxu0
      %v6776 = vadd.f32 0.0, %v6775
      %v6777 = vpop.f32.mrb[0].mxu0
      %v6778 = vpop.f32.mrb[0].mxu0
      %v6779 = vadd.f32 0.0, %v6778
      %v6780 = vpop.f32.mrb[0].mxu0
      %6781 = vmatprep.mubr.bf16.mxu0 0
      %6782 = vmatmul.mubr.bf16.gmra.mrb[0].mxu0 %v4414
      %v6783 = vpop.f32.mrb[0].mxu0
      %v6784 = vadd.f32 0.0, %v6783
      %v6785 = vpop.f32.mrb[0].mxu0
      %v6786 = vpop.f32.mrb[0].mxu0
      %v6787 = vadd.f32 0.0, %v6786
      %v6788 = vpop.f32.mrb[0].mxu0
      %6789 = vmatprep.mubr.bf16.mxu0 0
      %6790 = vmatmul.mubr.bf16.gmra.mrb[0].mxu0 %v4417
      %v6791 = vpop.f32.mrb[0].mxu0
      %v6792 = vadd.f32 0.0, %v6791
      %v6793 = vpop.f32.mrb[0].mxu0
      %v6794 = vpop.f32.mrb[0].mxu0
      %v6795 = vadd.f32 0.0, %v6794
      %v6796 = vpop.f32.mrb[0].mxu0
      %6797 = vmatprep.mubr.bf16.mxu0 0
      %6798 = vmatmul.mubr.bf16.gmra.mrb[0].mxu0 %v4420
      %v6799 = vpop.f32.mrb[0].mxu0
      %v6800 = vadd.f32 0.0, %v6799
      %v6801 = vpop.f32.mrb[0].mxu0
      %v6802 = vpop.f32.mrb[0].mxu0
      %v6803 = vadd.f32 0.0, %v6802
      %v6804 = vpop.f32.mrb[0].mxu0
      %6805 = vmatprep.mubr.bf16.mxu0 0
      %6806 = vmatmul.mubr.bf16.gmra.mrb[0].mxu0 %v4423
      %v6807 = vpop.f32.mrb[0].mxu0
      %v6808 = vadd.f32 0.0, %v6807
      %v6809 = vpop.f32.mrb[0].mxu0
      %v6810 = vpop.f32.mrb[0].mxu0
      %v6811 = vadd.f32 0.0, %v6810
      %v6812 = vpop.f32.mrb[0].mxu0
      %6813 = vmatprep.mubr.bf16.mxu0 0
      %6814 = vmatmul.mubr.bf16.gmra.mrb[0].mxu0 %v4426
      %v6815 = vpop.f32.mrb[0].mxu0
      %v6816 = vadd.f32 0.0, %v6815
      %v6817 = vpop.f32.mrb[0].mxu0
      %v6818 = vpop.f32.mrb[0].mxu0
      %v6819 = vadd.f32 0.0, %v6818
      %v6820 = vpop.f32.mrb[0].mxu0
      %6821 = vmatprep.mubr.bf16.mxu0 0
      %6822 = vmatmul.mubr.bf16.gmra.mrb[0].mxu0 %v4429
      %v6823 = vpop.f32.mrb[0].mxu0
      %v6824 = vadd.f32 0.0, %v6823
      %v6825 = vpop.f32.mrb[0].mxu0
      %v6826 = vpop.f32.mrb[0].mxu0
      %v6827 = vadd.f32 0.0, %v6826
      %v6828 = vpop.f32.mrb[0].mxu0
      %6829 = vmatprep.mubr.bf16.mxu0 0
      %6830 = vmatmul.mubr.bf16.gmra.mrb[0].mxu0 %v4432
      %v6831 = vpop.f32.mrb[0].mxu0
      %v6832 = vadd.f32 0.0, %v6831
      %v6833 = vpop.f32.mrb[0].mxu0
      %v6834 = vpop.f32.mrb[0].mxu0
      %v6835 = vadd.f32 0.0, %v6834
      %v6836 = vpop.f32.mrb[0].mxu0
      %6837 = vmatprep.mubr.bf16.mxu0 0
      %6838 = vmatmul.mubr.bf16.gmra.mrb[0].mxu0 %v4435
      %v6839 = vpop.f32.mrb[0].mxu0
      %v6840 = vadd.f32 0.0, %v6839
      %v6841 = vpop.f32.mrb[0].mxu0
      %v6842 = vpop.f32.mrb[0].mxu0
      %v6843 = vadd.f32 0.0, %v6842
      %v6844 = vpop.f32.mrb[0].mxu0
      %6845 = vmatprep.mubr.bf16.mxu0 0
      %6846 = vmatmul.mubr.bf16.gmra.mrb[0].mxu0 %v4438
      %v6847 = vpop.f32.mrb[0].mxu0
      %v6848 = vadd.f32 0.0, %v6847
      %v6849 = vpop.f32.mrb[0].mxu0
      %v6850 = vpop.f32.mrb[0].mxu0
      %v6851 = vadd.f32 0.0, %v6850
      %v6852 = vpop.f32.mrb[0].mxu0
      %6853 = vmatprep.mubr.bf16.mxu0 0
      %6854 = vmatmul.mubr.bf16.gmra.mrb[0].mxu0 %v4441
      %v6855 = vpop.f32.mrb[0].mxu0
      %v6856 = vadd.f32 0.0, %v6855
      %v6857 = vpop.f32.mrb[0].mxu0
      %v6858 = vpop.f32.mrb[0].mxu0
      %v6859 = vadd.f32 0.0, %v6858
      %v6860 = vpop.f32.mrb[0].mxu0
      %6861 = vmatprep.mubr.bf16.mxu0 0
      %6862 = vmatmul.mubr.bf16.gmra.mrb[0].mxu0 %v4444
      %v6863 = vpop.f32.mrb[0].mxu0
      %v6864 = vadd.f32 0.0, %v6863
      %v6865 = vpop.f32.mrb[0].mxu0
      %v6866 = vpop.f32.mrb[0].mxu0
      %v6867 = vadd.f32 0.0, %v6866
      %v6868 = vpop.f32.mrb[0].mxu0
      %6869 = vmatprep.mubr.bf16.mxu0 0
      %6870 = vmatmul.mubr.bf16.gmra.mrb[0].mxu0 %v4447
      %v6871 = vpop.f32.mrb[0].mxu0
      %v6872 = vadd.f32 0.0, %v6871
      %v6873 = vpop.f32.mrb[0].mxu0
      %v6874 = vpop.f32.mrb[0].mxu0
      %v6875 = vadd.f32 0.0, %v6874
      %v6876 = vpop.f32.mrb[0].mxu0
      %6877 = vmatprep.mubr.bf16.mxu0 0
      %6878 = vmatmul.mubr.bf16.gmra.mrb[0].mxu0 %v4450
      %v6879 = vpop.f32.mrb[0].mxu0
      %v6880 = vadd.f32 0.0, %v6879
      %v6881 = vpop.f32.mrb[0].mxu0
      %v6882 = vpop.f32.mrb[0].mxu0
      %v6883 = vadd.f32 0.0, %v6882
      %v6884 = vpop.f32.mrb[0].mxu0
      %6885 = vmatprep.mubr.bf16.mxu0 0
      %6886 = vmatmul.mubr.bf16.gmra.mrb[0].mxu0 %v4453
      %v6887 = vpop.f32.mrb[0].mxu0
      %v6888 = vadd.f32 0.0, %v6887
      %v6889 = vpop.f32.mrb[0].mxu0
      %v6890 = vpop.f32.mrb[0].mxu0
      %v6891 = vadd.f32 0.0, %v6890
      %v6892 = vpop.f32.mrb[0].mxu0
      %6893 = vmatprep.mubr.bf16.mxu0 0
      %6894 = vmatmul.mubr.bf16.gmra.mrb[0].mxu0 %v4456
      %v6895 = vpop.f32.mrb[0].mxu0
      %v6896 = vadd.f32 0.0, %v6895
      %v6897 = vpop.f32.mrb[0].mxu0
      %v6898 = vpop.f32.mrb[0].mxu0
      %v6899 = vadd.f32 0.0, %v6898
      %v6900 = vpop.f32.mrb[0].mxu0
      %6901 = vmatprep.mubr.bf16.mxu0 0
      %6902 = vmatmul.mubr.bf16.gmra.mrb[0].mxu0 %v4459
      %v6903 = vpop.f32.mrb[0].mxu0
      %v6904 = vadd.f32 0.0, %v6903
      %v6905 = vpop.f32.mrb[0].mxu0
      %v6906 = vpop.f32.mrb[0].mxu0
      %v6907 = vadd.f32 0.0, %v6906
      %v6908 = vpop.f32.mrb[0].mxu0
      %6909 = vmatprep.mubr.bf16.mxu0 0
      %6910 = vmatmul.mubr.bf16.gmra.mrb[0].mxu0 %v4462
      %v6911 = vpop.f32.mrb[0].mxu0
      %v6912 = vadd.f32 0.0, %v6911
      %v6913 = vpop.f32.mrb[0].mxu0
      %v6914 = vpop.f32.mrb[0].mxu0
      %v6915 = vadd.f32 0.0, %v6914
      %v6916 = vpop.f32.mrb[0].mxu0
      %6917 = vmatprep.mubr.bf16.mxu0 0
      %6918 = vmatmul.mubr.bf16.gmra.mrb[0].mxu0 %v4465
      %v6919 = vpop.f32.mrb[0].mxu0
      %v6920 = vadd.f32 0.0, %v6919
      %v6921 = vpop.f32.mrb[0].mxu0
      %v6922 = vpop.f32.mrb[0].mxu0
      %v6923 = vadd.f32 0.0, %v6922
      %v6924 = vpop.f32.mrb[0].mxu0
      %6925 = vmatprep.mubr.bf16.mxu0 0
      %6926 = vmatmul.mubr.bf16.gmra.mrb[0].mxu0 %v4468
      %v6927 = vpop.f32.mrb[0].mxu0
      %v6928 = vadd.f32 0.0, %v6927
      %v6929 = vpop.f32.mrb[0].mxu0
      %v6930 = vpop.f32.mrb[0].mxu0
      %v6931 = vadd.f32 0.0, %v6930
      %v6932 = vpop.f32.mrb[0].mxu0
      %6933 = vmatprep.mubr.bf16.mxu0 0
      %6934 = vmatmul.mubr.bf16.gmra.mrb[0].mxu0 %v4471
      %v6935 = vpop.f32.mrb[0].mxu0
      %v6936 = vadd.f32 0.0, %v6935
      %v6937 = vpop.f32.mrb[0].mxu0
      %v6938 = vpop.f32.mrb[0].mxu0
      %v6939 = vadd.f32 0.0, %v6938
      %v6940 = vpop.f32.mrb[0].mxu0
      %6941 = vmatprep.mubr.bf16.mxu0 0
      %6942 = vmatmul.mubr.bf16.gmra.mrb[0].mxu0 %v4474
      %v6943 = vpop.f32.mrb[0].mxu0
      %v6944 = vadd.f32 0.0, %v6943
      %v6945 = vpop.f32.mrb[0].mxu0
      %v6946 = vpop.f32.mrb[0].mxu0
      %v6947 = vadd.f32 0.0, %v6946
      %v6948 = vpop.f32.mrb[0].mxu0
      %6949 = vmatprep.mubr.bf16.mxu0 0
      %6950 = vmatmul.mubr.bf16.gmra.mrb[0].mxu0 %v4477
      %v6951 = vpop.f32.mrb[0].mxu0
      %v6952 = vadd.f32 0.0, %v6951
      %v6953 = vpop.f32.mrb[0].mxu0
      %v6954 = vpop.f32.mrb[0].mxu0
      %v6955 = vadd.f32 0.0, %v6954
      %v6956 = vpop.f32.mrb[0].mxu0
      %6957 = vmatprep.mubr.bf16.mxu0 0
      %6958 = vmatmul.mubr.bf16.gmra.mrb[0].mxu0 %v4480
      %v6959 = vpop.f32.mrb[0].mxu0
      %v6960 = vadd.f32 0.0, %v6959
      %v6961 = vpop.f32.mrb[0].mxu0
      %v6962 = vpop.f32.mrb[0].mxu0
      %v6963 = vadd.f32 0.0, %v6962
      %v6964 = vpop.f32.mrb[0].mxu0
      %6965 = vmatprep.mubr.bf16.mxu0 0
      %6966 = vmatmul.mubr.bf16.gmra.mrb[0].mxu0 %v4483
      %v6967 = vpop.f32.mrb[0].mxu0
      %v6968 = vadd.f32 0.0, %v6967
      %v6969 = vpop.f32.mrb[0].mxu0
      %v6970 = vpop.f32.mrb[0].mxu0
      %v6971 = vadd.f32 0.0, %v6970
      %v6972 = vpop.f32.mrb[0].mxu0
      %6973 = vmatprep.mubr.bf16.mxu0 0
      %6974 = vmatmul.mubr.bf16.gmra.mrb[0].mxu0 %v4486
      %v6975 = vpop.f32.mrb[0].mxu0
      %v6976 = vadd.f32 0.0, %v6975
      %v6977 = vpop.f32.mrb[0].mxu0
      %v6978 = vpop.f32.mrb[0].mxu0
      %v6979 = vadd.f32 0.0, %v6978
      %v6980 = vpop.f32.mrb[0].mxu0
      %6981 = vmatprep.mubr.bf16.mxu0 0
      %6982 = vmatmul.mubr.bf16.gmra.mrb[0].mxu0 %v4489
      %v6983 = vpop.f32.mrb[0].mxu0
      %v6984 = vadd.f32 0.0, %v6983
      %v6985 = vpop.f32.mrb[0].mxu0
      %v6986 = vpop.f32.mrb[0].mxu0
      %v6987 = vadd.f32 0.0, %v6986
      %v6988 = vpop.f32.mrb[0].mxu0
      %6989 = vmatprep.mubr.bf16.mxu0 0
      %6990 = vmatmul.mubr.bf16.gmra.mrb[0].mxu0 %v4492
      %v6991 = vpop.f32.mrb[0].mxu0
      %v6992 = vadd.f32 0.0, %v6991
      %v6993 = vpop.f32.mrb[0].mxu0
      %v6994 = vpop.f32.mrb[0].mxu0
      %v6995 = vadd.f32 0.0, %v6994
      %v6996 = vpop.f32.mrb[0].mxu0
      %6997 = vmatprep.mubr.bf16.mxu0 0
      %6998 = vmatmul.mubr.bf16.gmra.mrb[0].mxu0 %v4495
      %v6999 = vpop.f32.mrb[0].mxu0
      %v7000 = vadd.f32 0.0, %v6999
      %v7001 = vpop.f32.mrb[0].mxu0
      %v7002 = vpop.f32.mrb[0].mxu0
      %v7003 = vadd.f32 0.0, %v7002
      %v7004 = vpop.f32.mrb[0].mxu0
      %7005 = vmatprep.mubr.bf16.mxu0 0
      %7006 = vmatmul.mubr.bf16.gmra.mrb[0].mxu0 %v4498
      %v7007 = vpop.f32.mrb[0].mxu0
      %v7008 = vadd.f32 0.0, %v7007
      %v7009 = vpop.f32.mrb[0].mxu0
      %v7010 = vpop.f32.mrb[0].mxu0
      %v7011 = vadd.f32 0.0, %v7010
      %v7012 = vpop.f32.mrb[0].mxu0
      %7013 = vmatprep.mubr.bf16.mxu0 0
      %7014 = vmatmul.mubr.bf16.gmra.mrb[0].mxu0 %v4501
      %v7015 = vpop.f32.mrb[0].mxu0
      %v7016 = vadd.f32 0.0, %v7015
      %v7017 = vpop.f32.mrb[0].mxu0
      %v7018 = vpop.f32.mrb[0].mxu0
      %v7019 = vadd.f32 0.0, %v7018
      %v7020 = vpop.f32.mrb[0].mxu0
      %7021 = vmatprep.mubr.bf16.mxu0 0
      %7022 = vmatmul.mubr.bf16.gmra.mrb[0].mxu0 %v4504
      %v7023 = vpop.f32.mrb[0].mxu0
      %v7024 = vadd.f32 0.0, %v7023
      %v7025 = vpop.f32.mrb[0].mxu0
      %v7026 = vpop.f32.mrb[0].mxu0
      %v7027 = vadd.f32 0.0, %v7026
      %v7028 = vpop.f32.mrb[0].mxu0
      %7029 = vmatprep.mubr.bf16.mxu0 0
      %7030 = vmatmul.mubr.bf16.gmra.mrb[0].mxu0 %v4507
      %v7031 = vpop.f32.mrb[0].mxu0
      %v7032 = vadd.f32 0.0, %v7031
      %v7033 = vpop.f32.mrb[0].mxu0
      %v7034 = vpop.f32.mrb[0].mxu0
      %v7035 = vadd.f32 0.0, %v7034
      %v7036 = vpop.f32.mrb[0].mxu0
      %7037 = vmatprep.mubr.bf16.mxu0 0
      %7038 = vmatmul.mubr.bf16.gmra.mrb[0].mxu0 %v4510
      %v7039 = vpop.f32.mrb[0].mxu0
      %v7040 = vadd.f32 0.0, %v7039
      %v7041 = vpop.f32.mrb[0].mxu0
      %v7042 = vpop.f32.mrb[0].mxu0
      %v7043 = vadd.f32 0.0, %v7042
      %v7044 = vpop.f32.mrb[0].mxu0
      %7045 = vmatprep.mubr.bf16.mxu0 0
      %7046 = vmatmul.mubr.bf16.gmra.mrb[0].mxu0 %v4513
      %v7047 = vpop.f32.mrb[0].mxu0
      %v7048 = vadd.f32 0.0, %v7047
      %v7049 = vpop.f32.mrb[0].mxu0
      %v7050 = vpop.f32.mrb[0].mxu0
      %v7051 = vadd.f32 0.0, %v7050
      %v7052 = vpop.f32.mrb[0].mxu0
      %7053 = vmatprep.mubr.bf16.mxu0 0
      %7054 = vmatmul.mubr.bf16.gmra.mrb[0].mxu0 %v4516
      %v7055 = vpop.f32.mrb[0].mxu0
      %v7056 = vadd.f32 0.0, %v7055
      %v7057 = vpop.f32.mrb[0].mxu0
      %v7058 = vpop.f32.mrb[0].mxu0
      %v7059 = vadd.f32 0.0, %v7058
      %v7060 = vpop.f32.mrb[0].mxu0
      %7061 = vmatprep.mubr.bf16.mxu0 0
      %7062 = vmatmul.mubr.bf16.gmra.mrb[0].mxu0 %v4519
      %v7063 = vpop.f32.mrb[0].mxu0
      %v7064 = vadd.f32 0.0, %v7063
      %v7065 = vpop.f32.mrb[0].mxu0
      %v7066 = vpop.f32.mrb[0].mxu0
      %v7067 = vadd.f32 0.0, %v7066
      %v7068 = vpop.f32.mrb[0].mxu0
      %7069 = vmatprep.mubr.bf16.mxu0 0
      %7070 = vmatmul.mubr.bf16.gmra.mrb[0].mxu0 %v4522
      %v7071 = vpop.f32.mrb[0].mxu0
      %v7072 = vadd.f32 0.0, %v7071
      %v7073 = vpop.f32.mrb[0].mxu0
      %v7074 = vpop.f32.mrb[0].mxu0
      %v7075 = vadd.f32 0.0, %v7074
      %v7076 = vpop.f32.mrb[0].mxu0
      %7077 = vmatprep.mubr.bf16.mxu0 0
      %7078 = vmatmul.mubr.bf16.gmra.mrb[0].mxu0 %v4525
      %v7079 = vpop.f32.mrb[0].mxu0
      %v7080 = vadd.f32 0.0, %v7079
      %v7081 = vpop.f32.mrb[0].mxu0
      %v7082 = vpop.f32.mrb[0].mxu0
      %v7083 = vadd.f32 0.0, %v7082
      %v7084 = vpop.f32.mrb[0].mxu0
      %7085 = vmatprep.mubr.bf16.mxu0 0
      %7086 = vmatmul.mubr.bf16.gmra.mrb[0].mxu0 %v4528
      %v7087 = vpop.f32.mrb[0].mxu0
      %v7088 = vadd.f32 0.0, %v7087
      %v7089 = vpop.f32.mrb[0].mxu0
      %v7090 = vpop.f32.mrb[0].mxu0
      %v7091 = vadd.f32 0.0, %v7090
      %v7092 = vpop.f32.mrb[0].mxu0
      %7093 = vmatprep.mubr.bf16.mxu0 0
      %7094 = vmatmul.mubr.bf16.gmra.mrb[0].mxu0 %v4531
      %v7095 = vpop.f32.mrb[0].mxu0
      %v7096 = vadd.f32 0.0, %v7095
      %v7097 = vpop.f32.mrb[0].mxu0
      %v7098 = vpop.f32.mrb[0].mxu0
      %v7099 = vadd.f32 0.0, %v7098
      %v7100 = vpop.f32.mrb[0].mxu0
      %7101 = vmatprep.mubr.bf16.mxu0 0
      %7102 = vmatmul.mubr.bf16.gmra.mrb[0].mxu0 %v4534
      %v7103 = vpop.f32.mrb[0].mxu0
      %v7104 = vadd.f32 0.0, %v7103
      %v7105 = vpop.f32.mrb[0].mxu0
      %v7106 = vpop.f32.mrb[0].mxu0
      %v7107 = vadd.f32 0.0, %v7106
      %v7108 = vpop.f32.mrb[0].mxu0
      %7109 = vmatprep.mubr.bf16.mxu0 0
      %7110 = vmatmul.mubr.bf16.gmra.mrb[0].mxu0 %v4537
      %v7111 = vpop.f32.mrb[0].mxu0
      %v7112 = vadd.f32 0.0, %v7111
      %v7113 = vpop.f32.mrb[0].mxu0
      %v7114 = vpop.f32.mrb[0].mxu0
      %v7115 = vadd.f32 0.0, %v7114
      %v7116 = vpop.f32.mrb[0].mxu0
      %7117 = vmatprep.mubr.bf16.mxu0 0
      %7118 = vmatmul.mubr.bf16.gmra.mrb[0].mxu0 %v4540
      %v7119 = vpop.f32.mrb[0].mxu0
      %v7120 = vadd.f32 0.0, %v7119
      %v7121 = vpop.f32.mrb[0].mxu0
      %v7122 = vpop.f32.mrb[0].mxu0
      %v7123 = vadd.f32 0.0, %v7122
      %v7124 = vpop.f32.mrb[0].mxu0
      %7125 = vmatprep.mubr.bf16.mxu0 0
      %7126 = vmatmul.mubr.bf16.gmra.mrb[0].mxu0 %v4543
      %v7127 = vpop.f32.mrb[0].mxu0
      %v7128 = vadd.f32 0.0, %v7127
      %v7129 = vpop.f32.mrb[0].mxu0
      %v7130 = vpop.f32.mrb[0].mxu0
      %v7131 = vadd.f32 0.0, %v7130
      %v7132 = vpop.f32.mrb[0].mxu0
      %7133 = vmatprep.mubr.bf16.mxu0 0
      %7134 = vmatmul.mubr.bf16.gmra.mrb[0].mxu0 %v4546
      %v7135 = vpop.f32.mrb[0].mxu0
      %v7136 = vadd.f32 0.0, %v7135
      %v7137 = vpop.f32.mrb[0].mxu0
      %v7138 = vpop.f32.mrb[0].mxu0
      %v7139 = vadd.f32 0.0, %v7138
      %v7140 = vpop.f32.mrb[0].mxu0
      %7141 = vmatprep.mubr.bf16.mxu0 0
      %7142 = vmatmul.mubr.bf16.gmra.mrb[0].mxu0 %v4549
      %v7143 = vpop.f32.mrb[0].mxu0
      %v7144 = vadd.f32 0.0, %v7143
      %v7145 = vpop.f32.mrb[0].mxu0
      %v7146 = vpop.f32.mrb[0].mxu0
      %v7147 = vadd.f32 0.0, %v7146
      %v7148 = vpop.f32.mrb[0].mxu0
      %7149 = vmatprep.mubr.bf16.mxu0 0
      %7150 = vmatmul.mubr.bf16.gmra.mrb[0].mxu0 %v4552
      %v7151 = vpop.f32.mrb[0].mxu0
      %v7152 = vadd.f32 0.0, %v7151
      %v7153 = vpop.f32.mrb[0].mxu0
      %v7154 = vpop.f32.mrb[0].mxu0
      %v7155 = vadd.f32 0.0, %v7154
      %v7156 = vpop.f32.mrb[0].mxu0
      %7157 = vmatprep.mubr.bf16.mxu0 0
      %7158 = vmatmul.mubr.bf16.gmra.mrb[0].mxu0 %v4555
      %v7159 = vpop.f32.mrb[0].mxu0
      %v7160 = vadd.f32 0.0, %v7159
      %v7161 = vpop.f32.mrb[0].mxu0
      %v7162 = vpop.f32.mrb[0].mxu0
      %v7163 = vadd.f32 0.0, %v7162
      %v7164 = vpop.f32.mrb[0].mxu0
      %7165 = vmatprep.mubr.bf16.mxu0 0
      %7166 = vmatmul.mubr.bf16.gmra.mrb[0].mxu0 %v4558
      %v7167 = vpop.f32.mrb[0].mxu0
      %v7168 = vadd.f32 0.0, %v7167
      %v7169 = vpop.f32.mrb[0].mxu0
      %v7170 = vpop.f32.mrb[0].mxu0
      %v7171 = vadd.f32 0.0, %v7170
      %v7172 = vpop.f32.mrb[0].mxu0
      %7173 = vmatprep.mubr.bf16.mxu0 0
      %7174 = vmatmul.mubr.bf16.gmra.mrb[0].mxu0 %v4561
      %v7175 = vpop.f32.mrb[0].mxu0
      %v7176 = vadd.f32 0.0, %v7175
      %v7177 = vpop.f32.mrb[0].mxu0
      %v7178 = vpop.f32.mrb[0].mxu0
      %v7179 = vadd.f32 0.0, %v7178
      %v7180 = vpop.f32.mrb[0].mxu0
      %7181 = vmatprep.mubr.bf16.mxu0 0
      %7182 = vmatmul.mubr.bf16.gmra.mrb[0].mxu0 %v4564
      %v7183 = vpop.f32.mrb[0].mxu0
      %v7184 = vadd.f32 0.0, %v7183
      %v7185 = vpop.f32.mrb[0].mxu0
      %v7186 = vpop.f32.mrb[0].mxu0
      %v7187 = vadd.f32 0.0, %v7186
      %v7188 = vpop.f32.mrb[0].mxu0
      %7189 = vmatprep.mubr.bf16.mxu0 0
      %7190 = vmatmul.mubr.bf16.gmra.mrb[0].mxu0 %v4567
      %v7191 = vpop.f32.mrb[0].mxu0
      %v7192 = vadd.f32 0.0, %v7191
      %v7193 = vpop.f32.mrb[0].mxu0
      %v7194 = vpop.f32.mrb[0].mxu0
      %v7195 = vadd.f32 0.0, %v7194
      %v7196 = vpop.f32.mrb[0].mxu0
      %7197 = vmatprep.mubr.bf16.mxu0 0
      %7198 = vmatmul.mubr.bf16.gmra.mrb[0].mxu0 %v4570
      %v7199 = vpop.f32.mrb[0].mxu0
      %v7200 = vadd.f32 0.0, %v7199
      %v7201 = vpop.f32.mrb[0].mxu0
      %v7202 = vpop.f32.mrb[0].mxu0
      %v7203 = vadd.f32 0.0, %v7202
      %v7204 = vpop.f32.mrb[0].mxu0
      %7205 = vmatprep.mubr.bf16.mxu0 0
      %7206 = vmatmul.mubr.bf16.gmra.mrb[0].mxu0 %v4573
      %v7207 = vpop.f32.mrb[0].mxu0
      %v7208 = vadd.f32 0.0, %v7207
      %v7209 = vpop.f32.mrb[0].mxu0
      %v7210 = vpop.f32.mrb[0].mxu0
      %v7211 = vadd.f32 0.0, %v7210
      %v7212 = vpop.f32.mrb[0].mxu0
      %7213 = vmatprep.mubr.bf16.mxu0 0
      %7214 = vmatmul.mubr.bf16.gmra.mrb[0].mxu0 %v4576
      %v7215 = vpop.f32.mrb[0].mxu0
      %v7216 = vadd.f32 0.0, %v7215
      %v7217 = vpop.f32.mrb[0].mxu0
      %v7218 = vpop.f32.mrb[0].mxu0
      %v7219 = vadd.f32 0.0, %v7218
      %v7220 = vpop.f32.mrb[0].mxu0
      %7221 = vmatprep.mubr.bf16.mxu0 0
      %7222 = vmatmul.mubr.bf16.gmra.mrb[0].mxu0 %v4579
      %v7223 = vpop.f32.mrb[0].mxu0
      %v7224 = vadd.f32 0.0, %v7223
      %v7225 = vpop.f32.mrb[0].mxu0
      %v7226 = vpop.f32.mrb[0].mxu0
      %v7227 = vadd.f32 0.0, %v7226
      %v7228 = vpop.f32.mrb[0].mxu0
      %7229 = vmatprep.mubr.bf16.mxu0 0
      %7230 = vmatmul.mubr.bf16.gmra.mrb[0].mxu0 %v4582
      %v7231 = vpop.f32.mrb[0].mxu0
      %v7232 = vadd.f32 0.0, %v7231
      %v7233 = vpop.f32.mrb[0].mxu0
      %v7234 = vpop.f32.mrb[0].mxu0
      %v7235 = vadd.f32 0.0, %v7234
      %v7236 = vpop.f32.mrb[0].mxu0
      %7237 = vmatprep.mubr.bf16.mxu0 0
      %7238 = vmatmul.mubr.bf16.gmra.mrb[0].mxu0 %v4585
      %v7239 = vpop.f32.mrb[0].mxu0
      %v7240 = vadd.f32 0.0, %v7239
      %v7241 = vpop.f32.mrb[0].mxu0
      %v7242 = vpop.f32.mrb[0].mxu0
      %v7243 = vadd.f32 0.0, %v7242
      %v7244 = vpop.f32.mrb[0].mxu0
      %7245 = vmatprep.mubr.bf16.mxu0 0
      %7246 = vmatmul.mubr.bf16.gmra.mrb[0].mxu0 %v4588
      %v7247 = vpop.f32.mrb[0].mxu0
      %v7248 = vadd.f32 0.0, %v7247
      %v7249 = vpop.f32.mrb[0].mxu0
      %v7250 = vpop.f32.mrb[0].mxu0
      %v7251 = vadd.f32 0.0, %v7250
      %v7252 = vpop.f32.mrb[0].mxu0
      %7253 = vmatprep.mubr.bf16.mxu0 0
      %7254 = vmatmul.mubr.bf16.gmra.mrb[0].mxu0 %v6717
      %v7255 = vpop.f32.mrb[0].mxu0
      %v7256 = vadd.f32 0.0, %v7255
      %v7257 = vpop.f32.mrb[0].mxu0
      %v7258 = vpop.f32.mrb[0].mxu0
      %v7259 = vadd.f32 0.0, %v7258
      %v7260 = vpop.f32.mrb[0].mxu0
      %7261 = vmatprep.mubr.bf16.mxu0 0
      %7262 = vmatmul.mubr.bf16.gmra.mrb[0].mxu0 %v6720
      %v7263 = vpop.f32.mrb[0].mxu0
      %v7264 = vadd.f32 0.0, %v7263
      %v7265 = vpop.f32.mrb[0].mxu0
      %v7266 = vpop.f32.mrb[0].mxu0
      %v7267 = vadd.f32 0.0, %v7266
      %v7268 = vpop.f32.mrb[0].mxu0
      %7269 = vdwg.mxu0
      %v7270 = vadd.f32 %v6566, %v6760
      %v7271 = vadd.f32 %v6567, %v6763
      %v7272 = vadd.f32 %v6568, %v6768
      %v7273 = vadd.f32 %v6569, %v6771
      %v7274 = vadd.f32 %v6570, %v6776
      %v7275 = vadd.f32 %v6571, %v6779
      %v7276 = vadd.f32 %v6572, %v6784
      %v7277 = vadd.f32 %v6573, %v6787
      %v7278 = vadd.f32 %v6574, %v6792
      %v7279 = vadd.f32 %v6575, %v6795
      %v7280 = vadd.f32 %v6576, %v6800
      %v7281 = vadd.f32 %v6577, %v6803
      %v7282 = vadd.f32 %v6578, %v6808
      %v7283 = vadd.f32 %v6579, %v6811
      %v7284 = vadd.f32 %v6580, %v6816
      %v7285 = vadd.f32 %v6581, %v6819
      %v7286 = vadd.f32 %v6582, %v6824
      %v7287 = vadd.f32 %v6583, %v6827
      %v7288 = vadd.f32 %v6584, %v6832
      %v7289 = vadd.f32 %v6585, %v6835
      %v7290 = vadd.f32 %v6586, %v6840
      %v7291 = vadd.f32 %v6587, %v6843
      %v7292 = vadd.f32 %v6588, %v6848
      %v7293 = vadd.f32 %v6589, %v6851
      %v7294 = vadd.f32 %v6590, %v6856
      %v7295 = vadd.f32 %v6591, %v6859
      %v7296 = vadd.f32 %v6592, %v6864
      %v7297 = vadd.f32 %v6593, %v6867
      %v7298 = vadd.f32 %v6594, %v6872
      %v7299 = vadd.f32 %v6595, %v6875
      %v7300 = vadd.f32 %v6596, %v6880
      %v7301 = vadd.f32 %v6597, %v6883
      %v7302 = vadd.f32 %v6598, %v6888
      %v7303 = vadd.f32 %v6599, %v6891
      %v7304 = vadd.f32 %v6600, %v6896
      %v7305 = vadd.f32 %v6601, %v6899
      %v7306 = vadd.f32 %v6602, %v6904
      %v7307 = vadd.f32 %v6603, %v6907
      %v7308 = vadd.f32 %v6604, %v6912
      %v7309 = vadd.f32 %v6605, %v6915
      %v7310 = vadd.f32 %v6606, %v6920
      %v7311 = vadd.f32 %v6607, %v6923
      %v7312 = vadd.f32 %v6608, %v6928
      %v7313 = vadd.f32 %v6609, %v6931
      %v7314 = vadd.f32 %v6610, %v6936
      %v7315 = vadd.f32 %v6611, %v6939
      %v7316 = vadd.f32 %v6612, %v6944
      %v7317 = vadd.f32 %v6613, %v6947
      %v7318 = vadd.f32 %v6614, %v6952
      %v7319 = vadd.f32 %v6615, %v6955
      %v7320 = vadd.f32 %v6616, %v6960
      %v7321 = vadd.f32 %v6617, %v6963
      %v7322 = vadd.f32 %v6618, %v6968
      %v7323 = vadd.f32 %v6619, %v6971
      %v7324 = vadd.f32 %v6620, %v6976
      %v7325 = vadd.f32 %v6621, %v6979
      %v7326 = vadd.f32 %v6622, %v6984
      %v7327 = vadd.f32 %v6623, %v6987
      %v7328 = vadd.f32 %v6624, %v6992
      %v7329 = vadd.f32 %v6625, %v6995
      %v7330 = vadd.f32 %v6626, %v7000
      %v7331 = vadd.f32 %v6627, %v7003
      %v7332 = vadd.f32 %v6628, %v7008
      %v7333 = vadd.f32 %v6629, %v7011
      %v7334 = vadd.f32 %v6630, %v7016
      %v7335 = vadd.f32 %v6631, %v7019
      %v7336 = vadd.f32 %v6632, %v7024
      %v7337 = vadd.f32 %v6633, %v7027
      %v7338 = vadd.f32 %v6634, %v7032
      %v7339 = vadd.f32 %v6635, %v7035
      %v7340 = vadd.f32 %v6636, %v7040
      %v7341 = vadd.f32 %v6637, %v7043
      %v7342 = vadd.f32 %v6638, %v7048
      %v7343 = vadd.f32 %v6639, %v7051
      %v7344 = vadd.f32 %v6640, %v7056
      %v7345 = vadd.f32 %v6641, %v7059
      %v7346 = vadd.f32 %v6642, %v7064
      %v7347 = vadd.f32 %v6643, %v7067
      %v7348 = vadd.f32 %v6644, %v7072
      %v7349 = vadd.f32 %v6645, %v7075
      %v7350 = vadd.f32 %v6646, %v7080
      %v7351 = vadd.f32 %v6647, %v7083
      %v7352 = vadd.f32 %v6648, %v7088
      %v7353 = vadd.f32 %v6649, %v7091
      %v7354 = vadd.f32 %v6650, %v7096
      %v7355 = vadd.f32 %v6651, %v7099
      %v7356 = vadd.f32 %v6652, %v7104
      %v7357 = vadd.f32 %v6653, %v7107
      %v7358 = vadd.f32 %v6654, %v7112
      %v7359 = vadd.f32 %v6655, %v7115
      %v7360 = vadd.f32 %v6656, %v7120
      %v7361 = vadd.f32 %v6657, %v7123
      %v7362 = vadd.f32 %v6658, %v7128
      %v7363 = vadd.f32 %v6659, %v7131
      %v7364 = vadd.f32 %v6660, %v7136
      %v7365 = vadd.f32 %v6661, %v7139
      %v7366 = vadd.f32 %v6662, %v7144
      %v7367 = vadd.f32 %v6663, %v7147
      %v7368 = vadd.f32 %v6664, %v7152
      %v7369 = vadd.f32 %v6665, %v7155
      %v7370 = vadd.f32 %v6666, %v7160
      %v7371 = vadd.f32 %v6667, %v7163
      %v7372 = vadd.f32 %v6668, %v7168
      %v7373 = vadd.f32 %v6669, %v7171
      %v7374 = vadd.f32 %v6670, %v7176
      %v7375 = vadd.f32 %v6671, %v7179
      %v7376 = vadd.f32 %v6672, %v7184
      %v7377 = vadd.f32 %v6673, %v7187
      %v7378 = vadd.f32 %v6674, %v7192
      %v7379 = vadd.f32 %v6675, %v7195
      %v7380 = vadd.f32 %v6676, %v7200
      %v7381 = vadd.f32 %v6677, %v7203
      %v7382 = vadd.f32 %v6678, %v7208
      %v7383 = vadd.f32 %v6679, %v7211
      %v7384 = vadd.f32 %v6680, %v7216
      %v7385 = vadd.f32 %v6681, %v7219
      %v7386 = vadd.f32 %v6682, %v7224
      %v7387 = vadd.f32 %v6683, %v7227
      %v7388 = vadd.f32 %v6684, %v7232
      %v7389 = vadd.f32 %v6685, %v7235
      %v7390 = vadd.f32 %v6686, %v7240
      %v7391 = vadd.f32 %v6687, %v7243
      %v7392 = vadd.f32 %v6688, %v7248
      %v7393 = vadd.f32 %v6689, %v7251
      %v7394 = vadd.f32 %v6690, %v7256
      %v7395 = vadd.f32 %v6691, %v7259
      %v7396 = vadd.f32 %v6692, %v7264
      %v7397 = vadd.f32 %v6693, %v7267
      %s7398 = scalar_lea.vmem %s1, 12
      %v7399 = vld [vmem:[%s7398] sm:$0x3]
      %v7404 = vunpack.c.l.b16 %v337
      %v7405 = vunpack.c.l.b16 %v338
      %v7406 = vunpack.c.l.b16 %v339
      %v7407 = vunpack.c.l.b16 %v340
      %v7408 = vpack.c.b16 %v7405, %v7404
      %v7409 = vpack.c.b16 %v7407, %v7406
      %v7411 = vsel %vm1948, %v7408, 0
      %v7414 = vsel %vm1948, %v7409, 0
      %v7417 = vand.u32 %v7399, %v2144
      %7419 = vmatprep.subr.bf16.mxu0 0
      %7420 = vmatpush1.bf16.msra.mxu0 %v7417
      %7421 = vmatprep.subr.bf16.mxu0 0
      %7422 = vmatpush1.bf16.msra.mxu0 0
      %7423 = vmatprep.subr.bf16.mxu0 0
      %7424 = vmatpush1.bf16.msra.mxu0 0
      %7425 = vmatprep.subr.bf16.mxu0 0
      %7426 = vmatpush1.bf16.msra.mxu0 0
      %7427 = vmatprep.subr.bf16.mxu0 0
      %7428 = vmatpush1.bf16.msra.mxu0 0
      %7429 = vmatprep.subr.bf16.mxu0 0
      %7430 = vmatpush1.bf16.msra.mxu0 0
      %7431 = vmatprep.subr.bf16.mxu0 0
      %7432 = vmatpush1.bf16.msra.mxu0 0
      %7433 = vmatprep.subr.bf16.mxu0 0
      %7434 = vmatpush1.bf16.msra.mxu0 0
      %7435 = vmatprep.subr.bf16.mxu0 0
      %7436 = vmatpush1.bf16.msra.mxu0 0
      %7437 = vmatprep.subr.bf16.mxu0 0
      %7438 = vmatpush1.bf16.msra.mxu0 0
      %7439 = vmatprep.subr.bf16.mxu0 0
      %7440 = vmatpush1.bf16.msra.mxu0 0
      %7441 = vmatprep.subr.bf16.mxu0 0
      %7442 = vmatpush1.bf16.msra.mxu0 0
      %7443 = vmatprep.subr.bf16.mxu0 0
      %7444 = vmatpush1.bf16.msra.mxu0 0
      %7445 = vmatprep.subr.bf16.mxu0 0
      %7446 = vmatpush1.bf16.msra.mxu0 0
      %7447 = vmatprep.subr.bf16.mxu0 0
      %7448 = vmatpush1.bf16.msra.mxu0 0
      %7449 = vmatprep.subr.bf16.mxu0 0
      %7450 = vmatpush1.bf16.msra.mxu0 0
      %7451 = vmatprep.mubr.bf16.mxu0 0
      %7452 = vmatmul.mubr.bf16.gmra.mrb[0].mxu0 %v3026
      %v7453 = vpop.f32.mrb[0].mxu0
      %v7454 = vadd.f32 0.0, %v7453
      %v7455 = vpop.f32.mrb[0].mxu0
      %v7456 = vpop.f32.mrb[0].mxu0
      %v7457 = vadd.f32 0.0, %v7456
      %v7458 = vpop.f32.mrb[0].mxu0
      %7459 = vmatprep.mubr.bf16.mxu0 0
      %7460 = vmatmul.mubr.bf16.gmra.mrb[0].mxu0 %v3029
      %v7461 = vpop.f32.mrb[0].mxu0
      %v7462 = vadd.f32 0.0, %v7461
      %v7463 = vpop.f32.mrb[0].mxu0
      %v7464 = vpop.f32.mrb[0].mxu0
      %v7465 = vadd.f32 0.0, %v7464
      %v7466 = vpop.f32.mrb[0].mxu0
      %7467 = vmatprep.mubr.bf16.mxu0 0
      %7468 = vmatmul.mubr.bf16.gmra.mrb[0].mxu0 %v3032
      %v7469 = vpop.f32.mrb[0].mxu0
      %v7470 = vadd.f32 0.0, %v7469
      %v7471 = vpop.f32.mrb[0].mxu0
      %v7472 = vpop.f32.mrb[0].mxu0
      %v7473 = vadd.f32 0.0, %v7472
      %v7474 = vpop.f32.mrb[0].mxu0
      %7475 = vmatprep.mubr.bf16.mxu0 0
      %7476 = vmatmul.mubr.bf16.gmra.mrb[0].mxu0 %v3035
      %v7477 = vpop.f32.mrb[0].mxu0
      %v7478 = vadd.f32 0.0, %v7477
      %v7479 = vpop.f32.mrb[0].mxu0
      %v7480 = vpop.f32.mrb[0].mxu0
      %v7481 = vadd.f32 0.0, %v7480
      %v7482 = vpop.f32.mrb[0].mxu0
      %7483 = vmatprep.mubr.bf16.mxu0 0
      %7484 = vmatmul.mubr.bf16.gmra.mrb[0].mxu0 %v3038
      %v7485 = vpop.f32.mrb[0].mxu0
      %v7486 = vadd.f32 0.0, %v7485
      %v7487 = vpop.f32.mrb[0].mxu0
      %v7488 = vpop.f32.mrb[0].mxu0
      %v7489 = vadd.f32 0.0, %v7488
      %v7490 = vpop.f32.mrb[0].mxu0
      %7491 = vmatprep.mubr.bf16.mxu0 0
      %7492 = vmatmul.mubr.bf16.gmra.mrb[0].mxu0 %v3041
      %v7493 = vpop.f32.mrb[0].mxu0
      %v7494 = vadd.f32 0.0, %v7493
      %v7495 = vpop.f32.mrb[0].mxu0
      %v7496 = vpop.f32.mrb[0].mxu0
      %v7497 = vadd.f32 0.0, %v7496
      %v7498 = vpop.f32.mrb[0].mxu0
      %7499 = vmatprep.mubr.bf16.mxu0 0
      %7500 = vmatmul.mubr.bf16.gmra.mrb[0].mxu0 %v3044
      %v7501 = vpop.f32.mrb[0].mxu0
      %v7502 = vadd.f32 0.0, %v7501
      %v7503 = vpop.f32.mrb[0].mxu0
      %v7504 = vpop.f32.mrb[0].mxu0
      %v7505 = vadd.f32 0.0, %v7504
      %v7506 = vpop.f32.mrb[0].mxu0
      %7507 = vmatprep.mubr.bf16.mxu0 0
      %7508 = vmatmul.mubr.bf16.gmra.mrb[0].mxu0 %v3047
      %v7509 = vpop.f32.mrb[0].mxu0
      %v7510 = vadd.f32 0.0, %v7509
      %v7511 = vpop.f32.mrb[0].mxu0
      %v7512 = vpop.f32.mrb[0].mxu0
      %v7513 = vadd.f32 0.0, %v7512
      %v7514 = vpop.f32.mrb[0].mxu0
      %7515 = vmatprep.mubr.bf16.mxu0 0
      %7516 = vmatmul.mubr.bf16.gmra.mrb[0].mxu0 %v3050
      %v7517 = vpop.f32.mrb[0].mxu0
      %v7518 = vadd.f32 0.0, %v7517
      %v7519 = vpop.f32.mrb[0].mxu0
      %v7520 = vpop.f32.mrb[0].mxu0
      %v7521 = vadd.f32 0.0, %v7520
      %v7522 = vpop.f32.mrb[0].mxu0
      %7523 = vmatprep.mubr.bf16.mxu0 0
      %7524 = vmatmul.mubr.bf16.gmra.mrb[0].mxu0 %v3053
      %v7525 = vpop.f32.mrb[0].mxu0
      %v7526 = vadd.f32 0.0, %v7525
      %v7527 = vpop.f32.mrb[0].mxu0
      %v7528 = vpop.f32.mrb[0].mxu0
      %v7529 = vadd.f32 0.0, %v7528
      %v7530 = vpop.f32.mrb[0].mxu0
      %7531 = vmatprep.mubr.bf16.mxu0 0
      %7532 = vmatmul.mubr.bf16.gmra.mrb[0].mxu0 %v3056
      %v7533 = vpop.f32.mrb[0].mxu0
      %v7534 = vadd.f32 0.0, %v7533
      %v7535 = vpop.f32.mrb[0].mxu0
      %v7536 = vpop.f32.mrb[0].mxu0
      %v7537 = vadd.f32 0.0, %v7536
      %v7538 = vpop.f32.mrb[0].mxu0
      %7539 = vmatprep.mubr.bf16.mxu0 0
      %7540 = vmatmul.mubr.bf16.gmra.mrb[0].mxu0 %v3059
      %v7541 = vpop.f32.mrb[0].mxu0
      %v7542 = vadd.f32 0.0, %v7541
      %v7543 = vpop.f32.mrb[0].mxu0
      %v7544 = vpop.f32.mrb[0].mxu0
      %v7545 = vadd.f32 0.0, %v7544
      %v7546 = vpop.f32.mrb[0].mxu0
      %7547 = vmatprep.mubr.bf16.mxu0 0
      %7548 = vmatmul.mubr.bf16.gmra.mrb[0].mxu0 %v3062
      %v7549 = vpop.f32.mrb[0].mxu0
      %v7550 = vadd.f32 0.0, %v7549
      %v7551 = vpop.f32.mrb[0].mxu0
      %v7552 = vpop.f32.mrb[0].mxu0
      %v7553 = vadd.f32 0.0, %v7552
      %v7554 = vpop.f32.mrb[0].mxu0
      %7555 = vmatprep.mubr.bf16.mxu0 0
      %7556 = vmatmul.mubr.bf16.gmra.mrb[0].mxu0 %v3065
      %v7557 = vpop.f32.mrb[0].mxu0
      %v7558 = vadd.f32 0.0, %v7557
      %v7559 = vpop.f32.mrb[0].mxu0
      %v7560 = vpop.f32.mrb[0].mxu0
      %v7561 = vadd.f32 0.0, %v7560
      %v7562 = vpop.f32.mrb[0].mxu0
      %7563 = vmatprep.mubr.bf16.mxu0 0
      %7564 = vmatmul.mubr.bf16.gmra.mrb[0].mxu0 %v3068
      %v7565 = vpop.f32.mrb[0].mxu0
      %v7566 = vadd.f32 0.0, %v7565
      %v7567 = vpop.f32.mrb[0].mxu0
      %v7568 = vpop.f32.mrb[0].mxu0
      %v7569 = vadd.f32 0.0, %v7568
      %v7570 = vpop.f32.mrb[0].mxu0
      %7571 = vmatprep.mubr.bf16.mxu0 0
      %7572 = vmatmul.mubr.bf16.gmra.mrb[0].mxu0 %v3071
      %v7573 = vpop.f32.mrb[0].mxu0
      %v7574 = vadd.f32 0.0, %v7573
      %v7575 = vpop.f32.mrb[0].mxu0
      %v7576 = vpop.f32.mrb[0].mxu0
      %v7577 = vadd.f32 0.0, %v7576
      %v7578 = vpop.f32.mrb[0].mxu0
      %7579 = vmatprep.mubr.bf16.mxu0 0
      %7580 = vmatmul.mubr.bf16.gmra.mrb[0].mxu0 %v3074
      %v7581 = vpop.f32.mrb[0].mxu0
      %v7582 = vadd.f32 0.0, %v7581
      %v7583 = vpop.f32.mrb[0].mxu0
      %v7584 = vpop.f32.mrb[0].mxu0
      %v7585 = vadd.f32 0.0, %v7584
      %v7586 = vpop.f32.mrb[0].mxu0
      %7587 = vmatprep.mubr.bf16.mxu0 0
      %7588 = vmatmul.mubr.bf16.gmra.mrb[0].mxu0 %v3077
      %v7589 = vpop.f32.mrb[0].mxu0
      %v7590 = vadd.f32 0.0, %v7589
      %v7591 = vpop.f32.mrb[0].mxu0
      %v7592 = vpop.f32.mrb[0].mxu0
      %v7593 = vadd.f32 0.0, %v7592
      %v7594 = vpop.f32.mrb[0].mxu0
      %7595 = vmatprep.mubr.bf16.mxu0 0
      %7596 = vmatmul.mubr.bf16.gmra.mrb[0].mxu0 %v3080
      %v7597 = vpop.f32.mrb[0].mxu0
      %v7598 = vadd.f32 0.0, %v7597
      %v7599 = vpop.f32.mrb[0].mxu0
      %v7600 = vpop.f32.mrb[0].mxu0
      %v7601 = vadd.f32 0.0, %v7600
      %v7602 = vpop.f32.mrb[0].mxu0
      %7603 = vmatprep.mubr.bf16.mxu0 0
      %7604 = vmatmul.mubr.bf16.gmra.mrb[0].mxu0 %v3083
      %v7605 = vpop.f32.mrb[0].mxu0
      %v7606 = vadd.f32 0.0, %v7605
      %v7607 = vpop.f32.mrb[0].mxu0
      %v7608 = vpop.f32.mrb[0].mxu0
      %v7609 = vadd.f32 0.0, %v7608
      %v7610 = vpop.f32.mrb[0].mxu0
      %7611 = vmatprep.mubr.bf16.mxu0 0
      %7612 = vmatmul.mubr.bf16.gmra.mrb[0].mxu0 %v3086
      %v7613 = vpop.f32.mrb[0].mxu0
      %v7614 = vadd.f32 0.0, %v7613
      %v7615 = vpop.f32.mrb[0].mxu0
      %v7616 = vpop.f32.mrb[0].mxu0
      %v7617 = vadd.f32 0.0, %v7616
      %v7618 = vpop.f32.mrb[0].mxu0
      %7619 = vmatprep.mubr.bf16.mxu0 0
      %7620 = vmatmul.mubr.bf16.gmra.mrb[0].mxu0 %v3089
      %v7621 = vpop.f32.mrb[0].mxu0
      %v7622 = vadd.f32 0.0, %v7621
      %v7623 = vpop.f32.mrb[0].mxu0
      %v7624 = vpop.f32.mrb[0].mxu0
      %v7625 = vadd.f32 0.0, %v7624
      %v7626 = vpop.f32.mrb[0].mxu0
      %7627 = vmatprep.mubr.bf16.mxu0 0
      %7628 = vmatmul.mubr.bf16.gmra.mrb[0].mxu0 %v3092
      %v7629 = vpop.f32.mrb[0].mxu0
      %v7630 = vadd.f32 0.0, %v7629
      %v7631 = vpop.f32.mrb[0].mxu0
      %v7632 = vpop.f32.mrb[0].mxu0
      %v7633 = vadd.f32 0.0, %v7632
      %v7634 = vpop.f32.mrb[0].mxu0
      %7635 = vmatprep.mubr.bf16.mxu0 0
      %7636 = vmatmul.mubr.bf16.gmra.mrb[0].mxu0 %v3095
      %v7637 = vpop.f32.mrb[0].mxu0
      %v7638 = vadd.f32 0.0, %v7637
      %v7639 = vpop.f32.mrb[0].mxu0
      %v7640 = vpop.f32.mrb[0].mxu0
      %v7641 = vadd.f32 0.0, %v7640
      %v7642 = vpop.f32.mrb[0].mxu0
      %7643 = vmatprep.mubr.bf16.mxu0 0
      %7644 = vmatmul.mubr.bf16.gmra.mrb[0].mxu0 %v3098
      %v7645 = vpop.f32.mrb[0].mxu0
      %v7646 = vadd.f32 0.0, %v7645
      %v7647 = vpop.f32.mrb[0].mxu0
      %v7648 = vpop.f32.mrb[0].mxu0
      %v7649 = vadd.f32 0.0, %v7648
      %v7650 = vpop.f32.mrb[0].mxu0
      %7651 = vmatprep.mubr.bf16.mxu0 0
      %7652 = vmatmul.mubr.bf16.gmra.mrb[0].mxu0 %v3101
      %v7653 = vpop.f32.mrb[0].mxu0
      %v7654 = vadd.f32 0.0, %v7653
      %v7655 = vpop.f32.mrb[0].mxu0
      %v7656 = vpop.f32.mrb[0].mxu0
      %v7657 = vadd.f32 0.0, %v7656
      %v7658 = vpop.f32.mrb[0].mxu0
      %7659 = vmatprep.mubr.bf16.mxu0 0
      %7660 = vmatmul.mubr.bf16.gmra.mrb[0].mxu0 %v3104
      %v7661 = vpop.f32.mrb[0].mxu0
      %v7662 = vadd.f32 0.0, %v7661
      %v7663 = vpop.f32.mrb[0].mxu0
      %v7664 = vpop.f32.mrb[0].mxu0
      %v7665 = vadd.f32 0.0, %v7664
      %v7666 = vpop.f32.mrb[0].mxu0
      %7667 = vmatprep.mubr.bf16.mxu0 0
      %7668 = vmatmul.mubr.bf16.gmra.mrb[0].mxu0 %v3107
      %v7669 = vpop.f32.mrb[0].mxu0
      %v7670 = vadd.f32 0.0, %v7669
      %v7671 = vpop.f32.mrb[0].mxu0
      %v7672 = vpop.f32.mrb[0].mxu0
      %v7673 = vadd.f32 0.0, %v7672
      %v7674 = vpop.f32.mrb[0].mxu0
      %7675 = vmatprep.mubr.bf16.mxu0 0
      %7676 = vmatmul.mubr.bf16.gmra.mrb[0].mxu0 %v3110
      %v7677 = vpop.f32.mrb[0].mxu0
      %v7678 = vadd.f32 0.0, %v7677
      %v7679 = vpop.f32.mrb[0].mxu0
      %v7680 = vpop.f32.mrb[0].mxu0
      %v7681 = vadd.f32 0.0, %v7680
      %v7682 = vpop.f32.mrb[0].mxu0
      %7683 = vmatprep.mubr.bf16.mxu0 0
      %7684 = vmatmul.mubr.bf16.gmra.mrb[0].mxu0 %v3113
      %v7685 = vpop.f32.mrb[0].mxu0
      %v7686 = vadd.f32 0.0, %v7685
      %v7687 = vpop.f32.mrb[0].mxu0
      %v7688 = vpop.f32.mrb[0].mxu0
      %v7689 = vadd.f32 0.0, %v7688
      %v7690 = vpop.f32.mrb[0].mxu0
      %7691 = vmatprep.mubr.bf16.mxu0 0
      %7692 = vmatmul.mubr.bf16.gmra.mrb[0].mxu0 %v3116
      %v7693 = vpop.f32.mrb[0].mxu0
      %v7694 = vadd.f32 0.0, %v7693
      %v7695 = vpop.f32.mrb[0].mxu0
      %v7696 = vpop.f32.mrb[0].mxu0
      %v7697 = vadd.f32 0.0, %v7696
      %v7698 = vpop.f32.mrb[0].mxu0
      %7699 = vmatprep.mubr.bf16.mxu0 0
      %7700 = vmatmul.mubr.bf16.gmra.mrb[0].mxu0 %v3119
      %v7701 = vpop.f32.mrb[0].mxu0
      %v7702 = vadd.f32 0.0, %v7701
      %v7703 = vpop.f32.mrb[0].mxu0
      %v7704 = vpop.f32.mrb[0].mxu0
      %v7705 = vadd.f32 0.0, %v7704
      %v7706 = vpop.f32.mrb[0].mxu0
      %7707 = vmatprep.mubr.bf16.mxu0 0
      %7708 = vmatmul.mubr.bf16.gmra.mrb[0].mxu0 %v3122
      %v7709 = vpop.f32.mrb[0].mxu0
      %v7710 = vadd.f32 0.0, %v7709
      %v7711 = vpop.f32.mrb[0].mxu0
      %v7712 = vpop.f32.mrb[0].mxu0
      %v7713 = vadd.f32 0.0, %v7712
      %v7714 = vpop.f32.mrb[0].mxu0
      %7715 = vmatprep.mubr.bf16.mxu0 0
      %7716 = vmatmul.mubr.bf16.gmra.mrb[0].mxu0 %v3125
      %v7717 = vpop.f32.mrb[0].mxu0
      %v7718 = vadd.f32 0.0, %v7717
      %v7719 = vpop.f32.mrb[0].mxu0
      %v7720 = vpop.f32.mrb[0].mxu0
      %v7721 = vadd.f32 0.0, %v7720
      %v7722 = vpop.f32.mrb[0].mxu0
      %7723 = vmatprep.mubr.bf16.mxu0 0
      %7724 = vmatmul.mubr.bf16.gmra.mrb[0].mxu0 %v3128
      %v7725 = vpop.f32.mrb[0].mxu0
      %v7726 = vadd.f32 0.0, %v7725
      %v7727 = vpop.f32.mrb[0].mxu0
      %v7728 = vpop.f32.mrb[0].mxu0
      %v7729 = vadd.f32 0.0, %v7728
      %v7730 = vpop.f32.mrb[0].mxu0
      %7731 = vmatprep.mubr.bf16.mxu0 0
      %7732 = vmatmul.mubr.bf16.gmra.mrb[0].mxu0 %v3131
      %v7733 = vpop.f32.mrb[0].mxu0
      %v7734 = vadd.f32 0.0, %v7733
      %v7735 = vpop.f32.mrb[0].mxu0
      %v7736 = vpop.f32.mrb[0].mxu0
      %v7737 = vadd.f32 0.0, %v7736
      %v7738 = vpop.f32.mrb[0].mxu0
      %7739 = vmatprep.mubr.bf16.mxu0 0
      %7740 = vmatmul.mubr.bf16.gmra.mrb[0].mxu0 %v3134
      %v7741 = vpop.f32.mrb[0].mxu0
      %v7742 = vadd.f32 0.0, %v7741
      %v7743 = vpop.f32.mrb[0].mxu0
      %v7744 = vpop.f32.mrb[0].mxu0
      %v7745 = vadd.f32 0.0, %v7744
      %v7746 = vpop.f32.mrb[0].mxu0
      %7747 = vmatprep.mubr.bf16.mxu0 0
      %7748 = vmatmul.mubr.bf16.gmra.mrb[0].mxu0 %v3137
      %v7749 = vpop.f32.mrb[0].mxu0
      %v7750 = vadd.f32 0.0, %v7749
      %v7751 = vpop.f32.mrb[0].mxu0
      %v7752 = vpop.f32.mrb[0].mxu0
      %v7753 = vadd.f32 0.0, %v7752
      %v7754 = vpop.f32.mrb[0].mxu0
      %7755 = vmatprep.mubr.bf16.mxu0 0
      %7756 = vmatmul.mubr.bf16.gmra.mrb[0].mxu0 %v3140
      %v7757 = vpop.f32.mrb[0].mxu0
      %v7758 = vadd.f32 0.0, %v7757
      %v7759 = vpop.f32.mrb[0].mxu0
      %v7760 = vpop.f32.mrb[0].mxu0
      %v7761 = vadd.f32 0.0, %v7760
      %v7762 = vpop.f32.mrb[0].mxu0
      %7763 = vmatprep.mubr.bf16.mxu0 0
      %7764 = vmatmul.mubr.bf16.gmra.mrb[0].mxu0 %v3143
      %v7765 = vpop.f32.mrb[0].mxu0
      %v7766 = vadd.f32 0.0, %v7765
      %v7767 = vpop.f32.mrb[0].mxu0
      %v7768 = vpop.f32.mrb[0].mxu0
      %v7769 = vadd.f32 0.0, %v7768
      %v7770 = vpop.f32.mrb[0].mxu0
      %7771 = vmatprep.mubr.bf16.mxu0 0
      %7772 = vmatmul.mubr.bf16.gmra.mrb[0].mxu0 %v3146
      %v7773 = vpop.f32.mrb[0].mxu0
      %v7774 = vadd.f32 0.0, %v7773
      %v7775 = vpop.f32.mrb[0].mxu0
      %v7776 = vpop.f32.mrb[0].mxu0
      %v7777 = vadd.f32 0.0, %v7776
      %v7778 = vpop.f32.mrb[0].mxu0
      %7779 = vmatprep.mubr.bf16.mxu0 0
      %7780 = vmatmul.mubr.bf16.gmra.mrb[0].mxu0 %v3149
      %v7781 = vpop.f32.mrb[0].mxu0
      %v7782 = vadd.f32 0.0, %v7781
      %v7783 = vpop.f32.mrb[0].mxu0
      %v7784 = vpop.f32.mrb[0].mxu0
      %v7785 = vadd.f32 0.0, %v7784
      %v7786 = vpop.f32.mrb[0].mxu0
      %7787 = vmatprep.mubr.bf16.mxu0 0
      %7788 = vmatmul.mubr.bf16.gmra.mrb[0].mxu0 %v3152
      %v7789 = vpop.f32.mrb[0].mxu0
      %v7790 = vadd.f32 0.0, %v7789
      %v7791 = vpop.f32.mrb[0].mxu0
      %v7792 = vpop.f32.mrb[0].mxu0
      %v7793 = vadd.f32 0.0, %v7792
      %v7794 = vpop.f32.mrb[0].mxu0
      %7795 = vmatprep.mubr.bf16.mxu0 0
      %7796 = vmatmul.mubr.bf16.gmra.mrb[0].mxu0 %v3155
      %v7797 = vpop.f32.mrb[0].mxu0
      %v7798 = vadd.f32 0.0, %v7797
      %v7799 = vpop.f32.mrb[0].mxu0
      %v7800 = vpop.f32.mrb[0].mxu0
      %v7801 = vadd.f32 0.0, %v7800
      %v7802 = vpop.f32.mrb[0].mxu0
      %7803 = vmatprep.mubr.bf16.mxu0 0
      %7804 = vmatmul.mubr.bf16.gmra.mrb[0].mxu0 %v3158
      %v7805 = vpop.f32.mrb[0].mxu0
      %v7806 = vadd.f32 0.0, %v7805
      %v7807 = vpop.f32.mrb[0].mxu0
      %v7808 = vpop.f32.mrb[0].mxu0
      %v7809 = vadd.f32 0.0, %v7808
      %v7810 = vpop.f32.mrb[0].mxu0
      %7811 = vmatprep.mubr.bf16.mxu0 0
      %7812 = vmatmul.mubr.bf16.gmra.mrb[0].mxu0 %v3161
      %v7813 = vpop.f32.mrb[0].mxu0
      %v7814 = vadd.f32 0.0, %v7813
      %v7815 = vpop.f32.mrb[0].mxu0
      %v7816 = vpop.f32.mrb[0].mxu0
      %v7817 = vadd.f32 0.0, %v7816
      %v7818 = vpop.f32.mrb[0].mxu0
      %7819 = vmatprep.mubr.bf16.mxu0 0
      %7820 = vmatmul.mubr.bf16.gmra.mrb[0].mxu0 %v3164
      %v7821 = vpop.f32.mrb[0].mxu0
      %v7822 = vadd.f32 0.0, %v7821
      %v7823 = vpop.f32.mrb[0].mxu0
      %v7824 = vpop.f32.mrb[0].mxu0
      %v7825 = vadd.f32 0.0, %v7824
      %v7826 = vpop.f32.mrb[0].mxu0
      %7827 = vmatprep.mubr.bf16.mxu0 0
      %7828 = vmatmul.mubr.bf16.gmra.mrb[0].mxu0 %v3167
      %v7829 = vpop.f32.mrb[0].mxu0
      %v7830 = vadd.f32 0.0, %v7829
      %v7831 = vpop.f32.mrb[0].mxu0
      %v7832 = vpop.f32.mrb[0].mxu0
      %v7833 = vadd.f32 0.0, %v7832
      %v7834 = vpop.f32.mrb[0].mxu0
      %7835 = vmatprep.mubr.bf16.mxu0 0
      %7836 = vmatmul.mubr.bf16.gmra.mrb[0].mxu0 %v3170
      %v7837 = vpop.f32.mrb[0].mxu0
      %v7838 = vadd.f32 0.0, %v7837
      %v7839 = vpop.f32.mrb[0].mxu0
      %v7840 = vpop.f32.mrb[0].mxu0
      %v7841 = vadd.f32 0.0, %v7840
      %v7842 = vpop.f32.mrb[0].mxu0
      %7843 = vmatprep.mubr.bf16.mxu0 0
      %7844 = vmatmul.mubr.bf16.gmra.mrb[0].mxu0 %v3173
      %v7845 = vpop.f32.mrb[0].mxu0
      %v7846 = vadd.f32 0.0, %v7845
      %v7847 = vpop.f32.mrb[0].mxu0
      %v7848 = vpop.f32.mrb[0].mxu0
      %v7849 = vadd.f32 0.0, %v7848
      %v7850 = vpop.f32.mrb[0].mxu0
      %7851 = vmatprep.mubr.bf16.mxu0 0
      %7852 = vmatmul.mubr.bf16.gmra.mrb[0].mxu0 %v3176
      %v7853 = vpop.f32.mrb[0].mxu0
      %v7854 = vadd.f32 0.0, %v7853
      %v7855 = vpop.f32.mrb[0].mxu0
      %v7856 = vpop.f32.mrb[0].mxu0
      %v7857 = vadd.f32 0.0, %v7856
      %v7858 = vpop.f32.mrb[0].mxu0
      %7859 = vmatprep.mubr.bf16.mxu0 0
      %7860 = vmatmul.mubr.bf16.gmra.mrb[0].mxu0 %v3179
      %v7861 = vpop.f32.mrb[0].mxu0
      %v7862 = vadd.f32 0.0, %v7861
      %v7863 = vpop.f32.mrb[0].mxu0
      %v7864 = vpop.f32.mrb[0].mxu0
      %v7865 = vadd.f32 0.0, %v7864
      %v7866 = vpop.f32.mrb[0].mxu0
      %7867 = vmatprep.mubr.bf16.mxu0 0
      %7868 = vmatmul.mubr.bf16.gmra.mrb[0].mxu0 %v3182
      %v7869 = vpop.f32.mrb[0].mxu0
      %v7870 = vadd.f32 0.0, %v7869
      %v7871 = vpop.f32.mrb[0].mxu0
      %v7872 = vpop.f32.mrb[0].mxu0
      %v7873 = vadd.f32 0.0, %v7872
      %v7874 = vpop.f32.mrb[0].mxu0
      %7875 = vmatprep.mubr.bf16.mxu0 0
      %7876 = vmatmul.mubr.bf16.gmra.mrb[0].mxu0 %v3185
      %v7877 = vpop.f32.mrb[0].mxu0
      %v7878 = vadd.f32 0.0, %v7877
      %v7879 = vpop.f32.mrb[0].mxu0
      %v7880 = vpop.f32.mrb[0].mxu0
      %v7881 = vadd.f32 0.0, %v7880
      %v7882 = vpop.f32.mrb[0].mxu0
      %7883 = vmatprep.mubr.bf16.mxu0 0
      %7884 = vmatmul.mubr.bf16.gmra.mrb[0].mxu0 %v3188
      %v7885 = vpop.f32.mrb[0].mxu0
      %v7886 = vadd.f32 0.0, %v7885
      %v7887 = vpop.f32.mrb[0].mxu0
      %v7888 = vpop.f32.mrb[0].mxu0
      %v7889 = vadd.f32 0.0, %v7888
      %v7890 = vpop.f32.mrb[0].mxu0
      %7891 = vmatprep.mubr.bf16.mxu0 0
      %7892 = vmatmul.mubr.bf16.gmra.mrb[0].mxu0 %v3191
      %v7893 = vpop.f32.mrb[0].mxu0
      %v7894 = vadd.f32 0.0, %v7893
      %v7895 = vpop.f32.mrb[0].mxu0
      %v7896 = vpop.f32.mrb[0].mxu0
      %v7897 = vadd.f32 0.0, %v7896
      %v7898 = vpop.f32.mrb[0].mxu0
      %7899 = vmatprep.mubr.bf16.mxu0 0
      %7900 = vmatmul.mubr.bf16.gmra.mrb[0].mxu0 %v3194
      %v7901 = vpop.f32.mrb[0].mxu0
      %v7902 = vadd.f32 0.0, %v7901
      %v7903 = vpop.f32.mrb[0].mxu0
      %v7904 = vpop.f32.mrb[0].mxu0
      %v7905 = vadd.f32 0.0, %v7904
      %v7906 = vpop.f32.mrb[0].mxu0
      %7907 = vmatprep.mubr.bf16.mxu0 0
      %7908 = vmatmul.mubr.bf16.gmra.mrb[0].mxu0 %v3197
      %v7909 = vpop.f32.mrb[0].mxu0
      %v7910 = vadd.f32 0.0, %v7909
      %v7911 = vpop.f32.mrb[0].mxu0
      %v7912 = vpop.f32.mrb[0].mxu0
      %v7913 = vadd.f32 0.0, %v7912
      %v7914 = vpop.f32.mrb[0].mxu0
      %7915 = vmatprep.mubr.bf16.mxu0 0
      %7916 = vmatmul.mubr.bf16.gmra.mrb[0].mxu0 %v3200
      %v7917 = vpop.f32.mrb[0].mxu0
      %v7918 = vadd.f32 0.0, %v7917
      %v7919 = vpop.f32.mrb[0].mxu0
      %v7920 = vpop.f32.mrb[0].mxu0
      %v7921 = vadd.f32 0.0, %v7920
      %v7922 = vpop.f32.mrb[0].mxu0
      %7923 = vmatprep.mubr.bf16.mxu0 0
      %7924 = vmatmul.mubr.bf16.gmra.mrb[0].mxu0 %v3203
      %v7925 = vpop.f32.mrb[0].mxu0
      %v7926 = vadd.f32 0.0, %v7925
      %v7927 = vpop.f32.mrb[0].mxu0
      %v7928 = vpop.f32.mrb[0].mxu0
      %v7929 = vadd.f32 0.0, %v7928
      %v7930 = vpop.f32.mrb[0].mxu0
      %7931 = vmatprep.mubr.bf16.mxu0 0
      %7932 = vmatmul.mubr.bf16.gmra.mrb[0].mxu0 %v5279
      %v7933 = vpop.f32.mrb[0].mxu0
      %v7934 = vadd.f32 0.0, %v7933
      %v7935 = vpop.f32.mrb[0].mxu0
      %v7936 = vpop.f32.mrb[0].mxu0
      %v7937 = vadd.f32 0.0, %v7936
      %v7938 = vpop.f32.mrb[0].mxu0
      %7939 = vmatprep.mubr.bf16.mxu0 0
      %7940 = vmatmul.mubr.bf16.gmra.mrb[0].mxu0 %v5282
      %v7941 = vpop.f32.mrb[0].mxu0
      %v7942 = vadd.f32 0.0, %v7941
      %v7943 = vpop.f32.mrb[0].mxu0
      %v7944 = vpop.f32.mrb[0].mxu0
      %v7945 = vadd.f32 0.0, %v7944
      %v7946 = vpop.f32.mrb[0].mxu0
      %7947 = vmatprep.mubr.bf16.mxu0 0
      %7948 = vmatmul.mubr.bf16.gmra.mrb[0].mxu0 %v7411
      %v7949 = vpop.f32.mrb[0].mxu0
      %v7950 = vadd.f32 0.0, %v7949
      %v7951 = vpop.f32.mrb[0].mxu0
      %v7952 = vpop.f32.mrb[0].mxu0
      %v7953 = vadd.f32 0.0, %v7952
      %v7954 = vpop.f32.mrb[0].mxu0
      %7955 = vmatprep.mubr.bf16.mxu0 0
      %7956 = vmatmul.mubr.bf16.gmra.mrb[0].mxu0 %v7414
      %v7957 = vpop.f32.mrb[0].mxu0
      %v7958 = vadd.f32 0.0, %v7957
      %v7959 = vpop.f32.mrb[0].mxu0
      %v7960 = vpop.f32.mrb[0].mxu0
      %v7961 = vadd.f32 0.0, %v7960
      %v7962 = vpop.f32.mrb[0].mxu0
      %7963 = vdwg.mxu0
      %v7964 = vadd.f32 %v7270, %v7454
      %v7965 = vadd.f32 %v7271, %v7457
      %v7966 = vadd.f32 %v7272, %v7462
      %v7967 = vadd.f32 %v7273, %v7465
      %v7968 = vadd.f32 %v7274, %v7470
      %v7969 = vadd.f32 %v7275, %v7473
      %v7970 = vadd.f32 %v7276, %v7478
      %v7971 = vadd.f32 %v7277, %v7481
      %v7972 = vadd.f32 %v7278, %v7486
      %v7973 = vadd.f32 %v7279, %v7489
      %v7974 = vadd.f32 %v7280, %v7494
      %v7975 = vadd.f32 %v7281, %v7497
      %v7976 = vadd.f32 %v7282, %v7502
      %v7977 = vadd.f32 %v7283, %v7505
      %v7978 = vadd.f32 %v7284, %v7510
      %v7979 = vadd.f32 %v7285, %v7513
      %v7980 = vadd.f32 %v7286, %v7518
      %v7981 = vadd.f32 %v7287, %v7521
      %v7982 = vadd.f32 %v7288, %v7526
      %v7983 = vadd.f32 %v7289, %v7529
      %v7984 = vadd.f32 %v7290, %v7534
      %v7985 = vadd.f32 %v7291, %v7537
      %v7986 = vadd.f32 %v7292, %v7542
      %v7987 = vadd.f32 %v7293, %v7545
      %v7988 = vadd.f32 %v7294, %v7550
      %v7989 = vadd.f32 %v7295, %v7553
      %v7990 = vadd.f32 %v7296, %v7558
      %v7991 = vadd.f32 %v7297, %v7561
      %v7992 = vadd.f32 %v7298, %v7566
      %v7993 = vadd.f32 %v7299, %v7569
      %v7994 = vadd.f32 %v7300, %v7574
      %v7995 = vadd.f32 %v7301, %v7577
      %v7996 = vadd.f32 %v7302, %v7582
      %v7997 = vadd.f32 %v7303, %v7585
      %v7998 = vadd.f32 %v7304, %v7590
      %v7999 = vadd.f32 %v7305, %v7593
      %v8000 = vadd.f32 %v7306, %v7598
      %v8001 = vadd.f32 %v7307, %v7601
      %v8002 = vadd.f32 %v7308, %v7606
      %v8003 = vadd.f32 %v7309, %v7609
      %v8004 = vadd.f32 %v7310, %v7614
      %v8005 = vadd.f32 %v7311, %v7617
      %v8006 = vadd.f32 %v7312, %v7622
      %v8007 = vadd.f32 %v7313, %v7625
      %v8008 = vadd.f32 %v7314, %v7630
      %v8009 = vadd.f32 %v7315, %v7633
      %v8010 = vadd.f32 %v7316, %v7638
      %v8011 = vadd.f32 %v7317, %v7641
      %v8012 = vadd.f32 %v7318, %v7646
      %v8013 = vadd.f32 %v7319, %v7649
      %v8014 = vadd.f32 %v7320, %v7654
      %v8015 = vadd.f32 %v7321, %v7657
      %v8016 = vadd.f32 %v7322, %v7662
      %v8017 = vadd.f32 %v7323, %v7665
      %v8018 = vadd.f32 %v7324, %v7670
      %v8019 = vadd.f32 %v7325, %v7673
      %v8020 = vadd.f32 %v7326, %v7678
      %v8021 = vadd.f32 %v7327, %v7681
      %v8022 = vadd.f32 %v7328, %v7686
      %v8023 = vadd.f32 %v7329, %v7689
      %v8024 = vadd.f32 %v7330, %v7694
      %v8025 = vadd.f32 %v7331, %v7697
      %v8026 = vadd.f32 %v7332, %v7702
      %v8027 = vadd.f32 %v7333, %v7705
      %v8028 = vadd.f32 %v7334, %v7710
      %v8029 = vadd.f32 %v7335, %v7713
      %v8030 = vadd.f32 %v7336, %v7718
      %v8031 = vadd.f32 %v7337, %v7721
      %v8032 = vadd.f32 %v7338, %v7726
      %v8033 = vadd.f32 %v7339, %v7729
      %v8034 = vadd.f32 %v7340, %v7734
      %v8035 = vadd.f32 %v7341, %v7737
      %v8036 = vadd.f32 %v7342, %v7742
      %v8037 = vadd.f32 %v7343, %v7745
      %v8038 = vadd.f32 %v7344, %v7750
      %v8039 = vadd.f32 %v7345, %v7753
      %v8040 = vadd.f32 %v7346, %v7758
      %v8041 = vadd.f32 %v7347, %v7761
      %v8042 = vadd.f32 %v7348, %v7766
      %v8043 = vadd.f32 %v7349, %v7769
      %v8044 = vadd.f32 %v7350, %v7774
      %v8045 = vadd.f32 %v7351, %v7777
      %v8046 = vadd.f32 %v7352, %v7782
      %v8047 = vadd.f32 %v7353, %v7785
      %v8048 = vadd.f32 %v7354, %v7790
      %v8049 = vadd.f32 %v7355, %v7793
      %v8050 = vadd.f32 %v7356, %v7798
      %v8051 = vadd.f32 %v7357, %v7801
      %v8052 = vadd.f32 %v7358, %v7806
      %v8053 = vadd.f32 %v7359, %v7809
      %v8054 = vadd.f32 %v7360, %v7814
      %v8055 = vadd.f32 %v7361, %v7817
      %v8056 = vadd.f32 %v7362, %v7822
      %v8057 = vadd.f32 %v7363, %v7825
      %v8058 = vadd.f32 %v7364, %v7830
      %v8059 = vadd.f32 %v7365, %v7833
      %v8060 = vadd.f32 %v7366, %v7838
      %v8061 = vadd.f32 %v7367, %v7841
      %v8062 = vadd.f32 %v7368, %v7846
      %v8063 = vadd.f32 %v7369, %v7849
      %v8064 = vadd.f32 %v7370, %v7854
      %v8065 = vadd.f32 %v7371, %v7857
      %v8066 = vadd.f32 %v7372, %v7862
      %v8067 = vadd.f32 %v7373, %v7865
      %v8068 = vadd.f32 %v7374, %v7870
      %v8069 = vadd.f32 %v7375, %v7873
      %v8070 = vadd.f32 %v7376, %v7878
      %v8071 = vadd.f32 %v7377, %v7881
      %v8072 = vadd.f32 %v7378, %v7886
      %v8073 = vadd.f32 %v7379, %v7889
      %v8074 = vadd.f32 %v7380, %v7894
      %v8075 = vadd.f32 %v7381, %v7897
      %v8076 = vadd.f32 %v7382, %v7902
      %v8077 = vadd.f32 %v7383, %v7905
      %v8078 = vadd.f32 %v7384, %v7910
      %v8079 = vadd.f32 %v7385, %v7913
      %v8080 = vadd.f32 %v7386, %v7918
      %v8081 = vadd.f32 %v7387, %v7921
      %v8082 = vadd.f32 %v7388, %v7926
      %v8083 = vadd.f32 %v7389, %v7929
      %v8084 = vadd.f32 %v7390, %v7934
      %v8085 = vadd.f32 %v7391, %v7937
      %v8086 = vadd.f32 %v7392, %v7942
      %v8087 = vadd.f32 %v7393, %v7945
      %v8088 = vadd.f32 %v7394, %v7950
      %v8089 = vadd.f32 %v7395, %v7953
      %v8090 = vadd.f32 %v7396, %v7958
      %v8091 = vadd.f32 %v7397, %v7961
      %v8093 = vshrl.u32 %v337, 16
      %v8095 = vrot.slane %v8093, 4
      %v8096 = vshll.u32 %v337, 16
      %v8098 = vrot.slane %v8096, 5
      %v8099 = vor.u32 %v8095, %v8098
      %v8100 = vrot.slane %v8099, 4
      %v8102 = vshll.u32 %v338, 16
      %v8104 = vrot.slane %v8102, 5
      %v8105 = vsel %vm345, %v8100, %v8104
      %v8106 = vshrl.u32 %v338, 16
      %v8108 = vrot.slane %v8106, 4
      %v8109 = vor.u32 %v8108, %v8104
      %v8110 = vrot.slane %v8109, 4
      %v8112 = vshll.u32 %v339, 16
      %v8114 = vrot.slane %v8112, 5
      %v8115 = vsel %vm345, %v8110, %v8114
      %v8116 = vshrl.u32 %v339, 16
      %v8118 = vrot.slane %v8116, 4
      %v8119 = vor.u32 %v8118, %v8114
      %v8120 = vrot.slane %v8119, 4
      %v8122 = vshll.u32 %v340, 16
      %v8124 = vrot.slane %v8122, 5
      %v8125 = vsel %vm345, %v8120, %v8124
      %v8126 = vshrl.u32 %v340, 16
      %v8128 = vrot.slane %v8126, 4
      %v8129 = vor.u32 %v8128, %v8124
      %v8130 = vrot.slane %v8129, 4
      %v8132 = vshll.u32 %v341, 16
      %v8134 = vrot.slane %v8132, 5
      %v8135 = vsel %vm345, %v8130, %v8134
      %s8136 = scalar_lea.vmem %s1, 14
      %v8137 = vld [vmem:[%s8136] sm:$0x3]
      %v8138 = vunpack.c.l.b16 %v8105
      %v8139 = vunpack.c.l.b16 %v8115
      %v8140 = vunpack.c.l.b16 %v8125
      %v8141 = vunpack.c.l.b16 %v8135
      %v8142 = vpack.c.b16 %v8139, %v8138
      %v8143 = vpack.c.b16 %v8141, %v8140
      %v8145 = vsel %vm1948, %v8142, 0
      %v8148 = vsel %vm1948, %v8143, 0
      %v8151 = vand.u32 %v8137, %v2144
      %8153 = vmatprep.subr.bf16.mxu0 0
      %8154 = vmatpush1.bf16.msra.mxu0 %v8151
      %8155 = vmatprep.subr.bf16.mxu0 0
      %8156 = vmatpush1.bf16.msra.mxu0 0
      %8157 = vmatprep.subr.bf16.mxu0 0
      %8158 = vmatpush1.bf16.msra.mxu0 0
      %8159 = vmatprep.subr.bf16.mxu0 0
      %8160 = vmatpush1.bf16.msra.mxu0 0
      %8161 = vmatprep.subr.bf16.mxu0 0
      %8162 = vmatpush1.bf16.msra.mxu0 0
      %8163 = vmatprep.subr.bf16.mxu0 0
      %8164 = vmatpush1.bf16.msra.mxu0 0
      %8165 = vmatprep.subr.bf16.mxu0 0
      %8166 = vmatpush1.bf16.msra.mxu0 0
      %8167 = vmatprep.subr.bf16.mxu0 0
      %8168 = vmatpush1.bf16.msra.mxu0 0
      %8169 = vmatprep.subr.bf16.mxu0 0
      %8170 = vmatpush1.bf16.msra.mxu0 0
      %8171 = vmatprep.subr.bf16.mxu0 0
      %8172 = vmatpush1.bf16.msra.mxu0 0
      %8173 = vmatprep.subr.bf16.mxu0 0
      %8174 = vmatpush1.bf16.msra.mxu0 0
      %8175 = vmatprep.subr.bf16.mxu0 0
      %8176 = vmatpush1.bf16.msra.mxu0 0
      %8177 = vmatprep.subr.bf16.mxu0 0
      %8178 = vmatpush1.bf16.msra.mxu0 0
      %8179 = vmatprep.subr.bf16.mxu0 0
      %8180 = vmatpush1.bf16.msra.mxu0 0
      %8181 = vmatprep.subr.bf16.mxu0 0
      %8182 = vmatpush1.bf16.msra.mxu0 0
      %8183 = vmatprep.subr.bf16.mxu0 0
      %8184 = vmatpush1.bf16.msra.mxu0 0
      %8185 = vmatprep.mubr.bf16.mxu0 0
      %8186 = vmatmul.mubr.bf16.gmra.mrb[0].mxu0 %v1962
      %v8187 = vpop.f32.mrb[0].mxu0
      %v8188 = vadd.f32 0.0, %v8187
      %v8189 = vpop.f32.mrb[0].mxu0
      %v8190 = vpop.f32.mrb[0].mxu0
      %v8191 = vadd.f32 0.0, %v8190
      %v8192 = vpop.f32.mrb[0].mxu0
      %8193 = vmatprep.mubr.bf16.mxu0 0
      %8194 = vmatmul.mubr.bf16.gmra.mrb[0].mxu0 %v1965
      %v8195 = vpop.f32.mrb[0].mxu0
      %v8196 = vadd.f32 0.0, %v8195
      %v8197 = vpop.f32.mrb[0].mxu0
      %v8198 = vpop.f32.mrb[0].mxu0
      %v8199 = vadd.f32 0.0, %v8198
      %v8200 = vpop.f32.mrb[0].mxu0
      %8201 = vmatprep.mubr.bf16.mxu0 0
      %8202 = vmatmul.mubr.bf16.gmra.mrb[0].mxu0 %v1968
      %v8203 = vpop.f32.mrb[0].mxu0
      %v8204 = vadd.f32 0.0, %v8203
      %v8205 = vpop.f32.mrb[0].mxu0
      %v8206 = vpop.f32.mrb[0].mxu0
      %v8207 = vadd.f32 0.0, %v8206
      %v8208 = vpop.f32.mrb[0].mxu0
      %8209 = vmatprep.mubr.bf16.mxu0 0
      %8210 = vmatmul.mubr.bf16.gmra.mrb[0].mxu0 %v1971
      %v8211 = vpop.f32.mrb[0].mxu0
      %v8212 = vadd.f32 0.0, %v8211
      %v8213 = vpop.f32.mrb[0].mxu0
      %v8214 = vpop.f32.mrb[0].mxu0
      %v8215 = vadd.f32 0.0, %v8214
      %v8216 = vpop.f32.mrb[0].mxu0
      %8217 = vmatprep.mubr.bf16.mxu0 0
      %8218 = vmatmul.mubr.bf16.gmra.mrb[0].mxu0 %v1974
      %v8219 = vpop.f32.mrb[0].mxu0
      %v8220 = vadd.f32 0.0, %v8219
      %v8221 = vpop.f32.mrb[0].mxu0
      %v8222 = vpop.f32.mrb[0].mxu0
      %v8223 = vadd.f32 0.0, %v8222
      %v8224 = vpop.f32.mrb[0].mxu0
      %8225 = vmatprep.mubr.bf16.mxu0 0
      %8226 = vmatmul.mubr.bf16.gmra.mrb[0].mxu0 %v1977
      %v8227 = vpop.f32.mrb[0].mxu0
      %v8228 = vadd.f32 0.0, %v8227
      %v8229 = vpop.f32.mrb[0].mxu0
      %v8230 = vpop.f32.mrb[0].mxu0
      %v8231 = vadd.f32 0.0, %v8230
      %v8232 = vpop.f32.mrb[0].mxu0
      %8233 = vmatprep.mubr.bf16.mxu0 0
      %8234 = vmatmul.mubr.bf16.gmra.mrb[0].mxu0 %v1980
      %v8235 = vpop.f32.mrb[0].mxu0
      %v8236 = vadd.f32 0.0, %v8235
      %v8237 = vpop.f32.mrb[0].mxu0
      %v8238 = vpop.f32.mrb[0].mxu0
      %v8239 = vadd.f32 0.0, %v8238
      %v8240 = vpop.f32.mrb[0].mxu0
      %8241 = vmatprep.mubr.bf16.mxu0 0
      %8242 = vmatmul.mubr.bf16.gmra.mrb[0].mxu0 %v1983
      %v8243 = vpop.f32.mrb[0].mxu0
      %v8244 = vadd.f32 0.0, %v8243
      %v8245 = vpop.f32.mrb[0].mxu0
      %v8246 = vpop.f32.mrb[0].mxu0
      %v8247 = vadd.f32 0.0, %v8246
      %v8248 = vpop.f32.mrb[0].mxu0
      %8249 = vmatprep.mubr.bf16.mxu0 0
      %8250 = vmatmul.mubr.bf16.gmra.mrb[0].mxu0 %v1986
      %v8251 = vpop.f32.mrb[0].mxu0
      %v8252 = vadd.f32 0.0, %v8251
      %v8253 = vpop.f32.mrb[0].mxu0
      %v8254 = vpop.f32.mrb[0].mxu0
      %v8255 = vadd.f32 0.0, %v8254
      %v8256 = vpop.f32.mrb[0].mxu0
      %8257 = vmatprep.mubr.bf16.mxu0 0
      %8258 = vmatmul.mubr.bf16.gmra.mrb[0].mxu0 %v1989
      %v8259 = vpop.f32.mrb[0].mxu0
      %v8260 = vadd.f32 0.0, %v8259
      %v8261 = vpop.f32.mrb[0].mxu0
      %v8262 = vpop.f32.mrb[0].mxu0
      %v8263 = vadd.f32 0.0, %v8262
      %v8264 = vpop.f32.mrb[0].mxu0
      %8265 = vmatprep.mubr.bf16.mxu0 0
      %8266 = vmatmul.mubr.bf16.gmra.mrb[0].mxu0 %v1992
      %v8267 = vpop.f32.mrb[0].mxu0
      %v8268 = vadd.f32 0.0, %v8267
      %v8269 = vpop.f32.mrb[0].mxu0
      %v8270 = vpop.f32.mrb[0].mxu0
      %v8271 = vadd.f32 0.0, %v8270
      %v8272 = vpop.f32.mrb[0].mxu0
      %8273 = vmatprep.mubr.bf16.mxu0 0
      %8274 = vmatmul.mubr.bf16.gmra.mrb[0].mxu0 %v1995
      %v8275 = vpop.f32.mrb[0].mxu0
      %v8276 = vadd.f32 0.0, %v8275
      %v8277 = vpop.f32.mrb[0].mxu0
      %v8278 = vpop.f32.mrb[0].mxu0
      %v8279 = vadd.f32 0.0, %v8278
      %v8280 = vpop.f32.mrb[0].mxu0
      %8281 = vmatprep.mubr.bf16.mxu0 0
      %8282 = vmatmul.mubr.bf16.gmra.mrb[0].mxu0 %v1998
      %v8283 = vpop.f32.mrb[0].mxu0
      %v8284 = vadd.f32 0.0, %v8283
      %v8285 = vpop.f32.mrb[0].mxu0
      %v8286 = vpop.f32.mrb[0].mxu0
      %v8287 = vadd.f32 0.0, %v8286
      %v8288 = vpop.f32.mrb[0].mxu0
      %8289 = vmatprep.mubr.bf16.mxu0 0
      %8290 = vmatmul.mubr.bf16.gmra.mrb[0].mxu0 %v2001
      %v8291 = vpop.f32.mrb[0].mxu0
      %v8292 = vadd.f32 0.0, %v8291
      %v8293 = vpop.f32.mrb[0].mxu0
      %v8294 = vpop.f32.mrb[0].mxu0
      %v8295 = vadd.f32 0.0, %v8294
      %v8296 = vpop.f32.mrb[0].mxu0
      %8297 = vmatprep.mubr.bf16.mxu0 0
      %8298 = vmatmul.mubr.bf16.gmra.mrb[0].mxu0 %v2004
      %v8299 = vpop.f32.mrb[0].mxu0
      %v8300 = vadd.f32 0.0, %v8299
      %v8301 = vpop.f32.mrb[0].mxu0
      %v8302 = vpop.f32.mrb[0].mxu0
      %v8303 = vadd.f32 0.0, %v8302
      %v8304 = vpop.f32.mrb[0].mxu0
      %8305 = vmatprep.mubr.bf16.mxu0 0
      %8306 = vmatmul.mubr.bf16.gmra.mrb[0].mxu0 %v2007
      %v8307 = vpop.f32.mrb[0].mxu0
      %v8308 = vadd.f32 0.0, %v8307
      %v8309 = vpop.f32.mrb[0].mxu0
      %v8310 = vpop.f32.mrb[0].mxu0
      %v8311 = vadd.f32 0.0, %v8310
      %v8312 = vpop.f32.mrb[0].mxu0
      %8313 = vmatprep.mubr.bf16.mxu0 0
      %8314 = vmatmul.mubr.bf16.gmra.mrb[0].mxu0 %v2010
      %v8315 = vpop.f32.mrb[0].mxu0
      %v8316 = vadd.f32 0.0, %v8315
      %v8317 = vpop.f32.mrb[0].mxu0
      %v8318 = vpop.f32.mrb[0].mxu0
      %v8319 = vadd.f32 0.0, %v8318
      %v8320 = vpop.f32.mrb[0].mxu0
      %8321 = vmatprep.mubr.bf16.mxu0 0
      %8322 = vmatmul.mubr.bf16.gmra.mrb[0].mxu0 %v2013
      %v8323 = vpop.f32.mrb[0].mxu0
      %v8324 = vadd.f32 0.0, %v8323
      %v8325 = vpop.f32.mrb[0].mxu0
      %v8326 = vpop.f32.mrb[0].mxu0
      %v8327 = vadd.f32 0.0, %v8326
      %v8328 = vpop.f32.mrb[0].mxu0
      %8329 = vmatprep.mubr.bf16.mxu0 0
      %8330 = vmatmul.mubr.bf16.gmra.mrb[0].mxu0 %v2016
      %v8331 = vpop.f32.mrb[0].mxu0
      %v8332 = vadd.f32 0.0, %v8331
      %v8333 = vpop.f32.mrb[0].mxu0
      %v8334 = vpop.f32.mrb[0].mxu0
      %v8335 = vadd.f32 0.0, %v8334
      %v8336 = vpop.f32.mrb[0].mxu0
      %8337 = vmatprep.mubr.bf16.mxu0 0
      %8338 = vmatmul.mubr.bf16.gmra.mrb[0].mxu0 %v2019
      %v8339 = vpop.f32.mrb[0].mxu0
      %v8340 = vadd.f32 0.0, %v8339
      %v8341 = vpop.f32.mrb[0].mxu0
      %v8342 = vpop.f32.mrb[0].mxu0
      %v8343 = vadd.f32 0.0, %v8342
      %v8344 = vpop.f32.mrb[0].mxu0
      %8345 = vmatprep.mubr.bf16.mxu0 0
      %8346 = vmatmul.mubr.bf16.gmra.mrb[0].mxu0 %v2022
      %v8347 = vpop.f32.mrb[0].mxu0
      %v8348 = vadd.f32 0.0, %v8347
      %v8349 = vpop.f32.mrb[0].mxu0
      %v8350 = vpop.f32.mrb[0].mxu0
      %v8351 = vadd.f32 0.0, %v8350
      %v8352 = vpop.f32.mrb[0].mxu0
      %8353 = vmatprep.mubr.bf16.mxu0 0
      %8354 = vmatmul.mubr.bf16.gmra.mrb[0].mxu0 %v2025
      %v8355 = vpop.f32.mrb[0].mxu0
      %v8356 = vadd.f32 0.0, %v8355
      %v8357 = vpop.f32.mrb[0].mxu0
      %v8358 = vpop.f32.mrb[0].mxu0
      %v8359 = vadd.f32 0.0, %v8358
      %v8360 = vpop.f32.mrb[0].mxu0
      %8361 = vmatprep.mubr.bf16.mxu0 0
      %8362 = vmatmul.mubr.bf16.gmra.mrb[0].mxu0 %v2028
      %v8363 = vpop.f32.mrb[0].mxu0
      %v8364 = vadd.f32 0.0, %v8363
      %v8365 = vpop.f32.mrb[0].mxu0
      %v8366 = vpop.f32.mrb[0].mxu0
      %v8367 = vadd.f32 0.0, %v8366
      %v8368 = vpop.f32.mrb[0].mxu0
      %8369 = vmatprep.mubr.bf16.mxu0 0
      %8370 = vmatmul.mubr.bf16.gmra.mrb[0].mxu0 %v2031
      %v8371 = vpop.f32.mrb[0].mxu0
      %v8372 = vadd.f32 0.0, %v8371
      %v8373 = vpop.f32.mrb[0].mxu0
      %v8374 = vpop.f32.mrb[0].mxu0
      %v8375 = vadd.f32 0.0, %v8374
      %v8376 = vpop.f32.mrb[0].mxu0
      %8377 = vmatprep.mubr.bf16.mxu0 0
      %8378 = vmatmul.mubr.bf16.gmra.mrb[0].mxu0 %v2034
      %v8379 = vpop.f32.mrb[0].mxu0
      %v8380 = vadd.f32 0.0, %v8379
      %v8381 = vpop.f32.mrb[0].mxu0
      %v8382 = vpop.f32.mrb[0].mxu0
      %v8383 = vadd.f32 0.0, %v8382
      %v8384 = vpop.f32.mrb[0].mxu0
      %8385 = vmatprep.mubr.bf16.mxu0 0
      %8386 = vmatmul.mubr.bf16.gmra.mrb[0].mxu0 %v2037
      %v8387 = vpop.f32.mrb[0].mxu0
      %v8388 = vadd.f32 0.0, %v8387
      %v8389 = vpop.f32.mrb[0].mxu0
      %v8390 = vpop.f32.mrb[0].mxu0
      %v8391 = vadd.f32 0.0, %v8390
      %v8392 = vpop.f32.mrb[0].mxu0
      %8393 = vmatprep.mubr.bf16.mxu0 0
      %8394 = vmatmul.mubr.bf16.gmra.mrb[0].mxu0 %v2040
      %v8395 = vpop.f32.mrb[0].mxu0
      %v8396 = vadd.f32 0.0, %v8395
      %v8397 = vpop.f32.mrb[0].mxu0
      %v8398 = vpop.f32.mrb[0].mxu0
      %v8399 = vadd.f32 0.0, %v8398
      %v8400 = vpop.f32.mrb[0].mxu0
      %8401 = vmatprep.mubr.bf16.mxu0 0
      %8402 = vmatmul.mubr.bf16.gmra.mrb[0].mxu0 %v2043
      %v8403 = vpop.f32.mrb[0].mxu0
      %v8404 = vadd.f32 0.0, %v8403
      %v8405 = vpop.f32.mrb[0].mxu0
      %v8406 = vpop.f32.mrb[0].mxu0
      %v8407 = vadd.f32 0.0, %v8406
      %v8408 = vpop.f32.mrb[0].mxu0
      %8409 = vmatprep.mubr.bf16.mxu0 0
      %8410 = vmatmul.mubr.bf16.gmra.mrb[0].mxu0 %v2046
      %v8411 = vpop.f32.mrb[0].mxu0
      %v8412 = vadd.f32 0.0, %v8411
      %v8413 = vpop.f32.mrb[0].mxu0
      %v8414 = vpop.f32.mrb[0].mxu0
      %v8415 = vadd.f32 0.0, %v8414
      %v8416 = vpop.f32.mrb[0].mxu0
      %8417 = vmatprep.mubr.bf16.mxu0 0
      %8418 = vmatmul.mubr.bf16.gmra.mrb[0].mxu0 %v2049
      %v8419 = vpop.f32.mrb[0].mxu0
      %v8420 = vadd.f32 0.0, %v8419
      %v8421 = vpop.f32.mrb[0].mxu0
      %v8422 = vpop.f32.mrb[0].mxu0
      %v8423 = vadd.f32 0.0, %v8422
      %v8424 = vpop.f32.mrb[0].mxu0
      %8425 = vmatprep.mubr.bf16.mxu0 0
      %8426 = vmatmul.mubr.bf16.gmra.mrb[0].mxu0 %v2052
      %v8427 = vpop.f32.mrb[0].mxu0
      %v8428 = vadd.f32 0.0, %v8427
      %v8429 = vpop.f32.mrb[0].mxu0
      %v8430 = vpop.f32.mrb[0].mxu0
      %v8431 = vadd.f32 0.0, %v8430
      %v8432 = vpop.f32.mrb[0].mxu0
      %8433 = vmatprep.mubr.bf16.mxu0 0
      %8434 = vmatmul.mubr.bf16.gmra.mrb[0].mxu0 %v2055
      %v8435 = vpop.f32.mrb[0].mxu0
      %v8436 = vadd.f32 0.0, %v8435
      %v8437 = vpop.f32.mrb[0].mxu0
      %v8438 = vpop.f32.mrb[0].mxu0
      %v8439 = vadd.f32 0.0, %v8438
      %v8440 = vpop.f32.mrb[0].mxu0
      %8441 = vmatprep.mubr.bf16.mxu0 0
      %8442 = vmatmul.mubr.bf16.gmra.mrb[0].mxu0 %v2058
      %v8443 = vpop.f32.mrb[0].mxu0
      %v8444 = vadd.f32 0.0, %v8443
      %v8445 = vpop.f32.mrb[0].mxu0
      %v8446 = vpop.f32.mrb[0].mxu0
      %v8447 = vadd.f32 0.0, %v8446
      %v8448 = vpop.f32.mrb[0].mxu0
      %8449 = vmatprep.mubr.bf16.mxu0 0
      %8450 = vmatmul.mubr.bf16.gmra.mrb[0].mxu0 %v2061
      %v8451 = vpop.f32.mrb[0].mxu0
      %v8452 = vadd.f32 0.0, %v8451
      %v8453 = vpop.f32.mrb[0].mxu0
      %v8454 = vpop.f32.mrb[0].mxu0
      %v8455 = vadd.f32 0.0, %v8454
      %v8456 = vpop.f32.mrb[0].mxu0
      %8457 = vmatprep.mubr.bf16.mxu0 0
      %8458 = vmatmul.mubr.bf16.gmra.mrb[0].mxu0 %v2064
      %v8459 = vpop.f32.mrb[0].mxu0
      %v8460 = vadd.f32 0.0, %v8459
      %v8461 = vpop.f32.mrb[0].mxu0
      %v8462 = vpop.f32.mrb[0].mxu0
      %v8463 = vadd.f32 0.0, %v8462
      %v8464 = vpop.f32.mrb[0].mxu0
      %8465 = vmatprep.mubr.bf16.mxu0 0
      %8466 = vmatmul.mubr.bf16.gmra.mrb[0].mxu0 %v2067
      %v8467 = vpop.f32.mrb[0].mxu0
      %v8468 = vadd.f32 0.0, %v8467
      %v8469 = vpop.f32.mrb[0].mxu0
      %v8470 = vpop.f32.mrb[0].mxu0
      %v8471 = vadd.f32 0.0, %v8470
      %v8472 = vpop.f32.mrb[0].mxu0
      %8473 = vmatprep.mubr.bf16.mxu0 0
      %8474 = vmatmul.mubr.bf16.gmra.mrb[0].mxu0 %v2070
      %v8475 = vpop.f32.mrb[0].mxu0
      %v8476 = vadd.f32 0.0, %v8475
      %v8477 = vpop.f32.mrb[0].mxu0
      %v8478 = vpop.f32.mrb[0].mxu0
      %v8479 = vadd.f32 0.0, %v8478
      %v8480 = vpop.f32.mrb[0].mxu0
      %8481 = vmatprep.mubr.bf16.mxu0 0
      %8482 = vmatmul.mubr.bf16.gmra.mrb[0].mxu0 %v2073
      %v8483 = vpop.f32.mrb[0].mxu0
      %v8484 = vadd.f32 0.0, %v8483
      %v8485 = vpop.f32.mrb[0].mxu0
      %v8486 = vpop.f32.mrb[0].mxu0
      %v8487 = vadd.f32 0.0, %v8486
      %v8488 = vpop.f32.mrb[0].mxu0
      %8489 = vmatprep.mubr.bf16.mxu0 0
      %8490 = vmatmul.mubr.bf16.gmra.mrb[0].mxu0 %v2076
      %v8491 = vpop.f32.mrb[0].mxu0
      %v8492 = vadd.f32 0.0, %v8491
      %v8493 = vpop.f32.mrb[0].mxu0
      %v8494 = vpop.f32.mrb[0].mxu0
      %v8495 = vadd.f32 0.0, %v8494
      %v8496 = vpop.f32.mrb[0].mxu0
      %8497 = vmatprep.mubr.bf16.mxu0 0
      %8498 = vmatmul.mubr.bf16.gmra.mrb[0].mxu0 %v2079
      %v8499 = vpop.f32.mrb[0].mxu0
      %v8500 = vadd.f32 0.0, %v8499
      %v8501 = vpop.f32.mrb[0].mxu0
      %v8502 = vpop.f32.mrb[0].mxu0
      %v8503 = vadd.f32 0.0, %v8502
      %v8504 = vpop.f32.mrb[0].mxu0
      %8505 = vmatprep.mubr.bf16.mxu0 0
      %8506 = vmatmul.mubr.bf16.gmra.mrb[0].mxu0 %v2082
      %v8507 = vpop.f32.mrb[0].mxu0
      %v8508 = vadd.f32 0.0, %v8507
      %v8509 = vpop.f32.mrb[0].mxu0
      %v8510 = vpop.f32.mrb[0].mxu0
      %v8511 = vadd.f32 0.0, %v8510
      %v8512 = vpop.f32.mrb[0].mxu0
      %8513 = vmatprep.mubr.bf16.mxu0 0
      %8514 = vmatmul.mubr.bf16.gmra.mrb[0].mxu0 %v2085
      %v8515 = vpop.f32.mrb[0].mxu0
      %v8516 = vadd.f32 0.0, %v8515
      %v8517 = vpop.f32.mrb[0].mxu0
      %v8518 = vpop.f32.mrb[0].mxu0
      %v8519 = vadd.f32 0.0, %v8518
      %v8520 = vpop.f32.mrb[0].mxu0
      %8521 = vmatprep.mubr.bf16.mxu0 0
      %8522 = vmatmul.mubr.bf16.gmra.mrb[0].mxu0 %v2088
      %v8523 = vpop.f32.mrb[0].mxu0
      %v8524 = vadd.f32 0.0, %v8523
      %v8525 = vpop.f32.mrb[0].mxu0
      %v8526 = vpop.f32.mrb[0].mxu0
      %v8527 = vadd.f32 0.0, %v8526
      %v8528 = vpop.f32.mrb[0].mxu0
      %8529 = vmatprep.mubr.bf16.mxu0 0
      %8530 = vmatmul.mubr.bf16.gmra.mrb[0].mxu0 %v2091
      %v8531 = vpop.f32.mrb[0].mxu0
      %v8532 = vadd.f32 0.0, %v8531
      %v8533 = vpop.f32.mrb[0].mxu0
      %v8534 = vpop.f32.mrb[0].mxu0
      %v8535 = vadd.f32 0.0, %v8534
      %v8536 = vpop.f32.mrb[0].mxu0
      %8537 = vmatprep.mubr.bf16.mxu0 0
      %8538 = vmatmul.mubr.bf16.gmra.mrb[0].mxu0 %v2094
      %v8539 = vpop.f32.mrb[0].mxu0
      %v8540 = vadd.f32 0.0, %v8539
      %v8541 = vpop.f32.mrb[0].mxu0
      %v8542 = vpop.f32.mrb[0].mxu0
      %v8543 = vadd.f32 0.0, %v8542
      %v8544 = vpop.f32.mrb[0].mxu0
      %8545 = vmatprep.mubr.bf16.mxu0 0
      %8546 = vmatmul.mubr.bf16.gmra.mrb[0].mxu0 %v2097
      %v8547 = vpop.f32.mrb[0].mxu0
      %v8548 = vadd.f32 0.0, %v8547
      %v8549 = vpop.f32.mrb[0].mxu0
      %v8550 = vpop.f32.mrb[0].mxu0
      %v8551 = vadd.f32 0.0, %v8550
      %v8552 = vpop.f32.mrb[0].mxu0
      %8553 = vmatprep.mubr.bf16.mxu0 0
      %8554 = vmatmul.mubr.bf16.gmra.mrb[0].mxu0 %v2100
      %v8555 = vpop.f32.mrb[0].mxu0
      %v8556 = vadd.f32 0.0, %v8555
      %v8557 = vpop.f32.mrb[0].mxu0
      %v8558 = vpop.f32.mrb[0].mxu0
      %v8559 = vadd.f32 0.0, %v8558
      %v8560 = vpop.f32.mrb[0].mxu0
      %8561 = vmatprep.mubr.bf16.mxu0 0
      %8562 = vmatmul.mubr.bf16.gmra.mrb[0].mxu0 %v2103
      %v8563 = vpop.f32.mrb[0].mxu0
      %v8564 = vadd.f32 0.0, %v8563
      %v8565 = vpop.f32.mrb[0].mxu0
      %v8566 = vpop.f32.mrb[0].mxu0
      %v8567 = vadd.f32 0.0, %v8566
      %v8568 = vpop.f32.mrb[0].mxu0
      %8569 = vmatprep.mubr.bf16.mxu0 0
      %8570 = vmatmul.mubr.bf16.gmra.mrb[0].mxu0 %v2106
      %v8571 = vpop.f32.mrb[0].mxu0
      %v8572 = vadd.f32 0.0, %v8571
      %v8573 = vpop.f32.mrb[0].mxu0
      %v8574 = vpop.f32.mrb[0].mxu0
      %v8575 = vadd.f32 0.0, %v8574
      %v8576 = vpop.f32.mrb[0].mxu0
      %8577 = vmatprep.mubr.bf16.mxu0 0
      %8578 = vmatmul.mubr.bf16.gmra.mrb[0].mxu0 %v2109
      %v8579 = vpop.f32.mrb[0].mxu0
      %v8580 = vadd.f32 0.0, %v8579
      %v8581 = vpop.f32.mrb[0].mxu0
      %v8582 = vpop.f32.mrb[0].mxu0
      %v8583 = vadd.f32 0.0, %v8582
      %v8584 = vpop.f32.mrb[0].mxu0
      %8585 = vmatprep.mubr.bf16.mxu0 0
      %8586 = vmatmul.mubr.bf16.gmra.mrb[0].mxu0 %v2112
      %v8587 = vpop.f32.mrb[0].mxu0
      %v8588 = vadd.f32 0.0, %v8587
      %v8589 = vpop.f32.mrb[0].mxu0
      %v8590 = vpop.f32.mrb[0].mxu0
      %v8591 = vadd.f32 0.0, %v8590
      %v8592 = vpop.f32.mrb[0].mxu0
      %8593 = vmatprep.mubr.bf16.mxu0 0
      %8594 = vmatmul.mubr.bf16.gmra.mrb[0].mxu0 %v2115
      %v8595 = vpop.f32.mrb[0].mxu0
      %v8596 = vadd.f32 0.0, %v8595
      %v8597 = vpop.f32.mrb[0].mxu0
      %v8598 = vpop.f32.mrb[0].mxu0
      %v8599 = vadd.f32 0.0, %v8598
      %v8600 = vpop.f32.mrb[0].mxu0
      %8601 = vmatprep.mubr.bf16.mxu0 0
      %8602 = vmatmul.mubr.bf16.gmra.mrb[0].mxu0 %v2118
      %v8603 = vpop.f32.mrb[0].mxu0
      %v8604 = vadd.f32 0.0, %v8603
      %v8605 = vpop.f32.mrb[0].mxu0
      %v8606 = vpop.f32.mrb[0].mxu0
      %v8607 = vadd.f32 0.0, %v8606
      %v8608 = vpop.f32.mrb[0].mxu0
      %8609 = vmatprep.mubr.bf16.mxu0 0
      %8610 = vmatmul.mubr.bf16.gmra.mrb[0].mxu0 %v2121
      %v8611 = vpop.f32.mrb[0].mxu0
      %v8612 = vadd.f32 0.0, %v8611
      %v8613 = vpop.f32.mrb[0].mxu0
      %v8614 = vpop.f32.mrb[0].mxu0
      %v8615 = vadd.f32 0.0, %v8614
      %v8616 = vpop.f32.mrb[0].mxu0
      %8617 = vmatprep.mubr.bf16.mxu0 0
      %8618 = vmatmul.mubr.bf16.gmra.mrb[0].mxu0 %v2124
      %v8619 = vpop.f32.mrb[0].mxu0
      %v8620 = vadd.f32 0.0, %v8619
      %v8621 = vpop.f32.mrb[0].mxu0
      %v8622 = vpop.f32.mrb[0].mxu0
      %v8623 = vadd.f32 0.0, %v8622
      %v8624 = vpop.f32.mrb[0].mxu0
      %8625 = vmatprep.mubr.bf16.mxu0 0
      %8626 = vmatmul.mubr.bf16.gmra.mrb[0].mxu0 %v2127
      %v8627 = vpop.f32.mrb[0].mxu0
      %v8628 = vadd.f32 0.0, %v8627
      %v8629 = vpop.f32.mrb[0].mxu0
      %v8630 = vpop.f32.mrb[0].mxu0
      %v8631 = vadd.f32 0.0, %v8630
      %v8632 = vpop.f32.mrb[0].mxu0
      %8633 = vmatprep.mubr.bf16.mxu0 0
      %8634 = vmatmul.mubr.bf16.gmra.mrb[0].mxu0 %v2130
      %v8635 = vpop.f32.mrb[0].mxu0
      %v8636 = vadd.f32 0.0, %v8635
      %v8637 = vpop.f32.mrb[0].mxu0
      %v8638 = vpop.f32.mrb[0].mxu0
      %v8639 = vadd.f32 0.0, %v8638
      %v8640 = vpop.f32.mrb[0].mxu0
      %8641 = vmatprep.mubr.bf16.mxu0 0
      %8642 = vmatmul.mubr.bf16.gmra.mrb[0].mxu0 %v2133
      %v8643 = vpop.f32.mrb[0].mxu0
      %v8644 = vadd.f32 0.0, %v8643
      %v8645 = vpop.f32.mrb[0].mxu0
      %v8646 = vpop.f32.mrb[0].mxu0
      %v8647 = vadd.f32 0.0, %v8646
      %v8648 = vpop.f32.mrb[0].mxu0
      %8649 = vmatprep.mubr.bf16.mxu0 0
      %8650 = vmatmul.mubr.bf16.gmra.mrb[0].mxu0 %v2136
      %v8651 = vpop.f32.mrb[0].mxu0
      %v8652 = vadd.f32 0.0, %v8651
      %v8653 = vpop.f32.mrb[0].mxu0
      %v8654 = vpop.f32.mrb[0].mxu0
      %v8655 = vadd.f32 0.0, %v8654
      %v8656 = vpop.f32.mrb[0].mxu0
      %8657 = vmatprep.mubr.bf16.mxu0 0
      %8658 = vmatmul.mubr.bf16.gmra.mrb[0].mxu0 %v2139
      %v8659 = vpop.f32.mrb[0].mxu0
      %v8660 = vadd.f32 0.0, %v8659
      %v8661 = vpop.f32.mrb[0].mxu0
      %v8662 = vpop.f32.mrb[0].mxu0
      %v8663 = vadd.f32 0.0, %v8662
      %v8664 = vpop.f32.mrb[0].mxu0
      %8665 = vmatprep.mubr.bf16.mxu0 0
      %8666 = vmatmul.mubr.bf16.gmra.mrb[0].mxu0 %v6013
      %v8667 = vpop.f32.mrb[0].mxu0
      %v8668 = vadd.f32 0.0, %v8667
      %v8669 = vpop.f32.mrb[0].mxu0
      %v8670 = vpop.f32.mrb[0].mxu0
      %v8671 = vadd.f32 0.0, %v8670
      %v8672 = vpop.f32.mrb[0].mxu0
      %8673 = vmatprep.mubr.bf16.mxu0 0
      %8674 = vmatmul.mubr.bf16.gmra.mrb[0].mxu0 %v6016
      %v8675 = vpop.f32.mrb[0].mxu0
      %v8676 = vadd.f32 0.0, %v8675
      %v8677 = vpop.f32.mrb[0].mxu0
      %v8678 = vpop.f32.mrb[0].mxu0
      %v8679 = vadd.f32 0.0, %v8678
      %v8680 = vpop.f32.mrb[0].mxu0
      %8681 = vmatprep.mubr.bf16.mxu0 0
      %8682 = vmatmul.mubr.bf16.gmra.mrb[0].mxu0 %v8145
      %v8683 = vpop.f32.mrb[0].mxu0
      %v8684 = vadd.f32 0.0, %v8683
      %v8685 = vpop.f32.mrb[0].mxu0
      %v8686 = vpop.f32.mrb[0].mxu0
      %v8687 = vadd.f32 0.0, %v8686
      %v8688 = vpop.f32.mrb[0].mxu0
      %8689 = vmatprep.mubr.bf16.mxu0 0
      %8690 = vmatmul.mubr.bf16.gmra.mrb[0].mxu0 %v8148
      %v8691 = vpop.f32.mrb[0].mxu0
      %v8692 = vadd.f32 0.0, %v8691
      %v8693 = vpop.f32.mrb[0].mxu0
      %v8694 = vpop.f32.mrb[0].mxu0
      %v8695 = vadd.f32 0.0, %v8694
      %v8696 = vpop.f32.mrb[0].mxu0
      %8697 = vdwg.mxu0
      %v8698 = vadd.f32 %v7964, %v8188
      %v8699 = vadd.f32 %v7965, %v8191
      %v8700 = vadd.f32 %v7966, %v8196
      %v8701 = vadd.f32 %v7967, %v8199
      %v8702 = vadd.f32 %v7968, %v8204
      %v8703 = vadd.f32 %v7969, %v8207
      %v8704 = vadd.f32 %v7970, %v8212
      %v8705 = vadd.f32 %v7971, %v8215
      %v8706 = vadd.f32 %v7972, %v8220
      %v8707 = vadd.f32 %v7973, %v8223
      %v8708 = vadd.f32 %v7974, %v8228
      %v8709 = vadd.f32 %v7975, %v8231
      %v8710 = vadd.f32 %v7976, %v8236
      %v8711 = vadd.f32 %v7977, %v8239
      %v8712 = vadd.f32 %v7978, %v8244
      %v8713 = vadd.f32 %v7979, %v8247
      %v8714 = vadd.f32 %v7980, %v8252
      %v8715 = vadd.f32 %v7981, %v8255
      %v8716 = vadd.f32 %v7982, %v8260
      %v8717 = vadd.f32 %v7983, %v8263
      %v8718 = vadd.f32 %v7984, %v8268
      %v8719 = vadd.f32 %v7985, %v8271
      %v8720 = vadd.f32 %v7986, %v8276
      %v8721 = vadd.f32 %v7987, %v8279
      %v8722 = vadd.f32 %v7988, %v8284
      %v8723 = vadd.f32 %v7989, %v8287
      %v8724 = vadd.f32 %v7990, %v8292
      %v8725 = vadd.f32 %v7991, %v8295
      %v8726 = vadd.f32 %v7992, %v8300
      %v8727 = vadd.f32 %v7993, %v8303
      %v8728 = vadd.f32 %v7994, %v8308
      %v8729 = vadd.f32 %v7995, %v8311
      %v8730 = vadd.f32 %v7996, %v8316
      %v8731 = vadd.f32 %v7997, %v8319
      %v8732 = vadd.f32 %v7998, %v8324
      %v8733 = vadd.f32 %v7999, %v8327
      %v8734 = vadd.f32 %v8000, %v8332
      %v8735 = vadd.f32 %v8001, %v8335
      %v8736 = vadd.f32 %v8002, %v8340
      %v8737 = vadd.f32 %v8003, %v8343
      %v8738 = vadd.f32 %v8004, %v8348
      %v8739 = vadd.f32 %v8005, %v8351
      %v8740 = vadd.f32 %v8006, %v8356
      %v8741 = vadd.f32 %v8007, %v8359
      %v8742 = vadd.f32 %v8008, %v8364
      %v8743 = vadd.f32 %v8009, %v8367
      %v8744 = vadd.f32 %v8010, %v8372
      %v8745 = vadd.f32 %v8011, %v8375
      %v8746 = vadd.f32 %v8012, %v8380
      %v8747 = vadd.f32 %v8013, %v8383
      %v8748 = vadd.f32 %v8014, %v8388
      %v8749 = vadd.f32 %v8015, %v8391
      %v8750 = vadd.f32 %v8016, %v8396
      %v8751 = vadd.f32 %v8017, %v8399
      %v8752 = vadd.f32 %v8018, %v8404
      %v8753 = vadd.f32 %v8019, %v8407
      %v8754 = vadd.f32 %v8020, %v8412
      %v8755 = vadd.f32 %v8021, %v8415
      %v8756 = vadd.f32 %v8022, %v8420
      %v8757 = vadd.f32 %v8023, %v8423
      %v8758 = vadd.f32 %v8024, %v8428
      %v8759 = vadd.f32 %v8025, %v8431
      %v8760 = vadd.f32 %v8026, %v8436
      %v8761 = vadd.f32 %v8027, %v8439
      %v8762 = vadd.f32 %v8028, %v8444
      %v8763 = vadd.f32 %v8029, %v8447
      %v8764 = vadd.f32 %v8030, %v8452
      %v8765 = vadd.f32 %v8031, %v8455
      %v8766 = vadd.f32 %v8032, %v8460
      %v8767 = vadd.f32 %v8033, %v8463
      %v8768 = vadd.f32 %v8034, %v8468
      %v8769 = vadd.f32 %v8035, %v8471
      %v8770 = vadd.f32 %v8036, %v8476
      %v8771 = vadd.f32 %v8037, %v8479
      %v8772 = vadd.f32 %v8038, %v8484
      %v8773 = vadd.f32 %v8039, %v8487
      %v8774 = vadd.f32 %v8040, %v8492
      %v8775 = vadd.f32 %v8041, %v8495
      %v8776 = vadd.f32 %v8042, %v8500
      %v8777 = vadd.f32 %v8043, %v8503
      %v8778 = vadd.f32 %v8044, %v8508
      %v8779 = vadd.f32 %v8045, %v8511
      %v8780 = vadd.f32 %v8046, %v8516
      %v8781 = vadd.f32 %v8047, %v8519
      %v8782 = vadd.f32 %v8048, %v8524
      %v8783 = vadd.f32 %v8049, %v8527
      %v8784 = vadd.f32 %v8050, %v8532
      %v8785 = vadd.f32 %v8051, %v8535
      %v8786 = vadd.f32 %v8052, %v8540
      %v8787 = vadd.f32 %v8053, %v8543
      %v8788 = vadd.f32 %v8054, %v8548
      %v8789 = vadd.f32 %v8055, %v8551
      %v8790 = vadd.f32 %v8056, %v8556
      %v8791 = vadd.f32 %v8057, %v8559
      %v8792 = vadd.f32 %v8058, %v8564
      %v8793 = vadd.f32 %v8059, %v8567
      %v8794 = vadd.f32 %v8060, %v8572
      %v8795 = vadd.f32 %v8061, %v8575
      %v8796 = vadd.f32 %v8062, %v8580
      %v8797 = vadd.f32 %v8063, %v8583
      %v8798 = vadd.f32 %v8064, %v8588
      %v8799 = vadd.f32 %v8065, %v8591
      %v8800 = vadd.f32 %v8066, %v8596
      %v8801 = vadd.f32 %v8067, %v8599
      %v8802 = vadd.f32 %v8068, %v8604
      %v8803 = vadd.f32 %v8069, %v8607
      %v8804 = vadd.f32 %v8070, %v8612
      %v8805 = vadd.f32 %v8071, %v8615
      %v8806 = vadd.f32 %v8072, %v8620
      %v8807 = vadd.f32 %v8073, %v8623
      %v8808 = vadd.f32 %v8074, %v8628
      %v8809 = vadd.f32 %v8075, %v8631
      %v8810 = vadd.f32 %v8076, %v8636
      %v8811 = vadd.f32 %v8077, %v8639
      %v8812 = vadd.f32 %v8078, %v8644
      %v8813 = vadd.f32 %v8079, %v8647
      %v8814 = vadd.f32 %v8080, %v8652
      %v8815 = vadd.f32 %v8081, %v8655
      %v8816 = vadd.f32 %v8082, %v8660
      %v8817 = vadd.f32 %v8083, %v8663
      %v8818 = vadd.f32 %v8084, %v8668
      %v8819 = vadd.f32 %v8085, %v8671
      %v8820 = vadd.f32 %v8086, %v8676
      %v8821 = vadd.f32 %v8087, %v8679
      %v8822 = vadd.f32 %v8088, %v8684
      %v8823 = vadd.f32 %v8089, %v8687
      %v8824 = vadd.f32 %v8090, %v8692
      %v8825 = vadd.f32 %v8091, %v8695
      %v8827 = vrot.slane %v337, 5
      %v8828 = vrot.slane %v8827, 4
      %v8829 = vrot.slane %v338, 5
      %v8830 = vsel %vm3787, %v8828, %v8829
      %v8831 = vrot.slane %v8829, 4
      %v8832 = vrot.slane %v339, 5
      %v8833 = vsel %vm3787, %v8831, %v8832
      %v8834 = vrot.slane %v8832, 4
      %v8835 = vrot.slane %v340, 5
      %v8836 = vsel %vm3787, %v8834, %v8835
      %v8837 = vrot.slane %v8835, 4
      %v8838 = vrot.slane %v341, 5
      %v8839 = vsel %vm3787, %v8837, %v8838
      %s8840 = scalar_lea.vmem %s1, 16
      %v8841 = vld [vmem:[%s8840] sm:$0x3]
      %v8842 = vunpack.c.l.b16 %v8830
      %v8843 = vunpack.c.l.b16 %v8833
      %v8844 = vunpack.c.l.b16 %v8836
      %v8845 = vunpack.c.l.b16 %v8839
      %v8846 = vpack.c.b16 %v8843, %v8842
      %v8847 = vpack.c.b16 %v8845, %v8844
      %v8849 = vsel %vm1948, %v8846, 0
      %v8852 = vsel %vm1948, %v8847, 0
      %v8855 = vand.u32 %v8841, %v2144
      %8857 = vmatprep.subr.bf16.mxu0 0
      %8858 = vmatpush1.bf16.msra.mxu0 %v8855
      %8859 = vmatprep.subr.bf16.mxu0 0
      %8860 = vmatpush1.bf16.msra.mxu0 0
      %8861 = vmatprep.subr.bf16.mxu0 0
      %8862 = vmatpush1.bf16.msra.mxu0 0
      %8863 = vmatprep.subr.bf16.mxu0 0
      %8864 = vmatpush1.bf16.msra.mxu0 0
      %8865 = vmatprep.subr.bf16.mxu0 0
      %8866 = vmatpush1.bf16.msra.mxu0 0
      %8867 = vmatprep.subr.bf16.mxu0 0
      %8868 = vmatpush1.bf16.msra.mxu0 0
      %8869 = vmatprep.subr.bf16.mxu0 0
      %8870 = vmatpush1.bf16.msra.mxu0 0
      %8871 = vmatprep.subr.bf16.mxu0 0
      %8872 = vmatpush1.bf16.msra.mxu0 0
      %8873 = vmatprep.subr.bf16.mxu0 0
      %8874 = vmatpush1.bf16.msra.mxu0 0
      %8875 = vmatprep.subr.bf16.mxu0 0
      %8876 = vmatpush1.bf16.msra.mxu0 0
      %8877 = vmatprep.subr.bf16.mxu0 0
      %8878 = vmatpush1.bf16.msra.mxu0 0
      %8879 = vmatprep.subr.bf16.mxu0 0
      %8880 = vmatpush1.bf16.msra.mxu0 0
      %8881 = vmatprep.subr.bf16.mxu0 0
      %8882 = vmatpush1.bf16.msra.mxu0 0
      %8883 = vmatprep.subr.bf16.mxu0 0
      %8884 = vmatpush1.bf16.msra.mxu0 0
      %8885 = vmatprep.subr.bf16.mxu0 0
      %8886 = vmatpush1.bf16.msra.mxu0 0
      %8887 = vmatprep.subr.bf16.mxu0 0
      %8888 = vmatpush1.bf16.msra.mxu0 0
      %8889 = vmatprep.mubr.bf16.mxu0 0
      %8890 = vmatmul.mubr.bf16.gmra.mrb[0].mxu0 %v4411
      %v8891 = vpop.f32.mrb[0].mxu0
      %v8892 = vadd.f32 0.0, %v8891
      %v8893 = vpop.f32.mrb[0].mxu0
      %v8894 = vpop.f32.mrb[0].mxu0
      %v8895 = vadd.f32 0.0, %v8894
      %v8896 = vpop.f32.mrb[0].mxu0
      %8897 = vmatprep.mubr.bf16.mxu0 0
      %8898 = vmatmul.mubr.bf16.gmra.mrb[0].mxu0 %v4414
      %v8899 = vpop.f32.mrb[0].mxu0
      %v8900 = vadd.f32 0.0, %v8899
      %v8901 = vpop.f32.mrb[0].mxu0
      %v8902 = vpop.f32.mrb[0].mxu0
      %v8903 = vadd.f32 0.0, %v8902
      %v8904 = vpop.f32.mrb[0].mxu0
      %8905 = vmatprep.mubr.bf16.mxu0 0
      %8906 = vmatmul.mubr.bf16.gmra.mrb[0].mxu0 %v4417
      %v8907 = vpop.f32.mrb[0].mxu0
      %v8908 = vadd.f32 0.0, %v8907
      %v8909 = vpop.f32.mrb[0].mxu0
      %v8910 = vpop.f32.mrb[0].mxu0
      %v8911 = vadd.f32 0.0, %v8910
      %v8912 = vpop.f32.mrb[0].mxu0
      %8913 = vmatprep.mubr.bf16.mxu0 0
      %8914 = vmatmul.mubr.bf16.gmra.mrb[0].mxu0 %v4420
      %v8915 = vpop.f32.mrb[0].mxu0
      %v8916 = vadd.f32 0.0, %v8915
      %v8917 = vpop.f32.mrb[0].mxu0
      %v8918 = vpop.f32.mrb[0].mxu0
      %v8919 = vadd.f32 0.0, %v8918
      %v8920 = vpop.f32.mrb[0].mxu0
      %8921 = vmatprep.mubr.bf16.mxu0 0
      %8922 = vmatmul.mubr.bf16.gmra.mrb[0].mxu0 %v4423
      %v8923 = vpop.f32.mrb[0].mxu0
      %v8924 = vadd.f32 0.0, %v8923
      %v8925 = vpop.f32.mrb[0].mxu0
      %v8926 = vpop.f32.mrb[0].mxu0
      %v8927 = vadd.f32 0.0, %v8926
      %v8928 = vpop.f32.mrb[0].mxu0
      %8929 = vmatprep.mubr.bf16.mxu0 0
      %8930 = vmatmul.mubr.bf16.gmra.mrb[0].mxu0 %v4426
      %v8931 = vpop.f32.mrb[0].mxu0
      %v8932 = vadd.f32 0.0, %v8931
      %v8933 = vpop.f32.mrb[0].mxu0
      %v8934 = vpop.f32.mrb[0].mxu0
      %v8935 = vadd.f32 0.0, %v8934
      %v8936 = vpop.f32.mrb[0].mxu0
      %8937 = vmatprep.mubr.bf16.mxu0 0
      %8938 = vmatmul.mubr.bf16.gmra.mrb[0].mxu0 %v4429
      %v8939 = vpop.f32.mrb[0].mxu0
      %v8940 = vadd.f32 0.0, %v8939
      %v8941 = vpop.f32.mrb[0].mxu0
      %v8942 = vpop.f32.mrb[0].mxu0
      %v8943 = vadd.f32 0.0, %v8942
      %v8944 = vpop.f32.mrb[0].mxu0
      %8945 = vmatprep.mubr.bf16.mxu0 0
      %8946 = vmatmul.mubr.bf16.gmra.mrb[0].mxu0 %v4432
      %v8947 = vpop.f32.mrb[0].mxu0
      %v8948 = vadd.f32 0.0, %v8947
      %v8949 = vpop.f32.mrb[0].mxu0
      %v8950 = vpop.f32.mrb[0].mxu0
      %v8951 = vadd.f32 0.0, %v8950
      %v8952 = vpop.f32.mrb[0].mxu0
      %8953 = vmatprep.mubr.bf16.mxu0 0
      %8954 = vmatmul.mubr.bf16.gmra.mrb[0].mxu0 %v4435
      %v8955 = vpop.f32.mrb[0].mxu0
      %v8956 = vadd.f32 0.0, %v8955
      %v8957 = vpop.f32.mrb[0].mxu0
      %v8958 = vpop.f32.mrb[0].mxu0
      %v8959 = vadd.f32 0.0, %v8958
      %v8960 = vpop.f32.mrb[0].mxu0
      %8961 = vmatprep.mubr.bf16.mxu0 0
      %8962 = vmatmul.mubr.bf16.gmra.mrb[0].mxu0 %v4438
      %v8963 = vpop.f32.mrb[0].mxu0
      %v8964 = vadd.f32 0.0, %v8963
      %v8965 = vpop.f32.mrb[0].mxu0
      %v8966 = vpop.f32.mrb[0].mxu0
      %v8967 = vadd.f32 0.0, %v8966
      %v8968 = vpop.f32.mrb[0].mxu0
      %8969 = vmatprep.mubr.bf16.mxu0 0
      %8970 = vmatmul.mubr.bf16.gmra.mrb[0].mxu0 %v4441
      %v8971 = vpop.f32.mrb[0].mxu0
      %v8972 = vadd.f32 0.0, %v8971
      %v8973 = vpop.f32.mrb[0].mxu0
      %v8974 = vpop.f32.mrb[0].mxu0
      %v8975 = vadd.f32 0.0, %v8974
      %v8976 = vpop.f32.mrb[0].mxu0
      %8977 = vmatprep.mubr.bf16.mxu0 0
      %8978 = vmatmul.mubr.bf16.gmra.mrb[0].mxu0 %v4444
      %v8979 = vpop.f32.mrb[0].mxu0
      %v8980 = vadd.f32 0.0, %v8979
      %v8981 = vpop.f32.mrb[0].mxu0
      %v8982 = vpop.f32.mrb[0].mxu0
      %v8983 = vadd.f32 0.0, %v8982
      %v8984 = vpop.f32.mrb[0].mxu0
      %8985 = vmatprep.mubr.bf16.mxu0 0
      %8986 = vmatmul.mubr.bf16.gmra.mrb[0].mxu0 %v4447
      %v8987 = vpop.f32.mrb[0].mxu0
      %v8988 = vadd.f32 0.0, %v8987
      %v8989 = vpop.f32.mrb[0].mxu0
      %v8990 = vpop.f32.mrb[0].mxu0
      %v8991 = vadd.f32 0.0, %v8990
      %v8992 = vpop.f32.mrb[0].mxu0
      %8993 = vmatprep.mubr.bf16.mxu0 0
      %8994 = vmatmul.mubr.bf16.gmra.mrb[0].mxu0 %v4450
      %v8995 = vpop.f32.mrb[0].mxu0
      %v8996 = vadd.f32 0.0, %v8995
      %v8997 = vpop.f32.mrb[0].mxu0
      %v8998 = vpop.f32.mrb[0].mxu0
      %v8999 = vadd.f32 0.0, %v8998
      %v9000 = vpop.f32.mrb[0].mxu0
      %9001 = vmatprep.mubr.bf16.mxu0 0
      %9002 = vmatmul.mubr.bf16.gmra.mrb[0].mxu0 %v4453
      %v9003 = vpop.f32.mrb[0].mxu0
      %v9004 = vadd.f32 0.0, %v9003
      %v9005 = vpop.f32.mrb[0].mxu0
      %v9006 = vpop.f32.mrb[0].mxu0
      %v9007 = vadd.f32 0.0, %v9006
      %v9008 = vpop.f32.mrb[0].mxu0
      %9009 = vmatprep.mubr.bf16.mxu0 0
      %9010 = vmatmul.mubr.bf16.gmra.mrb[0].mxu0 %v4456
      %v9011 = vpop.f32.mrb[0].mxu0
      %v9012 = vadd.f32 0.0, %v9011
      %v9013 = vpop.f32.mrb[0].mxu0
      %v9014 = vpop.f32.mrb[0].mxu0
      %v9015 = vadd.f32 0.0, %v9014
      %v9016 = vpop.f32.mrb[0].mxu0
      %9017 = vmatprep.mubr.bf16.mxu0 0
      %9018 = vmatmul.mubr.bf16.gmra.mrb[0].mxu0 %v4459
      %v9019 = vpop.f32.mrb[0].mxu0
      %v9020 = vadd.f32 0.0, %v9019
      %v9021 = vpop.f32.mrb[0].mxu0
      %v9022 = vpop.f32.mrb[0].mxu0
      %v9023 = vadd.f32 0.0, %v9022
      %v9024 = vpop.f32.mrb[0].mxu0
      %9025 = vmatprep.mubr.bf16.mxu0 0
      %9026 = vmatmul.mubr.bf16.gmra.mrb[0].mxu0 %v4462
      %v9027 = vpop.f32.mrb[0].mxu0
      %v9028 = vadd.f32 0.0, %v9027
      %v9029 = vpop.f32.mrb[0].mxu0
      %v9030 = vpop.f32.mrb[0].mxu0
      %v9031 = vadd.f32 0.0, %v9030
      %v9032 = vpop.f32.mrb[0].mxu0
      %9033 = vmatprep.mubr.bf16.mxu0 0
      %9034 = vmatmul.mubr.bf16.gmra.mrb[0].mxu0 %v4465
      %v9035 = vpop.f32.mrb[0].mxu0
      %v9036 = vadd.f32 0.0, %v9035
      %v9037 = vpop.f32.mrb[0].mxu0
      %v9038 = vpop.f32.mrb[0].mxu0
      %v9039 = vadd.f32 0.0, %v9038
      %v9040 = vpop.f32.mrb[0].mxu0
      %9041 = vmatprep.mubr.bf16.mxu0 0
      %9042 = vmatmul.mubr.bf16.gmra.mrb[0].mxu0 %v4468
      %v9043 = vpop.f32.mrb[0].mxu0
      %v9044 = vadd.f32 0.0, %v9043
      %v9045 = vpop.f32.mrb[0].mxu0
      %v9046 = vpop.f32.mrb[0].mxu0
      %v9047 = vadd.f32 0.0, %v9046
      %v9048 = vpop.f32.mrb[0].mxu0
      %9049 = vmatprep.mubr.bf16.mxu0 0
      %9050 = vmatmul.mubr.bf16.gmra.mrb[0].mxu0 %v4471
      %v9051 = vpop.f32.mrb[0].mxu0
      %v9052 = vadd.f32 0.0, %v9051
      %v9053 = vpop.f32.mrb[0].mxu0
      %v9054 = vpop.f32.mrb[0].mxu0
      %v9055 = vadd.f32 0.0, %v9054
      %v9056 = vpop.f32.mrb[0].mxu0
      %9057 = vmatprep.mubr.bf16.mxu0 0
      %9058 = vmatmul.mubr.bf16.gmra.mrb[0].mxu0 %v4474
      %v9059 = vpop.f32.mrb[0].mxu0
      %v9060 = vadd.f32 0.0, %v9059
      %v9061 = vpop.f32.mrb[0].mxu0
      %v9062 = vpop.f32.mrb[0].mxu0
      %v9063 = vadd.f32 0.0, %v9062
      %v9064 = vpop.f32.mrb[0].mxu0
      %9065 = vmatprep.mubr.bf16.mxu0 0
      %9066 = vmatmul.mubr.bf16.gmra.mrb[0].mxu0 %v4477
      %v9067 = vpop.f32.mrb[0].mxu0
      %v9068 = vadd.f32 0.0, %v9067
      %v9069 = vpop.f32.mrb[0].mxu0
      %v9070 = vpop.f32.mrb[0].mxu0
      %v9071 = vadd.f32 0.0, %v9070
      %v9072 = vpop.f32.mrb[0].mxu0
      %9073 = vmatprep.mubr.bf16.mxu0 0
      %9074 = vmatmul.mubr.bf16.gmra.mrb[0].mxu0 %v4480
      %v9075 = vpop.f32.mrb[0].mxu0
      %v9076 = vadd.f32 0.0, %v9075
      %v9077 = vpop.f32.mrb[0].mxu0
      %v9078 = vpop.f32.mrb[0].mxu0
      %v9079 = vadd.f32 0.0, %v9078
      %v9080 = vpop.f32.mrb[0].mxu0
      %9081 = vmatprep.mubr.bf16.mxu0 0
      %9082 = vmatmul.mubr.bf16.gmra.mrb[0].mxu0 %v4483
      %v9083 = vpop.f32.mrb[0].mxu0
      %v9084 = vadd.f32 0.0, %v9083
      %v9085 = vpop.f32.mrb[0].mxu0
      %v9086 = vpop.f32.mrb[0].mxu0
      %v9087 = vadd.f32 0.0, %v9086
      %v9088 = vpop.f32.mrb[0].mxu0
      %9089 = vmatprep.mubr.bf16.mxu0 0
      %9090 = vmatmul.mubr.bf16.gmra.mrb[0].mxu0 %v4486
      %v9091 = vpop.f32.mrb[0].mxu0
      %v9092 = vadd.f32 0.0, %v9091
      %v9093 = vpop.f32.mrb[0].mxu0
      %v9094 = vpop.f32.mrb[0].mxu0
      %v9095 = vadd.f32 0.0, %v9094
      %v9096 = vpop.f32.mrb[0].mxu0
      %9097 = vmatprep.mubr.bf16.mxu0 0
      %9098 = vmatmul.mubr.bf16.gmra.mrb[0].mxu0 %v4489
      %v9099 = vpop.f32.mrb[0].mxu0
      %v9100 = vadd.f32 0.0, %v9099
      %v9101 = vpop.f32.mrb[0].mxu0
      %v9102 = vpop.f32.mrb[0].mxu0
      %v9103 = vadd.f32 0.0, %v9102
      %v9104 = vpop.f32.mrb[0].mxu0
      %9105 = vmatprep.mubr.bf16.mxu0 0
      %9106 = vmatmul.mubr.bf16.gmra.mrb[0].mxu0 %v4492
      %v9107 = vpop.f32.mrb[0].mxu0
      %v9108 = vadd.f32 0.0, %v9107
      %v9109 = vpop.f32.mrb[0].mxu0
      %v9110 = vpop.f32.mrb[0].mxu0
      %v9111 = vadd.f32 0.0, %v9110
      %v9112 = vpop.f32.mrb[0].mxu0
      %9113 = vmatprep.mubr.bf16.mxu0 0
      %9114 = vmatmul.mubr.bf16.gmra.mrb[0].mxu0 %v4495
      %v9115 = vpop.f32.mrb[0].mxu0
      %v9116 = vadd.f32 0.0, %v9115
      %v9117 = vpop.f32.mrb[0].mxu0
      %v9118 = vpop.f32.mrb[0].mxu0
      %v9119 = vadd.f32 0.0, %v9118
      %v9120 = vpop.f32.mrb[0].mxu0
      %9121 = vmatprep.mubr.bf16.mxu0 0
      %9122 = vmatmul.mubr.bf16.gmra.mrb[0].mxu0 %v4498
      %v9123 = vpop.f32.mrb[0].mxu0
      %v9124 = vadd.f32 0.0, %v9123
      %v9125 = vpop.f32.mrb[0].mxu0
      %v9126 = vpop.f32.mrb[0].mxu0
      %v9127 = vadd.f32 0.0, %v9126
      %v9128 = vpop.f32.mrb[0].mxu0
      %9129 = vmatprep.mubr.bf16.mxu0 0
      %9130 = vmatmul.mubr.bf16.gmra.mrb[0].mxu0 %v4501
      %v9131 = vpop.f32.mrb[0].mxu0
      %v9132 = vadd.f32 0.0, %v9131
      %v9133 = vpop.f32.mrb[0].mxu0
      %v9134 = vpop.f32.mrb[0].mxu0
      %v9135 = vadd.f32 0.0, %v9134
      %v9136 = vpop.f32.mrb[0].mxu0
      %9137 = vmatprep.mubr.bf16.mxu0 0
      %9138 = vmatmul.mubr.bf16.gmra.mrb[0].mxu0 %v4504
      %v9139 = vpop.f32.mrb[0].mxu0
      %v9140 = vadd.f32 0.0, %v9139
      %v9141 = vpop.f32.mrb[0].mxu0
      %v9142 = vpop.f32.mrb[0].mxu0
      %v9143 = vadd.f32 0.0, %v9142
      %v9144 = vpop.f32.mrb[0].mxu0
      %9145 = vmatprep.mubr.bf16.mxu0 0
      %9146 = vmatmul.mubr.bf16.gmra.mrb[0].mxu0 %v4507
      %v9147 = vpop.f32.mrb[0].mxu0
      %v9148 = vadd.f32 0.0, %v9147
      %v9149 = vpop.f32.mrb[0].mxu0
      %v9150 = vpop.f32.mrb[0].mxu0
      %v9151 = vadd.f32 0.0, %v9150
      %v9152 = vpop.f32.mrb[0].mxu0
      %9153 = vmatprep.mubr.bf16.mxu0 0
      %9154 = vmatmul.mubr.bf16.gmra.mrb[0].mxu0 %v4510
      %v9155 = vpop.f32.mrb[0].mxu0
      %v9156 = vadd.f32 0.0, %v9155
      %v9157 = vpop.f32.mrb[0].mxu0
      %v9158 = vpop.f32.mrb[0].mxu0
      %v9159 = vadd.f32 0.0, %v9158
      %v9160 = vpop.f32.mrb[0].mxu0
      %9161 = vmatprep.mubr.bf16.mxu0 0
      %9162 = vmatmul.mubr.bf16.gmra.mrb[0].mxu0 %v4513
      %v9163 = vpop.f32.mrb[0].mxu0
      %v9164 = vadd.f32 0.0, %v9163
      %v9165 = vpop.f32.mrb[0].mxu0
      %v9166 = vpop.f32.mrb[0].mxu0
      %v9167 = vadd.f32 0.0, %v9166
      %v9168 = vpop.f32.mrb[0].mxu0
      %9169 = vmatprep.mubr.bf16.mxu0 0
      %9170 = vmatmul.mubr.bf16.gmra.mrb[0].mxu0 %v4516
      %v9171 = vpop.f32.mrb[0].mxu0
      %v9172 = vadd.f32 0.0, %v9171
      %v9173 = vpop.f32.mrb[0].mxu0
      %v9174 = vpop.f32.mrb[0].mxu0
      %v9175 = vadd.f32 0.0, %v9174
      %v9176 = vpop.f32.mrb[0].mxu0
      %9177 = vmatprep.mubr.bf16.mxu0 0
      %9178 = vmatmul.mubr.bf16.gmra.mrb[0].mxu0 %v4519
      %v9179 = vpop.f32.mrb[0].mxu0
      %v9180 = vadd.f32 0.0, %v9179
      %v9181 = vpop.f32.mrb[0].mxu0
      %v9182 = vpop.f32.mrb[0].mxu0
      %v9183 = vadd.f32 0.0, %v9182
      %v9184 = vpop.f32.mrb[0].mxu0
      %9185 = vmatprep.mubr.bf16.mxu0 0
      %9186 = vmatmul.mubr.bf16.gmra.mrb[0].mxu0 %v4522
      %v9187 = vpop.f32.mrb[0].mxu0
      %v9188 = vadd.f32 0.0, %v9187
      %v9189 = vpop.f32.mrb[0].mxu0
      %v9190 = vpop.f32.mrb[0].mxu0
      %v9191 = vadd.f32 0.0, %v9190
      %v9192 = vpop.f32.mrb[0].mxu0
      %9193 = vmatprep.mubr.bf16.mxu0 0
      %9194 = vmatmul.mubr.bf16.gmra.mrb[0].mxu0 %v4525
      %v9195 = vpop.f32.mrb[0].mxu0
      %v9196 = vadd.f32 0.0, %v9195
      %v9197 = vpop.f32.mrb[0].mxu0
      %v9198 = vpop.f32.mrb[0].mxu0
      %v9199 = vadd.f32 0.0, %v9198
      %v9200 = vpop.f32.mrb[0].mxu0
      %9201 = vmatprep.mubr.bf16.mxu0 0
      %9202 = vmatmul.mubr.bf16.gmra.mrb[0].mxu0 %v4528
      %v9203 = vpop.f32.mrb[0].mxu0
      %v9204 = vadd.f32 0.0, %v9203
      %v9205 = vpop.f32.mrb[0].mxu0
      %v9206 = vpop.f32.mrb[0].mxu0
      %v9207 = vadd.f32 0.0, %v9206
      %v9208 = vpop.f32.mrb[0].mxu0
      %9209 = vmatprep.mubr.bf16.mxu0 0
      %9210 = vmatmul.mubr.bf16.gmra.mrb[0].mxu0 %v4531
      %v9211 = vpop.f32.mrb[0].mxu0
      %v9212 = vadd.f32 0.0, %v9211
      %v9213 = vpop.f32.mrb[0].mxu0
      %v9214 = vpop.f32.mrb[0].mxu0
      %v9215 = vadd.f32 0.0, %v9214
      %v9216 = vpop.f32.mrb[0].mxu0
      %9217 = vmatprep.mubr.bf16.mxu0 0
      %9218 = vmatmul.mubr.bf16.gmra.mrb[0].mxu0 %v4534
      %v9219 = vpop.f32.mrb[0].mxu0
      %v9220 = vadd.f32 0.0, %v9219
      %v9221 = vpop.f32.mrb[0].mxu0
      %v9222 = vpop.f32.mrb[0].mxu0
      %v9223 = vadd.f32 0.0, %v9222
      %v9224 = vpop.f32.mrb[0].mxu0
      %9225 = vmatprep.mubr.bf16.mxu0 0
      %9226 = vmatmul.mubr.bf16.gmra.mrb[0].mxu0 %v4537
      %v9227 = vpop.f32.mrb[0].mxu0
      %v9228 = vadd.f32 0.0, %v9227
      %v9229 = vpop.f32.mrb[0].mxu0
      %v9230 = vpop.f32.mrb[0].mxu0
      %v9231 = vadd.f32 0.0, %v9230
      %v9232 = vpop.f32.mrb[0].mxu0
      %9233 = vmatprep.mubr.bf16.mxu0 0
      %9234 = vmatmul.mubr.bf16.gmra.mrb[0].mxu0 %v4540
      %v9235 = vpop.f32.mrb[0].mxu0
      %v9236 = vadd.f32 0.0, %v9235
      %v9237 = vpop.f32.mrb[0].mxu0
      %v9238 = vpop.f32.mrb[0].mxu0
      %v9239 = vadd.f32 0.0, %v9238
      %v9240 = vpop.f32.mrb[0].mxu0
      %9241 = vmatprep.mubr.bf16.mxu0 0
      %9242 = vmatmul.mubr.bf16.gmra.mrb[0].mxu0 %v4543
      %v9243 = vpop.f32.mrb[0].mxu0
      %v9244 = vadd.f32 0.0, %v9243
      %v9245 = vpop.f32.mrb[0].mxu0
      %v9246 = vpop.f32.mrb[0].mxu0
      %v9247 = vadd.f32 0.0, %v9246
      %v9248 = vpop.f32.mrb[0].mxu0
      %9249 = vmatprep.mubr.bf16.mxu0 0
      %9250 = vmatmul.mubr.bf16.gmra.mrb[0].mxu0 %v4546
      %v9251 = vpop.f32.mrb[0].mxu0
      %v9252 = vadd.f32 0.0, %v9251
      %v9253 = vpop.f32.mrb[0].mxu0
      %v9254 = vpop.f32.mrb[0].mxu0
      %v9255 = vadd.f32 0.0, %v9254
      %v9256 = vpop.f32.mrb[0].mxu0
      %9257 = vmatprep.mubr.bf16.mxu0 0
      %9258 = vmatmul.mubr.bf16.gmra.mrb[0].mxu0 %v4549
      %v9259 = vpop.f32.mrb[0].mxu0
      %v9260 = vadd.f32 0.0, %v9259
      %v9261 = vpop.f32.mrb[0].mxu0
      %v9262 = vpop.f32.mrb[0].mxu0
      %v9263 = vadd.f32 0.0, %v9262
      %v9264 = vpop.f32.mrb[0].mxu0
      %9265 = vmatprep.mubr.bf16.mxu0 0
      %9266 = vmatmul.mubr.bf16.gmra.mrb[0].mxu0 %v4552
      %v9267 = vpop.f32.mrb[0].mxu0
      %v9268 = vadd.f32 0.0, %v9267
      %v9269 = vpop.f32.mrb[0].mxu0
      %v9270 = vpop.f32.mrb[0].mxu0
      %v9271 = vadd.f32 0.0, %v9270
      %v9272 = vpop.f32.mrb[0].mxu0
      %9273 = vmatprep.mubr.bf16.mxu0 0
      %9274 = vmatmul.mubr.bf16.gmra.mrb[0].mxu0 %v4555
      %v9275 = vpop.f32.mrb[0].mxu0
      %v9276 = vadd.f32 0.0, %v9275
      %v9277 = vpop.f32.mrb[0].mxu0
      %v9278 = vpop.f32.mrb[0].mxu0
      %v9279 = vadd.f32 0.0, %v9278
      %v9280 = vpop.f32.mrb[0].mxu0
      %9281 = vmatprep.mubr.bf16.mxu0 0
      %9282 = vmatmul.mubr.bf16.gmra.mrb[0].mxu0 %v4558
      %v9283 = vpop.f32.mrb[0].mxu0
      %v9284 = vadd.f32 0.0, %v9283
      %v9285 = vpop.f32.mrb[0].mxu0
      %v9286 = vpop.f32.mrb[0].mxu0
      %v9287 = vadd.f32 0.0, %v9286
      %v9288 = vpop.f32.mrb[0].mxu0
      %9289 = vmatprep.mubr.bf16.mxu0 0
      %9290 = vmatmul.mubr.bf16.gmra.mrb[0].mxu0 %v4561
      %v9291 = vpop.f32.mrb[0].mxu0
      %v9292 = vadd.f32 0.0, %v9291
      %v9293 = vpop.f32.mrb[0].mxu0
      %v9294 = vpop.f32.mrb[0].mxu0
      %v9295 = vadd.f32 0.0, %v9294
      %v9296 = vpop.f32.mrb[0].mxu0
      %9297 = vmatprep.mubr.bf16.mxu0 0
      %9298 = vmatmul.mubr.bf16.gmra.mrb[0].mxu0 %v4564
      %v9299 = vpop.f32.mrb[0].mxu0
      %v9300 = vadd.f32 0.0, %v9299
      %v9301 = vpop.f32.mrb[0].mxu0
      %v9302 = vpop.f32.mrb[0].mxu0
      %v9303 = vadd.f32 0.0, %v9302
      %v9304 = vpop.f32.mrb[0].mxu0
      %9305 = vmatprep.mubr.bf16.mxu0 0
      %9306 = vmatmul.mubr.bf16.gmra.mrb[0].mxu0 %v4567
      %v9307 = vpop.f32.mrb[0].mxu0
      %v9308 = vadd.f32 0.0, %v9307
      %v9309 = vpop.f32.mrb[0].mxu0
      %v9310 = vpop.f32.mrb[0].mxu0
      %v9311 = vadd.f32 0.0, %v9310
      %v9312 = vpop.f32.mrb[0].mxu0
      %9313 = vmatprep.mubr.bf16.mxu0 0
      %9314 = vmatmul.mubr.bf16.gmra.mrb[0].mxu0 %v4570
      %v9315 = vpop.f32.mrb[0].mxu0
      %v9316 = vadd.f32 0.0, %v9315
      %v9317 = vpop.f32.mrb[0].mxu0
      %v9318 = vpop.f32.mrb[0].mxu0
      %v9319 = vadd.f32 0.0, %v9318
      %v9320 = vpop.f32.mrb[0].mxu0
      %9321 = vmatprep.mubr.bf16.mxu0 0
      %9322 = vmatmul.mubr.bf16.gmra.mrb[0].mxu0 %v4573
      %v9323 = vpop.f32.mrb[0].mxu0
      %v9324 = vadd.f32 0.0, %v9323
      %v9325 = vpop.f32.mrb[0].mxu0
      %v9326 = vpop.f32.mrb[0].mxu0
      %v9327 = vadd.f32 0.0, %v9326
      %v9328 = vpop.f32.mrb[0].mxu0
      %9329 = vmatprep.mubr.bf16.mxu0 0
      %9330 = vmatmul.mubr.bf16.gmra.mrb[0].mxu0 %v4576
      %v9331 = vpop.f32.mrb[0].mxu0
      %v9332 = vadd.f32 0.0, %v9331
      %v9333 = vpop.f32.mrb[0].mxu0
      %v9334 = vpop.f32.mrb[0].mxu0
      %v9335 = vadd.f32 0.0, %v9334
      %v9336 = vpop.f32.mrb[0].mxu0
      %9337 = vmatprep.mubr.bf16.mxu0 0
      %9338 = vmatmul.mubr.bf16.gmra.mrb[0].mxu0 %v4579
      %v9339 = vpop.f32.mrb[0].mxu0
      %v9340 = vadd.f32 0.0, %v9339
      %v9341 = vpop.f32.mrb[0].mxu0
      %v9342 = vpop.f32.mrb[0].mxu0
      %v9343 = vadd.f32 0.0, %v9342
      %v9344 = vpop.f32.mrb[0].mxu0
      %9345 = vmatprep.mubr.bf16.mxu0 0
      %9346 = vmatmul.mubr.bf16.gmra.mrb[0].mxu0 %v4582
      %v9347 = vpop.f32.mrb[0].mxu0
      %v9348 = vadd.f32 0.0, %v9347
      %v9349 = vpop.f32.mrb[0].mxu0
      %v9350 = vpop.f32.mrb[0].mxu0
      %v9351 = vadd.f32 0.0, %v9350
      %v9352 = vpop.f32.mrb[0].mxu0
      %9353 = vmatprep.mubr.bf16.mxu0 0
      %9354 = vmatmul.mubr.bf16.gmra.mrb[0].mxu0 %v4585
      %v9355 = vpop.f32.mrb[0].mxu0
      %v9356 = vadd.f32 0.0, %v9355
      %v9357 = vpop.f32.mrb[0].mxu0
      %v9358 = vpop.f32.mrb[0].mxu0
      %v9359 = vadd.f32 0.0, %v9358
      %v9360 = vpop.f32.mrb[0].mxu0
      %9361 = vmatprep.mubr.bf16.mxu0 0
      %9362 = vmatmul.mubr.bf16.gmra.mrb[0].mxu0 %v4588
      %v9363 = vpop.f32.mrb[0].mxu0
      %v9364 = vadd.f32 0.0, %v9363
      %v9365 = vpop.f32.mrb[0].mxu0
      %v9366 = vpop.f32.mrb[0].mxu0
      %v9367 = vadd.f32 0.0, %v9366
      %v9368 = vpop.f32.mrb[0].mxu0
      %9369 = vmatprep.mubr.bf16.mxu0 0
      %9370 = vmatmul.mubr.bf16.gmra.mrb[0].mxu0 %v6717
      %v9371 = vpop.f32.mrb[0].mxu0
      %v9372 = vadd.f32 0.0, %v9371
      %v9373 = vpop.f32.mrb[0].mxu0
      %v9374 = vpop.f32.mrb[0].mxu0
      %v9375 = vadd.f32 0.0, %v9374
      %v9376 = vpop.f32.mrb[0].mxu0
      %9377 = vmatprep.mubr.bf16.mxu0 0
      %9378 = vmatmul.mubr.bf16.gmra.mrb[0].mxu0 %v6720
      %v9379 = vpop.f32.mrb[0].mxu0
      %v9380 = vadd.f32 0.0, %v9379
      %v9381 = vpop.f32.mrb[0].mxu0
      %v9382 = vpop.f32.mrb[0].mxu0
      %v9383 = vadd.f32 0.0, %v9382
      %v9384 = vpop.f32.mrb[0].mxu0
      %9385 = vmatprep.mubr.bf16.mxu0 0
      %9386 = vmatmul.mubr.bf16.gmra.mrb[0].mxu0 %v8849
      %v9387 = vpop.f32.mrb[0].mxu0
      %v9388 = vadd.f32 0.0, %v9387
      %v9389 = vpop.f32.mrb[0].mxu0
      %v9390 = vpop.f32.mrb[0].mxu0
      %v9391 = vadd.f32 0.0, %v9390
      %v9392 = vpop.f32.mrb[0].mxu0
      %9393 = vmatprep.mubr.bf16.mxu0 0
      %9394 = vmatmul.mubr.bf16.gmra.mrb[0].mxu0 %v8852
      %v9395 = vpop.f32.mrb[0].mxu0
      %v9396 = vadd.f32 0.0, %v9395
      %v9397 = vpop.f32.mrb[0].mxu0
      %v9398 = vpop.f32.mrb[0].mxu0
      %v9399 = vadd.f32 0.0, %v9398
      %v9400 = vpop.f32.mrb[0].mxu0
      %9401 = vdwg.mxu0
      %v9402 = vadd.f32 %v8698, %v8892
      %v9403 = vadd.f32 %v8699, %v8895
      %v9404 = vadd.f32 %v8700, %v8900
      %v9405 = vadd.f32 %v8701, %v8903
      %v9406 = vadd.f32 %v8702, %v8908
      %v9407 = vadd.f32 %v8703, %v8911
      %v9408 = vadd.f32 %v8704, %v8916
      %v9409 = vadd.f32 %v8705, %v8919
      %v9410 = vadd.f32 %v8706, %v8924
      %v9411 = vadd.f32 %v8707, %v8927
      %v9412 = vadd.f32 %v8708, %v8932
      %v9413 = vadd.f32 %v8709, %v8935
      %v9414 = vadd.f32 %v8710, %v8940
      %v9415 = vadd.f32 %v8711, %v8943
      %v9416 = vadd.f32 %v8712, %v8948
      %v9417 = vadd.f32 %v8713, %v8951
      %v9418 = vadd.f32 %v8714, %v8956
      %v9419 = vadd.f32 %v8715, %v8959
      %v9420 = vadd.f32 %v8716, %v8964
      %v9421 = vadd.f32 %v8717, %v8967
      %v9422 = vadd.f32 %v8718, %v8972
      %v9423 = vadd.f32 %v8719, %v8975
      %v9424 = vadd.f32 %v8720, %v8980
      %v9425 = vadd.f32 %v8721, %v8983
      %v9426 = vadd.f32 %v8722, %v8988
      %v9427 = vadd.f32 %v8723, %v8991
      %v9428 = vadd.f32 %v8724, %v8996
      %v9429 = vadd.f32 %v8725, %v8999
      %v9430 = vadd.f32 %v8726, %v9004
      %v9431 = vadd.f32 %v8727, %v9007
      %v9432 = vadd.f32 %v8728, %v9012
      %v9433 = vadd.f32 %v8729, %v9015
      %v9434 = vadd.f32 %v8730, %v9020
      %v9435 = vadd.f32 %v8731, %v9023
      %v9436 = vadd.f32 %v8732, %v9028
      %v9437 = vadd.f32 %v8733, %v9031
      %v9438 = vadd.f32 %v8734, %v9036
      %v9439 = vadd.f32 %v8735, %v9039
      %v9440 = vadd.f32 %v8736, %v9044
      %v9441 = vadd.f32 %v8737, %v9047
      %v9442 = vadd.f32 %v8738, %v9052
      %v9443 = vadd.f32 %v8739, %v9055
      %v9444 = vadd.f32 %v8740, %v9060
      %v9445 = vadd.f32 %v8741, %v9063
      %v9446 = vadd.f32 %v8742, %v9068
      %v9447 = vadd.f32 %v8743, %v9071
      %v9448 = vadd.f32 %v8744, %v9076
      %v9449 = vadd.f32 %v8745, %v9079
      %v9450 = vadd.f32 %v8746, %v9084
      %v9451 = vadd.f32 %v8747, %v9087
      %v9452 = vadd.f32 %v8748, %v9092
      %v9453 = vadd.f32 %v8749, %v9095
      %v9454 = vadd.f32 %v8750, %v9100
      %v9455 = vadd.f32 %v8751, %v9103
      %v9456 = vadd.f32 %v8752, %v9108
      %v9457 = vadd.f32 %v8753, %v9111
      %v9458 = vadd.f32 %v8754, %v9116
      %v9459 = vadd.f32 %v8755, %v9119
      %v9460 = vadd.f32 %v8756, %v9124
      %v9461 = vadd.f32 %v8757, %v9127
      %v9462 = vadd.f32 %v8758, %v9132
      %v9463 = vadd.f32 %v8759, %v9135
      %v9464 = vadd.f32 %v8760, %v9140
      %v9465 = vadd.f32 %v8761, %v9143
      %v9466 = vadd.f32 %v8762, %v9148
      %v9467 = vadd.f32 %v8763, %v9151
      %v9468 = vadd.f32 %v8764, %v9156
      %v9469 = vadd.f32 %v8765, %v9159
      %v9470 = vadd.f32 %v8766, %v9164
      %v9471 = vadd.f32 %v8767, %v9167
      %v9472 = vadd.f32 %v8768, %v9172
      %v9473 = vadd.f32 %v8769, %v9175
      %v9474 = vadd.f32 %v8770, %v9180
      %v9475 = vadd.f32 %v8771, %v9183
      %v9476 = vadd.f32 %v8772, %v9188
      %v9477 = vadd.f32 %v8773, %v9191
      %v9478 = vadd.f32 %v8774, %v9196
      %v9479 = vadd.f32 %v8775, %v9199
      %v9480 = vadd.f32 %v8776, %v9204
      %v9481 = vadd.f32 %v8777, %v9207
      %v9482 = vadd.f32 %v8778, %v9212
      %v9483 = vadd.f32 %v8779, %v9215
      %v9484 = vadd.f32 %v8780, %v9220
      %v9485 = vadd.f32 %v8781, %v9223
      %v9486 = vadd.f32 %v8782, %v9228
      %v9487 = vadd.f32 %v8783, %v9231
      %v9488 = vadd.f32 %v8784, %v9236
      %v9489 = vadd.f32 %v8785, %v9239
      %v9490 = vadd.f32 %v8786, %v9244
      %v9491 = vadd.f32 %v8787, %v9247
      %v9492 = vadd.f32 %v8788, %v9252
      %v9493 = vadd.f32 %v8789, %v9255
      %v9494 = vadd.f32 %v8790, %v9260
      %v9495 = vadd.f32 %v8791, %v9263
      %v9496 = vadd.f32 %v8792, %v9268
      %v9497 = vadd.f32 %v8793, %v9271
      %v9498 = vadd.f32 %v8794, %v9276
      %v9499 = vadd.f32 %v8795, %v9279
      %v9500 = vadd.f32 %v8796, %v9284
      %v9501 = vadd.f32 %v8797, %v9287
      %v9502 = vadd.f32 %v8798, %v9292
      %v9503 = vadd.f32 %v8799, %v9295
      %v9504 = vadd.f32 %v8800, %v9300
      %v9505 = vadd.f32 %v8801, %v9303
      %v9506 = vadd.f32 %v8802, %v9308
      %v9507 = vadd.f32 %v8803, %v9311
      %v9508 = vadd.f32 %v8804, %v9316
      %v9509 = vadd.f32 %v8805, %v9319
      %v9510 = vadd.f32 %v8806, %v9324
      %v9511 = vadd.f32 %v8807, %v9327
      %v9512 = vadd.f32 %v8808, %v9332
      %v9513 = vadd.f32 %v8809, %v9335
      %v9514 = vadd.f32 %v8810, %v9340
      %v9515 = vadd.f32 %v8811, %v9343
      %v9516 = vadd.f32 %v8812, %v9348
      %v9517 = vadd.f32 %v8813, %v9351
      %v9518 = vadd.f32 %v8814, %v9356
      %v9519 = vadd.f32 %v8815, %v9359
      %v9520 = vadd.f32 %v8816, %v9364
      %v9521 = vadd.f32 %v8817, %v9367
      %v9522 = vadd.f32 %v8818, %v9372
      %v9523 = vadd.f32 %v8819, %v9375
      %v9524 = vadd.f32 %v8820, %v9380
      %v9525 = vadd.f32 %v8821, %v9383
      %v9526 = vadd.f32 %v8822, %v9388
      %v9527 = vadd.f32 %v8823, %v9391
      %v9528 = vadd.f32 %v8824, %v9396
      %v9529 = vadd.f32 %v8825, %v9399
      %v9530 = vld [vmem:[%s2] sm:$0x1]
      %v9532 = vlaneseq
      %v9533 = vshrl.u32 %v9532, 7
      %v9534 = vsub.s32 0, %v9533
      %v9535 = vrot.slane %v9530, %v9534
      %v9537 = vadd.f32 %v9402, %v9535
      %v9538 = vadd.f32 %v9403, %v9535
      %v9539 = vadd.f32 %v9404, %v9535
      %v9540 = vadd.f32 %v9405, %v9535
      %v9541 = vadd.f32 %v9406, %v9535
      %v9542 = vadd.f32 %v9407, %v9535
      %v9543 = vadd.f32 %v9408, %v9535
      %v9544 = vadd.f32 %v9409, %v9535
      %v9545 = vadd.f32 %v9410, %v9535
      %v9546 = vadd.f32 %v9411, %v9535
      %v9547 = vadd.f32 %v9412, %v9535
      %v9548 = vadd.f32 %v9413, %v9535
      %v9549 = vadd.f32 %v9414, %v9535
      %v9550 = vadd.f32 %v9415, %v9535
      %v9551 = vadd.f32 %v9416, %v9535
      %v9552 = vadd.f32 %v9417, %v9535
      %v9553 = vadd.f32 %v9418, %v9535
      %v9554 = vadd.f32 %v9419, %v9535
      %v9555 = vadd.f32 %v9420, %v9535
      %v9556 = vadd.f32 %v9421, %v9535
      %v9557 = vadd.f32 %v9422, %v9535
      %v9558 = vadd.f32 %v9423, %v9535
      %v9559 = vadd.f32 %v9424, %v9535
      %v9560 = vadd.f32 %v9425, %v9535
      %v9561 = vadd.f32 %v9426, %v9535
      %v9562 = vadd.f32 %v9427, %v9535
      %v9563 = vadd.f32 %v9428, %v9535
      %v9564 = vadd.f32 %v9429, %v9535
      %v9565 = vadd.f32 %v9430, %v9535
      %v9566 = vadd.f32 %v9431, %v9535
      %v9567 = vadd.f32 %v9432, %v9535
      %v9568 = vadd.f32 %v9433, %v9535
      %v9569 = vadd.f32 %v9434, %v9535
      %v9570 = vadd.f32 %v9435, %v9535
      %v9571 = vadd.f32 %v9436, %v9535
      %v9572 = vadd.f32 %v9437, %v9535
      %v9573 = vadd.f32 %v9438, %v9535
      %v9574 = vadd.f32 %v9439, %v9535
      %v9575 = vadd.f32 %v9440, %v9535
      %v9576 = vadd.f32 %v9441, %v9535
      %v9577 = vadd.f32 %v9442, %v9535
      %v9578 = vadd.f32 %v9443, %v9535
      %v9579 = vadd.f32 %v9444, %v9535
      %v9580 = vadd.f32 %v9445, %v9535
      %v9581 = vadd.f32 %v9446, %v9535
      %v9582 = vadd.f32 %v9447, %v9535
      %v9583 = vadd.f32 %v9448, %v9535
      %v9584 = vadd.f32 %v9449, %v9535
      %v9585 = vadd.f32 %v9450, %v9535
      %v9586 = vadd.f32 %v9451, %v9535
      %v9587 = vadd.f32 %v9452, %v9535
      %v9588 = vadd.f32 %v9453, %v9535
      %v9589 = vadd.f32 %v9454, %v9535
      %v9590 = vadd.f32 %v9455, %v9535
      %v9591 = vadd.f32 %v9456, %v9535
      %v9592 = vadd.f32 %v9457, %v9535
      %v9593 = vadd.f32 %v9458, %v9535
      %v9594 = vadd.f32 %v9459, %v9535
      %v9595 = vadd.f32 %v9460, %v9535
      %v9596 = vadd.f32 %v9461, %v9535
      %v9597 = vadd.f32 %v9462, %v9535
      %v9598 = vadd.f32 %v9463, %v9535
      %v9599 = vadd.f32 %v9464, %v9535
      %v9600 = vadd.f32 %v9465, %v9535
      %v9601 = vadd.f32 %v9466, %v9535
      %v9602 = vadd.f32 %v9467, %v9535
      %v9603 = vadd.f32 %v9468, %v9535
      %v9604 = vadd.f32 %v9469, %v9535
      %v9605 = vadd.f32 %v9470, %v9535
      %v9606 = vadd.f32 %v9471, %v9535
      %v9607 = vadd.f32 %v9472, %v9535
      %v9608 = vadd.f32 %v9473, %v9535
      %v9609 = vadd.f32 %v9474, %v9535
      %v9610 = vadd.f32 %v9475, %v9535
      %v9611 = vadd.f32 %v9476, %v9535
      %v9612 = vadd.f32 %v9477, %v9535
      %v9613 = vadd.f32 %v9478, %v9535
      %v9614 = vadd.f32 %v9479, %v9535
      %v9615 = vadd.f32 %v9480, %v9535
      %v9616 = vadd.f32 %v9481, %v9535
      %v9617 = vadd.f32 %v9482, %v9535
      %v9618 = vadd.f32 %v9483, %v9535
      %v9619 = vadd.f32 %v9484, %v9535
      %v9620 = vadd.f32 %v9485, %v9535
      %v9621 = vadd.f32 %v9486, %v9535
      %v9622 = vadd.f32 %v9487, %v9535
      %v9623 = vadd.f32 %v9488, %v9535
      %v9624 = vadd.f32 %v9489, %v9535
      %v9625 = vadd.f32 %v9490, %v9535
      %v9626 = vadd.f32 %v9491, %v9535
      %v9627 = vadd.f32 %v9492, %v9535
      %v9628 = vadd.f32 %v9493, %v9535
      %v9629 = vadd.f32 %v9494, %v9535
      %v9630 = vadd.f32 %v9495, %v9535
      %v9631 = vadd.f32 %v9496, %v9535
      %v9632 = vadd.f32 %v9497, %v9535
      %v9633 = vadd.f32 %v9498, %v9535
      %v9634 = vadd.f32 %v9499, %v9535
      %v9635 = vadd.f32 %v9500, %v9535
      %v9636 = vadd.f32 %v9501, %v9535
      %v9637 = vadd.f32 %v9502, %v9535
      %v9638 = vadd.f32 %v9503, %v9535
      %v9639 = vadd.f32 %v9504, %v9535
      %v9640 = vadd.f32 %v9505, %v9535
      %v9641 = vadd.f32 %v9506, %v9535
      %v9642 = vadd.f32 %v9507, %v9535
      %v9643 = vadd.f32 %v9508, %v9535
      %v9644 = vadd.f32 %v9509, %v9535
      %v9645 = vadd.f32 %v9510, %v9535
      %v9646 = vadd.f32 %v9511, %v9535
      %v9647 = vadd.f32 %v9512, %v9535
      %v9648 = vadd.f32 %v9513, %v9535
      %v9649 = vadd.f32 %v9514, %v9535
      %v9650 = vadd.f32 %v9515, %v9535
      %v9651 = vadd.f32 %v9516, %v9535
      %v9652 = vadd.f32 %v9517, %v9535
      %v9653 = vadd.f32 %v9518, %v9535
      %v9654 = vadd.f32 %v9519, %v9535
      %v9655 = vadd.f32 %v9520, %v9535
      %v9656 = vadd.f32 %v9521, %v9535
      %v9657 = vadd.f32 %v9522, %v9535
      %v9658 = vadd.f32 %v9523, %v9535
      %v9659 = vadd.f32 %v9524, %v9535
      %v9660 = vadd.f32 %v9525, %v9535
      %v9661 = vadd.f32 %v9526, %v9535
      %v9662 = vadd.f32 %v9527, %v9535
      %v9663 = vadd.f32 %v9528, %v9535
      %v9664 = vadd.f32 %v9529, %v9535
      %v9665 = vmax.f32 %v9537, 0.0
      %v9666 = vmax.f32 %v9538, 0.0
      %v9667 = vmax.f32 %v9539, 0.0
      %v9668 = vmax.f32 %v9540, 0.0
      %v9669 = vmax.f32 %v9541, 0.0
      %v9670 = vmax.f32 %v9542, 0.0
      %v9671 = vmax.f32 %v9543, 0.0
      %v9672 = vmax.f32 %v9544, 0.0
      %v9673 = vmax.f32 %v9545, 0.0
      %v9674 = vmax.f32 %v9546, 0.0
      %v9675 = vmax.f32 %v9547, 0.0
      %v9676 = vmax.f32 %v9548, 0.0
      %v9677 = vmax.f32 %v9549, 0.0
      %v9678 = vmax.f32 %v9550, 0.0
      %v9679 = vmax.f32 %v9551, 0.0
      %v9680 = vmax.f32 %v9552, 0.0
      %v9681 = vmax.f32 %v9553, 0.0
      %v9682 = vmax.f32 %v9554, 0.0
      %v9683 = vmax.f32 %v9555, 0.0
      %v9684 = vmax.f32 %v9556, 0.0
      %v9685 = vmax.f32 %v9557, 0.0
      %v9686 = vmax.f32 %v9558, 0.0
      %v9687 = vmax.f32 %v9559, 0.0
      %v9688 = vmax.f32 %v9560, 0.0
      %v9689 = vmax.f32 %v9561, 0.0
      %v9690 = vmax.f32 %v9562, 0.0
      %v9691 = vmax.f32 %v9563, 0.0
      %v9692 = vmax.f32 %v9564, 0.0
      %v9693 = vmax.f32 %v9565, 0.0
      %v9694 = vmax.f32 %v9566, 0.0
      %v9695 = vmax.f32 %v9567, 0.0
      %v9696 = vmax.f32 %v9568, 0.0
      %v9697 = vmax.f32 %v9569, 0.0
      %v9698 = vmax.f32 %v9570, 0.0
      %v9699 = vmax.f32 %v9571, 0.0
      %v9700 = vmax.f32 %v9572, 0.0
      %v9701 = vmax.f32 %v9573, 0.0
      %v9702 = vmax.f32 %v9574, 0.0
      %v9703 = vmax.f32 %v9575, 0.0
      %v9704 = vmax.f32 %v9576, 0.0
      %v9705 = vmax.f32 %v9577, 0.0
      %v9706 = vmax.f32 %v9578, 0.0
      %v9707 = vmax.f32 %v9579, 0.0
      %v9708 = vmax.f32 %v9580, 0.0
      %v9709 = vmax.f32 %v9581, 0.0
      %v9710 = vmax.f32 %v9582, 0.0
      %v9711 = vmax.f32 %v9583, 0.0
      %v9712 = vmax.f32 %v9584, 0.0
      %v9713 = vmax.f32 %v9585, 0.0
      %v9714 = vmax.f32 %v9586, 0.0
      %v9715 = vmax.f32 %v9587, 0.0
      %v9716 = vmax.f32 %v9588, 0.0
      %v9717 = vmax.f32 %v9589, 0.0
      %v9718 = vmax.f32 %v9590, 0.0
      %v9719 = vmax.f32 %v9591, 0.0
      %v9720 = vmax.f32 %v9592, 0.0
      %v9721 = vmax.f32 %v9593, 0.0
      %v9722 = vmax.f32 %v9594, 0.0
      %v9723 = vmax.f32 %v9595, 0.0
      %v9724 = vmax.f32 %v9596, 0.0
      %v9725 = vmax.f32 %v9597, 0.0
      %v9726 = vmax.f32 %v9598, 0.0
      %v9727 = vmax.f32 %v9599, 0.0
      %v9728 = vmax.f32 %v9600, 0.0
      %v9729 = vmax.f32 %v9601, 0.0
      %v9730 = vmax.f32 %v9602, 0.0
      %v9731 = vmax.f32 %v9603, 0.0
      %v9732 = vmax.f32 %v9604, 0.0
      %v9733 = vmax.f32 %v9605, 0.0
      %v9734 = vmax.f32 %v9606, 0.0
      %v9735 = vmax.f32 %v9607, 0.0
      %v9736 = vmax.f32 %v9608, 0.0
      %v9737 = vmax.f32 %v9609, 0.0
      %v9738 = vmax.f32 %v9610, 0.0
      %v9739 = vmax.f32 %v9611, 0.0
      %v9740 = vmax.f32 %v9612, 0.0
      %v9741 = vmax.f32 %v9613, 0.0
      %v9742 = vmax.f32 %v9614, 0.0
      %v9743 = vmax.f32 %v9615, 0.0
      %v9744 = vmax.f32 %v9616, 0.0
      %v9745 = vmax.f32 %v9617, 0.0
      %v9746 = vmax.f32 %v9618, 0.0
      %v9747 = vmax.f32 %v9619, 0.0
      %v9748 = vmax.f32 %v9620, 0.0
      %v9749 = vmax.f32 %v9621, 0.0
      %v9750 = vmax.f32 %v9622, 0.0
      %v9751 = vmax.f32 %v9623, 0.0
      %v9752 = vmax.f32 %v9624, 0.0
      %v9753 = vmax.f32 %v9625, 0.0
      %v9754 = vmax.f32 %v9626, 0.0
      %v9755 = vmax.f32 %v9627, 0.0
      %v9756 = vmax.f32 %v9628, 0.0
      %v9757 = vmax.f32 %v9629, 0.0
      %v9758 = vmax.f32 %v9630, 0.0
      %v9759 = vmax.f32 %v9631, 0.0
      %v9760 = vmax.f32 %v9632, 0.0
      %v9761 = vmax.f32 %v9633, 0.0
      %v9762 = vmax.f32 %v9634, 0.0
      %v9763 = vmax.f32 %v9635, 0.0
      %v9764 = vmax.f32 %v9636, 0.0
      %v9765 = vmax.f32 %v9637, 0.0
      %v9766 = vmax.f32 %v9638, 0.0
      %v9767 = vmax.f32 %v9639, 0.0
      %v9768 = vmax.f32 %v9640, 0.0
      %v9769 = vmax.f32 %v9641, 0.0
      %v9770 = vmax.f32 %v9642, 0.0
      %v9771 = vmax.f32 %v9643, 0.0
      %v9772 = vmax.f32 %v9644, 0.0
      %v9773 = vmax.f32 %v9645, 0.0
      %v9774 = vmax.f32 %v9646, 0.0
      %v9775 = vmax.f32 %v9647, 0.0
      %v9776 = vmax.f32 %v9648, 0.0
      %v9777 = vmax.f32 %v9649, 0.0
      %v9778 = vmax.f32 %v9650, 0.0
      %v9779 = vmax.f32 %v9651, 0.0
      %v9780 = vmax.f32 %v9652, 0.0
      %v9781 = vmax.f32 %v9653, 0.0
      %v9782 = vmax.f32 %v9654, 0.0
      %v9783 = vmax.f32 %v9655, 0.0
      %v9784 = vmax.f32 %v9656, 0.0
      %v9785 = vmax.f32 %v9657, 0.0
      %v9786 = vmax.f32 %v9658, 0.0
      %v9787 = vmax.f32 %v9659, 0.0
      %v9788 = vmax.f32 %v9660, 0.0
      %v9789 = vmax.f32 %v9661, 0.0
      %v9790 = vmax.f32 %v9662, 0.0
      %v9791 = vmax.f32 %v9663, 0.0
      %v9792 = vmax.f32 %v9664, 0.0
      %vm9793 = vcmask 130048
      %9794 = vst.msk [vmem:[%s170] sm:$0xff] %vm9793, %v9665
      %9795 = vst.msk [vmem:[%s170 + $0x8] sm:$0xff] %vm9793, %v9666
      %9796 = vst.msk [vmem:[%s170 + $0x10] sm:$0xff] %vm9793, %v9667
      %9797 = vst.msk [vmem:[%s170 + $0x18] sm:$0xff] %vm9793, %v9668
      %9798 = vst.msk [vmem:[%s170 + $0x20] sm:$0xff] %vm9793, %v9669
      %9799 = vst.msk [vmem:[%s170 + $0x28] sm:$0xff] %vm9793, %v9670
      %9800 = vst.msk [vmem:[%s170 + $0x30] sm:$0xff] %vm9793, %v9671
      %9801 = vst.msk [vmem:[%s170 + $0x38] sm:$0xff] %vm9793, %v9672
      %9802 = vst.msk [vmem:[%s170 + $0x40] sm:$0xff] %vm9793, %v9673
      %9803 = vst.msk [vmem:[%s170 + $0x48] sm:$0xff] %vm9793, %v9674
      %9804 = vst.msk [vmem:[%s170 + $0x50] sm:$0xff] %vm9793, %v9675
      %9805 = vst.msk [vmem:[%s170 + $0x58] sm:$0xff] %vm9793, %v9676
      %9806 = vst.msk [vmem:[%s170 + $0x60] sm:$0xff] %vm9793, %v9677
      %9807 = vst.msk [vmem:[%s170 + $0x68] sm:$0xff] %vm9793, %v9678
      %9808 = vst.msk [vmem:[%s170 + $0x70] sm:$0xff] %vm9793, %v9679
      %9809 = vst.msk [vmem:[%s170 + $0x78] sm:$0xff] %vm9793, %v9680
      %9810 = vst.msk [vmem:[%s170 + $0x80] sm:$0xff] %vm9793, %v9681
      %9811 = vst.msk [vmem:[%s170 + $0x88] sm:$0xff] %vm9793, %v9682
      %9812 = vst.msk [vmem:[%s170 + $0x90] sm:$0xff] %vm9793, %v9683
      %9813 = vst.msk [vmem:[%s170 + $0x98] sm:$0xff] %vm9793, %v9684
      %9814 = vst.msk [vmem:[%s170 + $0xa0] sm:$0xff] %vm9793, %v9685
      %9815 = vst.msk [vmem:[%s170 + $0xa8] sm:$0xff] %vm9793, %v9686
      %9816 = vst.msk [vmem:[%s170 + $0xb0] sm:$0xff] %vm9793, %v9687
      %9817 = vst.msk [vmem:[%s170 + $0xb8] sm:$0xff] %vm9793, %v9688
      %9818 = vst.msk [vmem:[%s170 + $0xc0] sm:$0xff] %vm9793, %v9689
      %9819 = vst.msk [vmem:[%s170 + $0xc8] sm:$0xff] %vm9793, %v9690
      %9820 = vst.msk [vmem:[%s170 + $0xd0] sm:$0xff] %vm9793, %v9691
      %9821 = vst.msk [vmem:[%s170 + $0xd8] sm:$0xff] %vm9793, %v9692
      %9822 = vst.msk [vmem:[%s170 + $0xe0] sm:$0xff] %vm9793, %v9693
      %9823 = vst.msk [vmem:[%s170 + $0xe8] sm:$0xff] %vm9793, %v9694
      %9824 = vst.msk [vmem:[%s170 + $0xf0] sm:$0xff] %vm9793, %v9695
      %9825 = vst.msk [vmem:[%s170 + $0xf8] sm:$0xff] %vm9793, %v9696
      %9826 = vst.msk [vmem:[%s170 + $0x100] sm:$0xff] %vm9793, %v9697
      %9827 = vst.msk [vmem:[%s170 + $0x108] sm:$0xff] %vm9793, %v9698
      %9828 = vst.msk [vmem:[%s170 + $0x110] sm:$0xff] %vm9793, %v9699
      %9829 = vst.msk [vmem:[%s170 + $0x118] sm:$0xff] %vm9793, %v9700
      %9830 = vst.msk [vmem:[%s170 + $0x120] sm:$0xff] %vm9793, %v9701
      %9831 = vst.msk [vmem:[%s170 + $0x128] sm:$0xff] %vm9793, %v9702
      %9832 = vst.msk [vmem:[%s170 + $0x130] sm:$0xff] %vm9793, %v9703
      %9833 = vst.msk [vmem:[%s170 + $0x138] sm:$0xff] %vm9793, %v9704
      %9834 = vst.msk [vmem:[%s170 + $0x140] sm:$0xff] %vm9793, %v9705
      %9835 = vst.msk [vmem:[%s170 + $0x148] sm:$0xff] %vm9793, %v9706
      %9836 = vst.msk [vmem:[%s170 + $0x150] sm:$0xff] %vm9793, %v9707
      %9837 = vst.msk [vmem:[%s170 + $0x158] sm:$0xff] %vm9793, %v9708
      %9838 = vst.msk [vmem:[%s170 + $0x160] sm:$0xff] %vm9793, %v9709
      %9839 = vst.msk [vmem:[%s170 + $0x168] sm:$0xff] %vm9793, %v9710
      %9840 = vst.msk [vmem:[%s170 + $0x170] sm:$0xff] %vm9793, %v9711
      %9841 = vst.msk [vmem:[%s170 + $0x178] sm:$0xff] %vm9793, %v9712
      %9842 = vst.msk [vmem:[%s170 + $0x180] sm:$0xff] %vm9793, %v9713
      %9843 = vst.msk [vmem:[%s170 + $0x188] sm:$0xff] %vm9793, %v9714
      %9844 = vst.msk [vmem:[%s170 + $0x190] sm:$0xff] %vm9793, %v9715
      %9845 = vst.msk [vmem:[%s170 + $0x198] sm:$0xff] %vm9793, %v9716
      %9846 = vst.msk [vmem:[%s170 + $0x1a0] sm:$0xff] %vm9793, %v9717
      %9847 = vst.msk [vmem:[%s170 + $0x1a8] sm:$0xff] %vm9793, %v9718
      %9848 = vst.msk [vmem:[%s170 + $0x1b0] sm:$0xff] %vm9793, %v9719
      %9849 = vst.msk [vmem:[%s170 + $0x1b8] sm:$0xff] %vm9793, %v9720
      %9850 = vst.msk [vmem:[%s170 + $0x1c0] sm:$0xff] %vm9793, %v9721
      %9851 = vst.msk [vmem:[%s170 + $0x1c8] sm:$0xff] %vm9793, %v9722
      %9852 = vst.msk [vmem:[%s170 + $0x1d0] sm:$0xff] %vm9793, %v9723
      %9853 = vst.msk [vmem:[%s170 + $0x1d8] sm:$0xff] %vm9793, %v9724
      %9854 = vst.msk [vmem:[%s170 + $0x1e0] sm:$0xff] %vm9793, %v9725
      %9855 = vst.msk [vmem:[%s170 + $0x1e8] sm:$0xff] %vm9793, %v9726
      %9856 = vst.msk [vmem:[%s170 + $0x1f0] sm:$0xff] %vm9793, %v9727
      %9857 = vst.msk [vmem:[%s170 + $0x1f8] sm:$0xff] %vm9793, %v9728
      %9858 = vst.msk [vmem:[%s170 + $0x200] sm:$0xff] %vm9793, %v9729
      %9859 = vst.msk [vmem:[%s170 + $0x208] sm:$0xff] %vm9793, %v9730
      %9860 = vst.msk [vmem:[%s170 + $0x210] sm:$0xff] %vm9793, %v9731
      %9861 = vst.msk [vmem:[%s170 + $0x218] sm:$0xff] %vm9793, %v9732
      %9862 = vst.msk [vmem:[%s170 + $0x220] sm:$0xff] %vm9793, %v9733
      %9863 = vst.msk [vmem:[%s170 + $0x228] sm:$0xff] %vm9793, %v9734
      %9864 = vst.msk [vmem:[%s170 + $0x230] sm:$0xff] %vm9793, %v9735
      %9865 = vst.msk [vmem:[%s170 + $0x238] sm:$0xff] %vm9793, %v9736
      %9866 = vst.msk [vmem:[%s170 + $0x240] sm:$0xff] %vm9793, %v9737
      %9867 = vst.msk [vmem:[%s170 + $0x248] sm:$0xff] %vm9793, %v9738
      %9868 = vst.msk [vmem:[%s170 + $0x250] sm:$0xff] %vm9793, %v9739
      %9869 = vst.msk [vmem:[%s170 + $0x258] sm:$0xff] %vm9793, %v9740
      %9870 = vst.msk [vmem:[%s170 + $0x260] sm:$0xff] %vm9793, %v9741
      %9871 = vst.msk [vmem:[%s170 + $0x268] sm:$0xff] %vm9793, %v9742
      %9872 = vst.msk [vmem:[%s170 + $0x270] sm:$0xff] %vm9793, %v9743
      %9873 = vst.msk [vmem:[%s170 + $0x278] sm:$0xff] %vm9793, %v9744
      %9874 = vst.msk [vmem:[%s170 + $0x280] sm:$0xff] %vm9793, %v9745
      %9875 = vst.msk [vmem:[%s170 + $0x288] sm:$0xff] %vm9793, %v9746
      %9876 = vst.msk [vmem:[%s170 + $0x290] sm:$0xff] %vm9793, %v9747
      %9877 = vst.msk [vmem:[%s170 + $0x298] sm:$0xff] %vm9793, %v9748
      %9878 = vst.msk [vmem:[%s170 + $0x2a0] sm:$0xff] %vm9793, %v9749
      %9879 = vst.msk [vmem:[%s170 + $0x2a8] sm:$0xff] %vm9793, %v9750
      %9880 = vst.msk [vmem:[%s170 + $0x2b0] sm:$0xff] %vm9793, %v9751
      %9881 = vst.msk [vmem:[%s170 + $0x2b8] sm:$0xff] %vm9793, %v9752
      %9882 = vst.msk [vmem:[%s170 + $0x2c0] sm:$0xff] %vm9793, %v9753
      %9883 = vst.msk [vmem:[%s170 + $0x2c8] sm:$0xff] %vm9793, %v9754
      %9884 = vst.msk [vmem:[%s170 + $0x2d0] sm:$0xff] %vm9793, %v9755
      %9885 = vst.msk [vmem:[%s170 + $0x2d8] sm:$0xff] %vm9793, %v9756
      %9886 = vst.msk [vmem:[%s170 + $0x2e0] sm:$0xff] %vm9793, %v9757
      %9887 = vst.msk [vmem:[%s170 + $0x2e8] sm:$0xff] %vm9793, %v9758
      %9888 = vst.msk [vmem:[%s170 + $0x2f0] sm:$0xff] %vm9793, %v9759
      %9889 = vst.msk [vmem:[%s170 + $0x2f8] sm:$0xff] %vm9793, %v9760
      %9890 = vst.msk [vmem:[%s170 + $0x300] sm:$0xff] %vm9793, %v9761
      %9891 = vst.msk [vmem:[%s170 + $0x308] sm:$0xff] %vm9793, %v9762
      %9892 = vst.msk [vmem:[%s170 + $0x310] sm:$0xff] %vm9793, %v9763
      %9893 = vst.msk [vmem:[%s170 + $0x318] sm:$0xff] %vm9793, %v9764
      %9894 = vst.msk [vmem:[%s170 + $0x320] sm:$0xff] %vm9793, %v9765
      %9895 = vst.msk [vmem:[%s170 + $0x328] sm:$0xff] %vm9793, %v9766
      %9896 = vst.msk [vmem:[%s170 + $0x330] sm:$0xff] %vm9793, %v9767
      %9897 = vst.msk [vmem:[%s170 + $0x338] sm:$0xff] %vm9793, %v9768
      %9898 = vst.msk [vmem:[%s170 + $0x340] sm:$0xff] %vm9793, %v9769
      %9899 = vst.msk [vmem:[%s170 + $0x348] sm:$0xff] %vm9793, %v9770
      %9900 = vst.msk [vmem:[%s170 + $0x350] sm:$0xff] %vm9793, %v9771
      %9901 = vst.msk [vmem:[%s170 + $0x358] sm:$0xff] %vm9793, %v9772
      %9902 = vst.msk [vmem:[%s170 + $0x360] sm:$0xff] %vm9793, %v9773
      %9903 = vst.msk [vmem:[%s170 + $0x368] sm:$0xff] %vm9793, %v9774
      %9904 = vst.msk [vmem:[%s170 + $0x370] sm:$0xff] %vm9793, %v9775
      %9905 = vst.msk [vmem:[%s170 + $0x378] sm:$0xff] %vm9793, %v9776
      %9906 = vst.msk [vmem:[%s170 + $0x380] sm:$0xff] %vm9793, %v9777
      %9907 = vst.msk [vmem:[%s170 + $0x388] sm:$0xff] %vm9793, %v9778
      %9908 = vst.msk [vmem:[%s170 + $0x390] sm:$0xff] %vm9793, %v9779
      %9909 = vst.msk [vmem:[%s170 + $0x398] sm:$0xff] %vm9793, %v9780
      %9910 = vst.msk [vmem:[%s170 + $0x3a0] sm:$0xff] %vm9793, %v9781
      %9911 = vst.msk [vmem:[%s170 + $0x3a8] sm:$0xff] %vm9793, %v9782
      %9912 = vst.msk [vmem:[%s170 + $0x3b0] sm:$0xff] %vm9793, %v9783
      %9913 = vst.msk [vmem:[%s170 + $0x3b8] sm:$0xff] %vm9793, %v9784
      %9914 = vst.msk [vmem:[%s170 + $0x3c0] sm:$0xff] %vm9793, %v9785
      %9915 = vst.msk [vmem:[%s170 + $0x3c8] sm:$0xff] %vm9793, %v9786
      %9916 = vst.msk [vmem:[%s170 + $0x3d0] sm:$0xff] %vm9793, %v9787
      %9917 = vst.msk [vmem:[%s170 + $0x3d8] sm:$0xff] %vm9793, %v9788
      %9918 = vst.msk [vmem:[%s170 + $0x3e0] sm:$0xff] %vm9793, %v9789
      %9919 = vst.msk [vmem:[%s170 + $0x3e8] sm:$0xff] %vm9793, %v9790
      %9920 = vst.msk [vmem:[%s170 + $0x3f0] sm:$0xff] %vm9793, %v9791
      %9921 = vst.msk [vmem:[%s170 + $0x3f8] sm:$0xff] %vm9793, %v9792
      %p9922 = scmp.lt.s32.totalorder %s14, 1
      %s9923 = scalar_select %p9922, %s14, 1
      %s9924 = smul.addr %s9923, 128
      %s9925 = smul.addr %s9924, 8
      %s9926 = scalar_lea.vmem %s3, %s9925
      // Predicated region
      $region33: #{tpu_custom_call.1} parent=31 // pred_check
        %p9927 = pneg %p100
      $region34: #{tpu_custom_call.1} parent=31 // pred_check_branch
        %9929 = sbr.rel (%p9927) target = $region36
      $region35: #{tpu_custom_call.1} parent=31 // pred_region
        _
      $region36: #{tpu_custom_call.1} parent=31 // pred_fallthru
        _
    $region32: #{tpu_custom_call.1} parent=5 // pred_fallthru
      _
    %p9930 = scmp.le.s32.totalorder 2, %s9
    // Predicated region
    $region37: #{tpu_custom_call.1} parent=5 // pred_check
      %p9931 = pneg %p9930
    $region38: #{tpu_custom_call.1} parent=5 // pred_check_branch
      %9933 = sbr.rel (%p9931) target = $region40
    $region39: #{tpu_custom_call.1} parent=5 // pred_region
      %s9934 = ssub.s32 %s9, 2
      // Predicated region
      $region41: #{tpu_custom_call.1} parent=39 // pred_check
        %p9935 = pneg %p106
      $region42: #{tpu_custom_call.1} parent=39 // pred_check_branch
        %9937 = sbr.rel (%p9935) target = $region44
      $region43: #{tpu_custom_call.1} parent=39 // pred_region
        %p9938 = scmp.lt.s32.totalorder %s15, 1
        %s9939 = scalar_select %p9938, %s15, 1
        %s9940 = smul.addr %s9939, 128
        %s9941 = smul.addr %s9940, 8
        %s9942 = scalar_lea.vmem %s3, %s9941
      $region44: #{tpu_custom_call.1} parent=39 // pred_fallthru
        _
    $region40: #{tpu_custom_call.1} parent=5 // pred_fallthru
      _
  $region6: #{tpu_custom_call.1} parent=0 // loop_footer
    %s13 = sadd.s32 1, %s9
  $region7: #{tpu_custom_call.1} parent=0 // loop_footer_branch
    %8 = sbr.rel target = $region3
  $region8: #{tpu_custom_call.1} parent=0 // loop_exit
    _

</llo_original>
